<compile_context>
chip_gen: v6e
topology: v6e:2x2x1
jax: 0.10.0
libtpu: 0.0.40
codegen_flags: <defaults>
</compile_context>

<pallas_src>
import functools
import numpy as np

import jax
import jax.numpy as jnp
from jax.experimental import pallas as pl
from jax.experimental.pallas import tpu as pltpu

LN_EPS = 1e-6  # norm_layer = partial(nn.LayerNorm, eps=1e-6)

# MXU input dtype.  Keep f32 to exactly preserve reference numerics; switch to
# jnp.bfloat16 on v6e/v7x for ~2x MXU throughput and half the HBM traffic
# (accumulation stays f32 either way).
MXU_DTYPE = jnp.float32

# --------------------------------------------------------------------------
# Synthetic config (small shapes).
# --------------------------------------------------------------------------
CFG = dict(
    PATCH_SIZE=4,
    PATCH_NORM=True,
    IN_CHANS=3,
    DROP_RATE=0.0,
    ATTN_DROP_RATE=0.0,
    DROP_PATH_RATE=0.0,          # 0.0 -> drop_path / dropout are identity
    QKV_BIAS=True,
    QKV_SCALE=None,
    NUM_CHANNELS=(32, 64),
    NUM_BLOCKS=(2, 2),
    NUM_HEADS=(2, 4),
    NUM_WINDOW_SIZES=((2, 2), (2, 2)),
    NUM_MLP_RATIOS=(4.0, 4.0),
)


def _round_up(a, b):
    return -(-a // b) * b


# --------------------------------------------------------------------------
# Exact-GELU helper (erf via Abramowitz & Stegun 7.1.26, |err| <= 1.5e-7;
# uses only exp/abs/where which are guaranteed to lower in Mosaic).
# --------------------------------------------------------------------------
def _erf_f32(x):
    a1, a2, a3, a4, a5 = (0.254829592, -0.284496736, 1.421413741,
                          -1.453152027, 1.061405429)
    p = 0.3275911
    sgn = jnp.where(x >= 0.0, 1.0, -1.0)
    ax = jnp.abs(x)
    t = 1.0 / (1.0 + p * ax)
    poly = ((((a5 * t + a4) * t + a3) * t + a2) * t + a1) * t
    return sgn * (1.0 - poly * jnp.exp(-ax * ax))


def _gelu_exact(x):
    return 0.5 * x * (1.0 + _erf_f32(x * 0.7071067811865476))


# --------------------------------------------------------------------------
# Fused linear kernel:   out = epilogue( LN_in?(x) @ w )  with tiled (M, N, K)
# grid.  Epilogue order: (+bias) -> (GELU) -> (LayerNorm over N) -> (+residual).
# When the K axis is a single block (`single_k`), no accumulator scratch is
# allocated and the result is written directly (fast path).
# --------------------------------------------------------------------------
def _fused_linear_kernel(*refs, has_bias, has_ln_in, has_ln_out, act, has_res,
                         single_k):
    refs = list(refs)
    if single_k:
        acc_ref = None
        o_ref = refs.pop()
    else:
        acc_ref = refs.pop()
        o_ref = refs.pop()
    it = iter(refs)
    x_ref = next(it)
    w_ref = next(it)
    b_ref = next(it) if has_bias else None
    gi_ref = next(it) if has_ln_in else None
    bi_ref = next(it) if has_ln_in else None
    go_ref = next(it) if has_ln_out else None
    bo_ref = next(it) if has_ln_out else None
    r_ref = next(it) if has_res else None

    x = x_ref[...].astype(jnp.float32)
    if has_ln_in:
        mu = jnp.mean(x, axis=-1, keepdims=True)
        xc = x - mu
        var = jnp.mean(xc * xc, axis=-1, keepdims=True)
        x = (xc * jax.lax.rsqrt(var + LN_EPS)
             * gi_ref[...].astype(jnp.float32)
             + bi_ref[...].astype(jnp.float32))

    part = jnp.dot(x.astype(MXU_DTYPE), w_ref[...].astype(MXU_DTYPE),
                   preferred_element_type=jnp.float32)

    def _epilogue(y):
        if has_bias:
            y = y + b_ref[...].astype(jnp.float32)
        if act == "gelu":
            y = _gelu_exact(y)
        if has_ln_out:
            mu = jnp.mean(y, axis=-1, keepdims=True)
            yc = y - mu
            var = jnp.mean(yc * yc, axis=-1, keepdims=True)
            y = (yc * jax.lax.rsqrt(var + LN_EPS)
                 * go_ref[...].astype(jnp.float32)
                 + bo_ref[...].astype(jnp.float32))
        if has_res:
            y = y + r_ref[...].astype(jnp.float32)
        return y.astype(o_ref.dtype)

    if single_k:
        o_ref[...] = _epilogue(part)
    else:
        k = pl.program_id(2)
        nk = pl.num_programs(2)

        @pl.when(k == 0)
        def _():
            acc_ref[...] = jnp.zeros_like(acc_ref)

        acc_ref[...] += part

        @pl.when(k == nk - 1)
        def _():
            o_ref[...] = _epilogue(acc_ref[...])


def fused_linear(x, w, b=None, *, ln_in=None, ln_out=None, act=None,
                 residual=None):
    """out = [+residual][LN_out][gelu][+b]( LN_in?(x) @ w ).  x:(M,K) w:(K,N)."""
    M, K = x.shape
    N = w.shape[1]

    # --- tile policy -------------------------------------------------------
    TM = min(256, _round_up(M, 8))
    Mp = _round_up(M, TM)
    if ln_out is not None or N <= 256:
        TN, Np = N, N                 # single N block (full row visible)
    else:
        TN = 256
        Np = _round_up(N, TN)
    if ln_in is not None or K <= 1024:
        TK, Kp = K, K                 # single K block (full feature row visible)
    else:
        TK = 512
        Kp = _round_up(K, TK)
    gm, gn, gk = Mp // TM, Np // TN, Kp // TK
    single_k = (gk == 1)

    xp = x if (Mp == M and Kp == K) else jnp.pad(x, ((0, Mp - M), (0, Kp - K)))
    wp = w if (Kp == K and Np == N) else jnp.pad(w, ((0, Kp - K), (0, Np - N)))

    args = [xp, wp]
    in_specs = [
        pl.BlockSpec((TM, TK), lambda i, j, k: (i, k)),
        pl.BlockSpec((TK, TN), lambda i, j, k: (k, j)),
    ]
    has_bias = b is not None
    if has_bias:
        bias = b.reshape(1, N)
        if Np != N:
            bias = jnp.pad(bias, ((0, 0), (0, Np - N)))
        args.append(bias)
        in_specs.append(pl.BlockSpec((1, TN), lambda i, j, k: (0, j)))
    if ln_in is not None:
        g_in, b_in = ln_in
        args += [g_in.reshape(1, K), b_in.reshape(1, K)]
        in_specs += [pl.BlockSpec((1, TK), lambda i, j, k: (0, k)),
                     pl.BlockSpec((1, TK), lambda i, j, k: (0, k))]
    if ln_out is not None:
        g_out, b_out = ln_out
        args += [g_out.reshape(1, N), b_out.reshape(1, N)]
        in_specs += [pl.BlockSpec((1, TN), lambda i, j, k: (0, j)),
                     pl.BlockSpec((1, TN), lambda i, j, k: (0, j))]
    has_res = residual is not None
    if has_res:
        r = residual
        if Mp != M or Np != N:
            r = jnp.pad(r, ((0, Mp - M), (0, Np - N)))
        args.append(r)
        in_specs.append(pl.BlockSpec((TM, TN), lambda i, j, k: (i, j)))

    kern = functools.partial(
        _fused_linear_kernel, has_bias=has_bias, has_ln_in=ln_in is not None,
        has_ln_out=ln_out is not None, act=act, has_res=has_res,
        single_k=single_k)

    scratch = [] if single_k else [pltpu.VMEM((TM, TN), jnp.float32)]
    out = pl.pallas_call(
        kern,
        out_shape=jax.ShapeDtypeStruct((Mp, Np), x.dtype),
        grid=(gm, gn, gk),
        in_specs=in_specs,
        out_specs=pl.BlockSpec((TM, TN), lambda i, j, k: (i, j)),
        scratch_shapes=scratch,
        compiler_params=pltpu.CompilerParams(
            dimension_semantics=("parallel", "parallel", "arbitrary"),
            vmem_limit_bytes=32 * 1024 * 1024),
    )(*args)
    if Mp != M or Np != N:
        out = out[:M, :N]
    return out


# --------------------------------------------------------------------------
# Standalone tiled LayerNorm (per-stage output norm / padded fallback only).
# --------------------------------------------------------------------------
def _layernorm_kernel(x_ref, g_ref, b_ref, o_ref):
    x = x_ref[...].astype(jnp.float32)
    mu = jnp.mean(x, axis=-1, keepdims=True)
    xc = x - mu
    var = jnp.mean(xc * xc, axis=-1, keepdims=True)
    y = xc * jax.lax.rsqrt(var + LN_EPS)
    o_ref[...] = (y * g_ref[...] + b_ref[...]).astype(o_ref.dtype)


def layernorm(x, gamma, beta):
    M, C = x.shape
    TM = min(256, _round_up(M, 8))
    Mp = _round_up(M, TM)
    xp = x if Mp == M else jnp.pad(x, ((0, Mp - M), (0, 0)))
    out = pl.pallas_call(
        _layernorm_kernel,
        out_shape=jax.ShapeDtypeStruct((Mp, C), x.dtype),
        grid=(Mp // TM,),
        in_specs=[
            pl.BlockSpec((TM, C), lambda i: (i, 0)),
            pl.BlockSpec((1, C), lambda i: (0, 0)),
            pl.BlockSpec((1, C), lambda i: (0, 0)),
        ],
        out_specs=pl.BlockSpec((TM, C), lambda i: (i, 0)),
        compiler_params=pltpu.CompilerParams(dimension_semantics=("parallel",)),
    )(xp, gamma.reshape(1, C), beta.reshape(1, C))
    return out[:M] if Mp != M else out


# --------------------------------------------------------------------------
# Window attention kernel: one grid step = all windows of one image.
# Input is the packed QKV slab (nW, N, 3C); columns are already head-major
# (q heads | k heads | v heads), so q/k/v per head are static lane slices.
# --------------------------------------------------------------------------
def _window_attn_kernel(*refs, heads, scale, has_mask):
    if has_mask:
        qkv_ref, bias_ref, mask_ref, o_ref = refs
    else:
        qkv_ref, bias_ref, o_ref = refs
        mask_ref = None

    qkv = qkv_ref[...].astype(jnp.float32)          # (nW, N, 3C)
    _, _, three_c = qkv.shape
    C = three_c // 3
    hd = C // heads
    bias = bias_ref[...].astype(jnp.float32)        # (heads, N, N)
    mask = mask_ref[...].astype(jnp.float32) if has_mask else None  # (nW, N, N)

    outs = []
    for h in range(heads):
        qh = qkv[:, :, h * hd:(h + 1) * hd] * scale              # (nW, N, hd)
        kh = qkv[:, :, C + h * hd:C + (h + 1) * hd]
        vh = qkv[:, :, 2 * C + h * hd:2 * C + (h + 1) * hd]
        s = jnp.einsum('wnd,wmd->wnm', qh, kh,
                       preferred_element_type=jnp.float32)        # (nW, N, N)
        s = s + bias[h][None, :, :]
        if has_mask:
            s = s + mask
        s = s - jnp.max(s, axis=-1, keepdims=True)
        p = jnp.exp(s)
        p = p * pl.reciprocal(jnp.sum(p, axis=-1, keepdims=True), approx=True)
        outs.append(jnp.einsum('wnm,wmd->wnd', p, vh,
                               preferred_element_type=jnp.float32))
    o_ref[...] = jnp.concatenate(outs, axis=-1).astype(o_ref.dtype)


def window_attention(qkv_w, rel_bias, mask, scale, heads, n_windows):
    """qkv_w: (B*nW, N, 3C); rel_bias: (heads, N, N); mask: (nW, N, N) or None."""
    nWB, N, three_c = qkv_w.shape
    C = three_c // 3
    B = nWB // n_windows
    kern = functools.partial(_window_attn_kernel, heads=heads, scale=scale,
                             has_mask=mask is not None)
    in_specs = [
        pl.BlockSpec((n_windows, N, three_c), lambda b: (b, 0, 0)),
        pl.BlockSpec((heads, N, N), lambda b: (0, 0, 0)),
    ]
    args = [qkv_w, rel_bias]
    if mask is not None:
        in_specs.append(pl.BlockSpec((n_windows, N, N), lambda b: (0, 0, 0)))
        args.append(mask)
    return pl.pallas_call(
        kern,
        out_shape=jax.ShapeDtypeStruct((nWB, N, C), qkv_w.dtype),
        grid=(B,),
        in_specs=in_specs,
        out_specs=pl.BlockSpec((n_windows, N, C), lambda b: (b, 0, 0)),
        compiler_params=pltpu.CompilerParams(dimension_semantics=("parallel",)),
    )(*args)


# --------------------------------------------------------------------------
# Plain-JAX glue (window partition / reverse, masks, relative position index)
# --------------------------------------------------------------------------
def window_partition_jax(x, ws):
    B, H, W, C = x.shape
    x = x.reshape(B, H // ws, ws, W // ws, ws, C)
    return x.transpose(0, 1, 3, 2, 4, 5).reshape(-1, ws, ws, C)


def window_reverse_jax(windows, ws, H, W):
    C = windows.shape[-1]
    B = windows.shape[0] // ((H // ws) * (W // ws))
    x = windows.reshape(B, H // ws, W // ws, ws, ws, C)
    return x.transpose(0, 1, 3, 2, 4, 5).reshape(B, H, W, C)


def relative_position_index(ws):
    coords = np.stack(np.meshgrid(np.arange(ws), np.arange(ws), indexing='ij'))
    flat = coords.reshape(2, -1)
    rel = (flat[:, :, None] - flat[:, None, :]).transpose(1, 2, 0).astype(np.int64)
    rel[:, :, 0] += ws - 1
    rel[:, :, 1] += ws - 1
    rel[:, :, 0] *= 2 * ws - 1
    return rel.sum(-1)  # (ws*ws, ws*ws)


def build_attn_mask(H, W, ws, shift):
    """Replicates BasicLayer's shifted-window attention mask, shape (nW, N, N)."""
    Hp = int(np.ceil(H / ws)) * ws
    Wp = int(np.ceil(W / ws)) * ws
    img = np.zeros((1, Hp, Wp, 1), np.float32)
    slices = (slice(0, -ws), slice(-ws, -shift), slice(-shift, None))
    cnt = 0
    for hs in slices:
        for wsl in slices:
            img[:, hs, wsl, :] = cnt
            cnt += 1
    mw = img.reshape(1, Hp // ws, ws, Wp // ws, ws, 1).transpose(0, 1, 3, 2, 4, 5)
    mw = mw.reshape(-1, ws * ws)
    am = mw[:, None, :] - mw[:, :, None]
    am = np.where(am != 0, -100.0, 0.0).astype(np.float32)
    return jnp.asarray(am)


# --------------------------------------------------------------------------
# Parameter initialization (deterministic, synthetic).  The relative-position
# bias gather is hoisted here (stored as (heads, N, N) per block).
# --------------------------------------------------------------------------
class KeyGen:
    def __init__(self, key):
        self.key = key

    def __call__(self):
        self.key, k = jax.random.split(self.key)
        return k


def init_params(key):
    kg = KeyGen(key)

    def lin(kin, kout, bias=True):
        w = jax.random.normal(kg(), (kin, kout), jnp.float32) * 0.02
        b = jnp.zeros((kout,), jnp.float32) if bias else None
        return {'w': w, 'b': b}

    def ln(dim):
        return {'g': jnp.ones((dim,), jnp.float32),
                'b': jnp.zeros((dim,), jnp.float32)}

    ps, in_ch = CFG['PATCH_SIZE'], CFG['IN_CHANS']
    e0 = CFG['NUM_CHANNELS'][0]
    params = {
        'patch_embed': {
            'proj': lin(in_ch * ps * ps, e0),
            'norm': ln(e0) if CFG['PATCH_NORM'] else None,
        },
        'layers': [],
    }
    for i, C in enumerate(CFG['NUM_CHANNELS']):
        heads = CFG['NUM_HEADS'][i]
        ws = CFG['NUM_WINDOW_SIZES'][i][0]
        ratio = CFG['NUM_MLP_RATIOS'][i]
        N = ws * ws
        rel_idx = relative_position_index(ws)            # numpy (N, N)
        blocks = []
        for _ in range(CFG['NUM_BLOCKS'][i]):
            table = jax.random.normal(
                kg(), ((2 * ws - 1) ** 2, heads), jnp.float32) * 0.02
            rel_bias = table[rel_idx.reshape(-1)]        # (N*N, heads)
            rel_bias = rel_bias.reshape(N, N, heads).transpose(2, 0, 1)
            blocks.append({
                'norm1': ln(C),
                'qkv': lin(C, 3 * C, bias=CFG['QKV_BIAS']),
                'rel_bias': rel_bias,                    # (heads, N, N), precomputed
                'proj': lin(C, C),
                'norm2': ln(C),
                'fc1': lin(C, int(C * ratio)),
                'fc2': lin(int(C * ratio), C),
            })
        layer = {'blocks': blocks}
        if i < len(CFG['NUM_CHANNELS']) - 1:
            layer['down_norm'] = ln(4 * C)
            layer['down_red'] = lin(4 * C, 2 * C, bias=False)
        params['layers'].append(layer)
        params[f'norm{i}'] = ln(C)
    return params


# --------------------------------------------------------------------------
# Forward pass
# --------------------------------------------------------------------------
def patch_embed_forward(x_nchw, p):
    B, Cin, H, W = x_nchw.shape
    ps = CFG['PATCH_SIZE']
    pad_w = (ps - W % ps) % ps
    pad_h = (ps - H % ps) % ps
    if pad_w or pad_h:
        x_nchw = jnp.pad(x_nchw, ((0, 0), (0, 0), (0, pad_h), (0, pad_w)))
    H2, W2 = H + pad_h, W + pad_w
    Wh, Ww = H2 // ps, W2 // ps
    # stride==kernel conv == patch extraction + matmul (+ fused LayerNorm)
    x = x_nchw.reshape(B, Cin, Wh, ps, Ww, ps)
    x = x.transpose(0, 2, 4, 1, 3, 5).reshape(B * Wh * Ww, Cin * ps * ps)
    ln_out = ((p['norm']['g'], p['norm']['b'])
              if p['norm'] is not None else None)
    x = fused_linear(x, p['proj']['w'], p['proj']['b'], ln_out=ln_out)
    E = x.shape[-1]
    return x.reshape(B, Wh * Ww, E), Wh, Ww


def swin_block_forward(x, H, W, C, num_heads, ws, shift, attn_mask, bp):
    """x: (B, H*W, C) -> (B, H*W, C)."""
    B = x.shape[0]
    head_dim = C // num_heads
    scale = (CFG['QKV_SCALE'] if CFG['QKV_SCALE'] is not None
             else head_dim ** -0.5)
    N = ws * ws
    pad_b = (ws - H % ws) % ws
    pad_r = (ws - W % ws) % ws
    Hp, Wp = H + pad_b, W + pad_r

    shortcut = x.reshape(B * H * W, C)

    if pad_b == 0 and pad_r == 0:
        # LN1 fused into the QKV projection (both are pointwise per token, so
        # they commute with the shift / window-partition reordering).
        tok = shortcut
        if shift > 0:
            tok = jnp.roll(shortcut.reshape(B, H, W, C),
                           shift=(-shift, -shift), axis=(1, 2))
            tok = tok.reshape(B * H * W, C)
        qkv = fused_linear(tok, bp['qkv']['w'], bp['qkv']['b'],
                           ln_in=(bp['norm1']['g'], bp['norm1']['b']))
        qkv = qkv.reshape(B, Hp, Wp, 3 * C)
    else:
        # Padded fallback: LN first (pad rows must enter qkv as zeros, like torch).
        h = layernorm(shortcut, bp['norm1']['g'], bp['norm1']['b'])
        h = h.reshape(B, H, W, C)
        h = jnp.pad(h, ((0, 0), (0, pad_b), (0, pad_r), (0, 0)))
        if shift > 0:
            h = jnp.roll(h, shift=(-shift, -shift), axis=(1, 2))
        qkv = fused_linear(h.reshape(B * Hp * Wp, C),
                           bp['qkv']['w'], bp['qkv']['b'])
        qkv = qkv.reshape(B, Hp, Wp, 3 * C)

    qkv_w = window_partition_jax(qkv, ws).reshape(-1, N, 3 * C)   # (B*nW, N, 3C)
    n_windows = (Hp // ws) * (Wp // ws)

    mask = attn_mask if shift > 0 else None
    attn = window_attention(qkv_w, bp['rel_bias'], mask, scale,
                            num_heads, n_windows)                 # (B*nW, N, C)

    attn = attn.reshape(-1, ws, ws, C)
    hsp = window_reverse_jax(attn, ws, Hp, Wp)                    # (B, Hp, Wp, C)
    if shift > 0:
        hsp = jnp.roll(hsp, shift=(shift, shift), axis=(1, 2))
    if pad_b or pad_r:
        hsp = hsp[:, :H, :W, :]

    # attention output projection with bias + residual fused (drop_path = id)
    x = fused_linear(hsp.reshape(B * H * W, C),
                     bp['proj']['w'], bp['proj']['b'], residual=shortcut)

    # MLP: LN2 + fc1 + bias + exact GELU fused; fc2 + bias + residual fused
    y = fused_linear(x, bp['fc1']['w'], bp['fc1']['b'],
                     ln_in=(bp['norm2']['g'], bp['norm2']['b']), act='gelu')
    x = fused_linear(y, bp['fc2']['w'], bp['fc2']['b'], residual=x)
    return x.reshape(B, H * W, C)


def patch_merging(x, H, W, layer_p):
    B, L, C = x.shape
    x = x.reshape(B, H, W, C)
    if H % 2 == 1 or W % 2 == 1:
        x = jnp.pad(x, ((0, 0), (0, H % 2), (0, W % 2), (0, 0)))
    x0 = x[:, 0::2, 0::2, :]
    x1 = x[:, 1::2, 0::2, :]
    x2 = x[:, 0::2, 1::2, :]
    x3 = x[:, 1::2, 1::2, :]
    x = jnp.concatenate([x0, x1, x2, x3], axis=-1)
    Hn, Wn = x.shape[1], x.shape[2]
    x = x.reshape(B * Hn * Wn, 4 * C)
    # LayerNorm(4C) fused into the (bias-free) reduction matmul
    x = fused_linear(x, layer_p['down_red']['w'], None,
                     ln_in=(layer_p['down_norm']['g'], layer_p['down_norm']['b']))
    return x.reshape(B, Hn * Wn, 2 * C)


def basic_layer_forward(x, H, W, layer_p, C, num_heads, ws):
    shift = ws // 2
    attn_mask = build_attn_mask(H, W, ws, shift)   # trace-time constant (nW,N,N)
    for d, bp in enumerate(layer_p['blocks']):
        blk_shift = 0 if d % 2 == 0 else shift
        x = swin_block_forward(x, H, W, C, num_heads, ws, blk_shift,
                               attn_mask, bp)
    if 'down_norm' in layer_p:
        x_down = patch_merging(x, H, W, layer_p)
        return x, H, W, x_down, (H + 1) // 2, (W + 1) // 2
    return x, H, W, x, H, W


def swin_forward(x_nchw, params):
    B = x_nchw.shape[0]
    x, Wh, Ww = patch_embed_forward(x_nchw, params['patch_embed'])
    outs = []
    for i, C in enumerate(CFG['NUM_CHANNELS']):
        heads = CFG['NUM_HEADS'][i]
        ws = CFG['NUM_WINDOW_SIZES'][i][0]
        x_out, H, W, x, Wh, Ww = basic_layer_forward(
            x, Wh, Ww, params['layers'][i], C, heads, ws)
        norm_p = params[f'norm{i}']
        x_out = layernorm(x_out.reshape(-1, C), norm_p['g'], norm_p['b'])
        out = x_out.reshape(B, H, W, C).transpose(0, 3, 1, 2)   # NCHW, like torch
        outs.append(out)
    return tuple(outs)


# --------------------------------------------------------------------------
if __name__ == "__main__":
    key = jax.random.PRNGKey(0)
    kp, kx = jax.random.split(key)
    params = init_params(kp)
    x = jax.random.normal(kx, (2, 3, 16, 16), jnp.float32)  # NCHW, like PyTorch

    fwd = jax.jit(swin_forward)
    outs = fwd(x, params)
    outs = jax.block_until_ready(outs)

    assert outs[0].shape == (2, 32, 4, 4), outs[0].shape
    assert outs[1].shape == (2, 64, 2, 2), outs[1].shape
    assert all(bool(jnp.all(jnp.isfinite(o))) for o in outs)
    print("KERNEL_OK")
</pallas_src>

<mosaic_0001>
module attributes {stable_mosaic.version = 11 : i64} {
  func.func @_fused_linear_kernel(%arg0: i32, %arg1: i32, %arg2: i32, %arg3: memref<32x48xf32, #tpu.memory_space<vmem>>, %arg4: memref<48x32xf32, #tpu.memory_space<vmem>>, %arg5: memref<1x32xf32, #tpu.memory_space<vmem>>, %arg6: memref<1x32xf32, #tpu.memory_space<vmem>>, %arg7: memref<1x32xf32, #tpu.memory_space<vmem>>, %arg8: memref<32x32xf32, #tpu.memory_space<vmem>>) attributes {dimension_semantics = [#tpu.dimension_semantics<parallel>, #tpu.dimension_semantics<parallel>, #tpu.dimension_semantics<arbitrary>], iteration_bounds = array<i64: 1, 1, 1>, scalar_prefetch = 0 : i64, scratch_operands = 0 : i64, tpu.core_type = #tpu.core_type<tc>, window_params = [{transform_indices = @transform_0, window_bounds = array<i64: 32, 48>}, {transform_indices = @transform_1, window_bounds = array<i64: 48, 32>}, {transform_indices = @transform_2, window_bounds = array<i64: 1, 32>}, {transform_indices = @transform_3, window_bounds = array<i64: 1, 32>}, {transform_indices = @transform_4, window_bounds = array<i64: 1, 32>}, {transform_indices = @transform_5, window_bounds = array<i64: 32, 32>}]} {
    %c0 = arith.constant 0 : index
    %c0_0 = arith.constant 0 : index
    %0 = vector.load %arg3[%c0, %c0_0] : memref<32x48xf32, #tpu.memory_space<vmem>>, vector<32x48xf32>
    %c0_1 = arith.constant 0 : index
    %c0_2 = arith.constant 0 : index
    %1 = vector.load %arg4[%c0_1, %c0_2] : memref<48x32xf32, #tpu.memory_space<vmem>>, vector<48x32xf32>
    %cst = arith.constant dense<0.000000e+00> : vector<32x32xf32>
    %2 = tpu.matmul %0, %1, %cst {dimension_numbers = #tpu.dot_dimension_numbers<[1], [0], [0], [1], [0, 0, 1, 1], [], []>} : vector<32x48xf32>, vector<48x32xf32>, vector<32x32xf32> -> vector<32x32xf32>
    %c0_3 = arith.constant 0 : index
    %c0_4 = arith.constant 0 : index
    %3 = vector.load %arg5[%c0_3, %c0_4] : memref<1x32xf32, #tpu.memory_space<vmem>>, vector<1x32xf32>
    %4 = vector.broadcast %3 : vector<1x32xf32> to vector<32x32xf32>
    %5 = arith.addf %2, %4 : vector<32x32xf32>
    %cst_5 = arith.constant dense<0.000000e+00> : vector<32xf32>
    %6 = vector.multi_reduction <add>, %5, %cst_5 [1] : vector<32x32xf32> to vector<32xf32>
    %7 = vector.shape_cast %6 : vector<32xf32> to vector<32x1xf32>
    %cst_6 = arith.constant 3.200000e+01 : f32
    %8 = vector.broadcast %cst_6 : f32 to vector<32x1xf32>
    %9 = arith.divf %7, %8 : vector<32x1xf32>
    %10 = vector.broadcast %9 : vector<32x1xf32> to vector<32x32xf32>
    %11 = arith.subf %5, %10 : vector<32x32xf32>
    %12 = arith.mulf %11, %11 : vector<32x32xf32>
    %cst_7 = arith.constant dense<0.000000e+00> : vector<32xf32>
    %13 = vector.multi_reduction <add>, %12, %cst_7 [1] : vector<32x32xf32> to vector<32xf32>
    %14 = vector.shape_cast %13 : vector<32xf32> to vector<32x1xf32>
    %cst_8 = arith.constant 3.200000e+01 : f32
    %15 = vector.broadcast %cst_8 : f32 to vector<32x1xf32>
    %16 = arith.divf %14, %15 : vector<32x1xf32>
    %cst_9 = arith.constant 9.99999997E-7 : f32
    %17 = vector.broadcast %cst_9 : f32 to vector<32x1xf32>
    %18 = arith.addf %16, %17 : vector<32x1xf32>
    %19 = math.rsqrt %18 : vector<32x1xf32>
    %20 = vector.broadcast %19 : vector<32x1xf32> to vector<32x32xf32>
    %21 = arith.mulf %11, %20 : vector<32x32xf32>
    %c0_10 = arith.constant 0 : index
    %c0_11 = arith.constant 0 : index
    %22 = vector.load %arg6[%c0_10, %c0_11] : memref<1x32xf32, #tpu.memory_space<vmem>>, vector<1x32xf32>
    %23 = vector.broadcast %22 : vector<1x32xf32> to vector<32x32xf32>
    %24 = arith.mulf %21, %23 : vector<32x32xf32>
    %c0_12 = arith.constant 0 : index
    %c0_13 = arith.constant 0 : index
    %25 = vector.load %arg7[%c0_12, %c0_13] : memref<1x32xf32, #tpu.memory_space<vmem>>, vector<1x32xf32>
    %26 = vector.broadcast %25 : vector<1x32xf32> to vector<32x32xf32>
    %27 = arith.addf %24, %26 : vector<32x32xf32>
    %c0_14 = arith.constant 0 : index
    %c0_15 = arith.constant 0 : index
    %28 = vector.load %arg8[%c0_14, %c0_15] : memref<32x32xf32, #tpu.memory_space<vmem>>, vector<32x32xf32>
    tpu.vector_store %arg8[%c0_14, %c0_15], %27 {strides = array<i32>} : memref<32x32xf32, #tpu.memory_space<vmem>>, vector<32x32xf32>,
    return
  }
  func.func @transform_0(%arg0: i32, %arg1: i32, %arg2: i32) -> (i32, i32) {
    %c0_i32 = arith.constant 0 : i32
    return %arg0, %arg2 : i32, i32
  }
  func.func @transform_1(%arg0: i32, %arg1: i32, %arg2: i32) -> (i32, i32) {
    %c0_i32 = arith.constant 0 : i32
    return %arg2, %arg1 : i32, i32
  }
  func.func @transform_2(%arg0: i32, %arg1: i32, %arg2: i32) -> (i32, i32) {
    %c0_i32 = arith.constant 0 : i32
    %c0_i32_0 = arith.constant 0 : i32
    return %c0_i32, %arg1 : i32, i32
  }
  func.func @transform_3(%arg0: i32, %arg1: i32, %arg2: i32) -> (i32, i32) {
    %c0_i32 = arith.constant 0 : i32
    %c0_i32_0 = arith.constant 0 : i32
    return %c0_i32, %arg1 : i32, i32
  }
  func.func @transform_4(%arg0: i32, %arg1: i32, %arg2: i32) -> (i32, i32) {
    %c0_i32 = arith.constant 0 : i32
    %c0_i32_0 = arith.constant 0 : i32
    return %c0_i32, %arg1 : i32, i32
  }
  func.func @transform_5(%arg0: i32, %arg1: i32, %arg2: i32) -> (i32, i32) {
    %c0_i32 = arith.constant 0 : i32
    return %arg0, %arg1 : i32, i32
  }
}

module attributes {stable_mosaic.version = 11 : i64} {
  func.func @_window_attn_kernel(%arg0: i32, %arg1: memref<4x4x96xf32, #tpu.memory_space<vmem>>, %arg2: memref<2x4x4xf32, #tpu.memory_space<vmem>>, %arg3: memref<4x4x32xf32, #tpu.memory_space<vmem>>) attributes {dimension_semantics = [#tpu.dimension_semantics<parallel>], iteration_bounds = array<i64: 2>, scalar_prefetch = 0 : i64, scratch_operands = 0 : i64, tpu.core_type = #tpu.core_type<tc>, window_params = [{transform_indices = @transform_0, window_bounds = array<i64: 4, 4, 96>}, {pipeline_mode = #tpu.pipeline_mode<synchronous>, transform_indices = @transform_1, window_bounds = array<i64: 2, 4, 4>}, {transform_indices = @transform_2, window_bounds = array<i64: 4, 4, 32>}]} {
    %c0 = arith.constant 0 : index
    %c0_0 = arith.constant 0 : index
    %c0_1 = arith.constant 0 : index
    %0 = vector.load %arg1[%c0, %c0_0, %c0_1] : memref<4x4x96xf32, #tpu.memory_space<vmem>>, vector<4x4x96xf32>
    %c0_2 = arith.constant 0 : index
    %c0_3 = arith.constant 0 : index
    %c0_4 = arith.constant 0 : index
    %1 = vector.load %arg2[%c0_2, %c0_3, %c0_4] : memref<2x4x4xf32, #tpu.memory_space<vmem>>, vector<2x4x4xf32>
    %2 = vector.extract_strided_slice %0 {offsets = [0, 0, 0], sizes = [4, 4, 16], strides = [1, 1, 1]} : vector<4x4x96xf32> to vector<4x4x16xf32>
    %cst = arith.constant 2.500000e-01 : f32
    %3 = vector.broadcast %cst : f32 to vector<4x4x16xf32>
    %4 = arith.mulf %2, %3 : vector<4x4x16xf32>
    %5 = vector.extract_strided_slice %0 {offsets = [0, 0, 32], sizes = [4, 4, 16], strides = [1, 1, 1]} : vector<4x4x96xf32> to vector<4x4x16xf32>
    %6 = vector.extract_strided_slice %0 {offsets = [0, 0, 64], sizes = [4, 4, 16], strides = [1, 1, 1]} : vector<4x4x96xf32> to vector<4x4x16xf32>
    "tpu.trace_start"() <{level = 10 : i32, message = "wnd,wmd->wnm"}> : () -> ()
    %cst_5 = arith.constant dense<0.000000e+00> : vector<4x4x4xf32>
    %7 = tpu.matmul %4, %5, %cst_5 {dimension_numbers = #tpu.dot_dimension_numbers<[2], [2], [1], [1], [0, 0, 0, 1, 1, 1], [0], [0]>} : vector<4x4x16xf32>, vector<4x4x16xf32>, vector<4x4x4xf32> -> vector<4x4x4xf32>
    "tpu.trace_stop"() : () -> ()
    %8 = vector.extract_strided_slice %1 {offsets = [0, 0, 0], sizes = [1, 4, 4], strides = [1, 1, 1]} : vector<2x4x4xf32> to vector<1x4x4xf32>
    %9 = vector.shape_cast %8 : vector<1x4x4xf32> to vector<4x4xf32>
    %10 = vector.shape_cast %9 : vector<4x4xf32> to vector<1x4x4xf32>
    %11 = vector.broadcast %10 : vector<1x4x4xf32> to vector<4x4x4xf32>
    %12 = arith.addf %7, %11 : vector<4x4x4xf32>
    %cst_6 = arith.constant dense<0xFF800000> : vector<4x4xf32>
    %13 = vector.multi_reduction <maximumf>, %12, %cst_6 [2] : vector<4x4x4xf32> to vector<4x4xf32>
    %14 = vector.shape_cast %13 : vector<4x4xf32> to vector<4x4x1xf32>
    %15 = vector.broadcast %14 : vector<4x4x1xf32> to vector<4x4x4xf32>
    %16 = arith.subf %12, %15 : vector<4x4x4xf32>
    %17 = math.exp %16 : vector<4x4x4xf32>
    %cst_7 = arith.constant dense<0.000000e+00> : vector<4x4xf32>
    %18 = vector.multi_reduction <add>, %17, %cst_7 [2] : vector<4x4x4xf32> to vector<4x4xf32>
    %19 = vector.shape_cast %18 : vector<4x4xf32> to vector<4x4x1xf32>
    %20 = tpu.reciprocal %19 {approx = true} : vector<4x4x1xf32> -> vector<4x4x1xf32>
    %21 = vector.broadcast %20 : vector<4x4x1xf32> to vector<4x4x4xf32>
    %22 = arith.mulf %17, %21 : vector<4x4x4xf32>
    "tpu.trace_start"() <{level = 10 : i32, message = "wnm,wmd->wnd"}> : () -> ()
    %cst_8 = arith.constant dense<0.000000e+00> : vector<4x4x16xf32>
    %23 = tpu.matmul %22, %6, %cst_8 {dimension_numbers = #tpu.dot_dimension_numbers<[2], [1], [1], [2], [0, 0, 0, 1, 1, 2], [0], [0]>} : vector<4x4x4xf32>, vector<4x4x16xf32>, vector<4x4x16xf32> -> vector<4x4x16xf32>
    "tpu.trace_stop"() : () -> ()
    %24 = vector.extract_strided_slice %0 {offsets = [0, 0, 16], sizes = [4, 4, 16], strides = [1, 1, 1]} : vector<4x4x96xf32> to vector<4x4x16xf32>
    %cst_9 = arith.constant 2.500000e-01 : f32
    %25 = vector.broadcast %cst_9 : f32 to vector<4x4x16xf32>
    %26 = arith.mulf %24, %25 : vector<4x4x16xf32>
    %27 = vector.extract_strided_slice %0 {offsets = [0, 0, 48], sizes = [4, 4, 16], strides = [1, 1, 1]} : vector<4x4x96xf32> to vector<4x4x16xf32>
    %28 = vector.extract_strided_slice %0 {offsets = [0, 0, 80], sizes = [4, 4, 16], strides = [1, 1, 1]} : vector<4x4x96xf32> to vector<4x4x16xf32>
    "tpu.trace_start"() <{level = 10 : i32, message = "wnd,wmd->wnm"}> : () -> ()
    %cst_10 = arith.constant dense<0.000000e+00> : vector<4x4x4xf32>
    %29 = tpu.matmul %26, %27, %cst_10 {dimension_numbers = #tpu.dot_dimension_numbers<[2], [2], [1], [1], [0, 0, 0, 1, 1, 1], [0], [0]>} : vector<4x4x16xf32>, vector<4x4x16xf32>, vector<4x4x4xf32> -> vector<4x4x4xf32>
    "tpu.trace_stop"() : () -> ()
    %30 = vector.extract_strided_slice %1 {offsets = [1, 0, 0], sizes = [1, 4, 4], strides = [1, 1, 1]} : vector<2x4x4xf32> to vector<1x4x4xf32>
    %31 = vector.shape_cast %30 : vector<1x4x4xf32> to vector<4x4xf32>
    %32 = vector.shape_cast %31 : vector<4x4xf32> to vector<1x4x4xf32>
    %33 = vector.broadcast %32 : vector<1x4x4xf32> to vector<4x4x4xf32>
    %34 = arith.addf %29, %33 : vector<4x4x4xf32>
    %cst_11 = arith.constant dense<0xFF800000> : vector<4x4xf32>
    %35 = vector.multi_reduction <maximumf>, %34, %cst_11 [2] : vector<4x4x4xf32> to vector<4x4xf32>
    %36 = vector.shape_cast %35 : vector<4x4xf32> to vector<4x4x1xf32>
    %37 = vector.broadcast %36 : vector<4x4x1xf32> to vector<4x4x4xf32>
    %38 = arith.subf %34, %37 : vector<4x4x4xf32>
    %39 = math.exp %38 : vector<4x4x4xf32>
    %cst_12 = arith.constant dense<0.000000e+00> : vector<4x4xf32>
    %40 = vector.multi_reduction <add>, %39, %cst_12 [2] : vector<4x4x4xf32> to vector<4x4xf32>
    %41 = vector.shape_cast %40 : vector<4x4xf32> to vector<4x4x1xf32>
    %42 = tpu.reciprocal %41 {approx = true} : vector<4x4x1xf32> -> vector<4x4x1xf32>
    %43 = vector.broadcast %42 : vector<4x4x1xf32> to vector<4x4x4xf32>
    %44 = arith.mulf %39, %43 : vector<4x4x4xf32>
    "tpu.trace_start"() <{level = 10 : i32, message = "wnm,wmd->wnd"}> : () -> ()
    %cst_13 = arith.constant dense<0.000000e+00> : vector<4x4x16xf32>
    %45 = tpu.matmul %44, %28, %cst_13 {dimension_numbers = #tpu.dot_dimension_numbers<[2], [1], [1], [2], [0, 0, 0, 1, 1, 2], [0], [0]>} : vector<4x4x4xf32>, vector<4x4x16xf32>, vector<4x4x16xf32> -> vector<4x4x16xf32>
    "tpu.trace_stop"() : () -> ()
    %46 = tpu.concatenate %23, %45 in 2 : vector<4x4x16xf32>, vector<4x4x16xf32> -> vector<4x4x32xf32>
    %c0_14 = arith.constant 0 : index
    %c0_15 = arith.constant 0 : index
    %c0_16 = arith.constant 0 : index
    %47 = vector.load %arg3[%c0_14, %c0_15, %c0_16] : memref<4x4x32xf32, #tpu.memory_space<vmem>>, vector<4x4x32xf32>
    tpu.vector_store %arg3[%c0_14, %c0_15, %c0_16], %46 {strides = array<i32>} : memref<4x4x32xf32, #tpu.memory_space<vmem>>, vector<4x4x32xf32>,
    return
  }
  func.func @transform_0(%arg0: i32) -> (i32, i32, i32) {
    %c0_i32 = arith.constant 0 : i32
    %c0_i32_0 = arith.constant 0 : i32
    %c0_i32_1 = arith.constant 0 : i32
    return %arg0, %c0_i32, %c0_i32_0 : i32, i32, i32
  }
  func.func @transform_1(%arg0: i32) -> (i32, i32, i32) {
    %c0_i32 = arith.constant 0 : i32
    %c0_i32_0 = arith.constant 0 : i32
    %c0_i32_1 = arith.constant 0 : i32
    %c0_i32_2 = arith.constant 0 : i32
    return %c0_i32, %c0_i32_0, %c0_i32_1 : i32, i32, i32
  }
  func.func @transform_2(%arg0: i32) -> (i32, i32, i32) {
    %c0_i32 = arith.constant 0 : i32
    %c0_i32_0 = arith.constant 0 : i32
    %c0_i32_1 = arith.constant 0 : i32
    return %arg0, %c0_i32, %c0_i32_0 : i32, i32, i32
  }
}

module attributes {stable_mosaic.version = 11 : i64} {
  func.func @_fused_linear_kernel(%arg0: i32, %arg1: i32, %arg2: i32, %arg3: memref<32x32xf32, #tpu.memory_space<vmem>>, %arg4: memref<32x96xf32, #tpu.memory_space<vmem>>, %arg5: memref<1x96xf32, #tpu.memory_space<vmem>>, %arg6: memref<1x32xf32, #tpu.memory_space<vmem>>, %arg7: memref<1x32xf32, #tpu.memory_space<vmem>>, %arg8: memref<32x96xf32, #tpu.memory_space<vmem>>) attributes {dimension_semantics = [#tpu.dimension_semantics<parallel>, #tpu.dimension_semantics<parallel>, #tpu.dimension_semantics<arbitrary>], iteration_bounds = array<i64: 1, 1, 1>, scalar_prefetch = 0 : i64, scratch_operands = 0 : i64, tpu.core_type = #tpu.core_type<tc>, window_params = [{transform_indices = @transform_0, window_bounds = array<i64: 32, 32>}, {transform_indices = @transform_1, window_bounds = array<i64: 32, 96>}, {transform_indices = @transform_2, window_bounds = array<i64: 1, 96>}, {transform_indices = @transform_3, window_bounds = array<i64: 1, 32>}, {transform_indices = @transform_4, window_bounds = array<i64: 1, 32>}, {transform_indices = @transform_5, window_bounds = array<i64: 32, 96>}]} {
    %c0 = arith.constant 0 : index
    %c0_0 = arith.constant 0 : index
    %0 = vector.load %arg3[%c0, %c0_0] : memref<32x32xf32, #tpu.memory_space<vmem>>, vector<32x32xf32>
    %cst = arith.constant dense<0.000000e+00> : vector<32xf32>
    %1 = vector.multi_reduction <add>, %0, %cst [1] : vector<32x32xf32> to vector<32xf32>
    %2 = vector.shape_cast %1 : vector<32xf32> to vector<32x1xf32>
    %cst_1 = arith.constant 3.200000e+01 : f32
    %3 = vector.broadcast %cst_1 : f32 to vector<32x1xf32>
    %4 = arith.divf %2, %3 : vector<32x1xf32>
    %5 = vector.broadcast %4 : vector<32x1xf32> to vector<32x32xf32>
    %6 = arith.subf %0, %5 : vector<32x32xf32>
    %7 = arith.mulf %6, %6 : vector<32x32xf32>
    %cst_2 = arith.constant dense<0.000000e+00> : vector<32xf32>
    %8 = vector.multi_reduction <add>, %7, %cst_2 [1] : vector<32x32xf32> to vector<32xf32>
    %9 = vector.shape_cast %8 : vector<32xf32> to vector<32x1xf32>
    %cst_3 = arith.constant 3.200000e+01 : f32
    %10 = vector.broadcast %cst_3 : f32 to vector<32x1xf32>
    %11 = arith.divf %9, %10 : vector<32x1xf32>
    %cst_4 = arith.constant 9.99999997E-7 : f32
    %12 = vector.broadcast %cst_4 : f32 to vector<32x1xf32>
    %13 = arith.addf %11, %12 : vector<32x1xf32>
    %14 = math.rsqrt %13 : vector<32x1xf32>
    %15 = vector.broadcast %14 : vector<32x1xf32> to vector<32x32xf32>
    %16 = arith.mulf %6, %15 : vector<32x32xf32>
    %c0_5 = arith.constant 0 : index
    %c0_6 = arith.constant 0 : index
    %17 = vector.load %arg6[%c0_5, %c0_6] : memref<1x32xf32, #tpu.memory_space<vmem>>, vector<1x32xf32>
    %18 = vector.broadcast %17 : vector<1x32xf32> to vector<32x32xf32>
    %19 = arith.mulf %16, %18 : vector<32x32xf32>
    %c0_7 = arith.constant 0 : index
    %c0_8 = arith.constant 0 : index
    %20 = vector.load %arg7[%c0_7, %c0_8] : memref<1x32xf32, #tpu.memory_space<vmem>>, vector<1x32xf32>
    %21 = vector.broadcast %20 : vector<1x32xf32> to vector<32x32xf32>
    %22 = arith.addf %19, %21 : vector<32x32xf32>
    %c0_9 = arith.constant 0 : index
    %c0_10 = arith.constant 0 : index
    %23 = vector.load %arg4[%c0_9, %c0_10] : memref<32x96xf32, #tpu.memory_space<vmem>>, vector<32x96xf32>
    %cst_11 = arith.constant dense<0.000000e+00> : vector<32x96xf32>
    %24 = tpu.matmul %22, %23, %cst_11 {dimension_numbers = #tpu.dot_dimension_numbers<[1], [0], [0], [1], [0, 0, 1, 1], [], []>} : vector<32x32xf32>, vector<32x96xf32>, vector<32x96xf32> -> vector<32x96xf32>
    %c0_12 = arith.constant 0 : index
    %c0_13 = arith.constant 0 : index
    %25 = vector.load %arg5[%c0_12, %c0_13] : memref<1x96xf32, #tpu.memory_space<vmem>>, vector<1x96xf32>
    %26 = vector.broadcast %25 : vector<1x96xf32> to vector<32x96xf32>
    %27 = arith.addf %24, %26 : vector<32x96xf32>
    %c0_14 = arith.constant 0 : index
    %c0_15 = arith.constant 0 : index
    %28 = vector.load %arg8[%c0_14, %c0_15] : memref<32x96xf32, #tpu.memory_space<vmem>>, vector<32x96xf32>
    tpu.vector_store %arg8[%c0_14, %c0_15], %27 {strides = array<i32>} : memref<32x96xf32, #tpu.memory_space<vmem>>, vector<32x96xf32>,
    return
  }
  func.func @transform_0(%arg0: i32, %arg1: i32, %arg2: i32) -> (i32, i32) {
    %c0_i32 = arith.constant 0 : i32
    return %arg0, %arg2 : i32, i32
  }
  func.func @transform_1(%arg0: i32, %arg1: i32, %arg2: i32) -> (i32, i32) {
    %c0_i32 = arith.constant 0 : i32
    return %arg2, %arg1 : i32, i32
  }
  func.func @transform_2(%arg0: i32, %arg1: i32, %arg2: i32) -> (i32, i32) {
    %c0_i32 = arith.constant 0 : i32
    %c0_i32_0 = arith.constant 0 : i32
    return %c0_i32, %arg1 : i32, i32
  }
  func.func @transform_3(%arg0: i32, %arg1: i32, %arg2: i32) -> (i32, i32) {
    %c0_i32 = arith.constant 0 : i32
    %c0_i32_0 = arith.constant 0 : i32
    return %c0_i32, %arg2 : i32, i32
  }
  func.func @transform_4(%arg0: i32, %arg1: i32, %arg2: i32) -> (i32, i32) {
    %c0_i32 = arith.constant 0 : i32
    %c0_i32_0 = arith.constant 0 : i32
    return %c0_i32, %arg2 : i32, i32
  }
  func.func @transform_5(%arg0: i32, %arg1: i32, %arg2: i32) -> (i32, i32) {
    %c0_i32 = arith.constant 0 : i32
    return %arg0, %arg1 : i32, i32
  }
}

module attributes {stable_mosaic.version = 11 : i64} {
  func.func @_fused_linear_kernel(%arg0: i32, %arg1: i32, %arg2: i32, %arg3: memref<32x32xf32, #tpu.memory_space<vmem>>, %arg4: memref<32x32xf32, #tpu.memory_space<vmem>>, %arg5: memref<1x32xf32, #tpu.memory_space<vmem>>, %arg6: memref<32x32xf32, #tpu.memory_space<vmem>>, %arg7: memref<32x32xf32, #tpu.memory_space<vmem>>) attributes {dimension_semantics = [#tpu.dimension_semantics<parallel>, #tpu.dimension_semantics<parallel>, #tpu.dimension_semantics<arbitrary>], iteration_bounds = array<i64: 1, 1, 1>, scalar_prefetch = 0 : i64, scratch_operands = 0 : i64, tpu.core_type = #tpu.core_type<tc>, window_params = [{transform_indices = @transform_0, window_bounds = array<i64: 32, 32>}, {transform_indices = @transform_1, window_bounds = array<i64: 32, 32>}, {transform_indices = @transform_2, window_bounds = array<i64: 1, 32>}, {transform_indices = @transform_3, window_bounds = array<i64: 32, 32>}, {transform_indices = @transform_4, window_bounds = array<i64: 32, 32>}]} {
    %c0 = arith.constant 0 : index
    %c0_0 = arith.constant 0 : index
    %0 = vector.load %arg3[%c0, %c0_0] : memref<32x32xf32, #tpu.memory_space<vmem>>, vector<32x32xf32>
    %c0_1 = arith.constant 0 : index
    %c0_2 = arith.constant 0 : index
    %1 = vector.load %arg4[%c0_1, %c0_2] : memref<32x32xf32, #tpu.memory_space<vmem>>, vector<32x32xf32>
    %cst = arith.constant dense<0.000000e+00> : vector<32x32xf32>
    %2 = tpu.matmul %0, %1, %cst {dimension_numbers = #tpu.dot_dimension_numbers<[1], [0], [0], [1], [0, 0, 1, 1], [], []>} : vector<32x32xf32>, vector<32x32xf32>, vector<32x32xf32> -> vector<32x32xf32>
    %c0_3 = arith.constant 0 : index
    %c0_4 = arith.constant 0 : index
    %3 = vector.load %arg5[%c0_3, %c0_4] : memref<1x32xf32, #tpu.memory_space<vmem>>, vector<1x32xf32>
    %4 = vector.broadcast %3 : vector<1x32xf32> to vector<32x32xf32>
    %5 = arith.addf %2, %4 : vector<32x32xf32>
    %c0_5 = arith.constant 0 : index
    %c0_6 = arith.constant 0 : index
    %6 = vector.load %arg6[%c0_5, %c0_6] : memref<32x32xf32, #tpu.memory_space<vmem>>, vector<32x32xf32>
    %7 = arith.addf %5, %6 : vector<32x32xf32>
    %c0_7 = arith.constant 0 : index
    %c0_8 = arith.constant 0 : index
    %8 = vector.load %arg7[%c0_7, %c0_8] : memref<32x32xf32, #tpu.memory_space<vmem>>, vector<32x32xf32>
    tpu.vector_store %arg7[%c0_7, %c0_8], %7 {strides = array<i32>} : memref<32x32xf32, #tpu.memory_space<vmem>>, vector<32x32xf32>,
    return
  }
  func.func @transform_0(%arg0: i32, %arg1: i32, %arg2: i32) -> (i32, i32) {
    %c0_i32 = arith.constant 0 : i32
    return %arg0, %arg2 : i32, i32
  }
  func.func @transform_1(%arg0: i32, %arg1: i32, %arg2: i32) -> (i32, i32) {
    %c0_i32 = arith.constant 0 : i32
    return %arg2, %arg1 : i32, i32
  }
  func.func @transform_2(%arg0: i32, %arg1: i32, %arg2: i32) -> (i32, i32) {
    %c0_i32 = arith.constant 0 : i32
    %c0_i32_0 = arith.constant 0 : i32
    return %c0_i32, %arg1 : i32, i32
  }
  func.func @transform_3(%arg0: i32, %arg1: i32, %arg2: i32) -> (i32, i32) {
    %c0_i32 = arith.constant 0 : i32
    return %arg0, %arg1 : i32, i32
  }
  func.func @transform_4(%arg0: i32, %arg1: i32, %arg2: i32) -> (i32, i32) {
    %c0_i32 = arith.constant 0 : i32
    return %arg0, %arg1 : i32, i32
  }
}

module attributes {stable_mosaic.version = 11 : i64} {
  func.func @_fused_linear_kernel(%arg0: i32, %arg1: i32, %arg2: i32, %arg3: memref<32x128xf32, #tpu.memory_space<vmem>>, %arg4: memref<128x32xf32, #tpu.memory_space<vmem>>, %arg5: memref<1x32xf32, #tpu.memory_space<vmem>>, %arg6: memref<32x32xf32, #tpu.memory_space<vmem>>, %arg7: memref<32x32xf32, #tpu.memory_space<vmem>>) attributes {dimension_semantics = [#tpu.dimension_semantics<parallel>, #tpu.dimension_semantics<parallel>, #tpu.dimension_semantics<arbitrary>], iteration_bounds = array<i64: 1, 1, 1>, scalar_prefetch = 0 : i64, scratch_operands = 0 : i64, tpu.core_type = #tpu.core_type<tc>, window_params = [{transform_indices = @transform_0, window_bounds = array<i64: 32, 128>}, {transform_indices = @transform_1, window_bounds = array<i64: 128, 32>}, {transform_indices = @transform_2, window_bounds = array<i64: 1, 32>}, {transform_indices = @transform_3, window_bounds = array<i64: 32, 32>}, {transform_indices = @transform_4, window_bounds = array<i64: 32, 32>}]} {
    %c0 = arith.constant 0 : index
    %c0_0 = arith.constant 0 : index
    %0 = vector.load %arg3[%c0, %c0_0] : memref<32x128xf32, #tpu.memory_space<vmem>>, vector<32x128xf32>
    %c0_1 = arith.constant 0 : index
    %c0_2 = arith.constant 0 : index
    %1 = vector.load %arg4[%c0_1, %c0_2] : memref<128x32xf32, #tpu.memory_space<vmem>>, vector<128x32xf32>
    %cst = arith.constant dense<0.000000e+00> : vector<32x32xf32>
    %2 = tpu.matmul %0, %1, %cst {dimension_numbers = #tpu.dot_dimension_numbers<[1], [0], [0], [1], [0, 0, 1, 1], [], []>} : vector<32x128xf32>, vector<128x32xf32>, vector<32x32xf32> -> vector<32x32xf32>
    %c0_3 = arith.constant 0 : index
    %c0_4 = arith.constant 0 : index
    %3 = vector.load %arg5[%c0_3, %c0_4] : memref<1x32xf32, #tpu.memory_space<vmem>>, vector<1x32xf32>
    %4 = vector.broadcast %3 : vector<1x32xf32> to vector<32x32xf32>
    %5 = arith.addf %2, %4 : vector<32x32xf32>
    %c0_5 = arith.constant 0 : index
    %c0_6 = arith.constant 0 : index
    %6 = vector.load %arg6[%c0_5, %c0_6] : memref<32x32xf32, #tpu.memory_space<vmem>>, vector<32x32xf32>
    %7 = arith.addf %5, %6 : vector<32x32xf32>
    %c0_7 = arith.constant 0 : index
    %c0_8 = arith.constant 0 : index
    %8 = vector.load %arg7[%c0_7, %c0_8] : memref<32x32xf32, #tpu.memory_space<vmem>>, vector<32x32xf32>
    tpu.vector_store %arg7[%c0_7, %c0_8], %7 {strides = array<i32>} : memref<32x32xf32, #tpu.memory_space<vmem>>, vector<32x32xf32>,
    return
  }
  func.func @transform_0(%arg0: i32, %arg1: i32, %arg2: i32) -> (i32, i32) {
    %c0_i32 = arith.constant 0 : i32
    return %arg0, %arg2 : i32, i32
  }
  func.func @transform_1(%arg0: i32, %arg1: i32, %arg2: i32) -> (i32, i32) {
    %c0_i32 = arith.constant 0 : i32
    return %arg2, %arg1 : i32, i32
  }
  func.func @transform_2(%arg0: i32, %arg1: i32, %arg2: i32) -> (i32, i32) {
    %c0_i32 = arith.constant 0 : i32
    %c0_i32_0 = arith.constant 0 : i32
    return %c0_i32, %arg1 : i32, i32
  }
  func.func @transform_3(%arg0: i32, %arg1: i32, %arg2: i32) -> (i32, i32) {
    %c0_i32 = arith.constant 0 : i32
    return %arg0, %arg1 : i32, i32
  }
  func.func @transform_4(%arg0: i32, %arg1: i32, %arg2: i32) -> (i32, i32) {
    %c0_i32 = arith.constant 0 : i32
    return %arg0, %arg1 : i32, i32
  }
}

module attributes {stable_mosaic.version = 11 : i64} {
  func.func @_fused_linear_kernel(%arg0: i32, %arg1: i32, %arg2: i32, %arg3: memref<32x32xf32, #tpu.memory_space<vmem>>, %arg4: memref<32x128xf32, #tpu.memory_space<vmem>>, %arg5: memref<1x128xf32, #tpu.memory_space<vmem>>, %arg6: memref<1x32xf32, #tpu.memory_space<vmem>>, %arg7: memref<1x32xf32, #tpu.memory_space<vmem>>, %arg8: memref<32x128xf32, #tpu.memory_space<vmem>>) attributes {dimension_semantics = [#tpu.dimension_semantics<parallel>, #tpu.dimension_semantics<parallel>, #tpu.dimension_semantics<arbitrary>], iteration_bounds = array<i64: 1, 1, 1>, scalar_prefetch = 0 : i64, scratch_operands = 0 : i64, tpu.core_type = #tpu.core_type<tc>, window_params = [{transform_indices = @transform_0, window_bounds = array<i64: 32, 32>}, {transform_indices = @transform_1, window_bounds = array<i64: 32, 128>}, {transform_indices = @transform_2, window_bounds = array<i64: 1, 128>}, {transform_indices = @transform_3, window_bounds = array<i64: 1, 32>}, {transform_indices = @transform_4, window_bounds = array<i64: 1, 32>}, {transform_indices = @transform_5, window_bounds = array<i64: 32, 128>}]} {
    %c0 = arith.constant 0 : index
    %c0_0 = arith.constant 0 : index
    %0 = vector.load %arg3[%c0, %c0_0] : memref<32x32xf32, #tpu.memory_space<vmem>>, vector<32x32xf32>
    %cst = arith.constant dense<0.000000e+00> : vector<32xf32>
    %1 = vector.multi_reduction <add>, %0, %cst [1] : vector<32x32xf32> to vector<32xf32>
    %2 = vector.shape_cast %1 : vector<32xf32> to vector<32x1xf32>
    %cst_1 = arith.constant 3.200000e+01 : f32
    %3 = vector.broadcast %cst_1 : f32 to vector<32x1xf32>
    %4 = arith.divf %2, %3 : vector<32x1xf32>
    %5 = vector.broadcast %4 : vector<32x1xf32> to vector<32x32xf32>
    %6 = arith.subf %0, %5 : vector<32x32xf32>
    %7 = arith.mulf %6, %6 : vector<32x32xf32>
    %cst_2 = arith.constant dense<0.000000e+00> : vector<32xf32>
    %8 = vector.multi_reduction <add>, %7, %cst_2 [1] : vector<32x32xf32> to vector<32xf32>
    %9 = vector.shape_cast %8 : vector<32xf32> to vector<32x1xf32>
    %cst_3 = arith.constant 3.200000e+01 : f32
    %10 = vector.broadcast %cst_3 : f32 to vector<32x1xf32>
    %11 = arith.divf %9, %10 : vector<32x1xf32>
    %cst_4 = arith.constant 9.99999997E-7 : f32
    %12 = vector.broadcast %cst_4 : f32 to vector<32x1xf32>
    %13 = arith.addf %11, %12 : vector<32x1xf32>
    %14 = math.rsqrt %13 : vector<32x1xf32>
    %15 = vector.broadcast %14 : vector<32x1xf32> to vector<32x32xf32>
    %16 = arith.mulf %6, %15 : vector<32x32xf32>
    %c0_5 = arith.constant 0 : index
    %c0_6 = arith.constant 0 : index
    %17 = vector.load %arg6[%c0_5, %c0_6] : memref<1x32xf32, #tpu.memory_space<vmem>>, vector<1x32xf32>
    %18 = vector.broadcast %17 : vector<1x32xf32> to vector<32x32xf32>
    %19 = arith.mulf %16, %18 : vector<32x32xf32>
    %c0_7 = arith.constant 0 : index
    %c0_8 = arith.constant 0 : index
    %20 = vector.load %arg7[%c0_7, %c0_8] : memref<1x32xf32, #tpu.memory_space<vmem>>, vector<1x32xf32>
    %21 = vector.broadcast %20 : vector<1x32xf32> to vector<32x32xf32>
    %22 = arith.addf %19, %21 : vector<32x32xf32>
    %c0_9 = arith.constant 0 : index
    %c0_10 = arith.constant 0 : index
    %23 = vector.load %arg4[%c0_9, %c0_10] : memref<32x128xf32, #tpu.memory_space<vmem>>, vector<32x128xf32>
    %cst_11 = arith.constant dense<0.000000e+00> : vector<32x128xf32>
    %24 = tpu.matmul %22, %23, %cst_11 {dimension_numbers = #tpu.dot_dimension_numbers<[1], [0], [0], [1], [0, 0, 1, 1], [], []>} : vector<32x32xf32>, vector<32x128xf32>, vector<32x128xf32> -> vector<32x128xf32>
    %c0_12 = arith.constant 0 : index
    %c0_13 = arith.constant 0 : index
    %25 = vector.load %arg5[%c0_12, %c0_13] : memref<1x128xf32, #tpu.memory_space<vmem>>, vector<1x128xf32>
    %26 = vector.broadcast %25 : vector<1x128xf32> to vector<32x128xf32>
    %27 = arith.addf %24, %26 : vector<32x128xf32>
    %cst_14 = arith.constant 5.000000e-01 : f32
    %28 = vector.broadcast %cst_14 : f32 to vector<32x128xf32>
    %29 = arith.mulf %28, %27 : vector<32x128xf32>
    %cst_15 = arith.constant 0.707106769 : f32
    %30 = vector.broadcast %cst_15 : f32 to vector<32x128xf32>
    %31 = arith.mulf %27, %30 : vector<32x128xf32>
    %cst_16 = arith.constant 0.000000e+00 : f32
    %32 = vector.broadcast %cst_16 : f32 to vector<32x128xf32>
    %33 = arith.cmpf oge, %31, %32 : vector<32x128xf32>
    %cst_17 = arith.constant 1.000000e+00 : f32
    %cst_18 = arith.constant -1.000000e+00 : f32
    %34 = vector.broadcast %cst_17 : f32 to vector<32x128xf32>
    %35 = vector.broadcast %cst_18 : f32 to vector<32x128xf32>
    %36 = arith.select %33, %34, %35 : vector<32x128xi1>, vector<32x128xf32>
    %37 = math.absf %31 : vector<32x128xf32>
    %cst_19 = arith.constant 0.327591091 : f32
    %38 = vector.broadcast %cst_19 : f32 to vector<32x128xf32>
    %39 = arith.mulf %38, %37 : vector<32x128xf32>
    %cst_20 = arith.constant 1.000000e+00 : f32
    %40 = vector.broadcast %cst_20 : f32 to vector<32x128xf32>
    %41 = arith.addf %40, %39 : vector<32x128xf32>
    %cst_21 = arith.constant 1.000000e+00 : f32
    %42 = vector.broadcast %cst_21 : f32 to vector<32x128xf32>
    %43 = arith.divf %42, %41 : vector<32x128xf32>
    %cst_22 = arith.constant 1.06140542 : f32
    %44 = vector.broadcast %cst_22 : f32 to vector<32x128xf32>
    %45 = arith.mulf %44, %43 : vector<32x128xf32>
    %cst_23 = arith.constant -1.45315206 : f32
    %46 = vector.broadcast %cst_23 : f32 to vector<32x128xf32>
    %47 = arith.addf %45, %46 : vector<32x128xf32>
    %48 = arith.mulf %47, %43 : vector<32x128xf32>
    %cst_24 = arith.constant 1.42141378 : f32
    %49 = vector.broadcast %cst_24 : f32 to vector<32x128xf32>
    %50 = arith.addf %48, %49 : vector<32x128xf32>
    %51 = arith.mulf %50, %43 : vector<32x128xf32>
    %cst_25 = arith.constant -0.284496725 : f32
    %52 = vector.broadcast %cst_25 : f32 to vector<32x128xf32>
    %53 = arith.addf %51, %52 : vector<32x128xf32>
    %54 = arith.mulf %53, %43 : vector<32x128xf32>
    %cst_26 = arith.constant 0.254829586 : f32
    %55 = vector.broadcast %cst_26 : f32 to vector<32x128xf32>
    %56 = arith.addf %54, %55 : vector<32x128xf32>
    %57 = arith.mulf %56, %43 : vector<32x128xf32>
    %cst_27 = arith.constant 0.000000e+00 : f32
    %58 = vector.broadcast %cst_27 : f32 to vector<32x128xf32>
    %59 = arith.subf %58, %37 : vector<32x128xf32>
    %60 = arith.mulf %59, %37 : vector<32x128xf32>
    %61 = math.exp %60 : vector<32x128xf32>
    %62 = arith.mulf %57, %61 : vector<32x128xf32>
    %cst_28 = arith.constant 1.000000e+00 : f32
    %63 = vector.broadcast %cst_28 : f32 to vector<32x128xf32>
    %64 = arith.subf %63, %62 : vector<32x128xf32>
    %65 = arith.mulf %36, %64 : vector<32x128xf32>
    %cst_29 = arith.constant 1.000000e+00 : f32
    %66 = vector.broadcast %cst_29 : f32 to vector<32x128xf32>
    %67 = arith.addf %66, %65 : vector<32x128xf32>
    %68 = arith.mulf %29, %67 : vector<32x128xf32>
    %c0_30 = arith.constant 0 : index
    %c0_31 = arith.constant 0 : index
    %69 = vector.load %arg8[%c0_30, %c0_31] : memref<32x128xf32, #tpu.memory_space<vmem>>, vector<32x128xf32>
    tpu.vector_store %arg8[%c0_30, %c0_31], %68 {strides = array<i32>} : memref<32x128xf32, #tpu.memory_space<vmem>>, vector<32x128xf32>,
    return
  }
  func.func @transform_0(%arg0: i32, %arg1: i32, %arg2: i32) -> (i32, i32) {
    %c0_i32 = arith.constant 0 : i32
    return %arg0, %arg2 : i32, i32
  }
  func.func @transform_1(%arg0: i32, %arg1: i32, %arg2: i32) -> (i32, i32) {
    %c0_i32 = arith.constant 0 : i32
    return %arg2, %arg1 : i32, i32
  }
  func.func @transform_2(%arg0: i32, %arg1: i32, %arg2: i32) -> (i32, i32) {
    %c0_i32 = arith.constant 0 : i32
    %c0_i32_0 = arith.constant 0 : i32
    return %c0_i32, %arg1 : i32, i32
  }
  func.func @transform_3(%arg0: i32, %arg1: i32, %arg2: i32) -> (i32, i32) {
    %c0_i32 = arith.constant 0 : i32
    %c0_i32_0 = arith.constant 0 : i32
    return %c0_i32, %arg2 : i32, i32
  }
  func.func @transform_4(%arg0: i32, %arg1: i32, %arg2: i32) -> (i32, i32) {
    %c0_i32 = arith.constant 0 : i32
    %c0_i32_0 = arith.constant 0 : i32
    return %c0_i32, %arg2 : i32, i32
  }
  func.func @transform_5(%arg0: i32, %arg1: i32, %arg2: i32) -> (i32, i32) {
    %c0_i32 = arith.constant 0 : i32
    return %arg0, %arg1 : i32, i32
  }
}

module attributes {stable_mosaic.version = 11 : i64} {
  func.func @_window_attn_kernel(%arg0: i32, %arg1: memref<4x4x96xf32, #tpu.memory_space<vmem>>, %arg2: memref<2x4x4xf32, #tpu.memory_space<vmem>>, %arg3: memref<4x4x4xf32, #tpu.memory_space<vmem>>, %arg4: memref<4x4x32xf32, #tpu.memory_space<vmem>>) attributes {dimension_semantics = [#tpu.dimension_semantics<parallel>], iteration_bounds = array<i64: 2>, scalar_prefetch = 0 : i64, scratch_operands = 0 : i64, tpu.core_type = #tpu.core_type<tc>, window_params = [{transform_indices = @transform_0, window_bounds = array<i64: 4, 4, 96>}, {pipeline_mode = #tpu.pipeline_mode<synchronous>, transform_indices = @transform_1, window_bounds = array<i64: 2, 4, 4>}, {pipeline_mode = #tpu.pipeline_mode<synchronous>, transform_indices = @transform_2, window_bounds = array<i64: 4, 4, 4>}, {transform_indices = @transform_3, window_bounds = array<i64: 4, 4, 32>}]} {
    %c0 = arith.constant 0 : index
    %c0_0 = arith.constant 0 : index
    %c0_1 = arith.constant 0 : index
    %0 = vector.load %arg1[%c0, %c0_0, %c0_1] : memref<4x4x96xf32, #tpu.memory_space<vmem>>, vector<4x4x96xf32>
    %c0_2 = arith.constant 0 : index
    %c0_3 = arith.constant 0 : index
    %c0_4 = arith.constant 0 : index
    %1 = vector.load %arg2[%c0_2, %c0_3, %c0_4] : memref<2x4x4xf32, #tpu.memory_space<vmem>>, vector<2x4x4xf32>
    %c0_5 = arith.constant 0 : index
    %c0_6 = arith.constant 0 : index
    %c0_7 = arith.constant 0 : index
    %2 = vector.load %arg3[%c0_5, %c0_6, %c0_7] : memref<4x4x4xf32, #tpu.memory_space<vmem>>, vector<4x4x4xf32>
    %3 = vector.extract_strided_slice %0 {offsets = [0, 0, 0], sizes = [4, 4, 16], strides = [1, 1, 1]} : vector<4x4x96xf32> to vector<4x4x16xf32>
    %cst = arith.constant 2.500000e-01 : f32
    %4 = vector.broadcast %cst : f32 to vector<4x4x16xf32>
    %5 = arith.mulf %3, %4 : vector<4x4x16xf32>
    %6 = vector.extract_strided_slice %0 {offsets = [0, 0, 32], sizes = [4, 4, 16], strides = [1, 1, 1]} : vector<4x4x96xf32> to vector<4x4x16xf32>
    %7 = vector.extract_strided_slice %0 {offsets = [0, 0, 64], sizes = [4, 4, 16], strides = [1, 1, 1]} : vector<4x4x96xf32> to vector<4x4x16xf32>
    "tpu.trace_start"() <{level = 10 : i32, message = "wnd,wmd->wnm"}> : () -> ()
    %cst_8 = arith.constant dense<0.000000e+00> : vector<4x4x4xf32>
    %8 = tpu.matmul %5, %6, %cst_8 {dimension_numbers = #tpu.dot_dimension_numbers<[2], [2], [1], [1], [0, 0, 0, 1, 1, 1], [0], [0]>} : vector<4x4x16xf32>, vector<4x4x16xf32>, vector<4x4x4xf32> -> vector<4x4x4xf32>
    "tpu.trace_stop"() : () -> ()
    %9 = vector.extract_strided_slice %1 {offsets = [0, 0, 0], sizes = [1, 4, 4], strides = [1, 1, 1]} : vector<2x4x4xf32> to vector<1x4x4xf32>
    %10 = vector.shape_cast %9 : vector<1x4x4xf32> to vector<4x4xf32>
    %11 = vector.shape_cast %10 : vector<4x4xf32> to vector<1x4x4xf32>
    %12 = vector.broadcast %11 : vector<1x4x4xf32> to vector<4x4x4xf32>
    %13 = arith.addf %8, %12 : vector<4x4x4xf32>
    %14 = arith.addf %13, %2 : vector<4x4x4xf32>
    %cst_9 = arith.constant dense<0xFF800000> : vector<4x4xf32>
    %15 = vector.multi_reduction <maximumf>, %14, %cst_9 [2] : vector<4x4x4xf32> to vector<4x4xf32>
    %16 = vector.shape_cast %15 : vector<4x4xf32> to vector<4x4x1xf32>
    %17 = vector.broadcast %16 : vector<4x4x1xf32> to vector<4x4x4xf32>
    %18 = arith.subf %14, %17 : vector<4x4x4xf32>
    %19 = math.exp %18 : vector<4x4x4xf32>
    %cst_10 = arith.constant dense<0.000000e+00> : vector<4x4xf32>
    %20 = vector.multi_reduction <add>, %19, %cst_10 [2] : vector<4x4x4xf32> to vector<4x4xf32>
    %21 = vector.shape_cast %20 : vector<4x4xf32> to vector<4x4x1xf32>
    %22 = tpu.reciprocal %21 {approx = true} : vector<4x4x1xf32> -> vector<4x4x1xf32>
    %23 = vector.broadcast %22 : vector<4x4x1xf32> to vector<4x4x4xf32>
    %24 = arith.mulf %19, %23 : vector<4x4x4xf32>
    "tpu.trace_start"() <{level = 10 : i32, message = "wnm,wmd->wnd"}> : () -> ()
    %cst_11 = arith.constant dense<0.000000e+00> : vector<4x4x16xf32>
    %25 = tpu.matmul %24, %7, %cst_11 {dimension_numbers = #tpu.dot_dimension_numbers<[2], [1], [1], [2], [0, 0, 0, 1, 1, 2], [0], [0]>} : vector<4x4x4xf32>, vector<4x4x16xf32>, vector<4x4x16xf32> -> vector<4x4x16xf32>
    "tpu.trace_stop"() : () -> ()
    %26 = vector.extract_strided_slice %0 {offsets = [0, 0, 16], sizes = [4, 4, 16], strides = [1, 1, 1]} : vector<4x4x96xf32> to vector<4x4x16xf32>
    %cst_12 = arith.constant 2.500000e-01 : f32
    %27 = vector.broadcast %cst_12 : f32 to vector<4x4x16xf32>
    %28 = arith.mulf %26, %27 : vector<4x4x16xf32>
    %29 = vector.extract_strided_slice %0 {offsets = [0, 0, 48], sizes = [4, 4, 16], strides = [1, 1, 1]} : vector<4x4x96xf32> to vector<4x4x16xf32>
    %30 = vector.extract_strided_slice %0 {offsets = [0, 0, 80], sizes = [4, 4, 16], strides = [1, 1, 1]} : vector<4x4x96xf32> to vector<4x4x16xf32>
    "tpu.trace_start"() <{level = 10 : i32, message = "wnd,wmd->wnm"}> : () -> ()
    %cst_13 = arith.constant dense<0.000000e+00> : vector<4x4x4xf32>
    %31 = tpu.matmul %28, %29, %cst_13 {dimension_numbers = #tpu.dot_dimension_numbers<[2], [2], [1], [1], [0, 0, 0, 1, 1, 1], [0], [0]>} : vector<4x4x16xf32>, vector<4x4x16xf32>, vector<4x4x4xf32> -> vector<4x4x4xf32>
    "tpu.trace_stop"() : () -> ()
    %32 = vector.extract_strided_slice %1 {offsets = [1, 0, 0], sizes = [1, 4, 4], strides = [1, 1, 1]} : vector<2x4x4xf32> to vector<1x4x4xf32>
    %33 = vector.shape_cast %32 : vector<1x4x4xf32> to vector<4x4xf32>
    %34 = vector.shape_cast %33 : vector<4x4xf32> to vector<1x4x4xf32>
    %35 = vector.broadcast %34 : vector<1x4x4xf32> to vector<4x4x4xf32>
    %36 = arith.addf %31, %35 : vector<4x4x4xf32>
    %37 = arith.addf %36, %2 : vector<4x4x4xf32>
    %cst_14 = arith.constant dense<0xFF800000> : vector<4x4xf32>
    %38 = vector.multi_reduction <maximumf>, %37, %cst_14 [2] : vector<4x4x4xf32> to vector<4x4xf32>
    %39 = vector.shape_cast %38 : vector<4x4xf32> to vector<4x4x1xf32>
    %40 = vector.broadcast %39 : vector<4x4x1xf32> to vector<4x4x4xf32>
    %41 = arith.subf %37, %40 : vector<4x4x4xf32>
    %42 = math.exp %41 : vector<4x4x4xf32>
    %cst_15 = arith.constant dense<0.000000e+00> : vector<4x4xf32>
    %43 = vector.multi_reduction <add>, %42, %cst_15 [2] : vector<4x4x4xf32> to vector<4x4xf32>
    %44 = vector.shape_cast %43 : vector<4x4xf32> to vector<4x4x1xf32>
    %45 = tpu.reciprocal %44 {approx = true} : vector<4x4x1xf32> -> vector<4x4x1xf32>
    %46 = vector.broadcast %45 : vector<4x4x1xf32> to vector<4x4x4xf32>
    %47 = arith.mulf %42, %46 : vector<4x4x4xf32>
    "tpu.trace_start"() <{level = 10 : i32, message = "wnm,wmd->wnd"}> : () -> ()
    %cst_16 = arith.constant dense<0.000000e+00> : vector<4x4x16xf32>
    %48 = tpu.matmul %47, %30, %cst_16 {dimension_numbers = #tpu.dot_dimension_numbers<[2], [1], [1], [2], [0, 0, 0, 1, 1, 2], [0], [0]>} : vector<4x4x4xf32>, vector<4x4x16xf32>, vector<4x4x16xf32> -> vector<4x4x16xf32>
    "tpu.trace_stop"() : () -> ()
    %49 = tpu.concatenate %25, %48 in 2 : vector<4x4x16xf32>, vector<4x4x16xf32> -> vector<4x4x32xf32>
    %c0_17 = arith.constant 0 : index
    %c0_18 = arith.constant 0 : index
    %c0_19 = arith.constant 0 : index
    %50 = vector.load %arg4[%c0_17, %c0_18, %c0_19] : memref<4x4x32xf32, #tpu.memory_space<vmem>>, vector<4x4x32xf32>
    tpu.vector_store %arg4[%c0_17, %c0_18, %c0_19], %49 {strides = array<i32>} : memref<4x4x32xf32, #tpu.memory_space<vmem>>, vector<4x4x32xf32>,
    return
  }
  func.func @transform_0(%arg0: i32) -> (i32, i32, i32) {
    %c0_i32 = arith.constant 0 : i32
    %c0_i32_0 = arith.constant 0 : i32
    %c0_i32_1 = arith.constant 0 : i32
    return %arg0, %c0_i32, %c0_i32_0 : i32, i32, i32
  }
  func.func @transform_1(%arg0: i32) -> (i32, i32, i32) {
    %c0_i32 = arith.constant 0 : i32
    %c0_i32_0 = arith.constant 0 : i32
    %c0_i32_1 = arith.constant 0 : i32
    %c0_i32_2 = arith.constant 0 : i32
    return %c0_i32, %c0_i32_0, %c0_i32_1 : i32, i32, i32
  }
  func.func @transform_2(%arg0: i32) -> (i32, i32, i32) {
    %c0_i32 = arith.constant 0 : i32
    %c0_i32_0 = arith.constant 0 : i32
    %c0_i32_1 = arith.constant 0 : i32
    %c0_i32_2 = arith.constant 0 : i32
    return %c0_i32, %c0_i32_0, %c0_i32_1 : i32, i32, i32
  }
  func.func @transform_3(%arg0: i32) -> (i32, i32, i32) {
    %c0_i32 = arith.constant 0 : i32
    %c0_i32_0 = arith.constant 0 : i32
    %c0_i32_1 = arith.constant 0 : i32
    return %arg0, %c0_i32, %c0_i32_0 : i32, i32, i32
  }
}

module attributes {stable_mosaic.version = 11 : i64} {
  func.func @_fused_linear_kernel(%arg0: i32, %arg1: i32, %arg2: i32, %arg3: memref<8x128xf32, #tpu.memory_space<vmem>>, %arg4: memref<128x64xf32, #tpu.memory_space<vmem>>, %arg5: memref<1x128xf32, #tpu.memory_space<vmem>>, %arg6: memref<1x128xf32, #tpu.memory_space<vmem>>, %arg7: memref<8x64xf32, #tpu.memory_space<vmem>>) attributes {dimension_semantics = [#tpu.dimension_semantics<parallel>, #tpu.dimension_semantics<parallel>, #tpu.dimension_semantics<arbitrary>], iteration_bounds = array<i64: 1, 1, 1>, scalar_prefetch = 0 : i64, scratch_operands = 0 : i64, tpu.core_type = #tpu.core_type<tc>, window_params = [{transform_indices = @transform_0, window_bounds = array<i64: 8, 128>}, {transform_indices = @transform_1, window_bounds = array<i64: 128, 64>}, {transform_indices = @transform_2, window_bounds = array<i64: 1, 128>}, {transform_indices = @transform_3, window_bounds = array<i64: 1, 128>}, {transform_indices = @transform_4, window_bounds = array<i64: 8, 64>}]} {
    %c0 = arith.constant 0 : index
    %c0_0 = arith.constant 0 : index
    %0 = vector.load %arg3[%c0, %c0_0] : memref<8x128xf32, #tpu.memory_space<vmem>>, vector<8x128xf32>
    %cst = arith.constant dense<0.000000e+00> : vector<8xf32>
    %1 = vector.multi_reduction <add>, %0, %cst [1] : vector<8x128xf32> to vector<8xf32>
    %2 = vector.shape_cast %1 : vector<8xf32> to vector<8x1xf32>
    %cst_1 = arith.constant 1.280000e+02 : f32
    %3 = vector.broadcast %cst_1 : f32 to vector<8x1xf32>
    %4 = arith.divf %2, %3 : vector<8x1xf32>
    %5 = vector.broadcast %4 : vector<8x1xf32> to vector<8x128xf32>
    %6 = arith.subf %0, %5 : vector<8x128xf32>
    %7 = arith.mulf %6, %6 : vector<8x128xf32>
    %cst_2 = arith.constant dense<0.000000e+00> : vector<8xf32>
    %8 = vector.multi_reduction <add>, %7, %cst_2 [1] : vector<8x128xf32> to vector<8xf32>
    %9 = vector.shape_cast %8 : vector<8xf32> to vector<8x1xf32>
    %cst_3 = arith.constant 1.280000e+02 : f32
    %10 = vector.broadcast %cst_3 : f32 to vector<8x1xf32>
    %11 = arith.divf %9, %10 : vector<8x1xf32>
    %cst_4 = arith.constant 9.99999997E-7 : f32
    %12 = vector.broadcast %cst_4 : f32 to vector<8x1xf32>
    %13 = arith.addf %11, %12 : vector<8x1xf32>
    %14 = math.rsqrt %13 : vector<8x1xf32>
    %15 = vector.broadcast %14 : vector<8x1xf32> to vector<8x128xf32>
    %16 = arith.mulf %6, %15 : vector<8x128xf32>
    %c0_5 = arith.constant 0 : index
    %c0_6 = arith.constant 0 : index
    %17 = vector.load %arg5[%c0_5, %c0_6] : memref<1x128xf32, #tpu.memory_space<vmem>>, vector<1x128xf32>
    %18 = vector.broadcast %17 : vector<1x128xf32> to vector<8x128xf32>
    %19 = arith.mulf %16, %18 : vector<8x128xf32>
    %c0_7 = arith.constant 0 : index
    %c0_8 = arith.constant 0 : index
    %20 = vector.load %arg6[%c0_7, %c0_8] : memref<1x128xf32, #tpu.memory_space<vmem>>, vector<1x128xf32>
    %21 = vector.broadcast %20 : vector<1x128xf32> to vector<8x128xf32>
    %22 = arith.addf %19, %21 : vector<8x128xf32>
    %c0_9 = arith.constant 0 : index
    %c0_10 = arith.constant 0 : index
    %23 = vector.load %arg4[%c0_9, %c0_10] : memref<128x64xf32, #tpu.memory_space<vmem>>, vector<128x64xf32>
    %cst_11 = arith.constant dense<0.000000e+00> : vector<8x64xf32>
    %24 = tpu.matmul %22, %23, %cst_11 {dimension_numbers = #tpu.dot_dimension_numbers<[1], [0], [0], [1], [0, 0, 1, 1], [], []>} : vector<8x128xf32>, vector<128x64xf32>, vector<8x64xf32> -> vector<8x64xf32>
    %c0_12 = arith.constant 0 : index
    %c0_13 = arith.constant 0 : index
    %25 = vector.load %arg7[%c0_12, %c0_13] : memref<8x64xf32, #tpu.memory_space<vmem>>, vector<8x64xf32>
    tpu.vector_store %arg7[%c0_12, %c0_13], %24 {strides = array<i32>} : memref<8x64xf32, #tpu.memory_space<vmem>>, vector<8x64xf32>,
    return
  }
  func.func @transform_0(%arg0: i32, %arg1: i32, %arg2: i32) -> (i32, i32) {
    %c0_i32 = arith.constant 0 : i32
    return %arg0, %arg2 : i32, i32
  }
  func.func @transform_1(%arg0: i32, %arg1: i32, %arg2: i32) -> (i32, i32) {
    %c0_i32 = arith.constant 0 : i32
    return %arg2, %arg1 : i32, i32
  }
  func.func @transform_2(%arg0: i32, %arg1: i32, %arg2: i32) -> (i32, i32) {
    %c0_i32 = arith.constant 0 : i32
    %c0_i32_0 = arith.constant 0 : i32
    return %c0_i32, %arg2 : i32, i32
  }
  func.func @transform_3(%arg0: i32, %arg1: i32, %arg2: i32) -> (i32, i32) {
    %c0_i32 = arith.constant 0 : i32
    %c0_i32_0 = arith.constant 0 : i32
    return %c0_i32, %arg2 : i32, i32
  }
  func.func @transform_4(%arg0: i32, %arg1: i32, %arg2: i32) -> (i32, i32) {
    %c0_i32 = arith.constant 0 : i32
    return %arg0, %arg1 : i32, i32
  }
}

module attributes {stable_mosaic.version = 11 : i64} {
  func.func @_fused_linear_kernel(%arg0: i32, %arg1: i32, %arg2: i32, %arg3: memref<8x64xf32, #tpu.memory_space<vmem>>, %arg4: memref<64x192xf32, #tpu.memory_space<vmem>>, %arg5: memref<1x192xf32, #tpu.memory_space<vmem>>, %arg6: memref<1x64xf32, #tpu.memory_space<vmem>>, %arg7: memref<1x64xf32, #tpu.memory_space<vmem>>, %arg8: memref<8x192xf32, #tpu.memory_space<vmem>>) attributes {dimension_semantics = [#tpu.dimension_semantics<parallel>, #tpu.dimension_semantics<parallel>, #tpu.dimension_semantics<arbitrary>], iteration_bounds = array<i64: 1, 1, 1>, scalar_prefetch = 0 : i64, scratch_operands = 0 : i64, tpu.core_type = #tpu.core_type<tc>, window_params = [{transform_indices = @transform_0, window_bounds = array<i64: 8, 64>}, {transform_indices = @transform_1, window_bounds = array<i64: 64, 192>}, {transform_indices = @transform_2, window_bounds = array<i64: 1, 192>}, {transform_indices = @transform_3, window_bounds = array<i64: 1, 64>}, {transform_indices = @transform_4, window_bounds = array<i64: 1, 64>}, {transform_indices = @transform_5, window_bounds = array<i64: 8, 192>}]} {
    %c0 = arith.constant 0 : index
    %c0_0 = arith.constant 0 : index
    %0 = vector.load %arg3[%c0, %c0_0] : memref<8x64xf32, #tpu.memory_space<vmem>>, vector<8x64xf32>
    %cst = arith.constant dense<0.000000e+00> : vector<8xf32>
    %1 = vector.multi_reduction <add>, %0, %cst [1] : vector<8x64xf32> to vector<8xf32>
    %2 = vector.shape_cast %1 : vector<8xf32> to vector<8x1xf32>
    %cst_1 = arith.constant 6.400000e+01 : f32
    %3 = vector.broadcast %cst_1 : f32 to vector<8x1xf32>
    %4 = arith.divf %2, %3 : vector<8x1xf32>
    %5 = vector.broadcast %4 : vector<8x1xf32> to vector<8x64xf32>
    %6 = arith.subf %0, %5 : vector<8x64xf32>
    %7 = arith.mulf %6, %6 : vector<8x64xf32>
    %cst_2 = arith.constant dense<0.000000e+00> : vector<8xf32>
    %8 = vector.multi_reduction <add>, %7, %cst_2 [1] : vector<8x64xf32> to vector<8xf32>
    %9 = vector.shape_cast %8 : vector<8xf32> to vector<8x1xf32>
    %cst_3 = arith.constant 6.400000e+01 : f32
    %10 = vector.broadcast %cst_3 : f32 to vector<8x1xf32>
    %11 = arith.divf %9, %10 : vector<8x1xf32>
    %cst_4 = arith.constant 9.99999997E-7 : f32
    %12 = vector.broadcast %cst_4 : f32 to vector<8x1xf32>
    %13 = arith.addf %11, %12 : vector<8x1xf32>
    %14 = math.rsqrt %13 : vector<8x1xf32>
    %15 = vector.broadcast %14 : vector<8x1xf32> to vector<8x64xf32>
    %16 = arith.mulf %6, %15 : vector<8x64xf32>
    %c0_5 = arith.constant 0 : index
    %c0_6 = arith.constant 0 : index
    %17 = vector.load %arg6[%c0_5, %c0_6] : memref<1x64xf32, #tpu.memory_space<vmem>>, vector<1x64xf32>
    %18 = vector.broadcast %17 : vector<1x64xf32> to vector<8x64xf32>
    %19 = arith.mulf %16, %18 : vector<8x64xf32>
    %c0_7 = arith.constant 0 : index
    %c0_8 = arith.constant 0 : index
    %20 = vector.load %arg7[%c0_7, %c0_8] : memref<1x64xf32, #tpu.memory_space<vmem>>, vector<1x64xf32>
    %21 = vector.broadcast %20 : vector<1x64xf32> to vector<8x64xf32>
    %22 = arith.addf %19, %21 : vector<8x64xf32>
    %c0_9 = arith.constant 0 : index
    %c0_10 = arith.constant 0 : index
    %23 = vector.load %arg4[%c0_9, %c0_10] : memref<64x192xf32, #tpu.memory_space<vmem>>, vector<64x192xf32>
    %cst_11 = arith.constant dense<0.000000e+00> : vector<8x192xf32>
    %24 = tpu.matmul %22, %23, %cst_11 {dimension_numbers = #tpu.dot_dimension_numbers<[1], [0], [0], [1], [0, 0, 1, 1], [], []>} : vector<8x64xf32>, vector<64x192xf32>, vector<8x192xf32> -> vector<8x192xf32>
    %c0_12 = arith.constant 0 : index
    %c0_13 = arith.constant 0 : index
    %25 = vector.load %arg5[%c0_12, %c0_13] : memref<1x192xf32, #tpu.memory_space<vmem>>, vector<1x192xf32>
    %26 = vector.broadcast %25 : vector<1x192xf32> to vector<8x192xf32>
    %27 = arith.addf %24, %26 : vector<8x192xf32>
    %c0_14 = arith.constant 0 : index
    %c0_15 = arith.constant 0 : index
    %28 = vector.load %arg8[%c0_14, %c0_15] : memref<8x192xf32, #tpu.memory_space<vmem>>, vector<8x192xf32>
    tpu.vector_store %arg8[%c0_14, %c0_15], %27 {strides = array<i32>} : memref<8x192xf32, #tpu.memory_space<vmem>>, vector<8x192xf32>,
    return
  }
  func.func @transform_0(%arg0: i32, %arg1: i32, %arg2: i32) -> (i32, i32) {
    %c0_i32 = arith.constant 0 : i32
    return %arg0, %arg2 : i32, i32
  }
  func.func @transform_1(%arg0: i32, %arg1: i32, %arg2: i32) -> (i32, i32) {
    %c0_i32 = arith.constant 0 : i32
    return %arg2, %arg1 : i32, i32
  }
  func.func @transform_2(%arg0: i32, %arg1: i32, %arg2: i32) -> (i32, i32) {
    %c0_i32 = arith.constant 0 : i32
    %c0_i32_0 = arith.constant 0 : i32
    return %c0_i32, %arg1 : i32, i32
  }
  func.func @transform_3(%arg0: i32, %arg1: i32, %arg2: i32) -> (i32, i32) {
    %c0_i32 = arith.constant 0 : i32
    %c0_i32_0 = arith.constant 0 : i32
    return %c0_i32, %arg2 : i32, i32
  }
  func.func @transform_4(%arg0: i32, %arg1: i32, %arg2: i32) -> (i32, i32) {
    %c0_i32 = arith.constant 0 : i32
    %c0_i32_0 = arith.constant 0 : i32
    return %c0_i32, %arg2 : i32, i32
  }
  func.func @transform_5(%arg0: i32, %arg1: i32, %arg2: i32) -> (i32, i32) {
    %c0_i32 = arith.constant 0 : i32
    return %arg0, %arg1 : i32, i32
  }
}

module attributes {stable_mosaic.version = 11 : i64} {
  func.func @_window_attn_kernel(%arg0: i32, %arg1: memref<1x4x192xf32, #tpu.memory_space<vmem>>, %arg2: memref<4x4x4xf32, #tpu.memory_space<vmem>>, %arg3: memref<1x4x64xf32, #tpu.memory_space<vmem>>) attributes {dimension_semantics = [#tpu.dimension_semantics<parallel>], iteration_bounds = array<i64: 2>, scalar_prefetch = 0 : i64, scratch_operands = 0 : i64, tpu.core_type = #tpu.core_type<tc>, window_params = [{transform_indices = @transform_0, window_bounds = array<i64: 1, 4, 192>}, {pipeline_mode = #tpu.pipeline_mode<synchronous>, transform_indices = @transform_1, window_bounds = array<i64: 4, 4, 4>}, {transform_indices = @transform_2, window_bounds = array<i64: 1, 4, 64>}]} {
    %c0 = arith.constant 0 : index
    %c0_0 = arith.constant 0 : index
    %c0_1 = arith.constant 0 : index
    %0 = vector.load %arg1[%c0, %c0_0, %c0_1] : memref<1x4x192xf32, #tpu.memory_space<vmem>>, vector<1x4x192xf32>
    %c0_2 = arith.constant 0 : index
    %c0_3 = arith.constant 0 : index
    %c0_4 = arith.constant 0 : index
    %1 = vector.load %arg2[%c0_2, %c0_3, %c0_4] : memref<4x4x4xf32, #tpu.memory_space<vmem>>, vector<4x4x4xf32>
    %2 = vector.extract_strided_slice %0 {offsets = [0, 0, 0], sizes = [1, 4, 16], strides = [1, 1, 1]} : vector<1x4x192xf32> to vector<1x4x16xf32>
    %cst = arith.constant 2.500000e-01 : f32
    %3 = vector.broadcast %cst : f32 to vector<1x4x16xf32>
    %4 = arith.mulf %2, %3 : vector<1x4x16xf32>
    %5 = vector.extract_strided_slice %0 {offsets = [0, 0, 64], sizes = [1, 4, 16], strides = [1, 1, 1]} : vector<1x4x192xf32> to vector<1x4x16xf32>
    %6 = vector.extract_strided_slice %0 {offsets = [0, 0, 128], sizes = [1, 4, 16], strides = [1, 1, 1]} : vector<1x4x192xf32> to vector<1x4x16xf32>
    "tpu.trace_start"() <{level = 10 : i32, message = "wnd,wmd->wnm"}> : () -> ()
    %cst_5 = arith.constant dense<0.000000e+00> : vector<1x4x4xf32>
    %7 = tpu.matmul %4, %5, %cst_5 {dimension_numbers = #tpu.dot_dimension_numbers<[2], [2], [1], [1], [0, 0, 0, 1, 1, 1], [0], [0]>} : vector<1x4x16xf32>, vector<1x4x16xf32>, vector<1x4x4xf32> -> vector<1x4x4xf32>
    "tpu.trace_stop"() : () -> ()
    %8 = vector.extract_strided_slice %1 {offsets = [0, 0, 0], sizes = [1, 4, 4], strides = [1, 1, 1]} : vector<4x4x4xf32> to vector<1x4x4xf32>
    %9 = vector.shape_cast %8 : vector<1x4x4xf32> to vector<4x4xf32>
    %10 = vector.shape_cast %9 : vector<4x4xf32> to vector<1x4x4xf32>
    %11 = arith.addf %7, %10 : vector<1x4x4xf32>
    %cst_6 = arith.constant dense<0xFF800000> : vector<1x4xf32>
    %12 = vector.multi_reduction <maximumf>, %11, %cst_6 [2] : vector<1x4x4xf32> to vector<1x4xf32>
    %13 = vector.shape_cast %12 : vector<1x4xf32> to vector<1x4x1xf32>
    %14 = vector.broadcast %13 : vector<1x4x1xf32> to vector<1x4x4xf32>
    %15 = arith.subf %11, %14 : vector<1x4x4xf32>
    %16 = math.exp %15 : vector<1x4x4xf32>
    %cst_7 = arith.constant dense<0.000000e+00> : vector<1x4xf32>
    %17 = vector.multi_reduction <add>, %16, %cst_7 [2] : vector<1x4x4xf32> to vector<1x4xf32>
    %18 = vector.shape_cast %17 : vector<1x4xf32> to vector<1x4x1xf32>
    %19 = tpu.reciprocal %18 {approx = true} : vector<1x4x1xf32> -> vector<1x4x1xf32>
    %20 = vector.broadcast %19 : vector<1x4x1xf32> to vector<1x4x4xf32>
    %21 = arith.mulf %16, %20 : vector<1x4x4xf32>
    "tpu.trace_start"() <{level = 10 : i32, message = "wnm,wmd->wnd"}> : () -> ()
    %cst_8 = arith.constant dense<0.000000e+00> : vector<1x4x16xf32>
    %22 = tpu.matmul %21, %6, %cst_8 {dimension_numbers = #tpu.dot_dimension_numbers<[2], [1], [1], [2], [0, 0, 0, 1, 1, 2], [0], [0]>} : vector<1x4x4xf32>, vector<1x4x16xf32>, vector<1x4x16xf32> -> vector<1x4x16xf32>
    "tpu.trace_stop"() : () -> ()
    %23 = vector.extract_strided_slice %0 {offsets = [0, 0, 16], sizes = [1, 4, 16], strides = [1, 1, 1]} : vector<1x4x192xf32> to vector<1x4x16xf32>
    %cst_9 = arith.constant 2.500000e-01 : f32
    %24 = vector.broadcast %cst_9 : f32 to vector<1x4x16xf32>
    %25 = arith.mulf %23, %24 : vector<1x4x16xf32>
    %26 = vector.extract_strided_slice %0 {offsets = [0, 0, 80], sizes = [1, 4, 16], strides = [1, 1, 1]} : vector<1x4x192xf32> to vector<1x4x16xf32>
    %27 = vector.extract_strided_slice %0 {offsets = [0, 0, 144], sizes = [1, 4, 16], strides = [1, 1, 1]} : vector<1x4x192xf32> to vector<1x4x16xf32>
    "tpu.trace_start"() <{level = 10 : i32, message = "wnd,wmd->wnm"}> : () -> ()
    %cst_10 = arith.constant dense<0.000000e+00> : vector<1x4x4xf32>
    %28 = tpu.matmul %25, %26, %cst_10 {dimension_numbers = #tpu.dot_dimension_numbers<[2], [2], [1], [1], [0, 0, 0, 1, 1, 1], [0], [0]>} : vector<1x4x16xf32>, vector<1x4x16xf32>, vector<1x4x4xf32> -> vector<1x4x4xf32>
    "tpu.trace_stop"() : () -> ()
    %29 = vector.extract_strided_slice %1 {offsets = [1, 0, 0], sizes = [1, 4, 4], strides = [1, 1, 1]} : vector<4x4x4xf32> to vector<1x4x4xf32>
    %30 = vector.shape_cast %29 : vector<1x4x4xf32> to vector<4x4xf32>
    %31 = vector.shape_cast %30 : vector<4x4xf32> to vector<1x4x4xf32>
    %32 = arith.addf %28, %31 : vector<1x4x4xf32>
    %cst_11 = arith.constant dense<0xFF800000> : vector<1x4xf32>
    %33 = vector.multi_reduction <maximumf>, %32, %cst_11 [2] : vector<1x4x4xf32> to vector<1x4xf32>
    %34 = vector.shape_cast %33 : vector<1x4xf32> to vector<1x4x1xf32>
    %35 = vector.broadcast %34 : vector<1x4x1xf32> to vector<1x4x4xf32>
    %36 = arith.subf %32, %35 : vector<1x4x4xf32>
    %37 = math.exp %36 : vector<1x4x4xf32>
    %cst_12 = arith.constant dense<0.000000e+00> : vector<1x4xf32>
    %38 = vector.multi_reduction <add>, %37, %cst_12 [2] : vector<1x4x4xf32> to vector<1x4xf32>
    %39 = vector.shape_cast %38 : vector<1x4xf32> to vector<1x4x1xf32>
    %40 = tpu.reciprocal %39 {approx = true} : vector<1x4x1xf32> -> vector<1x4x1xf32>
    %41 = vector.broadcast %40 : vector<1x4x1xf32> to vector<1x4x4xf32>
    %42 = arith.mulf %37, %41 : vector<1x4x4xf32>
    "tpu.trace_start"() <{level = 10 : i32, message = "wnm,wmd->wnd"}> : () -> ()
    %cst_13 = arith.constant dense<0.000000e+00> : vector<1x4x16xf32>
    %43 = tpu.matmul %42, %27, %cst_13 {dimension_numbers = #tpu.dot_dimension_numbers<[2], [1], [1], [2], [0, 0, 0, 1, 1, 2], [0], [0]>} : vector<1x4x4xf32>, vector<1x4x16xf32>, vector<1x4x16xf32> -> vector<1x4x16xf32>
    "tpu.trace_stop"() : () -> ()
    %44 = vector.extract_strided_slice %0 {offsets = [0, 0, 32], sizes = [1, 4, 16], strides = [1, 1, 1]} : vector<1x4x192xf32> to vector<1x4x16xf32>
    %cst_14 = arith.constant 2.500000e-01 : f32
    %45 = vector.broadcast %cst_14 : f32 to vector<1x4x16xf32>
    %46 = arith.mulf %44, %45 : vector<1x4x16xf32>
    %47 = vector.extract_strided_slice %0 {offsets = [0, 0, 96], sizes = [1, 4, 16], strides = [1, 1, 1]} : vector<1x4x192xf32> to vector<1x4x16xf32>
    %48 = vector.extract_strided_slice %0 {offsets = [0, 0, 160], sizes = [1, 4, 16], strides = [1, 1, 1]} : vector<1x4x192xf32> to vector<1x4x16xf32>
    "tpu.trace_start"() <{level = 10 : i32, message = "wnd,wmd->wnm"}> : () -> ()
    %cst_15 = arith.constant dense<0.000000e+00> : vector<1x4x4xf32>
    %49 = tpu.matmul %46, %47, %cst_15 {dimension_numbers = #tpu.dot_dimension_numbers<[2], [2], [1], [1], [0, 0, 0, 1, 1, 1], [0], [0]>} : vector<1x4x16xf32>, vector<1x4x16xf32>, vector<1x4x4xf32> -> vector<1x4x4xf32>
    "tpu.trace_stop"() : () -> ()
    %50 = vector.extract_strided_slice %1 {offsets = [2, 0, 0], sizes = [1, 4, 4], strides = [1, 1, 1]} : vector<4x4x4xf32> to vector<1x4x4xf32>
    %51 = vector.shape_cast %50 : vector<1x4x4xf32> to vector<4x4xf32>
    %52 = vector.shape_cast %51 : vector<4x4xf32> to vector<1x4x4xf32>
    %53 = arith.addf %49, %52 : vector<1x4x4xf32>
    %cst_16 = arith.constant dense<0xFF800000> : vector<1x4xf32>
    %54 = vector.multi_reduction <maximumf>, %53, %cst_16 [2] : vector<1x4x4xf32> to vector<1x4xf32>
    %55 = vector.shape_cast %54 : vector<1x4xf32> to vector<1x4x1xf32>
    %56 = vector.broadcast %55 : vector<1x4x1xf32> to vector<1x4x4xf32>
    %57 = arith.subf %53, %56 : vector<1x4x4xf32>
    %58 = math.exp %57 : vector<1x4x4xf32>
    %cst_17 = arith.constant dense<0.000000e+00> : vector<1x4xf32>
    %59 = vector.multi_reduction <add>, %58, %cst_17 [2] : vector<1x4x4xf32> to vector<1x4xf32>
    %60 = vector.shape_cast %59 : vector<1x4xf32> to vector<1x4x1xf32>
    %61 = tpu.reciprocal %60 {approx = true} : vector<1x4x1xf32> -> vector<1x4x1xf32>
    %62 = vector.broadcast %61 : vector<1x4x1xf32> to vector<1x4x4xf32>
    %63 = arith.mulf %58, %62 : vector<1x4x4xf32>
    "tpu.trace_start"() <{level = 10 : i32, message = "wnm,wmd->wnd"}> : () -> ()
    %cst_18 = arith.constant dense<0.000000e+00> : vector<1x4x16xf32>
    %64 = tpu.matmul %63, %48, %cst_18 {dimension_numbers = #tpu.dot_dimension_numbers<[2], [1], [1], [2], [0, 0, 0, 1, 1, 2], [0], [0]>} : vector<1x4x4xf32>, vector<1x4x16xf32>, vector<1x4x16xf32> -> vector<1x4x16xf32>
    "tpu.trace_stop"() : () -> ()
    %65 = vector.extract_strided_slice %0 {offsets = [0, 0, 48], sizes = [1, 4, 16], strides = [1, 1, 1]} : vector<1x4x192xf32> to vector<1x4x16xf32>
    %cst_19 = arith.constant 2.500000e-01 : f32
    %66 = vector.broadcast %cst_19 : f32 to vector<1x4x16xf32>
    %67 = arith.mulf %65, %66 : vector<1x4x16xf32>
    %68 = vector.extract_strided_slice %0 {offsets = [0, 0, 112], sizes = [1, 4, 16], strides = [1, 1, 1]} : vector<1x4x192xf32> to vector<1x4x16xf32>
    %69 = vector.extract_strided_slice %0 {offsets = [0, 0, 176], sizes = [1, 4, 16], strides = [1, 1, 1]} : vector<1x4x192xf32> to vector<1x4x16xf32>
    "tpu.trace_start"() <{level = 10 : i32, message = "wnd,wmd->wnm"}> : () -> ()
    %cst_20 = arith.constant dense<0.000000e+00> : vector<1x4x4xf32>
    %70 = tpu.matmul %67, %68, %cst_20 {dimension_numbers = #tpu.dot_dimension_numbers<[2], [2], [1], [1], [0, 0, 0, 1, 1, 1], [0], [0]>} : vector<1x4x16xf32>, vector<1x4x16xf32>, vector<1x4x4xf32> -> vector<1x4x4xf32>
    "tpu.trace_stop"() : () -> ()
    %71 = vector.extract_strided_slice %1 {offsets = [3, 0, 0], sizes = [1, 4, 4], strides = [1, 1, 1]} : vector<4x4x4xf32> to vector<1x4x4xf32>
    %72 = vector.shape_cast %71 : vector<1x4x4xf32> to vector<4x4xf32>
    %73 = vector.shape_cast %72 : vector<4x4xf32> to vector<1x4x4xf32>
    %74 = arith.addf %70, %73 : vector<1x4x4xf32>
    %cst_21 = arith.constant dense<0xFF800000> : vector<1x4xf32>
    %75 = vector.multi_reduction <maximumf>, %74, %cst_21 [2] : vector<1x4x4xf32> to vector<1x4xf32>
    %76 = vector.shape_cast %75 : vector<1x4xf32> to vector<1x4x1xf32>
    %77 = vector.broadcast %76 : vector<1x4x1xf32> to vector<1x4x4xf32>
    %78 = arith.subf %74, %77 : vector<1x4x4xf32>
    %79 = math.exp %78 : vector<1x4x4xf32>
    %cst_22 = arith.constant dense<0.000000e+00> : vector<1x4xf32>
    %80 = vector.multi_reduction <add>, %79, %cst_22 [2] : vector<1x4x4xf32> to vector<1x4xf32>
    %81 = vector.shape_cast %80 : vector<1x4xf32> to vector<1x4x1xf32>
    %82 = tpu.reciprocal %81 {approx = true} : vector<1x4x1xf32> -> vector<1x4x1xf32>
    %83 = vector.broadcast %82 : vector<1x4x1xf32> to vector<1x4x4xf32>
    %84 = arith.mulf %79, %83 : vector<1x4x4xf32>
    "tpu.trace_start"() <{level = 10 : i32, message = "wnm,wmd->wnd"}> : () -> ()
    %cst_23 = arith.constant dense<0.000000e+00> : vector<1x4x16xf32>
    %85 = tpu.matmul %84, %69, %cst_23 {dimension_numbers = #tpu.dot_dimension_numbers<[2], [1], [1], [2], [0, 0, 0, 1, 1, 2], [0], [0]>} : vector<1x4x4xf32>, vector<1x4x16xf32>, vector<1x4x16xf32> -> vector<1x4x16xf32>
    "tpu.trace_stop"() : () -> ()
    %86 = tpu.concatenate %22, %43, %64, %85 in 2 : vector<1x4x16xf32>, vector<1x4x16xf32>, vector<1x4x16xf32>, vector<1x4x16xf32> -> vector<1x4x64xf32>
    %c0_24 = arith.constant 0 : index
    %c0_25 = arith.constant 0 : index
    %c0_26 = arith.constant 0 : index
    %87 = vector.load %arg3[%c0_24, %c0_25, %c0_26] : memref<1x4x64xf32, #tpu.memory_space<vmem>>, vector<1x4x64xf32>
    tpu.vector_store %arg3[%c0_24, %c0_25, %c0_26], %86 {strides = array<i32>} : memref<1x4x64xf32, #tpu.memory_space<vmem>>, vector<1x4x64xf32>,
    return
  }
  func.func @transform_0(%arg0: i32) -> (i32, i32, i32) {
    %c0_i32 = arith.constant 0 : i32
    %c0_i32_0 = arith.constant 0 : i32
    %c0_i32_1 = arith.constant 0 : i32
    return %arg0, %c0_i32, %c0_i32_0 : i32, i32, i32
  }
  func.func @transform_1(%arg0: i32) -> (i32, i32, i32) {
    %c0_i32 = arith.constant 0 : i32
    %c0_i32_0 = arith.constant 0 : i32
    %c0_i32_1 = arith.constant 0 : i32
    %c0_i32_2 = arith.constant 0 : i32
    return %c0_i32, %c0_i32_0, %c0_i32_1 : i32, i32, i32
  }
  func.func @transform_2(%arg0: i32) -> (i32, i32, i32) {
    %c0_i32 = arith.constant 0 : i32
    %c0_i32_0 = arith.constant 0 : i32
    %c0_i32_1 = arith.constant 0 : i32
    return %arg0, %c0_i32, %c0_i32_0 : i32, i32, i32
  }
}

module attributes {stable_mosaic.version = 11 : i64} {
  func.func @_fused_linear_kernel(%arg0: i32, %arg1: i32, %arg2: i32, %arg3: memref<8x64xf32, #tpu.memory_space<vmem>>, %arg4: memref<64x64xf32, #tpu.memory_space<vmem>>, %arg5: memref<1x64xf32, #tpu.memory_space<vmem>>, %arg6: memref<8x64xf32, #tpu.memory_space<vmem>>, %arg7: memref<8x64xf32, #tpu.memory_space<vmem>>) attributes {dimension_semantics = [#tpu.dimension_semantics<parallel>, #tpu.dimension_semantics<parallel>, #tpu.dimension_semantics<arbitrary>], iteration_bounds = array<i64: 1, 1, 1>, scalar_prefetch = 0 : i64, scratch_operands = 0 : i64, tpu.core_type = #tpu.core_type<tc>, window_params = [{transform_indices = @transform_0, window_bounds = array<i64: 8, 64>}, {transform_indices = @transform_1, window_bounds = array<i64: 64, 64>}, {transform_indices = @transform_2, window_bounds = array<i64: 1, 64>}, {transform_indices = @transform_3, window_bounds = array<i64: 8, 64>}, {transform_indices = @transform_4, window_bounds = array<i64: 8, 64>}]} {
    %c0 = arith.constant 0 : index
    %c0_0 = arith.constant 0 : index
    %0 = vector.load %arg3[%c0, %c0_0] : memref<8x64xf32, #tpu.memory_space<vmem>>, vector<8x64xf32>
    %c0_1 = arith.constant 0 : index
    %c0_2 = arith.constant 0 : index
    %1 = vector.load %arg4[%c0_1, %c0_2] : memref<64x64xf32, #tpu.memory_space<vmem>>, vector<64x64xf32>
    %cst = arith.constant dense<0.000000e+00> : vector<8x64xf32>
    %2 = tpu.matmul %0, %1, %cst {dimension_numbers = #tpu.dot_dimension_numbers<[1], [0], [0], [1], [0, 0, 1, 1], [], []>} : vector<8x64xf32>, vector<64x64xf32>, vector<8x64xf32> -> vector<8x64xf32>
    %c0_3 = arith.constant 0 : index
    %c0_4 = arith.constant 0 : index
    %3 = vector.load %arg5[%c0_3, %c0_4] : memref<1x64xf32, #tpu.memory_space<vmem>>, vector<1x64xf32>
    %4 = vector.broadcast %3 : vector<1x64xf32> to vector<8x64xf32>
    %5 = arith.addf %2, %4 : vector<8x64xf32>
    %c0_5 = arith.constant 0 : index
    %c0_6 = arith.constant 0 : index
    %6 = vector.load %arg6[%c0_5, %c0_6] : memref<8x64xf32, #tpu.memory_space<vmem>>, vector<8x64xf32>
    %7 = arith.addf %5, %6 : vector<8x64xf32>
    %c0_7 = arith.constant 0 : index
    %c0_8 = arith.constant 0 : index
    %8 = vector.load %arg7[%c0_7, %c0_8] : memref<8x64xf32, #tpu.memory_space<vmem>>, vector<8x64xf32>
    tpu.vector_store %arg7[%c0_7, %c0_8], %7 {strides = array<i32>} : memref<8x64xf32, #tpu.memory_space<vmem>>, vector<8x64xf32>,
    return
  }
  func.func @transform_0(%arg0: i32, %arg1: i32, %arg2: i32) -> (i32, i32) {
    %c0_i32 = arith.constant 0 : i32
    return %arg0, %arg2 : i32, i32
  }
  func.func @transform_1(%arg0: i32, %arg1: i32, %arg2: i32) -> (i32, i32) {
    %c0_i32 = arith.constant 0 : i32
    return %arg2, %arg1 : i32, i32
  }
  func.func @transform_2(%arg0: i32, %arg1: i32, %arg2: i32) -> (i32, i32) {
    %c0_i32 = arith.constant 0 : i32
    %c0_i32_0 = arith.constant 0 : i32
    return %c0_i32, %arg1 : i32, i32
  }
  func.func @transform_3(%arg0: i32, %arg1: i32, %arg2: i32) -> (i32, i32) {
    %c0_i32 = arith.constant 0 : i32
    return %arg0, %arg1 : i32, i32
  }
  func.func @transform_4(%arg0: i32, %arg1: i32, %arg2: i32) -> (i32, i32) {
    %c0_i32 = arith.constant 0 : i32
    return %arg0, %arg1 : i32, i32
  }
}

module attributes {stable_mosaic.version = 11 : i64} {
  func.func @_fused_linear_kernel(%arg0: i32, %arg1: i32, %arg2: i32, %arg3: memref<8x64xf32, #tpu.memory_space<vmem>>, %arg4: memref<64x256xf32, #tpu.memory_space<vmem>>, %arg5: memref<1x256xf32, #tpu.memory_space<vmem>>, %arg6: memref<1x64xf32, #tpu.memory_space<vmem>>, %arg7: memref<1x64xf32, #tpu.memory_space<vmem>>, %arg8: memref<8x256xf32, #tpu.memory_space<vmem>>) attributes {dimension_semantics = [#tpu.dimension_semantics<parallel>, #tpu.dimension_semantics<parallel>, #tpu.dimension_semantics<arbitrary>], iteration_bounds = array<i64: 1, 1, 1>, scalar_prefetch = 0 : i64, scratch_operands = 0 : i64, tpu.core_type = #tpu.core_type<tc>, window_params = [{transform_indices = @transform_0, window_bounds = array<i64: 8, 64>}, {transform_indices = @transform_1, window_bounds = array<i64: 64, 256>}, {transform_indices = @transform_2, window_bounds = array<i64: 1, 256>}, {transform_indices = @transform_3, window_bounds = array<i64: 1, 64>}, {transform_indices = @transform_4, window_bounds = array<i64: 1, 64>}, {transform_indices = @transform_5, window_bounds = array<i64: 8, 256>}]} {
    %c0 = arith.constant 0 : index
    %c0_0 = arith.constant 0 : index
    %0 = vector.load %arg3[%c0, %c0_0] : memref<8x64xf32, #tpu.memory_space<vmem>>, vector<8x64xf32>
    %cst = arith.constant dense<0.000000e+00> : vector<8xf32>
    %1 = vector.multi_reduction <add>, %0, %cst [1] : vector<8x64xf32> to vector<8xf32>
    %2 = vector.shape_cast %1 : vector<8xf32> to vector<8x1xf32>
    %cst_1 = arith.constant 6.400000e+01 : f32
    %3 = vector.broadcast %cst_1 : f32 to vector<8x1xf32>
    %4 = arith.divf %2, %3 : vector<8x1xf32>
    %5 = vector.broadcast %4 : vector<8x1xf32> to vector<8x64xf32>
    %6 = arith.subf %0, %5 : vector<8x64xf32>
    %7 = arith.mulf %6, %6 : vector<8x64xf32>
    %cst_2 = arith.constant dense<0.000000e+00> : vector<8xf32>
    %8 = vector.multi_reduction <add>, %7, %cst_2 [1] : vector<8x64xf32> to vector<8xf32>
    %9 = vector.shape_cast %8 : vector<8xf32> to vector<8x1xf32>
    %cst_3 = arith.constant 6.400000e+01 : f32
    %10 = vector.broadcast %cst_3 : f32 to vector<8x1xf32>
    %11 = arith.divf %9, %10 : vector<8x1xf32>
    %cst_4 = arith.constant 9.99999997E-7 : f32
    %12 = vector.broadcast %cst_4 : f32 to vector<8x1xf32>
    %13 = arith.addf %11, %12 : vector<8x1xf32>
    %14 = math.rsqrt %13 : vector<8x1xf32>
    %15 = vector.broadcast %14 : vector<8x1xf32> to vector<8x64xf32>
    %16 = arith.mulf %6, %15 : vector<8x64xf32>
    %c0_5 = arith.constant 0 : index
    %c0_6 = arith.constant 0 : index
    %17 = vector.load %arg6[%c0_5, %c0_6] : memref<1x64xf32, #tpu.memory_space<vmem>>, vector<1x64xf32>
    %18 = vector.broadcast %17 : vector<1x64xf32> to vector<8x64xf32>
    %19 = arith.mulf %16, %18 : vector<8x64xf32>
    %c0_7 = arith.constant 0 : index
    %c0_8 = arith.constant 0 : index
    %20 = vector.load %arg7[%c0_7, %c0_8] : memref<1x64xf32, #tpu.memory_space<vmem>>, vector<1x64xf32>
    %21 = vector.broadcast %20 : vector<1x64xf32> to vector<8x64xf32>
    %22 = arith.addf %19, %21 : vector<8x64xf32>
    %c0_9 = arith.constant 0 : index
    %c0_10 = arith.constant 0 : index
    %23 = vector.load %arg4[%c0_9, %c0_10] : memref<64x256xf32, #tpu.memory_space<vmem>>, vector<64x256xf32>
    %cst_11 = arith.constant dense<0.000000e+00> : vector<8x256xf32>
    %24 = tpu.matmul %22, %23, %cst_11 {dimension_numbers = #tpu.dot_dimension_numbers<[1], [0], [0], [1], [0, 0, 1, 1], [], []>} : vector<8x64xf32>, vector<64x256xf32>, vector<8x256xf32> -> vector<8x256xf32>
    %c0_12 = arith.constant 0 : index
    %c0_13 = arith.constant 0 : index
    %25 = vector.load %arg5[%c0_12, %c0_13] : memref<1x256xf32, #tpu.memory_space<vmem>>, vector<1x256xf32>
    %26 = vector.broadcast %25 : vector<1x256xf32> to vector<8x256xf32>
    %27 = arith.addf %24, %26 : vector<8x256xf32>
    %cst_14 = arith.constant 5.000000e-01 : f32
    %28 = vector.broadcast %cst_14 : f32 to vector<8x256xf32>
    %29 = arith.mulf %28, %27 : vector<8x256xf32>
    %cst_15 = arith.constant 0.707106769 : f32
    %30 = vector.broadcast %cst_15 : f32 to vector<8x256xf32>
    %31 = arith.mulf %27, %30 : vector<8x256xf32>
    %cst_16 = arith.constant 0.000000e+00 : f32
    %32 = vector.broadcast %cst_16 : f32 to vector<8x256xf32>
    %33 = arith.cmpf oge, %31, %32 : vector<8x256xf32>
    %cst_17 = arith.constant 1.000000e+00 : f32
    %cst_18 = arith.constant -1.000000e+00 : f32
    %34 = vector.broadcast %cst_17 : f32 to vector<8x256xf32>
    %35 = vector.broadcast %cst_18 : f32 to vector<8x256xf32>
    %36 = arith.select %33, %34, %35 : vector<8x256xi1>, vector<8x256xf32>
    %37 = math.absf %31 : vector<8x256xf32>
    %cst_19 = arith.constant 0.327591091 : f32
    %38 = vector.broadcast %cst_19 : f32 to vector<8x256xf32>
    %39 = arith.mulf %38, %37 : vector<8x256xf32>
    %cst_20 = arith.constant 1.000000e+00 : f32
    %40 = vector.broadcast %cst_20 : f32 to vector<8x256xf32>
    %41 = arith.addf %40, %39 : vector<8x256xf32>
    %cst_21 = arith.constant 1.000000e+00 : f32
    %42 = vector.broadcast %cst_21 : f32 to vector<8x256xf32>
    %43 = arith.divf %42, %41 : vector<8x256xf32>
    %cst_22 = arith.constant 1.06140542 : f32
    %44 = vector.broadcast %cst_22 : f32 to vector<8x256xf32>
    %45 = arith.mulf %44, %43 : vector<8x256xf32>
    %cst_23 = arith.constant -1.45315206 : f32
    %46 = vector.broadcast %cst_23 : f32 to vector<8x256xf32>
    %47 = arith.addf %45, %46 : vector<8x256xf32>
    %48 = arith.mulf %47, %43 : vector<8x256xf32>
    %cst_24 = arith.constant 1.42141378 : f32
    %49 = vector.broadcast %cst_24 : f32 to vector<8x256xf32>
    %50 = arith.addf %48, %49 : vector<8x256xf32>
    %51 = arith.mulf %50, %43 : vector<8x256xf32>
    %cst_25 = arith.constant -0.284496725 : f32
    %52 = vector.broadcast %cst_25 : f32 to vector<8x256xf32>
    %53 = arith.addf %51, %52 : vector<8x256xf32>
    %54 = arith.mulf %53, %43 : vector<8x256xf32>
    %cst_26 = arith.constant 0.254829586 : f32
    %55 = vector.broadcast %cst_26 : f32 to vector<8x256xf32>
    %56 = arith.addf %54, %55 : vector<8x256xf32>
    %57 = arith.mulf %56, %43 : vector<8x256xf32>
    %cst_27 = arith.constant 0.000000e+00 : f32
    %58 = vector.broadcast %cst_27 : f32 to vector<8x256xf32>
    %59 = arith.subf %58, %37 : vector<8x256xf32>
    %60 = arith.mulf %59, %37 : vector<8x256xf32>
    %61 = math.exp %60 : vector<8x256xf32>
    %62 = arith.mulf %57, %61 : vector<8x256xf32>
    %cst_28 = arith.constant 1.000000e+00 : f32
    %63 = vector.broadcast %cst_28 : f32 to vector<8x256xf32>
    %64 = arith.subf %63, %62 : vector<8x256xf32>
    %65 = arith.mulf %36, %64 : vector<8x256xf32>
    %cst_29 = arith.constant 1.000000e+00 : f32
    %66 = vector.broadcast %cst_29 : f32 to vector<8x256xf32>
    %67 = arith.addf %66, %65 : vector<8x256xf32>
    %68 = arith.mulf %29, %67 : vector<8x256xf32>
    %c0_30 = arith.constant 0 : index
    %c0_31 = arith.constant 0 : index
    %69 = vector.load %arg8[%c0_30, %c0_31] : memref<8x256xf32, #tpu.memory_space<vmem>>, vector<8x256xf32>
    tpu.vector_store %arg8[%c0_30, %c0_31], %68 {strides = array<i32>} : memref<8x256xf32, #tpu.memory_space<vmem>>, vector<8x256xf32>,
    return
  }
  func.func @transform_0(%arg0: i32, %arg1: i32, %arg2: i32) -> (i32, i32) {
    %c0_i32 = arith.constant 0 : i32
    return %arg0, %arg2 : i32, i32
  }
  func.func @transform_1(%arg0: i32, %arg1: i32, %arg2: i32) -> (i32, i32) {
    %c0_i32 = arith.constant 0 : i32
    return %arg2, %arg1 : i32, i32
  }
  func.func @transform_2(%arg0: i32, %arg1: i32, %arg2: i32) -> (i32, i32) {
    %c0_i32 = arith.constant 0 : i32
    %c0_i32_0 = arith.constant 0 : i32
    return %c0_i32, %arg1 : i32, i32
  }
  func.func @transform_3(%arg0: i32, %arg1: i32, %arg2: i32) -> (i32, i32) {
    %c0_i32 = arith.constant 0 : i32
    %c0_i32_0 = arith.constant 0 : i32
    return %c0_i32, %arg2 : i32, i32
  }
  func.func @transform_4(%arg0: i32, %arg1: i32, %arg2: i32) -> (i32, i32) {
    %c0_i32 = arith.constant 0 : i32
    %c0_i32_0 = arith.constant 0 : i32
    return %c0_i32, %arg2 : i32, i32
  }
  func.func @transform_5(%arg0: i32, %arg1: i32, %arg2: i32) -> (i32, i32) {
    %c0_i32 = arith.constant 0 : i32
    return %arg0, %arg1 : i32, i32
  }
}

module attributes {stable_mosaic.version = 11 : i64} {
  func.func @_fused_linear_kernel(%arg0: i32, %arg1: i32, %arg2: i32, %arg3: memref<8x256xf32, #tpu.memory_space<vmem>>, %arg4: memref<256x64xf32, #tpu.memory_space<vmem>>, %arg5: memref<1x64xf32, #tpu.memory_space<vmem>>, %arg6: memref<8x64xf32, #tpu.memory_space<vmem>>, %arg7: memref<8x64xf32, #tpu.memory_space<vmem>>) attributes {dimension_semantics = [#tpu.dimension_semantics<parallel>, #tpu.dimension_semantics<parallel>, #tpu.dimension_semantics<arbitrary>], iteration_bounds = array<i64: 1, 1, 1>, scalar_prefetch = 0 : i64, scratch_operands = 0 : i64, tpu.core_type = #tpu.core_type<tc>, window_params = [{transform_indices = @transform_0, window_bounds = array<i64: 8, 256>}, {transform_indices = @transform_1, window_bounds = array<i64: 256, 64>}, {transform_indices = @transform_2, window_bounds = array<i64: 1, 64>}, {transform_indices = @transform_3, window_bounds = array<i64: 8, 64>}, {transform_indices = @transform_4, window_bounds = array<i64: 8, 64>}]} {
    %c0 = arith.constant 0 : index
    %c0_0 = arith.constant 0 : index
    %0 = vector.load %arg3[%c0, %c0_0] : memref<8x256xf32, #tpu.memory_space<vmem>>, vector<8x256xf32>
    %c0_1 = arith.constant 0 : index
    %c0_2 = arith.constant 0 : index
    %1 = vector.load %arg4[%c0_1, %c0_2] : memref<256x64xf32, #tpu.memory_space<vmem>>, vector<256x64xf32>
    %cst = arith.constant dense<0.000000e+00> : vector<8x64xf32>
    %2 = tpu.matmul %0, %1, %cst {dimension_numbers = #tpu.dot_dimension_numbers<[1], [0], [0], [1], [0, 0, 1, 1], [], []>} : vector<8x256xf32>, vector<256x64xf32>, vector<8x64xf32> -> vector<8x64xf32>
    %c0_3 = arith.constant 0 : index
    %c0_4 = arith.constant 0 : index
    %3 = vector.load %arg5[%c0_3, %c0_4] : memref<1x64xf32, #tpu.memory_space<vmem>>, vector<1x64xf32>
    %4 = vector.broadcast %3 : vector<1x64xf32> to vector<8x64xf32>
    %5 = arith.addf %2, %4 : vector<8x64xf32>
    %c0_5 = arith.constant 0 : index
    %c0_6 = arith.constant 0 : index
    %6 = vector.load %arg6[%c0_5, %c0_6] : memref<8x64xf32, #tpu.memory_space<vmem>>, vector<8x64xf32>
    %7 = arith.addf %5, %6 : vector<8x64xf32>
    %c0_7 = arith.constant 0 : index
    %c0_8 = arith.constant 0 : index
    %8 = vector.load %arg7[%c0_7, %c0_8] : memref<8x64xf32, #tpu.memory_space<vmem>>, vector<8x64xf32>
    tpu.vector_store %arg7[%c0_7, %c0_8], %7 {strides = array<i32>} : memref<8x64xf32, #tpu.memory_space<vmem>>, vector<8x64xf32>,
    return
  }
  func.func @transform_0(%arg0: i32, %arg1: i32, %arg2: i32) -> (i32, i32) {
    %c0_i32 = arith.constant 0 : i32
    return %arg0, %arg2 : i32, i32
  }
  func.func @transform_1(%arg0: i32, %arg1: i32, %arg2: i32) -> (i32, i32) {
    %c0_i32 = arith.constant 0 : i32
    return %arg2, %arg1 : i32, i32
  }
  func.func @transform_2(%arg0: i32, %arg1: i32, %arg2: i32) -> (i32, i32) {
    %c0_i32 = arith.constant 0 : i32
    %c0_i32_0 = arith.constant 0 : i32
    return %c0_i32, %arg1 : i32, i32
  }
  func.func @transform_3(%arg0: i32, %arg1: i32, %arg2: i32) -> (i32, i32) {
    %c0_i32 = arith.constant 0 : i32
    return %arg0, %arg1 : i32, i32
  }
  func.func @transform_4(%arg0: i32, %arg1: i32, %arg2: i32) -> (i32, i32) {
    %c0_i32 = arith.constant 0 : i32
    return %arg0, %arg1 : i32, i32
  }
}

module attributes {stable_mosaic.version = 11 : i64} {
  func.func @_layernorm_kernel(%arg0: i32, %arg1: memref<8x64xf32, #tpu.memory_space<vmem>>, %arg2: memref<1x64xf32, #tpu.memory_space<vmem>>, %arg3: memref<1x64xf32, #tpu.memory_space<vmem>>, %arg4: memref<8x64xf32, #tpu.memory_space<vmem>>) attributes {dimension_semantics = [#tpu.dimension_semantics<parallel>], iteration_bounds = array<i64: 1>, scalar_prefetch = 0 : i64, scratch_operands = 0 : i64, tpu.core_type = #tpu.core_type<tc>, window_params = [{transform_indices = @transform_0, window_bounds = array<i64: 8, 64>}, {pipeline_mode = #tpu.pipeline_mode<synchronous>, transform_indices = @transform_1, window_bounds = array<i64: 1, 64>}, {pipeline_mode = #tpu.pipeline_mode<synchronous>, transform_indices = @transform_2, window_bounds = array<i64: 1, 64>}, {transform_indices = @transform_3, window_bounds = array<i64: 8, 64>}]} {
    %c0 = arith.constant 0 : index
    %c0_0 = arith.constant 0 : index
    %0 = vector.load %arg1[%c0, %c0_0] : memref<8x64xf32, #tpu.memory_space<vmem>>, vector<8x64xf32>
    %cst = arith.constant dense<0.000000e+00> : vector<8xf32>
    %1 = vector.multi_reduction <add>, %0, %cst [1] : vector<8x64xf32> to vector<8xf32>
    %2 = vector.shape_cast %1 : vector<8xf32> to vector<8x1xf32>
    %cst_1 = arith.constant 6.400000e+01 : f32
    %3 = vector.broadcast %cst_1 : f32 to vector<8x1xf32>
    %4 = arith.divf %2, %3 : vector<8x1xf32>
    %5 = vector.broadcast %4 : vector<8x1xf32> to vector<8x64xf32>
    %6 = arith.subf %0, %5 : vector<8x64xf32>
    %7 = arith.mulf %6, %6 : vector<8x64xf32>
    %cst_2 = arith.constant dense<0.000000e+00> : vector<8xf32>
    %8 = vector.multi_reduction <add>, %7, %cst_2 [1] : vector<8x64xf32> to vector<8xf32>
    %9 = vector.shape_cast %8 : vector<8xf32> to vector<8x1xf32>
    %cst_3 = arith.constant 6.400000e+01 : f32
    %10 = vector.broadcast %cst_3 : f32 to vector<8x1xf32>
    %11 = arith.divf %9, %10 : vector<8x1xf32>
    %cst_4 = arith.constant 9.99999997E-7 : f32
    %12 = vector.broadcast %cst_4 : f32 to vector<8x1xf32>
    %13 = arith.addf %11, %12 : vector<8x1xf32>
    %14 = math.rsqrt %13 : vector<8x1xf32>
    %15 = vector.broadcast %14 : vector<8x1xf32> to vector<8x64xf32>
    %16 = arith.mulf %6, %15 : vector<8x64xf32>
    %c0_5 = arith.constant 0 : index
    %c0_6 = arith.constant 0 : index
    %17 = vector.load %arg2[%c0_5, %c0_6] : memref<1x64xf32, #tpu.memory_space<vmem>>, vector<1x64xf32>
    %18 = vector.broadcast %17 : vector<1x64xf32> to vector<8x64xf32>
    %19 = arith.mulf %16, %18 : vector<8x64xf32>
    %c0_7 = arith.constant 0 : index
    %c0_8 = arith.constant 0 : index
    %20 = vector.load %arg3[%c0_7, %c0_8] : memref<1x64xf32, #tpu.memory_space<vmem>>, vector<1x64xf32>
    %21 = vector.broadcast %20 : vector<1x64xf32> to vector<8x64xf32>
    %22 = arith.addf %19, %21 : vector<8x64xf32>
    %c0_9 = arith.constant 0 : index
    %c0_10 = arith.constant 0 : index
    %23 = vector.load %arg4[%c0_9, %c0_10] : memref<8x64xf32, #tpu.memory_space<vmem>>, vector<8x64xf32>
    tpu.vector_store %arg4[%c0_9, %c0_10], %22 {strides = array<i32>} : memref<8x64xf32, #tpu.memory_space<vmem>>, vector<8x64xf32>,
    return
  }
  func.func @transform_0(%arg0: i32) -> (i32, i32) {
    %c0_i32 = arith.constant 0 : i32
    %c0_i32_0 = arith.constant 0 : i32
    return %arg0, %c0_i32 : i32, i32
  }
  func.func @transform_1(%arg0: i32) -> (i32, i32) {
    %c0_i32 = arith.constant 0 : i32
    %c0_i32_0 = arith.constant 0 : i32
    %c0_i32_1 = arith.constant 0 : i32
    return %c0_i32, %c0_i32_0 : i32, i32
  }
  func.func @transform_2(%arg0: i32) -> (i32, i32) {
    %c0_i32 = arith.constant 0 : i32
    %c0_i32_0 = arith.constant 0 : i32
    %c0_i32_1 = arith.constant 0 : i32
    return %c0_i32, %c0_i32_0 : i32, i32
  }
  func.func @transform_3(%arg0: i32) -> (i32, i32) {
    %c0_i32 = arith.constant 0 : i32
    %c0_i32_0 = arith.constant 0 : i32
    return %arg0, %c0_i32 : i32, i32
  }
}

module attributes {stable_mosaic.version = 11 : i64} {
  func.func @_window_attn_kernel(%arg0: i32, %arg1: memref<1x4x192xf32, #tpu.memory_space<vmem>>, %arg2: memref<4x4x4xf32, #tpu.memory_space<vmem>>, %arg3: memref<1x4x4xf32, #tpu.memory_space<vmem>>, %arg4: memref<1x4x64xf32, #tpu.memory_space<vmem>>) attributes {dimension_semantics = [#tpu.dimension_semantics<parallel>], iteration_bounds = array<i64: 2>, scalar_prefetch = 0 : i64, scratch_operands = 0 : i64, tpu.core_type = #tpu.core_type<tc>, window_params = [{transform_indices = @transform_0, window_bounds = array<i64: 1, 4, 192>}, {pipeline_mode = #tpu.pipeline_mode<synchronous>, transform_indices = @transform_1, window_bounds = array<i64: 4, 4, 4>}, {pipeline_mode = #tpu.pipeline_mode<synchronous>, transform_indices = @transform_2, window_bounds = array<i64: 1, 4, 4>}, {transform_indices = @transform_3, window_bounds = array<i64: 1, 4, 64>}]} {
    %c0 = arith.constant 0 : index
    %c0_0 = arith.constant 0 : index
    %c0_1 = arith.constant 0 : index
    %0 = vector.load %arg1[%c0, %c0_0, %c0_1] : memref<1x4x192xf32, #tpu.memory_space<vmem>>, vector<1x4x192xf32>
    %c0_2 = arith.constant 0 : index
    %c0_3 = arith.constant 0 : index
    %c0_4 = arith.constant 0 : index
    %1 = vector.load %arg2[%c0_2, %c0_3, %c0_4] : memref<4x4x4xf32, #tpu.memory_space<vmem>>, vector<4x4x4xf32>
    %c0_5 = arith.constant 0 : index
    %c0_6 = arith.constant 0 : index
    %c0_7 = arith.constant 0 : index
    %2 = vector.load %arg3[%c0_5, %c0_6, %c0_7] : memref<1x4x4xf32, #tpu.memory_space<vmem>>, vector<1x4x4xf32>
    %3 = vector.extract_strided_slice %0 {offsets = [0, 0, 0], sizes = [1, 4, 16], strides = [1, 1, 1]} : vector<1x4x192xf32> to vector<1x4x16xf32>
    %cst = arith.constant 2.500000e-01 : f32
    %4 = vector.broadcast %cst : f32 to vector<1x4x16xf32>
    %5 = arith.mulf %3, %4 : vector<1x4x16xf32>
    %6 = vector.extract_strided_slice %0 {offsets = [0, 0, 64], sizes = [1, 4, 16], strides = [1, 1, 1]} : vector<1x4x192xf32> to vector<1x4x16xf32>
    %7 = vector.extract_strided_slice %0 {offsets = [0, 0, 128], sizes = [1, 4, 16], strides = [1, 1, 1]} : vector<1x4x192xf32> to vector<1x4x16xf32>
    "tpu.trace_start"() <{level = 10 : i32, message = "wnd,wmd->wnm"}> : () -> ()
    %cst_8 = arith.constant dense<0.000000e+00> : vector<1x4x4xf32>
    %8 = tpu.matmul %5, %6, %cst_8 {dimension_numbers = #tpu.dot_dimension_numbers<[2], [2], [1], [1], [0, 0, 0, 1, 1, 1], [0], [0]>} : vector<1x4x16xf32>, vector<1x4x16xf32>, vector<1x4x4xf32> -> vector<1x4x4xf32>
    "tpu.trace_stop"() : () -> ()
    %9 = vector.extract_strided_slice %1 {offsets = [0, 0, 0], sizes = [1, 4, 4], strides = [1, 1, 1]} : vector<4x4x4xf32> to vector<1x4x4xf32>
    %10 = vector.shape_cast %9 : vector<1x4x4xf32> to vector<4x4xf32>
    %11 = vector.shape_cast %10 : vector<4x4xf32> to vector<1x4x4xf32>
    %12 = arith.addf %8, %11 : vector<1x4x4xf32>
    %13 = arith.addf %12, %2 : vector<1x4x4xf32>
    %cst_9 = arith.constant dense<0xFF800000> : vector<1x4xf32>
    %14 = vector.multi_reduction <maximumf>, %13, %cst_9 [2] : vector<1x4x4xf32> to vector<1x4xf32>
    %15 = vector.shape_cast %14 : vector<1x4xf32> to vector<1x4x1xf32>
    %16 = vector.broadcast %15 : vector<1x4x1xf32> to vector<1x4x4xf32>
    %17 = arith.subf %13, %16 : vector<1x4x4xf32>
    %18 = math.exp %17 : vector<1x4x4xf32>
    %cst_10 = arith.constant dense<0.000000e+00> : vector<1x4xf32>
    %19 = vector.multi_reduction <add>, %18, %cst_10 [2] : vector<1x4x4xf32> to vector<1x4xf32>
    %20 = vector.shape_cast %19 : vector<1x4xf32> to vector<1x4x1xf32>
    %21 = tpu.reciprocal %20 {approx = true} : vector<1x4x1xf32> -> vector<1x4x1xf32>
    %22 = vector.broadcast %21 : vector<1x4x1xf32> to vector<1x4x4xf32>
    %23 = arith.mulf %18, %22 : vector<1x4x4xf32>
    "tpu.trace_start"() <{level = 10 : i32, message = "wnm,wmd->wnd"}> : () -> ()
    %cst_11 = arith.constant dense<0.000000e+00> : vector<1x4x16xf32>
    %24 = tpu.matmul %23, %7, %cst_11 {dimension_numbers = #tpu.dot_dimension_numbers<[2], [1], [1], [2], [0, 0, 0, 1, 1, 2], [0], [0]>} : vector<1x4x4xf32>, vector<1x4x16xf32>, vector<1x4x16xf32> -> vector<1x4x16xf32>
    "tpu.trace_stop"() : () -> ()
    %25 = vector.extract_strided_slice %0 {offsets = [0, 0, 16], sizes = [1, 4, 16], strides = [1, 1, 1]} : vector<1x4x192xf32> to vector<1x4x16xf32>
    %cst_12 = arith.constant 2.500000e-01 : f32
    %26 = vector.broadcast %cst_12 : f32 to vector<1x4x16xf32>
    %27 = arith.mulf %25, %26 : vector<1x4x16xf32>
    %28 = vector.extract_strided_slice %0 {offsets = [0, 0, 80], sizes = [1, 4, 16], strides = [1, 1, 1]} : vector<1x4x192xf32> to vector<1x4x16xf32>
    %29 = vector.extract_strided_slice %0 {offsets = [0, 0, 144], sizes = [1, 4, 16], strides = [1, 1, 1]} : vector<1x4x192xf32> to vector<1x4x16xf32>
    "tpu.trace_start"() <{level = 10 : i32, message = "wnd,wmd->wnm"}> : () -> ()
    %cst_13 = arith.constant dense<0.000000e+00> : vector<1x4x4xf32>
    %30 = tpu.matmul %27, %28, %cst_13 {dimension_numbers = #tpu.dot_dimension_numbers<[2], [2], [1], [1], [0, 0, 0, 1, 1, 1], [0], [0]>} : vector<1x4x16xf32>, vector<1x4x16xf32>, vector<1x4x4xf32> -> vector<1x4x4xf32>
    "tpu.trace_stop"() : () -> ()
    %31 = vector.extract_strided_slice %1 {offsets = [1, 0, 0], sizes = [1, 4, 4], strides = [1, 1, 1]} : vector<4x4x4xf32> to vector<1x4x4xf32>
    %32 = vector.shape_cast %31 : vector<1x4x4xf32> to vector<4x4xf32>
    %33 = vector.shape_cast %32 : vector<4x4xf32> to vector<1x4x4xf32>
    %34 = arith.addf %30, %33 : vector<1x4x4xf32>
    %35 = arith.addf %34, %2 : vector<1x4x4xf32>
    %cst_14 = arith.constant dense<0xFF800000> : vector<1x4xf32>
    %36 = vector.multi_reduction <maximumf>, %35, %cst_14 [2] : vector<1x4x4xf32> to vector<1x4xf32>
    %37 = vector.shape_cast %36 : vector<1x4xf32> to vector<1x4x1xf32>
    %38 = vector.broadcast %37 : vector<1x4x1xf32> to vector<1x4x4xf32>
    %39 = arith.subf %35, %38 : vector<1x4x4xf32>
    %40 = math.exp %39 : vector<1x4x4xf32>
    %cst_15 = arith.constant dense<0.000000e+00> : vector<1x4xf32>
    %41 = vector.multi_reduction <add>, %40, %cst_15 [2] : vector<1x4x4xf32> to vector<1x4xf32>
    %42 = vector.shape_cast %41 : vector<1x4xf32> to vector<1x4x1xf32>
    %43 = tpu.reciprocal %42 {approx = true} : vector<1x4x1xf32> -> vector<1x4x1xf32>
    %44 = vector.broadcast %43 : vector<1x4x1xf32> to vector<1x4x4xf32>
    %45 = arith.mulf %40, %44 : vector<1x4x4xf32>
    "tpu.trace_start"() <{level = 10 : i32, message = "wnm,wmd->wnd"}> : () -> ()
    %cst_16 = arith.constant dense<0.000000e+00> : vector<1x4x16xf32>
    %46 = tpu.matmul %45, %29, %cst_16 {dimension_numbers = #tpu.dot_dimension_numbers<[2], [1], [1], [2], [0, 0, 0, 1, 1, 2], [0], [0]>} : vector<1x4x4xf32>, vector<1x4x16xf32>, vector<1x4x16xf32> -> vector<1x4x16xf32>
    "tpu.trace_stop"() : () -> ()
    %47 = vector.extract_strided_slice %0 {offsets = [0, 0, 32], sizes = [1, 4, 16], strides = [1, 1, 1]} : vector<1x4x192xf32> to vector<1x4x16xf32>
    %cst_17 = arith.constant 2.500000e-01 : f32
    %48 = vector.broadcast %cst_17 : f32 to vector<1x4x16xf32>
    %49 = arith.mulf %47, %48 : vector<1x4x16xf32>
    %50 = vector.extract_strided_slice %0 {offsets = [0, 0, 96], sizes = [1, 4, 16], strides = [1, 1, 1]} : vector<1x4x192xf32> to vector<1x4x16xf32>
    %51 = vector.extract_strided_slice %0 {offsets = [0, 0, 160], sizes = [1, 4, 16], strides = [1, 1, 1]} : vector<1x4x192xf32> to vector<1x4x16xf32>
    "tpu.trace_start"() <{level = 10 : i32, message = "wnd,wmd->wnm"}> : () -> ()
    %cst_18 = arith.constant dense<0.000000e+00> : vector<1x4x4xf32>
    %52 = tpu.matmul %49, %50, %cst_18 {dimension_numbers = #tpu.dot_dimension_numbers<[2], [2], [1], [1], [0, 0, 0, 1, 1, 1], [0], [0]>} : vector<1x4x16xf32>, vector<1x4x16xf32>, vector<1x4x4xf32> -> vector<1x4x4xf32>
    "tpu.trace_stop"() : () -> ()
    %53 = vector.extract_strided_slice %1 {offsets = [2, 0, 0], sizes = [1, 4, 4], strides = [1, 1, 1]} : vector<4x4x4xf32> to vector<1x4x4xf32>
    %54 = vector.shape_cast %53 : vector<1x4x4xf32> to vector<4x4xf32>
    %55 = vector.shape_cast %54 : vector<4x4xf32> to vector<1x4x4xf32>
    %56 = arith.addf %52, %55 : vector<1x4x4xf32>
    %57 = arith.addf %56, %2 : vector<1x4x4xf32>
    %cst_19 = arith.constant dense<0xFF800000> : vector<1x4xf32>
    %58 = vector.multi_reduction <maximumf>, %57, %cst_19 [2] : vector<1x4x4xf32> to vector<1x4xf32>
    %59 = vector.shape_cast %58 : vector<1x4xf32> to vector<1x4x1xf32>
    %60 = vector.broadcast %59 : vector<1x4x1xf32> to vector<1x4x4xf32>
    %61 = arith.subf %57, %60 : vector<1x4x4xf32>
    %62 = math.exp %61 : vector<1x4x4xf32>
    %cst_20 = arith.constant dense<0.000000e+00> : vector<1x4xf32>
    %63 = vector.multi_reduction <add>, %62, %cst_20 [2] : vector<1x4x4xf32> to vector<1x4xf32>
    %64 = vector.shape_cast %63 : vector<1x4xf32> to vector<1x4x1xf32>
    %65 = tpu.reciprocal %64 {approx = true} : vector<1x4x1xf32> -> vector<1x4x1xf32>
    %66 = vector.broadcast %65 : vector<1x4x1xf32> to vector<1x4x4xf32>
    %67 = arith.mulf %62, %66 : vector<1x4x4xf32>
    "tpu.trace_start"() <{level = 10 : i32, message = "wnm,wmd->wnd"}> : () -> ()
    %cst_21 = arith.constant dense<0.000000e+00> : vector<1x4x16xf32>
    %68 = tpu.matmul %67, %51, %cst_21 {dimension_numbers = #tpu.dot_dimension_numbers<[2], [1], [1], [2], [0, 0, 0, 1, 1, 2], [0], [0]>} : vector<1x4x4xf32>, vector<1x4x16xf32>, vector<1x4x16xf32> -> vector<1x4x16xf32>
    "tpu.trace_stop"() : () -> ()
    %69 = vector.extract_strided_slice %0 {offsets = [0, 0, 48], sizes = [1, 4, 16], strides = [1, 1, 1]} : vector<1x4x192xf32> to vector<1x4x16xf32>
    %cst_22 = arith.constant 2.500000e-01 : f32
    %70 = vector.broadcast %cst_22 : f32 to vector<1x4x16xf32>
    %71 = arith.mulf %69, %70 : vector<1x4x16xf32>
    %72 = vector.extract_strided_slice %0 {offsets = [0, 0, 112], sizes = [1, 4, 16], strides = [1, 1, 1]} : vector<1x4x192xf32> to vector<1x4x16xf32>
    %73 = vector.extract_strided_slice %0 {offsets = [0, 0, 176], sizes = [1, 4, 16], strides = [1, 1, 1]} : vector<1x4x192xf32> to vector<1x4x16xf32>
    "tpu.trace_start"() <{level = 10 : i32, message = "wnd,wmd->wnm"}> : () -> ()
    %cst_23 = arith.constant dense<0.000000e+00> : vector<1x4x4xf32>
    %74 = tpu.matmul %71, %72, %cst_23 {dimension_numbers = #tpu.dot_dimension_numbers<[2], [2], [1], [1], [0, 0, 0, 1, 1, 1], [0], [0]>} : vector<1x4x16xf32>, vector<1x4x16xf32>, vector<1x4x4xf32> -> vector<1x4x4xf32>
    "tpu.trace_stop"() : () -> ()
    %75 = vector.extract_strided_slice %1 {offsets = [3, 0, 0], sizes = [1, 4, 4], strides = [1, 1, 1]} : vector<4x4x4xf32> to vector<1x4x4xf32>
    %76 = vector.shape_cast %75 : vector<1x4x4xf32> to vector<4x4xf32>
    %77 = vector.shape_cast %76 : vector<4x4xf32> to vector<1x4x4xf32>
    %78 = arith.addf %74, %77 : vector<1x4x4xf32>
    %79 = arith.addf %78, %2 : vector<1x4x4xf32>
    %cst_24 = arith.constant dense<0xFF800000> : vector<1x4xf32>
    %80 = vector.multi_reduction <maximumf>, %79, %cst_24 [2] : vector<1x4x4xf32> to vector<1x4xf32>
    %81 = vector.shape_cast %80 : vector<1x4xf32> to vector<1x4x1xf32>
    %82 = vector.broadcast %81 : vector<1x4x1xf32> to vector<1x4x4xf32>
    %83 = arith.subf %79, %82 : vector<1x4x4xf32>
    %84 = math.exp %83 : vector<1x4x4xf32>
    %cst_25 = arith.constant dense<0.000000e+00> : vector<1x4xf32>
    %85 = vector.multi_reduction <add>, %84, %cst_25 [2] : vector<1x4x4xf32> to vector<1x4xf32>
    %86 = vector.shape_cast %85 : vector<1x4xf32> to vector<1x4x1xf32>
    %87 = tpu.reciprocal %86 {approx = true} : vector<1x4x1xf32> -> vector<1x4x1xf32>
    %88 = vector.broadcast %87 : vector<1x4x1xf32> to vector<1x4x4xf32>
    %89 = arith.mulf %84, %88 : vector<1x4x4xf32>
    "tpu.trace_start"() <{level = 10 : i32, message = "wnm,wmd->wnd"}> : () -> ()
    %cst_26 = arith.constant dense<0.000000e+00> : vector<1x4x16xf32>
    %90 = tpu.matmul %89, %73, %cst_26 {dimension_numbers = #tpu.dot_dimension_numbers<[2], [1], [1], [2], [0, 0, 0, 1, 1, 2], [0], [0]>} : vector<1x4x4xf32>, vector<1x4x16xf32>, vector<1x4x16xf32> -> vector<1x4x16xf32>
    "tpu.trace_stop"() : () -> ()
    %91 = tpu.concatenate %24, %46, %68, %90 in 2 : vector<1x4x16xf32>, vector<1x4x16xf32>, vector<1x4x16xf32>, vector<1x4x16xf32> -> vector<1x4x64xf32>
    %c0_27 = arith.constant 0 : index
    %c0_28 = arith.constant 0 : index
    %c0_29 = arith.constant 0 : index
    %92 = vector.load %arg4[%c0_27, %c0_28, %c0_29] : memref<1x4x64xf32, #tpu.memory_space<vmem>>, vector<1x4x64xf32>
    tpu.vector_store %arg4[%c0_27, %c0_28, %c0_29], %91 {strides = array<i32>} : memref<1x4x64xf32, #tpu.memory_space<vmem>>, vector<1x4x64xf32>,
    return
  }
  func.func @transform_0(%arg0: i32) -> (i32, i32, i32) {
    %c0_i32 = arith.constant 0 : i32
    %c0_i32_0 = arith.constant 0 : i32
    %c0_i32_1 = arith.constant 0 : i32
    return %arg0, %c0_i32, %c0_i32_0 : i32, i32, i32
  }
  func.func @transform_1(%arg0: i32) -> (i32, i32, i32) {
    %c0_i32 = arith.constant 0 : i32
    %c0_i32_0 = arith.constant 0 : i32
    %c0_i32_1 = arith.constant 0 : i32
    %c0_i32_2 = arith.constant 0 : i32
    return %c0_i32, %c0_i32_0, %c0_i32_1 : i32, i32, i32
  }
  func.func @transform_2(%arg0: i32) -> (i32, i32, i32) {
    %c0_i32 = arith.constant 0 : i32
    %c0_i32_0 = arith.constant 0 : i32
    %c0_i32_1 = arith.constant 0 : i32
    %c0_i32_2 = arith.constant 0 : i32
    return %c0_i32, %c0_i32_0, %c0_i32_1 : i32, i32, i32
  }
  func.func @transform_3(%arg0: i32) -> (i32, i32, i32) {
    %c0_i32 = arith.constant 0 : i32
    %c0_i32_0 = arith.constant 0 : i32
    %c0_i32_1 = arith.constant 0 : i32
    return %arg0, %c0_i32, %c0_i32_0 : i32, i32, i32
  }
}

module attributes {stable_mosaic.version = 11 : i64} {
  func.func @_layernorm_kernel(%arg0: i32, %arg1: memref<32x32xf32, #tpu.memory_space<vmem>>, %arg2: memref<1x32xf32, #tpu.memory_space<vmem>>, %arg3: memref<1x32xf32, #tpu.memory_space<vmem>>, %arg4: memref<32x32xf32, #tpu.memory_space<vmem>>) attributes {dimension_semantics = [#tpu.dimension_semantics<parallel>], iteration_bounds = array<i64: 1>, scalar_prefetch = 0 : i64, scratch_operands = 0 : i64, tpu.core_type = #tpu.core_type<tc>, window_params = [{transform_indices = @transform_0, window_bounds = array<i64: 32, 32>}, {pipeline_mode = #tpu.pipeline_mode<synchronous>, transform_indices = @transform_1, window_bounds = array<i64: 1, 32>}, {pipeline_mode = #tpu.pipeline_mode<synchronous>, transform_indices = @transform_2, window_bounds = array<i64: 1, 32>}, {transform_indices = @transform_3, window_bounds = array<i64: 32, 32>}]} {
    %c0 = arith.constant 0 : index
    %c0_0 = arith.constant 0 : index
    %0 = vector.load %arg1[%c0, %c0_0] : memref<32x32xf32, #tpu.memory_space<vmem>>, vector<32x32xf32>
    %cst = arith.constant dense<0.000000e+00> : vector<32xf32>
    %1 = vector.multi_reduction <add>, %0, %cst [1] : vector<32x32xf32> to vector<32xf32>
    %2 = vector.shape_cast %1 : vector<32xf32> to vector<32x1xf32>
    %cst_1 = arith.constant 3.200000e+01 : f32
    %3 = vector.broadcast %cst_1 : f32 to vector<32x1xf32>
    %4 = arith.divf %2, %3 : vector<32x1xf32>
    %5 = vector.broadcast %4 : vector<32x1xf32> to vector<32x32xf32>
    %6 = arith.subf %0, %5 : vector<32x32xf32>
    %7 = arith.mulf %6, %6 : vector<32x32xf32>
    %cst_2 = arith.constant dense<0.000000e+00> : vector<32xf32>
    %8 = vector.multi_reduction <add>, %7, %cst_2 [1] : vector<32x32xf32> to vector<32xf32>
    %9 = vector.shape_cast %8 : vector<32xf32> to vector<32x1xf32>
    %cst_3 = arith.constant 3.200000e+01 : f32
    %10 = vector.broadcast %cst_3 : f32 to vector<32x1xf32>
    %11 = arith.divf %9, %10 : vector<32x1xf32>
    %cst_4 = arith.constant 9.99999997E-7 : f32
    %12 = vector.broadcast %cst_4 : f32 to vector<32x1xf32>
    %13 = arith.addf %11, %12 : vector<32x1xf32>
    %14 = math.rsqrt %13 : vector<32x1xf32>
    %15 = vector.broadcast %14 : vector<32x1xf32> to vector<32x32xf32>
    %16 = arith.mulf %6, %15 : vector<32x32xf32>
    %c0_5 = arith.constant 0 : index
    %c0_6 = arith.constant 0 : index
    %17 = vector.load %arg2[%c0_5, %c0_6] : memref<1x32xf32, #tpu.memory_space<vmem>>, vector<1x32xf32>
    %18 = vector.broadcast %17 : vector<1x32xf32> to vector<32x32xf32>
    %19 = arith.mulf %16, %18 : vector<32x32xf32>
    %c0_7 = arith.constant 0 : index
    %c0_8 = arith.constant 0 : index
    %20 = vector.load %arg3[%c0_7, %c0_8] : memref<1x32xf32, #tpu.memory_space<vmem>>, vector<1x32xf32>
    %21 = vector.broadcast %20 : vector<1x32xf32> to vector<32x32xf32>
    %22 = arith.addf %19, %21 : vector<32x32xf32>
    %c0_9 = arith.constant 0 : index
    %c0_10 = arith.constant 0 : index
    %23 = vector.load %arg4[%c0_9, %c0_10] : memref<32x32xf32, #tpu.memory_space<vmem>>, vector<32x32xf32>
    tpu.vector_store %arg4[%c0_9, %c0_10], %22 {strides = array<i32>} : memref<32x32xf32, #tpu.memory_space<vmem>>, vector<32x32xf32>,
    return
  }
  func.func @transform_0(%arg0: i32) -> (i32, i32) {
    %c0_i32 = arith.constant 0 : i32
    %c0_i32_0 = arith.constant 0 : i32
    return %arg0, %c0_i32 : i32, i32
  }
  func.func @transform_1(%arg0: i32) -> (i32, i32) {
    %c0_i32 = arith.constant 0 : i32
    %c0_i32_0 = arith.constant 0 : i32
    %c0_i32_1 = arith.constant 0 : i32
    return %c0_i32, %c0_i32_0 : i32, i32
  }
  func.func @transform_2(%arg0: i32) -> (i32, i32) {
    %c0_i32 = arith.constant 0 : i32
    %c0_i32_0 = arith.constant 0 : i32
    %c0_i32_1 = arith.constant 0 : i32
    return %c0_i32, %c0_i32_0 : i32, i32
  }
  func.func @transform_3(%arg0: i32) -> (i32, i32) {
    %c0_i32 = arith.constant 0 : i32
    %c0_i32_0 = arith.constant 0 : i32
    return %arg0, %c0_i32 : i32, i32
  }
}

</mosaic_0001>

<llo_original>
// kernel: swin_forward.27
$region0: #{swin_forward.27}
  #allocation0 [shape = 'u32[]', space=smem, size = 0x4, offset = 0x4, fixed_abs, tag = 'smem constant byte address 0x4 - core index']
  #allocation1 [shape = 'u32[144,128]{1,0:T(1,128)}', space=vmem, size = 0x12000, scoped, tag = 'internal scratch']
  %s0 = inlined_call_operand.vmem [shape: f32[32,32], index: 0, kind: input, shape index: {}]
  %s1 = inlined_call_operand.vmem [shape: f32[32,32], index: 1, kind: input, shape index: {}]
  %s2 = inlined_call_operand.vmem [shape: f32[1,32], index: 2, kind: input, shape index: {}]
  %s3 = inlined_call_operand.vmem [shape: f32[32,32], index: 3, kind: input, shape index: {}]
  %s4 = inlined_call_operand.vmem [shape: f32[32,32], index: 4, kind: output, shape index: {}]
  %s5 = sld [smem:[#allocation0]]
  $region26: #{swin_forward.27} parent=0
    _
  %s7 = ssub.s32 1, %s5
  %s8 = scalar_select 0, %s7, %s5
  // Predicated region
  $region2: #{swin_forward.27} parent=0 // pred_check
    _
  $region3: #{swin_forward.27} parent=0 // pred_check_branch
    %10 = sbr.rel (0) target = $region5
  $region4: #{swin_forward.27} parent=0 // pred_region
    _
  $region5: #{swin_forward.27} parent=0 // pred_fallthru
    _
  // Predicated region
  $region6: #{swin_forward.27} parent=0 // pred_check
    _
  $region7: #{swin_forward.27} parent=0 // pred_check_branch
    %12 = sbr.rel (0) target = $region9
  $region8: #{swin_forward.27} parent=0 // pred_region
    _
  $region9: #{swin_forward.27} parent=0 // pred_fallthru
    _
  // Predicated region
  $region10: #{swin_forward.27} parent=0 // pred_check
    _
  $region11: #{swin_forward.27} parent=0 // pred_check_branch
    %14 = sbr.rel (0) target = $region13
  $region12: #{swin_forward.27} parent=0 // pred_region
    _
  $region13: #{swin_forward.27} parent=0 // pred_fallthru
    _
  // Predicated region
  $region14: #{swin_forward.27} parent=0 // pred_check
    _
  $region15: #{swin_forward.27} parent=0 // pred_check_branch
    %16 = sbr.rel (0) target = $region17
  $region16: #{swin_forward.27} parent=0 // pred_region
    _
  $region17: #{swin_forward.27} parent=0 // pred_fallthru
    _
  %v17 = vld [vmem:[%s0] sm:$0xff]
  %v18 = vld [vmem:[%s0 + $0x8] sm:$0xff]
  %v19 = vld [vmem:[%s0 + $0x10] sm:$0xff]
  %v20 = vld [vmem:[%s0 + $0x18] sm:$0xff]
  %v21 = vld [vmem:[%s1] sm:$0xff]
  %v22 = vld [vmem:[%s1 + $0x8] sm:$0xff]
  %v23 = vld [vmem:[%s1 + $0x10] sm:$0xff]
  %v24 = vld [vmem:[%s1 + $0x18] sm:$0xff]
  %v25 = vld [vmem:[%s2] sm:$0x1]
  %v27 = vlaneseq
  %v28 = vshrl.u32 %v27, 7
  %v29 = vsub.s32 0, %v28
  %v30 = vrot.slane %v25, %v29
  %vm32 = vcmask 261120
  %v34 = vsel %vm32, %v17, 0
  %v37 = vsel %vm32, %v18, 0
  %v40 = vsel %vm32, %v19, 0
  %v43 = vsel %vm32, %v20, 0
  %45 = vmatprep.subr.mxu0 0.0
  %46 = vmatpush1.msra.mxu0 0.0
  %47 = vmatprep.subr.mxu0 0.0
  %48 = vmatpush1.msra.mxu0 0.0
  %49 = vmatprep.subr.mxu0 0.0
  %50 = vmatpush1.msra.mxu0 0.0
  %51 = vmatprep.subr.mxu0 0.0
  %52 = vmatpush1.msra.mxu0 0.0
  %53 = vmatprep.subr.mxu0 0.0
  %54 = vmatpush1.msra.mxu0 0.0
  %55 = vmatprep.subr.mxu0 0.0
  %56 = vmatpush1.msra.mxu0 0.0
  %57 = vmatprep.subr.mxu0 0.0
  %58 = vmatpush1.msra.mxu0 0.0
  %59 = vmatprep.subr.mxu0 0.0
  %60 = vmatpush1.msra.mxu0 0.0
  %61 = vmatprep.subr.mxu0 0.0
  %62 = vmatpush1.msra.mxu0 0.0
  %63 = vmatprep.subr.mxu0 0.0
  %64 = vmatpush1.msra.mxu0 0.0
  %65 = vmatprep.subr.mxu0 0.0
  %66 = vmatpush1.msra.mxu0 0.0
  %67 = vmatprep.subr.mxu0 0.0
  %68 = vmatpush1.msra.mxu0 0.0
  %69 = vmatprep.subr.mxu0 0.0
  %70 = vmatpush1.msra.mxu0 %v24
  %71 = vmatprep.subr.mxu0 0.0
  %72 = vmatpush1.msra.mxu0 %v23
  %73 = vmatprep.subr.mxu0 0.0
  %74 = vmatpush1.msra.mxu0 %v22
  %75 = vmatprep.subr.mxu0 0.0
  %76 = vmatpush1.msra.mxu0 %v21
  %77 = vmatprep.subr.mxu0 0.0
  %78 = vmatpush2.msra.mxu0 0.0
  %79 = vmatprep.subr.mxu0 0.0
  %80 = vmatpush2.msra.mxu0 0.0
  %81 = vmatprep.subr.mxu0 0.0
  %82 = vmatpush2.msra.mxu0 0.0
  %83 = vmatprep.subr.mxu0 0.0
  %84 = vmatpush2.msra.mxu0 0.0
  %85 = vmatprep.subr.mxu0 0.0
  %86 = vmatpush2.msra.mxu0 0.0
  %87 = vmatprep.subr.mxu0 0.0
  %88 = vmatpush2.msra.mxu0 0.0
  %89 = vmatprep.subr.mxu0 0.0
  %90 = vmatpush2.msra.mxu0 0.0
  %91 = vmatprep.subr.mxu0 0.0
  %92 = vmatpush2.msra.mxu0 0.0
  %93 = vmatprep.subr.mxu0 0.0
  %94 = vmatpush2.msra.mxu0 0.0
  %95 = vmatprep.subr.mxu0 0.0
  %96 = vmatpush2.msra.mxu0 0.0
  %97 = vmatprep.subr.mxu0 0.0
  %98 = vmatpush2.msra.mxu0 0.0
  %99 = vmatprep.subr.mxu0 0.0
  %100 = vmatpush2.msra.mxu0 0.0
  %101 = vmatprep.subr.mxu0 0.0
  %102 = vmatpush2.msra.mxu0 0.0
  %103 = vmatprep.subr.mxu0 0.0
  %104 = vmatpush2.msra.mxu0 0.0
  %105 = vmatprep.subr.mxu0 0.0
  %106 = vmatpush2.msra.mxu0 0.0
  %107 = vmatprep.subr.mxu0 0.0
  %108 = vmatpush2.msra.mxu0 0.0
  %109 = vmatprep.mubr.f32.mxu0 0.0
  %110 = vmatmul.mubr.f32.gmra.mxu0 %v34
  %v111 = vpop.f32.mrf.mxu0
  %v112 = vadd.f32 %v30, %v111
  %v113 = vpop.f32.mrf.mxu0
  %114 = vmatprep.mubr.f32.mxu0 0.0
  %115 = vmatmul.mubr.f32.gmra.mxu0 %v37
  %v116 = vpop.f32.mrf.mxu0
  %v117 = vadd.f32 %v30, %v116
  %v118 = vpop.f32.mrf.mxu0
  %119 = vmatprep.mubr.f32.mxu0 0.0
  %120 = vmatmul.mubr.f32.gmra.mxu0 %v40
  %v121 = vpop.f32.mrf.mxu0
  %v122 = vadd.f32 %v30, %v121
  %v123 = vpop.f32.mrf.mxu0
  %124 = vmatprep.mubr.f32.mxu0 0.0
  %125 = vmatmul.mubr.f32.gmra.mxu0 %v43
  %v126 = vpop.f32.mrf.mxu0
  %v127 = vadd.f32 %v30, %v126
  %v128 = vpop.f32.mrf.mxu0
  %129 = vdwg.mxu0
  %v130 = vld [vmem:[%s3] sm:$0xff]
  %v131 = vld [vmem:[%s3 + $0x8] sm:$0xff]
  %v132 = vld [vmem:[%s3 + $0x10] sm:$0xff]
  %v133 = vld [vmem:[%s3 + $0x18] sm:$0xff]
  %v134 = vadd.f32 %v112, %v130
  %v135 = vadd.f32 %v117, %v131
  %v136 = vadd.f32 %v122, %v132
  %v137 = vadd.f32 %v127, %v133
  %138 = vst.msk [vmem:[%s4] sm:$0xff] %vm32, %v134
  %139 = vst.msk [vmem:[%s4 + $0x8] sm:$0xff] %vm32, %v135
  %140 = vst.msk [vmem:[%s4 + $0x10] sm:$0xff] %vm32, %v136
  %141 = vst.msk [vmem:[%s4 + $0x18] sm:$0xff] %vm32, %v137
  // Predicated region
  $region18: #{swin_forward.27} parent=0 // pred_check
    _
  $region19: #{swin_forward.27} parent=0 // pred_check_branch
    %143 = sbr.rel (0) target = $region21
  $region20: #{swin_forward.27} parent=0 // pred_region
    _
  $region21: #{swin_forward.27} parent=0 // pred_fallthru
    _
  // Predicated region
  $region22: #{swin_forward.27} parent=0 // pred_check
    _
  $region23: #{swin_forward.27} parent=0 // pred_check_branch
    %145 = sbr.rel (0) target = $region25
  $region24: #{swin_forward.27} parent=0 // pred_region
    _
  $region25: #{swin_forward.27} parent=0 // pred_fallthru
    _

// kernel: swin_forward.25
$region0: #{swin_forward.25}
  #allocation0 [shape = 'u32[]', space=smem, size = 0x4, offset = 0x4, fixed_abs, tag = 'smem constant byte address 0x4 - core index']
  #allocation1 [shape = 'u32[144,128]{1,0:T(1,128)}', space=vmem, size = 0x12000, scoped, tag = 'internal scratch']
  %s0 = inlined_call_operand.vmem [shape: f32[32,32], index: 0, kind: input, shape index: {}]
  %s1 = inlined_call_operand.vmem [shape: f32[32,96], index: 1, kind: input, shape index: {}]
  %s2 = inlined_call_operand.vmem [shape: f32[1,96], index: 2, kind: input, shape index: {}]
  %s3 = inlined_call_operand.vmem [shape: f32[1,32], index: 3, kind: input, shape index: {}]
  %s4 = inlined_call_operand.vmem [shape: f32[1,32], index: 4, kind: input, shape index: {}]
  %s5 = inlined_call_operand.vmem [shape: f32[32,96], index: 5, kind: output, shape index: {}]
  %s6 = sld [smem:[#allocation0]]
  $region30: #{swin_forward.25} parent=0
    _
  %s8 = ssub.s32 1, %s6
  %s9 = scalar_select 0, %s8, %s6
  // Predicated region
  $region2: #{swin_forward.25} parent=0 // pred_check
    _
  $region3: #{swin_forward.25} parent=0 // pred_check_branch
    %11 = sbr.rel (0) target = $region5
  $region4: #{swin_forward.25} parent=0 // pred_region
    _
  $region5: #{swin_forward.25} parent=0 // pred_fallthru
    _
  // Predicated region
  $region6: #{swin_forward.25} parent=0 // pred_check
    _
  $region7: #{swin_forward.25} parent=0 // pred_check_branch
    %13 = sbr.rel (0) target = $region9
  $region8: #{swin_forward.25} parent=0 // pred_region
    _
  $region9: #{swin_forward.25} parent=0 // pred_fallthru
    _
  // Predicated region
  $region10: #{swin_forward.25} parent=0 // pred_check
    _
  $region11: #{swin_forward.25} parent=0 // pred_check_branch
    %15 = sbr.rel (0) target = $region13
  $region12: #{swin_forward.25} parent=0 // pred_region
    _
  $region13: #{swin_forward.25} parent=0 // pred_fallthru
    _
  // Predicated region
  $region14: #{swin_forward.25} parent=0 // pred_check
    _
  $region15: #{swin_forward.25} parent=0 // pred_check_branch
    %17 = sbr.rel (0) target = $region17
  $region16: #{swin_forward.25} parent=0 // pred_region
    _
  $region17: #{swin_forward.25} parent=0 // pred_fallthru
    _
  // Predicated region
  $region18: #{swin_forward.25} parent=0 // pred_check
    _
  $region19: #{swin_forward.25} parent=0 // pred_check_branch
    %19 = sbr.rel (0) target = $region21
  $region20: #{swin_forward.25} parent=0 // pred_region
    _
  $region21: #{swin_forward.25} parent=0 // pred_fallthru
    _
  %v20 = vld [vmem:[%s0] sm:$0xff]
  %v21 = vld [vmem:[%s0 + $0x8] sm:$0xff]
  %v22 = vld [vmem:[%s0 + $0x10] sm:$0xff]
  %v23 = vld [vmem:[%s0 + $0x18] sm:$0xff]
  %vm24 = vcmask 261120
  %v25 = vsel %vm24, %v20, 0.0
  %26 = vadd.xlane.f32.xlu0 %v25
  %v27 = vpop.xlane.xlu0 %26
  %v28 = vsel %vm24, %v21, 0.0
  %29 = vadd.xlane.f32.xlu0 %v28
  %v30 = vpop.xlane.xlu0 %29
  %v31 = vsel %vm24, %v22, 0.0
  %32 = vadd.xlane.f32.xlu0 %v31
  %v33 = vpop.xlane.xlu0 %32
  %v34 = vsel %vm24, %v23, 0.0
  %35 = vadd.xlane.f32.xlu0 %v34
  %v36 = vpop.xlane.xlu0 %35
  %v37 = vrcp.pop 32.0
  %v38 = vmul.f32 %v27, %v37
  %v39 = vmul.f32 %v30, %v37
  %v40 = vmul.f32 %v33, %v37
  %v41 = vmul.f32 %v36, %v37
  %v42 = vsub.f32 %v20, %v38
  %v43 = vsub.f32 %v21, %v39
  %v44 = vsub.f32 %v22, %v40
  %v45 = vsub.f32 %v23, %v41
  %v46 = vmul.f32 %v42, %v42
  %v47 = vmul.f32 %v43, %v43
  %v48 = vmul.f32 %v44, %v44
  %v49 = vmul.f32 %v45, %v45
  %v50 = vsel %vm24, %v46, 0.0
  %51 = vadd.xlane.f32.xlu0 %v50
  %v52 = vpop.xlane.xlu0 %51
  %v53 = vsel %vm24, %v47, 0.0
  %54 = vadd.xlane.f32.xlu0 %v53
  %v55 = vpop.xlane.xlu0 %54
  %v56 = vsel %vm24, %v48, 0.0
  %57 = vadd.xlane.f32.xlu0 %v56
  %v58 = vpop.xlane.xlu0 %57
  %v59 = vsel %vm24, %v49, 0.0
  %60 = vadd.xlane.f32.xlu0 %v59
  %v61 = vpop.xlane.xlu0 %60
  %v62 = vmul.f32 %v52, %v37
  %v63 = vmul.f32 %v55, %v37
  %v64 = vmul.f32 %v58, %v37
  %v65 = vmul.f32 %v61, %v37
  %v66 = vadd.f32 %v62, 1e-06
  %v67 = vadd.f32 %v63, 1e-06
  %v68 = vadd.f32 %v64, 1e-06
  %v69 = vadd.f32 %v65, 1e-06
  %v70 = vrsqrt.pop %v66
  %v71 = vrsqrt.pop %v67
  %v72 = vrsqrt.pop %v68
  %v73 = vrsqrt.pop %v69
  %v74 = vmul.f32 %v42, %v70
  %v75 = vmul.f32 %v43, %v71
  %v76 = vmul.f32 %v44, %v72
  %v77 = vmul.f32 %v45, %v73
  %v78 = vld [vmem:[%s3] sm:$0x1]
  %v80 = vlaneseq
  %v81 = vshrl.u32 %v80, 7
  %v82 = vsub.s32 0, %v81
  %v83 = vrot.slane %v78, %v82
  %v85 = vmul.f32 %v74, %v83
  %v86 = vmul.f32 %v75, %v83
  %v87 = vmul.f32 %v76, %v83
  %v88 = vmul.f32 %v77, %v83
  %v89 = vld [vmem:[%s4] sm:$0x1]
  %v91 = vlaneseq
  %v92 = vshrl.u32 %v91, 7
  %v93 = vsub.s32 0, %v92
  %v94 = vrot.slane %v89, %v93
  %v96 = vadd.f32 %v85, %v94
  %v97 = vadd.f32 %v86, %v94
  %v98 = vadd.f32 %v87, %v94
  %v99 = vadd.f32 %v88, %v94
  %v100 = vld [vmem:[%s1] sm:$0xff]
  %v101 = vld [vmem:[%s1 + $0x8] sm:$0xff]
  %v102 = vld [vmem:[%s1 + $0x10] sm:$0xff]
  %v103 = vld [vmem:[%s1 + $0x18] sm:$0xff]
  %v104 = vld [vmem:[%s2] sm:$0x1]
  %v106 = vlaneseq
  %v107 = vshrl.u32 %v106, 7
  %v108 = vsub.s32 0, %v107
  %v109 = vrot.slane %v104, %v108
  %v112 = vsel %vm24, %v96, 0
  %v115 = vsel %vm24, %v97, 0
  %v118 = vsel %vm24, %v98, 0
  %v121 = vsel %vm24, %v99, 0
  %123 = vmatprep.subr.mxu0 0.0
  %124 = vmatpush1.msra.mxu0 0.0
  %125 = vmatprep.subr.mxu0 0.0
  %126 = vmatpush1.msra.mxu0 0.0
  %127 = vmatprep.subr.mxu0 0.0
  %128 = vmatpush1.msra.mxu0 0.0
  %129 = vmatprep.subr.mxu0 0.0
  %130 = vmatpush1.msra.mxu0 0.0
  %131 = vmatprep.subr.mxu0 0.0
  %132 = vmatpush1.msra.mxu0 0.0
  %133 = vmatprep.subr.mxu0 0.0
  %134 = vmatpush1.msra.mxu0 0.0
  %135 = vmatprep.subr.mxu0 0.0
  %136 = vmatpush1.msra.mxu0 0.0
  %137 = vmatprep.subr.mxu0 0.0
  %138 = vmatpush1.msra.mxu0 0.0
  %139 = vmatprep.subr.mxu0 0.0
  %140 = vmatpush1.msra.mxu0 0.0
  %141 = vmatprep.subr.mxu0 0.0
  %142 = vmatpush1.msra.mxu0 0.0
  %143 = vmatprep.subr.mxu0 0.0
  %144 = vmatpush1.msra.mxu0 0.0
  %145 = vmatprep.subr.mxu0 0.0
  %146 = vmatpush1.msra.mxu0 0.0
  %147 = vmatprep.subr.mxu0 0.0
  %148 = vmatpush1.msra.mxu0 %v103
  %149 = vmatprep.subr.mxu0 0.0
  %150 = vmatpush1.msra.mxu0 %v102
  %151 = vmatprep.subr.mxu0 0.0
  %152 = vmatpush1.msra.mxu0 %v101
  %153 = vmatprep.subr.mxu0 0.0
  %154 = vmatpush1.msra.mxu0 %v100
  %155 = vmatprep.subr.mxu0 0.0
  %156 = vmatpush2.msra.mxu0 0.0
  %157 = vmatprep.subr.mxu0 0.0
  %158 = vmatpush2.msra.mxu0 0.0
  %159 = vmatprep.subr.mxu0 0.0
  %160 = vmatpush2.msra.mxu0 0.0
  %161 = vmatprep.subr.mxu0 0.0
  %162 = vmatpush2.msra.mxu0 0.0
  %163 = vmatprep.subr.mxu0 0.0
  %164 = vmatpush2.msra.mxu0 0.0
  %165 = vmatprep.subr.mxu0 0.0
  %166 = vmatpush2.msra.mxu0 0.0
  %167 = vmatprep.subr.mxu0 0.0
  %168 = vmatpush2.msra.mxu0 0.0
  %169 = vmatprep.subr.mxu0 0.0
  %170 = vmatpush2.msra.mxu0 0.0
  %171 = vmatprep.subr.mxu0 0.0
  %172 = vmatpush2.msra.mxu0 0.0
  %173 = vmatprep.subr.mxu0 0.0
  %174 = vmatpush2.msra.mxu0 0.0
  %175 = vmatprep.subr.mxu0 0.0
  %176 = vmatpush2.msra.mxu0 0.0
  %177 = vmatprep.subr.mxu0 0.0
  %178 = vmatpush2.msra.mxu0 0.0
  %179 = vmatprep.subr.mxu0 0.0
  %180 = vmatpush2.msra.mxu0 0.0
  %181 = vmatprep.subr.mxu0 0.0
  %182 = vmatpush2.msra.mxu0 0.0
  %183 = vmatprep.subr.mxu0 0.0
  %184 = vmatpush2.msra.mxu0 0.0
  %185 = vmatprep.subr.mxu0 0.0
  %186 = vmatpush2.msra.mxu0 0.0
  %187 = vmatprep.mubr.f32.mxu0 0.0
  %188 = vmatmul.mubr.f32.gmra.mxu0 %v112
  %v189 = vpop.f32.mrf.mxu0
  %v190 = vadd.f32 %v109, %v189
  %v191 = vpop.f32.mrf.mxu0
  %192 = vmatprep.mubr.f32.mxu0 0.0
  %193 = vmatmul.mubr.f32.gmra.mxu0 %v115
  %v194 = vpop.f32.mrf.mxu0
  %v195 = vadd.f32 %v109, %v194
  %v196 = vpop.f32.mrf.mxu0
  %197 = vmatprep.mubr.f32.mxu0 0.0
  %198 = vmatmul.mubr.f32.gmra.mxu0 %v118
  %v199 = vpop.f32.mrf.mxu0
  %v200 = vadd.f32 %v109, %v199
  %v201 = vpop.f32.mrf.mxu0
  %202 = vmatprep.mubr.f32.mxu0 0.0
  %203 = vmatmul.mubr.f32.gmra.mxu0 %v121
  %v204 = vpop.f32.mrf.mxu0
  %v205 = vadd.f32 %v109, %v204
  %v206 = vpop.f32.mrf.mxu0
  %207 = vdwg.mxu0
  %vm208 = vcmask 785408
  %209 = vst.msk [vmem:[%s5] sm:$0xff] %vm208, %v190
  %210 = vst.msk [vmem:[%s5 + $0x8] sm:$0xff] %vm208, %v195
  %211 = vst.msk [vmem:[%s5 + $0x10] sm:$0xff] %vm208, %v200
  %212 = vst.msk [vmem:[%s5 + $0x18] sm:$0xff] %vm208, %v205
  // Predicated region
  $region22: #{swin_forward.25} parent=0 // pred_check
    _
  $region23: #{swin_forward.25} parent=0 // pred_check_branch
    %214 = sbr.rel (0) target = $region25
  $region24: #{swin_forward.25} parent=0 // pred_region
    _
  $region25: #{swin_forward.25} parent=0 // pred_fallthru
    _
  // Predicated region
  $region26: #{swin_forward.25} parent=0 // pred_check
    _
  $region27: #{swin_forward.25} parent=0 // pred_check_branch
    %216 = sbr.rel (0) target = $region29
  $region28: #{swin_forward.25} parent=0 // pred_region
    _
  $region29: #{swin_forward.25} parent=0 // pred_fallthru
    _

// kernel: swin_forward.24
$region0: #{swin_forward.24}
  #allocation0 [shape = 'u32[]', space=smem, size = 0x4, offset = 0x4, fixed_abs, tag = 'smem constant byte address 0x4 - core index']
  #allocation1 [shape = 'u32[144,128]{1,0:T(1,128)}', space=vmem, size = 0x12000, scoped, tag = 'internal scratch']
  %s0 = inlined_call_operand.vmem [shape: f32[32,48], index: 0, kind: input, shape index: {}]
  %s1 = inlined_call_operand.vmem [shape: f32[48,32], index: 1, kind: input, shape index: {}]
  %s2 = inlined_call_operand.vmem [shape: f32[1,32], index: 2, kind: input, shape index: {}]
  %s3 = inlined_call_operand.vmem [shape: f32[1,32], index: 3, kind: input, shape index: {}]
  %s4 = inlined_call_operand.vmem [shape: f32[1,32], index: 4, kind: input, shape index: {}]
  %s5 = inlined_call_operand.vmem [shape: f32[32,32], index: 5, kind: output, shape index: {}]
  %s6 = sld [smem:[#allocation0]]
  $region30: #{swin_forward.24} parent=0
    _
  %s8 = ssub.s32 1, %s6
  %s9 = scalar_select 0, %s8, %s6
  // Predicated region
  $region2: #{swin_forward.24} parent=0 // pred_check
    _
  $region3: #{swin_forward.24} parent=0 // pred_check_branch
    %11 = sbr.rel (0) target = $region5
  $region4: #{swin_forward.24} parent=0 // pred_region
    _
  $region5: #{swin_forward.24} parent=0 // pred_fallthru
    _
  // Predicated region
  $region6: #{swin_forward.24} parent=0 // pred_check
    _
  $region7: #{swin_forward.24} parent=0 // pred_check_branch
    %13 = sbr.rel (0) target = $region9
  $region8: #{swin_forward.24} parent=0 // pred_region
    _
  $region9: #{swin_forward.24} parent=0 // pred_fallthru
    _
  // Predicated region
  $region10: #{swin_forward.24} parent=0 // pred_check
    _
  $region11: #{swin_forward.24} parent=0 // pred_check_branch
    %15 = sbr.rel (0) target = $region13
  $region12: #{swin_forward.24} parent=0 // pred_region
    _
  $region13: #{swin_forward.24} parent=0 // pred_fallthru
    _
  // Predicated region
  $region14: #{swin_forward.24} parent=0 // pred_check
    _
  $region15: #{swin_forward.24} parent=0 // pred_check_branch
    %17 = sbr.rel (0) target = $region17
  $region16: #{swin_forward.24} parent=0 // pred_region
    _
  $region17: #{swin_forward.24} parent=0 // pred_fallthru
    _
  // Predicated region
  $region18: #{swin_forward.24} parent=0 // pred_check
    _
  $region19: #{swin_forward.24} parent=0 // pred_check_branch
    %19 = sbr.rel (0) target = $region21
  $region20: #{swin_forward.24} parent=0 // pred_region
    _
  $region21: #{swin_forward.24} parent=0 // pred_fallthru
    _
  %v20 = vld [vmem:[%s0] sm:$0xff]
  %v21 = vld [vmem:[%s0 + $0x8] sm:$0xff]
  %v22 = vld [vmem:[%s0 + $0x10] sm:$0xff]
  %v23 = vld [vmem:[%s0 + $0x18] sm:$0xff]
  %v24 = vld [vmem:[%s1] sm:$0xff]
  %v25 = vld [vmem:[%s1 + $0x8] sm:$0xff]
  %v26 = vld [vmem:[%s1 + $0x10] sm:$0xff]
  %v27 = vld [vmem:[%s1 + $0x18] sm:$0xff]
  %v28 = vld [vmem:[%s1 + $0x20] sm:$0xff]
  %v29 = vld [vmem:[%s1 + $0x28] sm:$0xff]
  %v30 = vld [vmem:[%s2] sm:$0x1]
  %v32 = vlaneseq
  %v33 = vshrl.u32 %v32, 7
  %v34 = vsub.s32 0, %v33
  %v35 = vrot.slane %v30, %v34
  %vm37 = vcmask 392192
  %v39 = vsel %vm37, %v20, 0
  %v42 = vsel %vm37, %v21, 0
  %v45 = vsel %vm37, %v22, 0
  %v48 = vsel %vm37, %v23, 0
  %50 = vmatprep.subr.mxu0 0.0
  %51 = vmatpush1.msra.mxu0 0.0
  %52 = vmatprep.subr.mxu0 0.0
  %53 = vmatpush1.msra.mxu0 0.0
  %54 = vmatprep.subr.mxu0 0.0
  %55 = vmatpush1.msra.mxu0 0.0
  %56 = vmatprep.subr.mxu0 0.0
  %57 = vmatpush1.msra.mxu0 0.0
  %58 = vmatprep.subr.mxu0 0.0
  %59 = vmatpush1.msra.mxu0 0.0
  %60 = vmatprep.subr.mxu0 0.0
  %61 = vmatpush1.msra.mxu0 0.0
  %62 = vmatprep.subr.mxu0 0.0
  %63 = vmatpush1.msra.mxu0 0.0
  %64 = vmatprep.subr.mxu0 0.0
  %65 = vmatpush1.msra.mxu0 0.0
  %66 = vmatprep.subr.mxu0 0.0
  %67 = vmatpush1.msra.mxu0 0.0
  %68 = vmatprep.subr.mxu0 0.0
  %69 = vmatpush1.msra.mxu0 0.0
  %70 = vmatprep.subr.mxu0 0.0
  %71 = vmatpush1.msra.mxu0 %v29
  %72 = vmatprep.subr.mxu0 0.0
  %73 = vmatpush1.msra.mxu0 %v28
  %74 = vmatprep.subr.mxu0 0.0
  %75 = vmatpush1.msra.mxu0 %v27
  %76 = vmatprep.subr.mxu0 0.0
  %77 = vmatpush1.msra.mxu0 %v26
  %78 = vmatprep.subr.mxu0 0.0
  %79 = vmatpush1.msra.mxu0 %v25
  %80 = vmatprep.subr.mxu0 0.0
  %81 = vmatpush1.msra.mxu0 %v24
  %82 = vmatprep.subr.mxu0 0.0
  %83 = vmatpush2.msra.mxu0 0.0
  %84 = vmatprep.subr.mxu0 0.0
  %85 = vmatpush2.msra.mxu0 0.0
  %86 = vmatprep.subr.mxu0 0.0
  %87 = vmatpush2.msra.mxu0 0.0
  %88 = vmatprep.subr.mxu0 0.0
  %89 = vmatpush2.msra.mxu0 0.0
  %90 = vmatprep.subr.mxu0 0.0
  %91 = vmatpush2.msra.mxu0 0.0
  %92 = vmatprep.subr.mxu0 0.0
  %93 = vmatpush2.msra.mxu0 0.0
  %94 = vmatprep.subr.mxu0 0.0
  %95 = vmatpush2.msra.mxu0 0.0
  %96 = vmatprep.subr.mxu0 0.0
  %97 = vmatpush2.msra.mxu0 0.0
  %98 = vmatprep.subr.mxu0 0.0
  %99 = vmatpush2.msra.mxu0 0.0
  %100 = vmatprep.subr.mxu0 0.0
  %101 = vmatpush2.msra.mxu0 0.0
  %102 = vmatprep.subr.mxu0 0.0
  %103 = vmatpush2.msra.mxu0 0.0
  %104 = vmatprep.subr.mxu0 0.0
  %105 = vmatpush2.msra.mxu0 0.0
  %106 = vmatprep.subr.mxu0 0.0
  %107 = vmatpush2.msra.mxu0 0.0
  %108 = vmatprep.subr.mxu0 0.0
  %109 = vmatpush2.msra.mxu0 0.0
  %110 = vmatprep.subr.mxu0 0.0
  %111 = vmatpush2.msra.mxu0 0.0
  %112 = vmatprep.subr.mxu0 0.0
  %113 = vmatpush2.msra.mxu0 0.0
  %114 = vmatprep.mubr.f32.mxu0 0.0
  %115 = vmatmul.mubr.f32.gmra.mxu0 %v39
  %v116 = vpop.f32.mrf.mxu0
  %v117 = vadd.f32 %v35, %v116
  %v118 = vpop.f32.mrf.mxu0
  %119 = vmatprep.mubr.f32.mxu0 0.0
  %120 = vmatmul.mubr.f32.gmra.mxu0 %v42
  %v121 = vpop.f32.mrf.mxu0
  %v122 = vadd.f32 %v35, %v121
  %v123 = vpop.f32.mrf.mxu0
  %124 = vmatprep.mubr.f32.mxu0 0.0
  %125 = vmatmul.mubr.f32.gmra.mxu0 %v45
  %v126 = vpop.f32.mrf.mxu0
  %v127 = vadd.f32 %v35, %v126
  %v128 = vpop.f32.mrf.mxu0
  %129 = vmatprep.mubr.f32.mxu0 0.0
  %130 = vmatmul.mubr.f32.gmra.mxu0 %v48
  %v131 = vpop.f32.mrf.mxu0
  %v132 = vadd.f32 %v35, %v131
  %v133 = vpop.f32.mrf.mxu0
  %134 = vdwg.mxu0
  %vm135 = vcmask 261120
  %v136 = vsel %vm135, %v117, 0.0
  %137 = vadd.xlane.f32.xlu0 %v136
  %v138 = vpop.xlane.xlu0 %137
  %v139 = vsel %vm135, %v122, 0.0
  %140 = vadd.xlane.f32.xlu0 %v139
  %v141 = vpop.xlane.xlu0 %140
  %v142 = vsel %vm135, %v127, 0.0
  %143 = vadd.xlane.f32.xlu0 %v142
  %v144 = vpop.xlane.xlu0 %143
  %v145 = vsel %vm135, %v132, 0.0
  %146 = vadd.xlane.f32.xlu0 %v145
  %v147 = vpop.xlane.xlu0 %146
  %v148 = vrcp.pop 32.0
  %v149 = vmul.f32 %v138, %v148
  %v150 = vmul.f32 %v141, %v148
  %v151 = vmul.f32 %v144, %v148
  %v152 = vmul.f32 %v147, %v148
  %v153 = vsub.f32 %v117, %v149
  %v154 = vsub.f32 %v122, %v150
  %v155 = vsub.f32 %v127, %v151
  %v156 = vsub.f32 %v132, %v152
  %v157 = vmul.f32 %v153, %v153
  %v158 = vmul.f32 %v154, %v154
  %v159 = vmul.f32 %v155, %v155
  %v160 = vmul.f32 %v156, %v156
  %v161 = vsel %vm135, %v157, 0.0
  %162 = vadd.xlane.f32.xlu0 %v161
  %v163 = vpop.xlane.xlu0 %162
  %v164 = vsel %vm135, %v158, 0.0
  %165 = vadd.xlane.f32.xlu0 %v164
  %v166 = vpop.xlane.xlu0 %165
  %v167 = vsel %vm135, %v159, 0.0
  %168 = vadd.xlane.f32.xlu0 %v167
  %v169 = vpop.xlane.xlu0 %168
  %v170 = vsel %vm135, %v160, 0.0
  %171 = vadd.xlane.f32.xlu0 %v170
  %v172 = vpop.xlane.xlu0 %171
  %v173 = vmul.f32 %v163, %v148
  %v174 = vmul.f32 %v166, %v148
  %v175 = vmul.f32 %v169, %v148
  %v176 = vmul.f32 %v172, %v148
  %v177 = vadd.f32 %v173, 1e-06
  %v178 = vadd.f32 %v174, 1e-06
  %v179 = vadd.f32 %v175, 1e-06
  %v180 = vadd.f32 %v176, 1e-06
  %v181 = vrsqrt.pop %v177
  %v182 = vrsqrt.pop %v178
  %v183 = vrsqrt.pop %v179
  %v184 = vrsqrt.pop %v180
  %v185 = vmul.f32 %v153, %v181
  %v186 = vmul.f32 %v154, %v182
  %v187 = vmul.f32 %v155, %v183
  %v188 = vmul.f32 %v156, %v184
  %v189 = vld [vmem:[%s3] sm:$0x1]
  %v191 = vlaneseq
  %v192 = vshrl.u32 %v191, 7
  %v193 = vsub.s32 0, %v192
  %v194 = vrot.slane %v189, %v193
  %v196 = vmul.f32 %v185, %v194
  %v197 = vmul.f32 %v186, %v194
  %v198 = vmul.f32 %v187, %v194
  %v199 = vmul.f32 %v188, %v194
  %v200 = vld [vmem:[%s4] sm:$0x1]
  %v202 = vlaneseq
  %v203 = vshrl.u32 %v202, 7
  %v204 = vsub.s32 0, %v203
  %v205 = vrot.slane %v200, %v204
  %v207 = vadd.f32 %v196, %v205
  %v208 = vadd.f32 %v197, %v205
  %v209 = vadd.f32 %v198, %v205
  %v210 = vadd.f32 %v199, %v205
  %211 = vst.msk [vmem:[%s5] sm:$0xff] %vm135, %v207
  %212 = vst.msk [vmem:[%s5 + $0x8] sm:$0xff] %vm135, %v208
  %213 = vst.msk [vmem:[%s5 + $0x10] sm:$0xff] %vm135, %v209
  %214 = vst.msk [vmem:[%s5 + $0x18] sm:$0xff] %vm135, %v210
  // Predicated region
  $region22: #{swin_forward.24} parent=0 // pred_check
    _
  $region23: #{swin_forward.24} parent=0 // pred_check_branch
    %216 = sbr.rel (0) target = $region25
  $region24: #{swin_forward.24} parent=0 // pred_region
    _
  $region25: #{swin_forward.24} parent=0 // pred_fallthru
    _
  // Predicated region
  $region26: #{swin_forward.24} parent=0 // pred_check
    _
  $region27: #{swin_forward.24} parent=0 // pred_check_branch
    %218 = sbr.rel (0) target = $region29
  $region28: #{swin_forward.24} parent=0 // pred_region
    _
  $region29: #{swin_forward.24} parent=0 // pred_fallthru
    _

// kernel: swin_forward.26
$region0: #{swin_forward.26}
  #allocation0 [shape = 'u32[]', space=smem, size = 0x4, offset = 0x4, fixed_abs, tag = 'smem constant byte address 0x4 - core index']
  #allocation1 [shape = 'u32[144,128]{1,0:T(1,128)}', space=vmem, size = 0x12000, scoped, tag = 'internal scratch']
  %s0 = inlined_call_operand.vmem [shape: f32[8,4,96], index: 0, kind: input, shape index: {}]
  %s1 = inlined_call_operand.vmem [shape: f32[2,4,4], index: 1, kind: input, shape index: {}]
  %s2 = inlined_call_operand.vmem [shape: f32[8,4,32], index: 2, kind: output, shape index: {}]
  %s3 = sld [smem:[#allocation0]]
  $region41: #{swin_forward.26} parent=0
    _
  %s5 = ssub.s32 1, %s3
  %s6 = scalar_select 0, %s5, %s3
  loop: start=0, step=1, limit=4
  $region2: #{swin_forward.26} parent=0 // loop_pre_header
    _
  $region3: #{swin_forward.26} parent=0 // loop_header
    %s8 = sphi 0, %s12
    %p9 = scmp.ge.s32.totalorder %s8, 4
    %s18 = sphi 0, %s20
    %s21 = sphi 0, %s18
    %s22 = sphi 0, %s21
    %s38 = sphi 0, %s22
    %s42 = sphi 0, %s42
    %s44 = sphi 0, %s42
    %s45 = sphi 0, %s44
    %s59 = sphi 0, %s45
    %s65 = sphi 0, %s67
    %s68 = sphi 0, %s65
    %s69 = sphi 0, %s68
    %s85 = sphi 0, %s69
  $region4: #{swin_forward.26} parent=0 // loop_header_branch
    %11 = sbr.rel (%p9) target = $region8
  $region5: #{swin_forward.26} parent=0 // loop_body
    %s13 = ssub.s32 %s8, 1
    %s14 = ssub.s32 %s8, 2
    %s15 = sadd.s32 %s8, 1
    %s16 = ssub.s32 %s8, %s15
    %p17 = scmp.eq.s32.totalorder %s16, 0
    %s19 = sadd.s32 %s18, 1
    %s20 = scalar_select %p17, %s18, %s19
    %p23 = pneg %p17
    %p24 = scmp.eq.s32.totalorder %s8, 1
    %p25 = por %p23, %p24
    %p26 = scmp.ne.s32.totalorder %s18, %s21
    %p27 = scmp.eq.s32.totalorder %s8, 0
    %p28 = por %p26, %p27
    %p29 = scmp.ne.s32.totalorder %s18, %s21
    %p30 = scmp.eq.s32.totalorder %s13, 1
    %p31 = por %p29, %p30
    %p32 = scmp.ne.s32.totalorder %s21, %s22
    %p33 = scmp.eq.s32.totalorder %s13, 0
    %p34 = por %p32, %p33
    %p35 = scmp.ne.s32.totalorder %s21, %s22
    %p36 = scmp.eq.s32.totalorder %s14, 1
    %p37 = por %p35, %p36
    %p39 = scmp.ne.s32.totalorder %s22, %s38
    %p40 = scmp.eq.s32.totalorder %s14, 0
    %p41 = por %p39, %p40
    %s43 = sadd.s32 %s42, 1
    %p46 = scmp.eq.s32.totalorder %s8, 1
    %p47 = scmp.ne.s32.totalorder %s42, %s44
    %p48 = scmp.eq.s32.totalorder %s8, 0
    %p49 = por %p47, %p48
    %p50 = scmp.ne.s32.totalorder %s42, %s44
    %p51 = scmp.eq.s32.totalorder %s13, 1
    %p52 = por %p50, %p51
    %p53 = scmp.ne.s32.totalorder %s44, %s45
    %p54 = scmp.eq.s32.totalorder %s13, 0
    %p55 = por %p53, %p54
    %p56 = scmp.ne.s32.totalorder %s44, %s45
    %p57 = scmp.eq.s32.totalorder %s14, 1
    %p58 = por %p56, %p57
    %p60 = scmp.ne.s32.totalorder %s45, %s59
    %p61 = scmp.eq.s32.totalorder %s14, 0
    %p62 = por %p60, %p61
    %s63 = ssub.s32 %s8, %s15
    %p64 = scmp.eq.s32.totalorder %s63, 0
    %s66 = sadd.s32 %s65, 1
    %s67 = scalar_select %p64, %s65, %s66
    %p70 = pneg %p64
    %p71 = scmp.eq.s32.totalorder %s8, 1
    %p72 = por %p70, %p71
    %p73 = scmp.ne.s32.totalorder %s65, %s68
    %p74 = scmp.eq.s32.totalorder %s8, 0
    %p75 = por %p73, %p74
    %p76 = scmp.ne.s32.totalorder %s65, %s68
    %p77 = scmp.eq.s32.totalorder %s13, 1
    %p78 = por %p76, %p77
    %p79 = scmp.ne.s32.totalorder %s68, %s69
    %p80 = scmp.eq.s32.totalorder %s13, 0
    %p81 = por %p79, %p80
    %p82 = scmp.ne.s32.totalorder %s68, %s69
    %p83 = scmp.eq.s32.totalorder %s14, 1
    %p84 = por %p82, %p83
    %p86 = scmp.ne.s32.totalorder %s69, %s85
    %p87 = scmp.eq.s32.totalorder %s14, 0
    %p88 = por %p86, %p87
    %p89 = scmp.le.s32.totalorder 1, %s8
    %p90 = scmp.lt.s32.totalorder %s8, 3
    %p91 = pnand %p89, %p90
    %p92 = pneg %p91
    // Predicated region
    $region9: #{swin_forward.26} parent=5 // pred_check
      _
    $region10: #{swin_forward.26} parent=5 // pred_check_branch
      %94 = sbr.rel (%p91) target = $region12
    $region11: #{swin_forward.26} parent=5 // pred_region
      %s95 = ssub.s32 %s8, 1
      // Predicated region
      $region13: #{swin_forward.26} parent=11 // pred_check
        %p96 = pneg %p55
      $region14: #{swin_forward.26} parent=11 // pred_check_branch
        %98 = sbr.rel (%p96) target = $region16
      $region15: #{swin_forward.26} parent=11 // pred_region
        _
      $region16: #{swin_forward.26} parent=11 // pred_fallthru
        _
    $region12: #{swin_forward.26} parent=5 // pred_fallthru
      _
    %p99 = scmp.lt.s32.totalorder %s8, 2
    // Predicated region
    $region17: #{swin_forward.26} parent=5 // pred_check
      %p100 = pneg %p99
    $region18: #{swin_forward.26} parent=5 // pred_check_branch
      %102 = sbr.rel (%p100) target = $region20
    $region19: #{swin_forward.26} parent=5 // pred_region
      // Predicated region
      $region21: #{swin_forward.26} parent=19 // pred_check
        %p103 = pneg %p28
      $region22: #{swin_forward.26} parent=19 // pred_check_branch
        %105 = sbr.rel (%p103) target = $region24
      $region23: #{swin_forward.26} parent=19 // pred_region
        %s106 = smul.u32 4, %s8
        %p107 = scmp.lt.s32.totalorder %s106, 7
        %s108 = scalar_select %p107, %s106, 7
        %s109 = smul.addr %s108, 4
        %s110 = scalar_lea.vmem %s0, %s109
        %s111 = smul.u32 4, %s8
      $region24: #{swin_forward.26} parent=19 // pred_fallthru
        _
    $region20: #{swin_forward.26} parent=5 // pred_fallthru
      _
    %p112 = scmp.le.s32.totalorder 1, %s8
    %p113 = scmp.lt.s32.totalorder %s8, 3
    %p114 = pnand %p112, %p113
    %p115 = pneg %p114
    // Predicated region
    $region25: #{swin_forward.26} parent=5 // pred_check
      _
    $region26: #{swin_forward.26} parent=5 // pred_check_branch
      %117 = sbr.rel (%p114) target = $region28
    $region27: #{swin_forward.26} parent=5 // pred_region
      %s118 = ssub.s32 %s8, 1
      %s119 = smul.u32 4, %s13
      %p120 = scmp.lt.s32.totalorder %s119, 7
      %s121 = scalar_select %p120, %s119, 7
      %s122 = smul.addr %s121, 4
      %s123 = scalar_lea.vmem %s0, %s122
      %p124 = pneg %p34
      %p125 = pneg %p31
      %p126 = pneg %p55
      %p127 = pneg %p52
      %p128 = pneg %p81
      %p129 = pneg %p78
      %s130 = smul.u32 4, %s13
      %p131 = scmp.lt.s32.totalorder %s130, 7
      %s132 = scalar_select %p131, %s130, 7
      %s133 = smul.addr %s132, 4
      %s134 = scalar_lea.vmem %s2, %s133
      %s135 = smul.u32 4, %s13
      %p136 = scmp.lt.s32.totalorder %s135, 7
      %s137 = scalar_select %p136, %s135, 7
      %s138 = smul.addr %s137, 4
      %s139 = scalar_lea.vmem %s0, %s138
      %s140 = smul.u32 4, %s13
      %s141 = smul.u32 4, %s13
      %p142 = scmp.lt.s32.totalorder %s141, 7
      %s143 = scalar_select %p142, %s141, 7
      %s144 = smul.addr %s143, 4
      %s145 = scalar_lea.vmem %s2, %s144
      %s146 = smul.u32 4, %s13
      %v147 = vld [vmem:[%s139] sm:$0xf]
      %v148 = vld [vmem:[%s139 + $0x4] sm:$0xf]
      %v149 = vld [vmem:[%s139 + $0x8] sm:$0xf]
      %v150 = vld [vmem:[%s139 + $0xc] sm:$0xf]
      %v151 = vld [vmem:[%s1] sm:$0xf]
      %v152 = vld [vmem:[%s1 + $0x4] sm:$0xf]
      %v153 = vmul.f32 %v147, 0.25
      %v154 = vmul.f32 %v148, 0.25
      %v155 = vmul.f32 %v149, 0.25
      %v156 = vmul.f32 %v150, 0.25
      %158 = vrot.lane.b32.xlu0 %v147, 96
      %v159 = vpop.permute.xlu0 %158
      %vm160 = vcmask 130048
      %v162 = vsel %vm160, %v153, 0
      %v164 = vsel %vm160, %v159, 0
      %166 = vmatprep.subr.mxu0 0.0
      %167 = vmatpush1.xpose.msra.mxu0 0.0
      %168 = vmatprep.subr.mxu0 0.0
      %169 = vmatpush1.xpose.msra.mxu0 0.0
      %170 = vmatprep.subr.mxu0 0.0
      %171 = vmatpush1.xpose.msra.mxu0 0.0
      %172 = vmatprep.subr.mxu0 0.0
      %173 = vmatpush1.xpose.msra.mxu0 0.0
      %174 = vmatprep.subr.mxu0 0.0
      %175 = vmatpush1.xpose.msra.mxu0 0.0
      %176 = vmatprep.subr.mxu0 0.0
      %177 = vmatpush1.xpose.msra.mxu0 0.0
      %178 = vmatprep.subr.mxu0 0.0
      %179 = vmatpush1.xpose.msra.mxu0 0.0
      %180 = vmatprep.subr.mxu0 0.0
      %181 = vmatpush1.xpose.msra.mxu0 0.0
      %182 = vmatprep.subr.mxu0 0.0
      %183 = vmatpush1.xpose.msra.mxu0 0.0
      %184 = vmatprep.subr.mxu0 0.0
      %185 = vmatpush1.xpose.msra.mxu0 0.0
      %186 = vmatprep.subr.mxu0 0.0
      %187 = vmatpush1.xpose.msra.mxu0 0.0
      %188 = vmatprep.subr.mxu0 0.0
      %189 = vmatpush1.xpose.msra.mxu0 0.0
      %190 = vmatprep.subr.mxu0 0.0
      %191 = vmatpush1.xpose.msra.mxu0 0.0
      %192 = vmatprep.subr.mxu0 0.0
      %193 = vmatpush1.xpose.msra.mxu0 0.0
      %194 = vmatprep.subr.mxu0 0.0
      %195 = vmatpush1.xpose.msra.mxu0 0.0
      %196 = vmatprep.subr.mxu0 0.0
      %197 = vmatpush1.xpose.msra.mxu0 %v164
      %198 = vmatprep.subr.mxu0 0.0
      %199 = vmatpush2.xpose.msra.mxu0 0.0
      %200 = vmatprep.subr.mxu0 0.0
      %201 = vmatpush2.xpose.msra.mxu0 0.0
      %202 = vmatprep.subr.mxu0 0.0
      %203 = vmatpush2.xpose.msra.mxu0 0.0
      %204 = vmatprep.subr.mxu0 0.0
      %205 = vmatpush2.xpose.msra.mxu0 0.0
      %206 = vmatprep.subr.mxu0 0.0
      %207 = vmatpush2.xpose.msra.mxu0 0.0
      %208 = vmatprep.subr.mxu0 0.0
      %209 = vmatpush2.xpose.msra.mxu0 0.0
      %210 = vmatprep.subr.mxu0 0.0
      %211 = vmatpush2.xpose.msra.mxu0 0.0
      %212 = vmatprep.subr.mxu0 0.0
      %213 = vmatpush2.xpose.msra.mxu0 0.0
      %214 = vmatprep.subr.mxu0 0.0
      %215 = vmatpush2.xpose.msra.mxu0 0.0
      %216 = vmatprep.subr.mxu0 0.0
      %217 = vmatpush2.xpose.msra.mxu0 0.0
      %218 = vmatprep.subr.mxu0 0.0
      %219 = vmatpush2.xpose.msra.mxu0 0.0
      %220 = vmatprep.subr.mxu0 0.0
      %221 = vmatpush2.xpose.msra.mxu0 0.0
      %222 = vmatprep.subr.mxu0 0.0
      %223 = vmatpush2.xpose.msra.mxu0 0.0
      %224 = vmatprep.subr.mxu0 0.0
      %225 = vmatpush2.xpose.msra.mxu0 0.0
      %226 = vmatprep.subr.mxu0 0.0
      %227 = vmatpush2.xpose.msra.mxu0 0.0
      %228 = vmatprep.subr.mxu0 0.0
      %229 = vmatpush2.xpose.msra.mxu0 0.0
      %230 = vmatprep.mubr.f32.mxu0 0.0
      %231 = vmatmul.mubr.f32.gmra.mxu0 %v162
      %v232 = vpop.f32.mrf.mxu0
      %v233 = vadd.f32 %v151, %v232
      %v234 = vpop.f32.mrf.mxu0
      %235 = vdwg.mxu0
      %237 = vrot.lane.b32.xlu0 %v148, 96
      %v238 = vpop.permute.xlu0 %237
      %v240 = vsel %vm160, %v154, 0
      %v242 = vsel %vm160, %v238, 0
      %244 = vmatprep.subr.mxu0 0.0
      %245 = vmatpush1.xpose.msra.mxu0 0.0
      %246 = vmatprep.subr.mxu0 0.0
      %247 = vmatpush1.xpose.msra.mxu0 0.0
      %248 = vmatprep.subr.mxu0 0.0
      %249 = vmatpush1.xpose.msra.mxu0 0.0
      %250 = vmatprep.subr.mxu0 0.0
      %251 = vmatpush1.xpose.msra.mxu0 0.0
      %252 = vmatprep.subr.mxu0 0.0
      %253 = vmatpush1.xpose.msra.mxu0 0.0
      %254 = vmatprep.subr.mxu0 0.0
      %255 = vmatpush1.xpose.msra.mxu0 0.0
      %256 = vmatprep.subr.mxu0 0.0
      %257 = vmatpush1.xpose.msra.mxu0 0.0
      %258 = vmatprep.subr.mxu0 0.0
      %259 = vmatpush1.xpose.msra.mxu0 0.0
      %260 = vmatprep.subr.mxu0 0.0
      %261 = vmatpush1.xpose.msra.mxu0 0.0
      %262 = vmatprep.subr.mxu0 0.0
      %263 = vmatpush1.xpose.msra.mxu0 0.0
      %264 = vmatprep.subr.mxu0 0.0
      %265 = vmatpush1.xpose.msra.mxu0 0.0
      %266 = vmatprep.subr.mxu0 0.0
      %267 = vmatpush1.xpose.msra.mxu0 0.0
      %268 = vmatprep.subr.mxu0 0.0
      %269 = vmatpush1.xpose.msra.mxu0 0.0
      %270 = vmatprep.subr.mxu0 0.0
      %271 = vmatpush1.xpose.msra.mxu0 0.0
      %272 = vmatprep.subr.mxu0 0.0
      %273 = vmatpush1.xpose.msra.mxu0 0.0
      %274 = vmatprep.subr.mxu0 0.0
      %275 = vmatpush1.xpose.msra.mxu0 %v242
      %276 = vmatprep.subr.mxu0 0.0
      %277 = vmatpush2.xpose.msra.mxu0 0.0
      %278 = vmatprep.subr.mxu0 0.0
      %279 = vmatpush2.xpose.msra.mxu0 0.0
      %280 = vmatprep.subr.mxu0 0.0
      %281 = vmatpush2.xpose.msra.mxu0 0.0
      %282 = vmatprep.subr.mxu0 0.0
      %283 = vmatpush2.xpose.msra.mxu0 0.0
      %284 = vmatprep.subr.mxu0 0.0
      %285 = vmatpush2.xpose.msra.mxu0 0.0
      %286 = vmatprep.subr.mxu0 0.0
      %287 = vmatpush2.xpose.msra.mxu0 0.0
      %288 = vmatprep.subr.mxu0 0.0
      %289 = vmatpush2.xpose.msra.mxu0 0.0
      %290 = vmatprep.subr.mxu0 0.0
      %291 = vmatpush2.xpose.msra.mxu0 0.0
      %292 = vmatprep.subr.mxu0 0.0
      %293 = vmatpush2.xpose.msra.mxu0 0.0
      %294 = vmatprep.subr.mxu0 0.0
      %295 = vmatpush2.xpose.msra.mxu0 0.0
      %296 = vmatprep.subr.mxu0 0.0
      %297 = vmatpush2.xpose.msra.mxu0 0.0
      %298 = vmatprep.subr.mxu0 0.0
      %299 = vmatpush2.xpose.msra.mxu0 0.0
      %300 = vmatprep.subr.mxu0 0.0
      %301 = vmatpush2.xpose.msra.mxu0 0.0
      %302 = vmatprep.subr.mxu0 0.0
      %303 = vmatpush2.xpose.msra.mxu0 0.0
      %304 = vmatprep.subr.mxu0 0.0
      %305 = vmatpush2.xpose.msra.mxu0 0.0
      %306 = vmatprep.subr.mxu0 0.0
      %307 = vmatpush2.xpose.msra.mxu0 0.0
      %308 = vmatprep.mubr.f32.mxu0 0.0
      %309 = vmatmul.mubr.f32.gmra.mxu0 %v240
      %v310 = vpop.f32.mrf.mxu0
      %v311 = vadd.f32 %v151, %v310
      %v312 = vpop.f32.mrf.mxu0
      %313 = vdwg.mxu0
      %315 = vrot.lane.b32.xlu0 %v149, 96
      %v316 = vpop.permute.xlu0 %315
      %v318 = vsel %vm160, %v155, 0
      %v320 = vsel %vm160, %v316, 0
      %322 = vmatprep.subr.mxu0 0.0
      %323 = vmatpush1.xpose.msra.mxu0 0.0
      %324 = vmatprep.subr.mxu0 0.0
      %325 = vmatpush1.xpose.msra.mxu0 0.0
      %326 = vmatprep.subr.mxu0 0.0
      %327 = vmatpush1.xpose.msra.mxu0 0.0
      %328 = vmatprep.subr.mxu0 0.0
      %329 = vmatpush1.xpose.msra.mxu0 0.0
      %330 = vmatprep.subr.mxu0 0.0
      %331 = vmatpush1.xpose.msra.mxu0 0.0
      %332 = vmatprep.subr.mxu0 0.0
      %333 = vmatpush1.xpose.msra.mxu0 0.0
      %334 = vmatprep.subr.mxu0 0.0
      %335 = vmatpush1.xpose.msra.mxu0 0.0
      %336 = vmatprep.subr.mxu0 0.0
      %337 = vmatpush1.xpose.msra.mxu0 0.0
      %338 = vmatprep.subr.mxu0 0.0
      %339 = vmatpush1.xpose.msra.mxu0 0.0
      %340 = vmatprep.subr.mxu0 0.0
      %341 = vmatpush1.xpose.msra.mxu0 0.0
      %342 = vmatprep.subr.mxu0 0.0
      %343 = vmatpush1.xpose.msra.mxu0 0.0
      %344 = vmatprep.subr.mxu0 0.0
      %345 = vmatpush1.xpose.msra.mxu0 0.0
      %346 = vmatprep.subr.mxu0 0.0
      %347 = vmatpush1.xpose.msra.mxu0 0.0
      %348 = vmatprep.subr.mxu0 0.0
      %349 = vmatpush1.xpose.msra.mxu0 0.0
      %350 = vmatprep.subr.mxu0 0.0
      %351 = vmatpush1.xpose.msra.mxu0 0.0
      %352 = vmatprep.subr.mxu0 0.0
      %353 = vmatpush1.xpose.msra.mxu0 %v320
      %354 = vmatprep.subr.mxu0 0.0
      %355 = vmatpush2.xpose.msra.mxu0 0.0
      %356 = vmatprep.subr.mxu0 0.0
      %357 = vmatpush2.xpose.msra.mxu0 0.0
      %358 = vmatprep.subr.mxu0 0.0
      %359 = vmatpush2.xpose.msra.mxu0 0.0
      %360 = vmatprep.subr.mxu0 0.0
      %361 = vmatpush2.xpose.msra.mxu0 0.0
      %362 = vmatprep.subr.mxu0 0.0
      %363 = vmatpush2.xpose.msra.mxu0 0.0
      %364 = vmatprep.subr.mxu0 0.0
      %365 = vmatpush2.xpose.msra.mxu0 0.0
      %366 = vmatprep.subr.mxu0 0.0
      %367 = vmatpush2.xpose.msra.mxu0 0.0
      %368 = vmatprep.subr.mxu0 0.0
      %369 = vmatpush2.xpose.msra.mxu0 0.0
      %370 = vmatprep.subr.mxu0 0.0
      %371 = vmatpush2.xpose.msra.mxu0 0.0
      %372 = vmatprep.subr.mxu0 0.0
      %373 = vmatpush2.xpose.msra.mxu0 0.0
      %374 = vmatprep.subr.mxu0 0.0
      %375 = vmatpush2.xpose.msra.mxu0 0.0
      %376 = vmatprep.subr.mxu0 0.0
      %377 = vmatpush2.xpose.msra.mxu0 0.0
      %378 = vmatprep.subr.mxu0 0.0
      %379 = vmatpush2.xpose.msra.mxu0 0.0
      %380 = vmatprep.subr.mxu0 0.0
      %381 = vmatpush2.xpose.msra.mxu0 0.0
      %382 = vmatprep.subr.mxu0 0.0
      %383 = vmatpush2.xpose.msra.mxu0 0.0
      %384 = vmatprep.subr.mxu0 0.0
      %385 = vmatpush2.xpose.msra.mxu0 0.0
      %386 = vmatprep.mubr.f32.mxu0 0.0
      %387 = vmatmul.mubr.f32.gmra.mxu0 %v318
      %v388 = vpop.f32.mrf.mxu0
      %v389 = vadd.f32 %v151, %v388
      %v390 = vpop.f32.mrf.mxu0
      %391 = vdwg.mxu0
      %393 = vrot.lane.b32.xlu0 %v150, 96
      %v394 = vpop.permute.xlu0 %393
      %v396 = vsel %vm160, %v156, 0
      %v398 = vsel %vm160, %v394, 0
      %400 = vmatprep.subr.mxu0 0.0
      %401 = vmatpush1.xpose.msra.mxu0 0.0
      %402 = vmatprep.subr.mxu0 0.0
      %403 = vmatpush1.xpose.msra.mxu0 0.0
      %404 = vmatprep.subr.mxu0 0.0
      %405 = vmatpush1.xpose.msra.mxu0 0.0
      %406 = vmatprep.subr.mxu0 0.0
      %407 = vmatpush1.xpose.msra.mxu0 0.0
      %408 = vmatprep.subr.mxu0 0.0
      %409 = vmatpush1.xpose.msra.mxu0 0.0
      %410 = vmatprep.subr.mxu0 0.0
      %411 = vmatpush1.xpose.msra.mxu0 0.0
      %412 = vmatprep.subr.mxu0 0.0
      %413 = vmatpush1.xpose.msra.mxu0 0.0
      %414 = vmatprep.subr.mxu0 0.0
      %415 = vmatpush1.xpose.msra.mxu0 0.0
      %416 = vmatprep.subr.mxu0 0.0
      %417 = vmatpush1.xpose.msra.mxu0 0.0
      %418 = vmatprep.subr.mxu0 0.0
      %419 = vmatpush1.xpose.msra.mxu0 0.0
      %420 = vmatprep.subr.mxu0 0.0
      %421 = vmatpush1.xpose.msra.mxu0 0.0
      %422 = vmatprep.subr.mxu0 0.0
      %423 = vmatpush1.xpose.msra.mxu0 0.0
      %424 = vmatprep.subr.mxu0 0.0
      %425 = vmatpush1.xpose.msra.mxu0 0.0
      %426 = vmatprep.subr.mxu0 0.0
      %427 = vmatpush1.xpose.msra.mxu0 0.0
      %428 = vmatprep.subr.mxu0 0.0
      %429 = vmatpush1.xpose.msra.mxu0 0.0
      %430 = vmatprep.subr.mxu0 0.0
      %431 = vmatpush1.xpose.msra.mxu0 %v398
      %432 = vmatprep.subr.mxu0 0.0
      %433 = vmatpush2.xpose.msra.mxu0 0.0
      %434 = vmatprep.subr.mxu0 0.0
      %435 = vmatpush2.xpose.msra.mxu0 0.0
      %436 = vmatprep.subr.mxu0 0.0
      %437 = vmatpush2.xpose.msra.mxu0 0.0
      %438 = vmatprep.subr.mxu0 0.0
      %439 = vmatpush2.xpose.msra.mxu0 0.0
      %440 = vmatprep.subr.mxu0 0.0
      %441 = vmatpush2.xpose.msra.mxu0 0.0
      %442 = vmatprep.subr.mxu0 0.0
      %443 = vmatpush2.xpose.msra.mxu0 0.0
      %444 = vmatprep.subr.mxu0 0.0
      %445 = vmatpush2.xpose.msra.mxu0 0.0
      %446 = vmatprep.subr.mxu0 0.0
      %447 = vmatpush2.xpose.msra.mxu0 0.0
      %448 = vmatprep.subr.mxu0 0.0
      %449 = vmatpush2.xpose.msra.mxu0 0.0
      %450 = vmatprep.subr.mxu0 0.0
      %451 = vmatpush2.xpose.msra.mxu0 0.0
      %452 = vmatprep.subr.mxu0 0.0
      %453 = vmatpush2.xpose.msra.mxu0 0.0
      %454 = vmatprep.subr.mxu0 0.0
      %455 = vmatpush2.xpose.msra.mxu0 0.0
      %456 = vmatprep.subr.mxu0 0.0
      %457 = vmatpush2.xpose.msra.mxu0 0.0
      %458 = vmatprep.subr.mxu0 0.0
      %459 = vmatpush2.xpose.msra.mxu0 0.0
      %460 = vmatprep.subr.mxu0 0.0
      %461 = vmatpush2.xpose.msra.mxu0 0.0
      %462 = vmatprep.subr.mxu0 0.0
      %463 = vmatpush2.xpose.msra.mxu0 0.0
      %464 = vmatprep.mubr.f32.mxu0 0.0
      %465 = vmatmul.mubr.f32.gmra.mxu0 %v396
      %v466 = vpop.f32.mrf.mxu0
      %v467 = vadd.f32 %v151, %v466
      %v468 = vpop.f32.mrf.mxu0
      %469 = vdwg.mxu0
      %vm470 = vcmask 27648
      %v471 = vsel %vm470, %v233, -inf
      %472 = vmax.xlane.f32.xlu0 %v471
      %v473 = vpop.xlane.xlu0 %472
      %v474 = vsel %vm470, %v311, -inf
      %475 = vmax.xlane.f32.xlu0 %v474
      %v476 = vpop.xlane.xlu0 %475
      %v477 = vsel %vm470, %v389, -inf
      %478 = vmax.xlane.f32.xlu0 %v477
      %v479 = vpop.xlane.xlu0 %478
      %v480 = vsel %vm470, %v467, -inf
      %481 = vmax.xlane.f32.xlu0 %v480
      %v482 = vpop.xlane.xlu0 %481
      %v483 = vsub.f32 %v233, %v473
      %v484 = vsub.f32 %v311, %v476
      %v485 = vsub.f32 %v389, %v479
      %v486 = vsub.f32 %v467, %v482
      %v487 = vmul.f32 %v483, 1.442695
      %v488 = vpow.pop %v487
      %v489 = vmul.f32 %v484, 1.442695
      %v490 = vpow.pop %v489
      %v491 = vmul.f32 %v485, 1.442695
      %v492 = vpow.pop %v491
      %v493 = vmul.f32 %v486, 1.442695
      %v494 = vpow.pop %v493
      %v495 = vsel %vm470, %v488, 0.0
      %496 = vadd.xlane.f32.xlu0 %v495
      %v497 = vpop.xlane.xlu0 %496
      %v498 = vsel %vm470, %v490, 0.0
      %499 = vadd.xlane.f32.xlu0 %v498
      %v500 = vpop.xlane.xlu0 %499
      %v501 = vsel %vm470, %v492, 0.0
      %502 = vadd.xlane.f32.xlu0 %v501
      %v503 = vpop.xlane.xlu0 %502
      %v504 = vsel %vm470, %v494, 0.0
      %505 = vadd.xlane.f32.xlu0 %v504
      %v506 = vpop.xlane.xlu0 %505
      %v507 = vrcp.pop %v497
      %v508 = vrcp.pop %v500
      %v509 = vrcp.pop %v503
      %v510 = vrcp.pop %v506
      %v511 = vmul.f32 %v488, %v507
      %v512 = vmul.f32 %v490, %v508
      %v513 = vmul.f32 %v492, %v509
      %v514 = vmul.f32 %v494, %v510
      %515 = vrot.lane.b32.xlu0 %v147, 64
      %v516 = vpop.permute.xlu0 %515
      %vm517 = vcmask 31744
      %v519 = vsel %vm517, %v511, 0
      %vm521 = vcmask 1043456
      %v522 = vsel %vm521, %v516, 0
      %524 = vmatprep.subr.mxu0 0.0
      %525 = vmatpush1.msra.mxu0 0.0
      %526 = vmatprep.subr.mxu0 0.0
      %527 = vmatpush1.msra.mxu0 0.0
      %528 = vmatprep.subr.mxu0 0.0
      %529 = vmatpush1.msra.mxu0 0.0
      %530 = vmatprep.subr.mxu0 0.0
      %531 = vmatpush1.msra.mxu0 0.0
      %532 = vmatprep.subr.mxu0 0.0
      %533 = vmatpush1.msra.mxu0 0.0
      %534 = vmatprep.subr.mxu0 0.0
      %535 = vmatpush1.msra.mxu0 0.0
      %536 = vmatprep.subr.mxu0 0.0
      %537 = vmatpush1.msra.mxu0 0.0
      %538 = vmatprep.subr.mxu0 0.0
      %539 = vmatpush1.msra.mxu0 0.0
      %540 = vmatprep.subr.mxu0 0.0
      %541 = vmatpush1.msra.mxu0 0.0
      %542 = vmatprep.subr.mxu0 0.0
      %543 = vmatpush1.msra.mxu0 0.0
      %544 = vmatprep.subr.mxu0 0.0
      %545 = vmatpush1.msra.mxu0 0.0
      %546 = vmatprep.subr.mxu0 0.0
      %547 = vmatpush1.msra.mxu0 0.0
      %548 = vmatprep.subr.mxu0 0.0
      %549 = vmatpush1.msra.mxu0 0.0
      %550 = vmatprep.subr.mxu0 0.0
      %551 = vmatpush1.msra.mxu0 0.0
      %552 = vmatprep.subr.mxu0 0.0
      %553 = vmatpush1.msra.mxu0 0.0
      %554 = vmatprep.subr.mxu0 0.0
      %555 = vmatpush1.msra.mxu0 %v522
      %556 = vmatprep.subr.mxu0 0.0
      %557 = vmatpush2.msra.mxu0 0.0
      %558 = vmatprep.subr.mxu0 0.0
      %559 = vmatpush2.msra.mxu0 0.0
      %560 = vmatprep.subr.mxu0 0.0
      %561 = vmatpush2.msra.mxu0 0.0
      %562 = vmatprep.subr.mxu0 0.0
      %563 = vmatpush2.msra.mxu0 0.0
      %564 = vmatprep.subr.mxu0 0.0
      %565 = vmatpush2.msra.mxu0 0.0
      %566 = vmatprep.subr.mxu0 0.0
      %567 = vmatpush2.msra.mxu0 0.0
      %568 = vmatprep.subr.mxu0 0.0
      %569 = vmatpush2.msra.mxu0 0.0
      %570 = vmatprep.subr.mxu0 0.0
      %571 = vmatpush2.msra.mxu0 0.0
      %572 = vmatprep.subr.mxu0 0.0
      %573 = vmatpush2.msra.mxu0 0.0
      %574 = vmatprep.subr.mxu0 0.0
      %575 = vmatpush2.msra.mxu0 0.0
      %576 = vmatprep.subr.mxu0 0.0
      %577 = vmatpush2.msra.mxu0 0.0
      %578 = vmatprep.subr.mxu0 0.0
      %579 = vmatpush2.msra.mxu0 0.0
      %580 = vmatprep.subr.mxu0 0.0
      %581 = vmatpush2.msra.mxu0 0.0
      %582 = vmatprep.subr.mxu0 0.0
      %583 = vmatpush2.msra.mxu0 0.0
      %584 = vmatprep.subr.mxu0 0.0
      %585 = vmatpush2.msra.mxu0 0.0
      %586 = vmatprep.subr.mxu0 0.0
      %587 = vmatpush2.msra.mxu0 0.0
      %588 = vmatprep.mubr.f32.mxu0 0.0
      %589 = vmatmul.mubr.f32.gmra.mxu0 %v519
      %v590 = vpop.f32.mrf.mxu0
      %v591 = vadd.f32 0.0, %v590
      %v592 = vpop.f32.mrf.mxu0
      %593 = vdwg.mxu0
      %594 = vrot.lane.b32.xlu0 %v148, 64
      %v595 = vpop.permute.xlu0 %594
      %v597 = vsel %vm517, %v512, 0
      %v599 = vsel %vm521, %v595, 0
      %601 = vmatprep.subr.mxu0 0.0
      %602 = vmatpush1.msra.mxu0 0.0
      %603 = vmatprep.subr.mxu0 0.0
      %604 = vmatpush1.msra.mxu0 0.0
      %605 = vmatprep.subr.mxu0 0.0
      %606 = vmatpush1.msra.mxu0 0.0
      %607 = vmatprep.subr.mxu0 0.0
      %608 = vmatpush1.msra.mxu0 0.0
      %609 = vmatprep.subr.mxu0 0.0
      %610 = vmatpush1.msra.mxu0 0.0
      %611 = vmatprep.subr.mxu0 0.0
      %612 = vmatpush1.msra.mxu0 0.0
      %613 = vmatprep.subr.mxu0 0.0
      %614 = vmatpush1.msra.mxu0 0.0
      %615 = vmatprep.subr.mxu0 0.0
      %616 = vmatpush1.msra.mxu0 0.0
      %617 = vmatprep.subr.mxu0 0.0
      %618 = vmatpush1.msra.mxu0 0.0
      %619 = vmatprep.subr.mxu0 0.0
      %620 = vmatpush1.msra.mxu0 0.0
      %621 = vmatprep.subr.mxu0 0.0
      %622 = vmatpush1.msra.mxu0 0.0
      %623 = vmatprep.subr.mxu0 0.0
      %624 = vmatpush1.msra.mxu0 0.0
      %625 = vmatprep.subr.mxu0 0.0
      %626 = vmatpush1.msra.mxu0 0.0
      %627 = vmatprep.subr.mxu0 0.0
      %628 = vmatpush1.msra.mxu0 0.0
      %629 = vmatprep.subr.mxu0 0.0
      %630 = vmatpush1.msra.mxu0 0.0
      %631 = vmatprep.subr.mxu0 0.0
      %632 = vmatpush1.msra.mxu0 %v599
      %633 = vmatprep.subr.mxu0 0.0
      %634 = vmatpush2.msra.mxu0 0.0
      %635 = vmatprep.subr.mxu0 0.0
      %636 = vmatpush2.msra.mxu0 0.0
      %637 = vmatprep.subr.mxu0 0.0
      %638 = vmatpush2.msra.mxu0 0.0
      %639 = vmatprep.subr.mxu0 0.0
      %640 = vmatpush2.msra.mxu0 0.0
      %641 = vmatprep.subr.mxu0 0.0
      %642 = vmatpush2.msra.mxu0 0.0
      %643 = vmatprep.subr.mxu0 0.0
      %644 = vmatpush2.msra.mxu0 0.0
      %645 = vmatprep.subr.mxu0 0.0
      %646 = vmatpush2.msra.mxu0 0.0
      %647 = vmatprep.subr.mxu0 0.0
      %648 = vmatpush2.msra.mxu0 0.0
      %649 = vmatprep.subr.mxu0 0.0
      %650 = vmatpush2.msra.mxu0 0.0
      %651 = vmatprep.subr.mxu0 0.0
      %652 = vmatpush2.msra.mxu0 0.0
      %653 = vmatprep.subr.mxu0 0.0
      %654 = vmatpush2.msra.mxu0 0.0
      %655 = vmatprep.subr.mxu0 0.0
      %656 = vmatpush2.msra.mxu0 0.0
      %657 = vmatprep.subr.mxu0 0.0
      %658 = vmatpush2.msra.mxu0 0.0
      %659 = vmatprep.subr.mxu0 0.0
      %660 = vmatpush2.msra.mxu0 0.0
      %661 = vmatprep.subr.mxu0 0.0
      %662 = vmatpush2.msra.mxu0 0.0
      %663 = vmatprep.subr.mxu0 0.0
      %664 = vmatpush2.msra.mxu0 0.0
      %665 = vmatprep.mubr.f32.mxu0 0.0
      %666 = vmatmul.mubr.f32.gmra.mxu0 %v597
      %v667 = vpop.f32.mrf.mxu0
      %v668 = vadd.f32 0.0, %v667
      %v669 = vpop.f32.mrf.mxu0
      %670 = vdwg.mxu0
      %671 = vrot.lane.b32.xlu0 %v149, 64
      %v672 = vpop.permute.xlu0 %671
      %v674 = vsel %vm517, %v513, 0
      %v676 = vsel %vm521, %v672, 0
      %678 = vmatprep.subr.mxu0 0.0
      %679 = vmatpush1.msra.mxu0 0.0
      %680 = vmatprep.subr.mxu0 0.0
      %681 = vmatpush1.msra.mxu0 0.0
      %682 = vmatprep.subr.mxu0 0.0
      %683 = vmatpush1.msra.mxu0 0.0
      %684 = vmatprep.subr.mxu0 0.0
      %685 = vmatpush1.msra.mxu0 0.0
      %686 = vmatprep.subr.mxu0 0.0
      %687 = vmatpush1.msra.mxu0 0.0
      %688 = vmatprep.subr.mxu0 0.0
      %689 = vmatpush1.msra.mxu0 0.0
      %690 = vmatprep.subr.mxu0 0.0
      %691 = vmatpush1.msra.mxu0 0.0
      %692 = vmatprep.subr.mxu0 0.0
      %693 = vmatpush1.msra.mxu0 0.0
      %694 = vmatprep.subr.mxu0 0.0
      %695 = vmatpush1.msra.mxu0 0.0
      %696 = vmatprep.subr.mxu0 0.0
      %697 = vmatpush1.msra.mxu0 0.0
      %698 = vmatprep.subr.mxu0 0.0
      %699 = vmatpush1.msra.mxu0 0.0
      %700 = vmatprep.subr.mxu0 0.0
      %701 = vmatpush1.msra.mxu0 0.0
      %702 = vmatprep.subr.mxu0 0.0
      %703 = vmatpush1.msra.mxu0 0.0
      %704 = vmatprep.subr.mxu0 0.0
      %705 = vmatpush1.msra.mxu0 0.0
      %706 = vmatprep.subr.mxu0 0.0
      %707 = vmatpush1.msra.mxu0 0.0
      %708 = vmatprep.subr.mxu0 0.0
      %709 = vmatpush1.msra.mxu0 %v676
      %710 = vmatprep.subr.mxu0 0.0
      %711 = vmatpush2.msra.mxu0 0.0
      %712 = vmatprep.subr.mxu0 0.0
      %713 = vmatpush2.msra.mxu0 0.0
      %714 = vmatprep.subr.mxu0 0.0
      %715 = vmatpush2.msra.mxu0 0.0
      %716 = vmatprep.subr.mxu0 0.0
      %717 = vmatpush2.msra.mxu0 0.0
      %718 = vmatprep.subr.mxu0 0.0
      %719 = vmatpush2.msra.mxu0 0.0
      %720 = vmatprep.subr.mxu0 0.0
      %721 = vmatpush2.msra.mxu0 0.0
      %722 = vmatprep.subr.mxu0 0.0
      %723 = vmatpush2.msra.mxu0 0.0
      %724 = vmatprep.subr.mxu0 0.0
      %725 = vmatpush2.msra.mxu0 0.0
      %726 = vmatprep.subr.mxu0 0.0
      %727 = vmatpush2.msra.mxu0 0.0
      %728 = vmatprep.subr.mxu0 0.0
      %729 = vmatpush2.msra.mxu0 0.0
      %730 = vmatprep.subr.mxu0 0.0
      %731 = vmatpush2.msra.mxu0 0.0
      %732 = vmatprep.subr.mxu0 0.0
      %733 = vmatpush2.msra.mxu0 0.0
      %734 = vmatprep.subr.mxu0 0.0
      %735 = vmatpush2.msra.mxu0 0.0
      %736 = vmatprep.subr.mxu0 0.0
      %737 = vmatpush2.msra.mxu0 0.0
      %738 = vmatprep.subr.mxu0 0.0
      %739 = vmatpush2.msra.mxu0 0.0
      %740 = vmatprep.subr.mxu0 0.0
      %741 = vmatpush2.msra.mxu0 0.0
      %742 = vmatprep.mubr.f32.mxu0 0.0
      %743 = vmatmul.mubr.f32.gmra.mxu0 %v674
      %v744 = vpop.f32.mrf.mxu0
      %v745 = vadd.f32 0.0, %v744
      %v746 = vpop.f32.mrf.mxu0
      %747 = vdwg.mxu0
      %748 = vrot.lane.b32.xlu0 %v150, 64
      %v749 = vpop.permute.xlu0 %748
      %v751 = vsel %vm517, %v514, 0
      %v753 = vsel %vm521, %v749, 0
      %755 = vmatprep.subr.mxu0 0.0
      %756 = vmatpush1.msra.mxu0 0.0
      %757 = vmatprep.subr.mxu0 0.0
      %758 = vmatpush1.msra.mxu0 0.0
      %759 = vmatprep.subr.mxu0 0.0
      %760 = vmatpush1.msra.mxu0 0.0
      %761 = vmatprep.subr.mxu0 0.0
      %762 = vmatpush1.msra.mxu0 0.0
      %763 = vmatprep.subr.mxu0 0.0
      %764 = vmatpush1.msra.mxu0 0.0
      %765 = vmatprep.subr.mxu0 0.0
      %766 = vmatpush1.msra.mxu0 0.0
      %767 = vmatprep.subr.mxu0 0.0
      %768 = vmatpush1.msra.mxu0 0.0
      %769 = vmatprep.subr.mxu0 0.0
      %770 = vmatpush1.msra.mxu0 0.0
      %771 = vmatprep.subr.mxu0 0.0
      %772 = vmatpush1.msra.mxu0 0.0
      %773 = vmatprep.subr.mxu0 0.0
      %774 = vmatpush1.msra.mxu0 0.0
      %775 = vmatprep.subr.mxu0 0.0
      %776 = vmatpush1.msra.mxu0 0.0
      %777 = vmatprep.subr.mxu0 0.0
      %778 = vmatpush1.msra.mxu0 0.0
      %779 = vmatprep.subr.mxu0 0.0
      %780 = vmatpush1.msra.mxu0 0.0
      %781 = vmatprep.subr.mxu0 0.0
      %782 = vmatpush1.msra.mxu0 0.0
      %783 = vmatprep.subr.mxu0 0.0
      %784 = vmatpush1.msra.mxu0 0.0
      %785 = vmatprep.subr.mxu0 0.0
      %786 = vmatpush1.msra.mxu0 %v753
      %787 = vmatprep.subr.mxu0 0.0
      %788 = vmatpush2.msra.mxu0 0.0
      %789 = vmatprep.subr.mxu0 0.0
      %790 = vmatpush2.msra.mxu0 0.0
      %791 = vmatprep.subr.mxu0 0.0
      %792 = vmatpush2.msra.mxu0 0.0
      %793 = vmatprep.subr.mxu0 0.0
      %794 = vmatpush2.msra.mxu0 0.0
      %795 = vmatprep.subr.mxu0 0.0
      %796 = vmatpush2.msra.mxu0 0.0
      %797 = vmatprep.subr.mxu0 0.0
      %798 = vmatpush2.msra.mxu0 0.0
      %799 = vmatprep.subr.mxu0 0.0
      %800 = vmatpush2.msra.mxu0 0.0
      %801 = vmatprep.subr.mxu0 0.0
      %802 = vmatpush2.msra.mxu0 0.0
      %803 = vmatprep.subr.mxu0 0.0
      %804 = vmatpush2.msra.mxu0 0.0
      %805 = vmatprep.subr.mxu0 0.0
      %806 = vmatpush2.msra.mxu0 0.0
      %807 = vmatprep.subr.mxu0 0.0
      %808 = vmatpush2.msra.mxu0 0.0
      %809 = vmatprep.subr.mxu0 0.0
      %810 = vmatpush2.msra.mxu0 0.0
      %811 = vmatprep.subr.mxu0 0.0
      %812 = vmatpush2.msra.mxu0 0.0
      %813 = vmatprep.subr.mxu0 0.0
      %814 = vmatpush2.msra.mxu0 0.0
      %815 = vmatprep.subr.mxu0 0.0
      %816 = vmatpush2.msra.mxu0 0.0
      %817 = vmatprep.subr.mxu0 0.0
      %818 = vmatpush2.msra.mxu0 0.0
      %819 = vmatprep.mubr.f32.mxu0 0.0
      %820 = vmatmul.mubr.f32.gmra.mxu0 %v751
      %v821 = vpop.f32.mrf.mxu0
      %v822 = vadd.f32 0.0, %v821
      %v823 = vpop.f32.mrf.mxu0
      %824 = vdwg.mxu0
      %825 = vrot.lane.b32.xlu0 %v153, 112
      %v826 = vpop.permute.xlu0 %825
      %827 = vrot.lane.b32.xlu0 %v147, 80
      %v828 = vpop.permute.xlu0 %827
      %v829 = vsel %vm160, %v826, 0
      %v831 = vsel %vm160, %v828, 0
      %833 = vmatprep.subr.mxu0 0.0
      %834 = vmatpush1.xpose.msra.mxu0 0.0
      %835 = vmatprep.subr.mxu0 0.0
      %836 = vmatpush1.xpose.msra.mxu0 0.0
      %837 = vmatprep.subr.mxu0 0.0
      %838 = vmatpush1.xpose.msra.mxu0 0.0
      %839 = vmatprep.subr.mxu0 0.0
      %840 = vmatpush1.xpose.msra.mxu0 0.0
      %841 = vmatprep.subr.mxu0 0.0
      %842 = vmatpush1.xpose.msra.mxu0 0.0
      %843 = vmatprep.subr.mxu0 0.0
      %844 = vmatpush1.xpose.msra.mxu0 0.0
      %845 = vmatprep.subr.mxu0 0.0
      %846 = vmatpush1.xpose.msra.mxu0 0.0
      %847 = vmatprep.subr.mxu0 0.0
      %848 = vmatpush1.xpose.msra.mxu0 0.0
      %849 = vmatprep.subr.mxu0 0.0
      %850 = vmatpush1.xpose.msra.mxu0 0.0
      %851 = vmatprep.subr.mxu0 0.0
      %852 = vmatpush1.xpose.msra.mxu0 0.0
      %853 = vmatprep.subr.mxu0 0.0
      %854 = vmatpush1.xpose.msra.mxu0 0.0
      %855 = vmatprep.subr.mxu0 0.0
      %856 = vmatpush1.xpose.msra.mxu0 0.0
      %857 = vmatprep.subr.mxu0 0.0
      %858 = vmatpush1.xpose.msra.mxu0 0.0
      %859 = vmatprep.subr.mxu0 0.0
      %860 = vmatpush1.xpose.msra.mxu0 0.0
      %861 = vmatprep.subr.mxu0 0.0
      %862 = vmatpush1.xpose.msra.mxu0 0.0
      %863 = vmatprep.subr.mxu0 0.0
      %864 = vmatpush1.xpose.msra.mxu0 %v831
      %865 = vmatprep.subr.mxu0 0.0
      %866 = vmatpush2.xpose.msra.mxu0 0.0
      %867 = vmatprep.subr.mxu0 0.0
      %868 = vmatpush2.xpose.msra.mxu0 0.0
      %869 = vmatprep.subr.mxu0 0.0
      %870 = vmatpush2.xpose.msra.mxu0 0.0
      %871 = vmatprep.subr.mxu0 0.0
      %872 = vmatpush2.xpose.msra.mxu0 0.0
      %873 = vmatprep.subr.mxu0 0.0
      %874 = vmatpush2.xpose.msra.mxu0 0.0
      %875 = vmatprep.subr.mxu0 0.0
      %876 = vmatpush2.xpose.msra.mxu0 0.0
      %877 = vmatprep.subr.mxu0 0.0
      %878 = vmatpush2.xpose.msra.mxu0 0.0
      %879 = vmatprep.subr.mxu0 0.0
      %880 = vmatpush2.xpose.msra.mxu0 0.0
      %881 = vmatprep.subr.mxu0 0.0
      %882 = vmatpush2.xpose.msra.mxu0 0.0
      %883 = vmatprep.subr.mxu0 0.0
      %884 = vmatpush2.xpose.msra.mxu0 0.0
      %885 = vmatprep.subr.mxu0 0.0
      %886 = vmatpush2.xpose.msra.mxu0 0.0
      %887 = vmatprep.subr.mxu0 0.0
      %888 = vmatpush2.xpose.msra.mxu0 0.0
      %889 = vmatprep.subr.mxu0 0.0
      %890 = vmatpush2.xpose.msra.mxu0 0.0
      %891 = vmatprep.subr.mxu0 0.0
      %892 = vmatpush2.xpose.msra.mxu0 0.0
      %893 = vmatprep.subr.mxu0 0.0
      %894 = vmatpush2.xpose.msra.mxu0 0.0
      %895 = vmatprep.subr.mxu0 0.0
      %896 = vmatpush2.xpose.msra.mxu0 0.0
      %897 = vmatprep.mubr.f32.mxu0 0.0
      %898 = vmatmul.mubr.f32.gmra.mxu0 %v829
      %v899 = vpop.f32.mrf.mxu0
      %v900 = vadd.f32 %v152, %v899
      %v901 = vpop.f32.mrf.mxu0
      %902 = vdwg.mxu0
      %903 = vrot.lane.b32.xlu0 %v154, 112
      %v904 = vpop.permute.xlu0 %903
      %905 = vrot.lane.b32.xlu0 %v148, 80
      %v906 = vpop.permute.xlu0 %905
      %v907 = vsel %vm160, %v904, 0
      %v909 = vsel %vm160, %v906, 0
      %911 = vmatprep.subr.mxu0 0.0
      %912 = vmatpush1.xpose.msra.mxu0 0.0
      %913 = vmatprep.subr.mxu0 0.0
      %914 = vmatpush1.xpose.msra.mxu0 0.0
      %915 = vmatprep.subr.mxu0 0.0
      %916 = vmatpush1.xpose.msra.mxu0 0.0
      %917 = vmatprep.subr.mxu0 0.0
      %918 = vmatpush1.xpose.msra.mxu0 0.0
      %919 = vmatprep.subr.mxu0 0.0
      %920 = vmatpush1.xpose.msra.mxu0 0.0
      %921 = vmatprep.subr.mxu0 0.0
      %922 = vmatpush1.xpose.msra.mxu0 0.0
      %923 = vmatprep.subr.mxu0 0.0
      %924 = vmatpush1.xpose.msra.mxu0 0.0
      %925 = vmatprep.subr.mxu0 0.0
      %926 = vmatpush1.xpose.msra.mxu0 0.0
      %927 = vmatprep.subr.mxu0 0.0
      %928 = vmatpush1.xpose.msra.mxu0 0.0
      %929 = vmatprep.subr.mxu0 0.0
      %930 = vmatpush1.xpose.msra.mxu0 0.0
      %931 = vmatprep.subr.mxu0 0.0
      %932 = vmatpush1.xpose.msra.mxu0 0.0
      %933 = vmatprep.subr.mxu0 0.0
      %934 = vmatpush1.xpose.msra.mxu0 0.0
      %935 = vmatprep.subr.mxu0 0.0
      %936 = vmatpush1.xpose.msra.mxu0 0.0
      %937 = vmatprep.subr.mxu0 0.0
      %938 = vmatpush1.xpose.msra.mxu0 0.0
      %939 = vmatprep.subr.mxu0 0.0
      %940 = vmatpush1.xpose.msra.mxu0 0.0
      %941 = vmatprep.subr.mxu0 0.0
      %942 = vmatpush1.xpose.msra.mxu0 %v909
      %943 = vmatprep.subr.mxu0 0.0
      %944 = vmatpush2.xpose.msra.mxu0 0.0
      %945 = vmatprep.subr.mxu0 0.0
      %946 = vmatpush2.xpose.msra.mxu0 0.0
      %947 = vmatprep.subr.mxu0 0.0
      %948 = vmatpush2.xpose.msra.mxu0 0.0
      %949 = vmatprep.subr.mxu0 0.0
      %950 = vmatpush2.xpose.msra.mxu0 0.0
      %951 = vmatprep.subr.mxu0 0.0
      %952 = vmatpush2.xpose.msra.mxu0 0.0
      %953 = vmatprep.subr.mxu0 0.0
      %954 = vmatpush2.xpose.msra.mxu0 0.0
      %955 = vmatprep.subr.mxu0 0.0
      %956 = vmatpush2.xpose.msra.mxu0 0.0
      %957 = vmatprep.subr.mxu0 0.0
      %958 = vmatpush2.xpose.msra.mxu0 0.0
      %959 = vmatprep.subr.mxu0 0.0
      %960 = vmatpush2.xpose.msra.mxu0 0.0
      %961 = vmatprep.subr.mxu0 0.0
      %962 = vmatpush2.xpose.msra.mxu0 0.0
      %963 = vmatprep.subr.mxu0 0.0
      %964 = vmatpush2.xpose.msra.mxu0 0.0
      %965 = vmatprep.subr.mxu0 0.0
      %966 = vmatpush2.xpose.msra.mxu0 0.0
      %967 = vmatprep.subr.mxu0 0.0
      %968 = vmatpush2.xpose.msra.mxu0 0.0
      %969 = vmatprep.subr.mxu0 0.0
      %970 = vmatpush2.xpose.msra.mxu0 0.0
      %971 = vmatprep.subr.mxu0 0.0
      %972 = vmatpush2.xpose.msra.mxu0 0.0
      %973 = vmatprep.subr.mxu0 0.0
      %974 = vmatpush2.xpose.msra.mxu0 0.0
      %975 = vmatprep.mubr.f32.mxu0 0.0
      %976 = vmatmul.mubr.f32.gmra.mxu0 %v907
      %v977 = vpop.f32.mrf.mxu0
      %v978 = vadd.f32 %v152, %v977
      %v979 = vpop.f32.mrf.mxu0
      %980 = vdwg.mxu0
      %981 = vrot.lane.b32.xlu0 %v155, 112
      %v982 = vpop.permute.xlu0 %981
      %983 = vrot.lane.b32.xlu0 %v149, 80
      %v984 = vpop.permute.xlu0 %983
      %v985 = vsel %vm160, %v982, 0
      %v987 = vsel %vm160, %v984, 0
      %989 = vmatprep.subr.mxu0 0.0
      %990 = vmatpush1.xpose.msra.mxu0 0.0
      %991 = vmatprep.subr.mxu0 0.0
      %992 = vmatpush1.xpose.msra.mxu0 0.0
      %993 = vmatprep.subr.mxu0 0.0
      %994 = vmatpush1.xpose.msra.mxu0 0.0
      %995 = vmatprep.subr.mxu0 0.0
      %996 = vmatpush1.xpose.msra.mxu0 0.0
      %997 = vmatprep.subr.mxu0 0.0
      %998 = vmatpush1.xpose.msra.mxu0 0.0
      %999 = vmatprep.subr.mxu0 0.0
      %1000 = vmatpush1.xpose.msra.mxu0 0.0
      %1001 = vmatprep.subr.mxu0 0.0
      %1002 = vmatpush1.xpose.msra.mxu0 0.0
      %1003 = vmatprep.subr.mxu0 0.0
      %1004 = vmatpush1.xpose.msra.mxu0 0.0
      %1005 = vmatprep.subr.mxu0 0.0
      %1006 = vmatpush1.xpose.msra.mxu0 0.0
      %1007 = vmatprep.subr.mxu0 0.0
      %1008 = vmatpush1.xpose.msra.mxu0 0.0
      %1009 = vmatprep.subr.mxu0 0.0
      %1010 = vmatpush1.xpose.msra.mxu0 0.0
      %1011 = vmatprep.subr.mxu0 0.0
      %1012 = vmatpush1.xpose.msra.mxu0 0.0
      %1013 = vmatprep.subr.mxu0 0.0
      %1014 = vmatpush1.xpose.msra.mxu0 0.0
      %1015 = vmatprep.subr.mxu0 0.0
      %1016 = vmatpush1.xpose.msra.mxu0 0.0
      %1017 = vmatprep.subr.mxu0 0.0
      %1018 = vmatpush1.xpose.msra.mxu0 0.0
      %1019 = vmatprep.subr.mxu0 0.0
      %1020 = vmatpush1.xpose.msra.mxu0 %v987
      %1021 = vmatprep.subr.mxu0 0.0
      %1022 = vmatpush2.xpose.msra.mxu0 0.0
      %1023 = vmatprep.subr.mxu0 0.0
      %1024 = vmatpush2.xpose.msra.mxu0 0.0
      %1025 = vmatprep.subr.mxu0 0.0
      %1026 = vmatpush2.xpose.msra.mxu0 0.0
      %1027 = vmatprep.subr.mxu0 0.0
      %1028 = vmatpush2.xpose.msra.mxu0 0.0
      %1029 = vmatprep.subr.mxu0 0.0
      %1030 = vmatpush2.xpose.msra.mxu0 0.0
      %1031 = vmatprep.subr.mxu0 0.0
      %1032 = vmatpush2.xpose.msra.mxu0 0.0
      %1033 = vmatprep.subr.mxu0 0.0
      %1034 = vmatpush2.xpose.msra.mxu0 0.0
      %1035 = vmatprep.subr.mxu0 0.0
      %1036 = vmatpush2.xpose.msra.mxu0 0.0
      %1037 = vmatprep.subr.mxu0 0.0
      %1038 = vmatpush2.xpose.msra.mxu0 0.0
      %1039 = vmatprep.subr.mxu0 0.0
      %1040 = vmatpush2.xpose.msra.mxu0 0.0
      %1041 = vmatprep.subr.mxu0 0.0
      %1042 = vmatpush2.xpose.msra.mxu0 0.0
      %1043 = vmatprep.subr.mxu0 0.0
      %1044 = vmatpush2.xpose.msra.mxu0 0.0
      %1045 = vmatprep.subr.mxu0 0.0
      %1046 = vmatpush2.xpose.msra.mxu0 0.0
      %1047 = vmatprep.subr.mxu0 0.0
      %1048 = vmatpush2.xpose.msra.mxu0 0.0
      %1049 = vmatprep.subr.mxu0 0.0
      %1050 = vmatpush2.xpose.msra.mxu0 0.0
      %1051 = vmatprep.subr.mxu0 0.0
      %1052 = vmatpush2.xpose.msra.mxu0 0.0
      %1053 = vmatprep.mubr.f32.mxu0 0.0
      %1054 = vmatmul.mubr.f32.gmra.mxu0 %v985
      %v1055 = vpop.f32.mrf.mxu0
      %v1056 = vadd.f32 %v152, %v1055
      %v1057 = vpop.f32.mrf.mxu0
      %1058 = vdwg.mxu0
      %1059 = vrot.lane.b32.xlu0 %v156, 112
      %v1060 = vpop.permute.xlu0 %1059
      %1061 = vrot.lane.b32.xlu0 %v150, 80
      %v1062 = vpop.permute.xlu0 %1061
      %v1063 = vsel %vm160, %v1060, 0
      %v1065 = vsel %vm160, %v1062, 0
      %1067 = vmatprep.subr.mxu0 0.0
      %1068 = vmatpush1.xpose.msra.mxu0 0.0
      %1069 = vmatprep.subr.mxu0 0.0
      %1070 = vmatpush1.xpose.msra.mxu0 0.0
      %1071 = vmatprep.subr.mxu0 0.0
      %1072 = vmatpush1.xpose.msra.mxu0 0.0
      %1073 = vmatprep.subr.mxu0 0.0
      %1074 = vmatpush1.xpose.msra.mxu0 0.0
      %1075 = vmatprep.subr.mxu0 0.0
      %1076 = vmatpush1.xpose.msra.mxu0 0.0
      %1077 = vmatprep.subr.mxu0 0.0
      %1078 = vmatpush1.xpose.msra.mxu0 0.0
      %1079 = vmatprep.subr.mxu0 0.0
      %1080 = vmatpush1.xpose.msra.mxu0 0.0
      %1081 = vmatprep.subr.mxu0 0.0
      %1082 = vmatpush1.xpose.msra.mxu0 0.0
      %1083 = vmatprep.subr.mxu0 0.0
      %1084 = vmatpush1.xpose.msra.mxu0 0.0
      %1085 = vmatprep.subr.mxu0 0.0
      %1086 = vmatpush1.xpose.msra.mxu0 0.0
      %1087 = vmatprep.subr.mxu0 0.0
      %1088 = vmatpush1.xpose.msra.mxu0 0.0
      %1089 = vmatprep.subr.mxu0 0.0
      %1090 = vmatpush1.xpose.msra.mxu0 0.0
      %1091 = vmatprep.subr.mxu0 0.0
      %1092 = vmatpush1.xpose.msra.mxu0 0.0
      %1093 = vmatprep.subr.mxu0 0.0
      %1094 = vmatpush1.xpose.msra.mxu0 0.0
      %1095 = vmatprep.subr.mxu0 0.0
      %1096 = vmatpush1.xpose.msra.mxu0 0.0
      %1097 = vmatprep.subr.mxu0 0.0
      %1098 = vmatpush1.xpose.msra.mxu0 %v1065
      %1099 = vmatprep.subr.mxu0 0.0
      %1100 = vmatpush2.xpose.msra.mxu0 0.0
      %1101 = vmatprep.subr.mxu0 0.0
      %1102 = vmatpush2.xpose.msra.mxu0 0.0
      %1103 = vmatprep.subr.mxu0 0.0
      %1104 = vmatpush2.xpose.msra.mxu0 0.0
      %1105 = vmatprep.subr.mxu0 0.0
      %1106 = vmatpush2.xpose.msra.mxu0 0.0
      %1107 = vmatprep.subr.mxu0 0.0
      %1108 = vmatpush2.xpose.msra.mxu0 0.0
      %1109 = vmatprep.subr.mxu0 0.0
      %1110 = vmatpush2.xpose.msra.mxu0 0.0
      %1111 = vmatprep.subr.mxu0 0.0
      %1112 = vmatpush2.xpose.msra.mxu0 0.0
      %1113 = vmatprep.subr.mxu0 0.0
      %1114 = vmatpush2.xpose.msra.mxu0 0.0
      %1115 = vmatprep.subr.mxu0 0.0
      %1116 = vmatpush2.xpose.msra.mxu0 0.0
      %1117 = vmatprep.subr.mxu0 0.0
      %1118 = vmatpush2.xpose.msra.mxu0 0.0
      %1119 = vmatprep.subr.mxu0 0.0
      %1120 = vmatpush2.xpose.msra.mxu0 0.0
      %1121 = vmatprep.subr.mxu0 0.0
      %1122 = vmatpush2.xpose.msra.mxu0 0.0
      %1123 = vmatprep.subr.mxu0 0.0
      %1124 = vmatpush2.xpose.msra.mxu0 0.0
      %1125 = vmatprep.subr.mxu0 0.0
      %1126 = vmatpush2.xpose.msra.mxu0 0.0
      %1127 = vmatprep.subr.mxu0 0.0
      %1128 = vmatpush2.xpose.msra.mxu0 0.0
      %1129 = vmatprep.subr.mxu0 0.0
      %1130 = vmatpush2.xpose.msra.mxu0 0.0
      %1131 = vmatprep.mubr.f32.mxu0 0.0
      %1132 = vmatmul.mubr.f32.gmra.mxu0 %v1063
      %v1133 = vpop.f32.mrf.mxu0
      %v1134 = vadd.f32 %v152, %v1133
      %v1135 = vpop.f32.mrf.mxu0
      %1136 = vdwg.mxu0
      %v1137 = vsel %vm470, %v900, -inf
      %1138 = vmax.xlane.f32.xlu0 %v1137
      %v1139 = vpop.xlane.xlu0 %1138
      %v1140 = vsel %vm470, %v978, -inf
      %1141 = vmax.xlane.f32.xlu0 %v1140
      %v1142 = vpop.xlane.xlu0 %1141
      %v1143 = vsel %vm470, %v1056, -inf
      %1144 = vmax.xlane.f32.xlu0 %v1143
      %v1145 = vpop.xlane.xlu0 %1144
      %v1146 = vsel %vm470, %v1134, -inf
      %1147 = vmax.xlane.f32.xlu0 %v1146
      %v1148 = vpop.xlane.xlu0 %1147
      %v1149 = vsub.f32 %v900, %v1139
      %v1150 = vsub.f32 %v978, %v1142
      %v1151 = vsub.f32 %v1056, %v1145
      %v1152 = vsub.f32 %v1134, %v1148
      %v1153 = vmul.f32 %v1149, 1.442695
      %v1154 = vpow.pop %v1153
      %v1155 = vmul.f32 %v1150, 1.442695
      %v1156 = vpow.pop %v1155
      %v1157 = vmul.f32 %v1151, 1.442695
      %v1158 = vpow.pop %v1157
      %v1159 = vmul.f32 %v1152, 1.442695
      %v1160 = vpow.pop %v1159
      %v1161 = vsel %vm470, %v1154, 0.0
      %1162 = vadd.xlane.f32.xlu0 %v1161
      %v1163 = vpop.xlane.xlu0 %1162
      %v1164 = vsel %vm470, %v1156, 0.0
      %1165 = vadd.xlane.f32.xlu0 %v1164
      %v1166 = vpop.xlane.xlu0 %1165
      %v1167 = vsel %vm470, %v1158, 0.0
      %1168 = vadd.xlane.f32.xlu0 %v1167
      %v1169 = vpop.xlane.xlu0 %1168
      %v1170 = vsel %vm470, %v1160, 0.0
      %1171 = vadd.xlane.f32.xlu0 %v1170
      %v1172 = vpop.xlane.xlu0 %1171
      %v1173 = vrcp.pop %v1163
      %v1174 = vrcp.pop %v1166
      %v1175 = vrcp.pop %v1169
      %v1176 = vrcp.pop %v1172
      %v1177 = vmul.f32 %v1154, %v1173
      %v1178 = vmul.f32 %v1156, %v1174
      %v1179 = vmul.f32 %v1158, %v1175
      %v1180 = vmul.f32 %v1160, %v1176
      %1181 = vrot.lane.b32.xlu0 %v147, 48
      %v1182 = vpop.permute.xlu0 %1181
      %v1184 = vsel %vm517, %v1177, 0
      %v1186 = vsel %vm521, %v1182, 0
      %1188 = vmatprep.subr.mxu0 0.0
      %1189 = vmatpush1.msra.mxu0 0.0
      %1190 = vmatprep.subr.mxu0 0.0
      %1191 = vmatpush1.msra.mxu0 0.0
      %1192 = vmatprep.subr.mxu0 0.0
      %1193 = vmatpush1.msra.mxu0 0.0
      %1194 = vmatprep.subr.mxu0 0.0
      %1195 = vmatpush1.msra.mxu0 0.0
      %1196 = vmatprep.subr.mxu0 0.0
      %1197 = vmatpush1.msra.mxu0 0.0
      %1198 = vmatprep.subr.mxu0 0.0
      %1199 = vmatpush1.msra.mxu0 0.0
      %1200 = vmatprep.subr.mxu0 0.0
      %1201 = vmatpush1.msra.mxu0 0.0
      %1202 = vmatprep.subr.mxu0 0.0
      %1203 = vmatpush1.msra.mxu0 0.0
      %1204 = vmatprep.subr.mxu0 0.0
      %1205 = vmatpush1.msra.mxu0 0.0
      %1206 = vmatprep.subr.mxu0 0.0
      %1207 = vmatpush1.msra.mxu0 0.0
      %1208 = vmatprep.subr.mxu0 0.0
      %1209 = vmatpush1.msra.mxu0 0.0
      %1210 = vmatprep.subr.mxu0 0.0
      %1211 = vmatpush1.msra.mxu0 0.0
      %1212 = vmatprep.subr.mxu0 0.0
      %1213 = vmatpush1.msra.mxu0 0.0
      %1214 = vmatprep.subr.mxu0 0.0
      %1215 = vmatpush1.msra.mxu0 0.0
      %1216 = vmatprep.subr.mxu0 0.0
      %1217 = vmatpush1.msra.mxu0 0.0
      %1218 = vmatprep.subr.mxu0 0.0
      %1219 = vmatpush1.msra.mxu0 %v1186
      %1220 = vmatprep.subr.mxu0 0.0
      %1221 = vmatpush2.msra.mxu0 0.0
      %1222 = vmatprep.subr.mxu0 0.0
      %1223 = vmatpush2.msra.mxu0 0.0
      %1224 = vmatprep.subr.mxu0 0.0
      %1225 = vmatpush2.msra.mxu0 0.0
      %1226 = vmatprep.subr.mxu0 0.0
      %1227 = vmatpush2.msra.mxu0 0.0
      %1228 = vmatprep.subr.mxu0 0.0
      %1229 = vmatpush2.msra.mxu0 0.0
      %1230 = vmatprep.subr.mxu0 0.0
      %1231 = vmatpush2.msra.mxu0 0.0
      %1232 = vmatprep.subr.mxu0 0.0
      %1233 = vmatpush2.msra.mxu0 0.0
      %1234 = vmatprep.subr.mxu0 0.0
      %1235 = vmatpush2.msra.mxu0 0.0
      %1236 = vmatprep.subr.mxu0 0.0
      %1237 = vmatpush2.msra.mxu0 0.0
      %1238 = vmatprep.subr.mxu0 0.0
      %1239 = vmatpush2.msra.mxu0 0.0
      %1240 = vmatprep.subr.mxu0 0.0
      %1241 = vmatpush2.msra.mxu0 0.0
      %1242 = vmatprep.subr.mxu0 0.0
      %1243 = vmatpush2.msra.mxu0 0.0
      %1244 = vmatprep.subr.mxu0 0.0
      %1245 = vmatpush2.msra.mxu0 0.0
      %1246 = vmatprep.subr.mxu0 0.0
      %1247 = vmatpush2.msra.mxu0 0.0
      %1248 = vmatprep.subr.mxu0 0.0
      %1249 = vmatpush2.msra.mxu0 0.0
      %1250 = vmatprep.subr.mxu0 0.0
      %1251 = vmatpush2.msra.mxu0 0.0
      %1252 = vmatprep.mubr.f32.mxu0 0.0
      %1253 = vmatmul.mubr.f32.gmra.mxu0 %v1184
      %v1254 = vpop.f32.mrf.mxu0
      %v1255 = vadd.f32 0.0, %v1254
      %v1256 = vpop.f32.mrf.mxu0
      %1257 = vdwg.mxu0
      %1258 = vrot.lane.b32.xlu0 %v148, 48
      %v1259 = vpop.permute.xlu0 %1258
      %v1261 = vsel %vm517, %v1178, 0
      %v1263 = vsel %vm521, %v1259, 0
      %1265 = vmatprep.subr.mxu0 0.0
      %1266 = vmatpush1.msra.mxu0 0.0
      %1267 = vmatprep.subr.mxu0 0.0
      %1268 = vmatpush1.msra.mxu0 0.0
      %1269 = vmatprep.subr.mxu0 0.0
      %1270 = vmatpush1.msra.mxu0 0.0
      %1271 = vmatprep.subr.mxu0 0.0
      %1272 = vmatpush1.msra.mxu0 0.0
      %1273 = vmatprep.subr.mxu0 0.0
      %1274 = vmatpush1.msra.mxu0 0.0
      %1275 = vmatprep.subr.mxu0 0.0
      %1276 = vmatpush1.msra.mxu0 0.0
      %1277 = vmatprep.subr.mxu0 0.0
      %1278 = vmatpush1.msra.mxu0 0.0
      %1279 = vmatprep.subr.mxu0 0.0
      %1280 = vmatpush1.msra.mxu0 0.0
      %1281 = vmatprep.subr.mxu0 0.0
      %1282 = vmatpush1.msra.mxu0 0.0
      %1283 = vmatprep.subr.mxu0 0.0
      %1284 = vmatpush1.msra.mxu0 0.0
      %1285 = vmatprep.subr.mxu0 0.0
      %1286 = vmatpush1.msra.mxu0 0.0
      %1287 = vmatprep.subr.mxu0 0.0
      %1288 = vmatpush1.msra.mxu0 0.0
      %1289 = vmatprep.subr.mxu0 0.0
      %1290 = vmatpush1.msra.mxu0 0.0
      %1291 = vmatprep.subr.mxu0 0.0
      %1292 = vmatpush1.msra.mxu0 0.0
      %1293 = vmatprep.subr.mxu0 0.0
      %1294 = vmatpush1.msra.mxu0 0.0
      %1295 = vmatprep.subr.mxu0 0.0
      %1296 = vmatpush1.msra.mxu0 %v1263
      %1297 = vmatprep.subr.mxu0 0.0
      %1298 = vmatpush2.msra.mxu0 0.0
      %1299 = vmatprep.subr.mxu0 0.0
      %1300 = vmatpush2.msra.mxu0 0.0
      %1301 = vmatprep.subr.mxu0 0.0
      %1302 = vmatpush2.msra.mxu0 0.0
      %1303 = vmatprep.subr.mxu0 0.0
      %1304 = vmatpush2.msra.mxu0 0.0
      %1305 = vmatprep.subr.mxu0 0.0
      %1306 = vmatpush2.msra.mxu0 0.0
      %1307 = vmatprep.subr.mxu0 0.0
      %1308 = vmatpush2.msra.mxu0 0.0
      %1309 = vmatprep.subr.mxu0 0.0
      %1310 = vmatpush2.msra.mxu0 0.0
      %1311 = vmatprep.subr.mxu0 0.0
      %1312 = vmatpush2.msra.mxu0 0.0
      %1313 = vmatprep.subr.mxu0 0.0
      %1314 = vmatpush2.msra.mxu0 0.0
      %1315 = vmatprep.subr.mxu0 0.0
      %1316 = vmatpush2.msra.mxu0 0.0
      %1317 = vmatprep.subr.mxu0 0.0
      %1318 = vmatpush2.msra.mxu0 0.0
      %1319 = vmatprep.subr.mxu0 0.0
      %1320 = vmatpush2.msra.mxu0 0.0
      %1321 = vmatprep.subr.mxu0 0.0
      %1322 = vmatpush2.msra.mxu0 0.0
      %1323 = vmatprep.subr.mxu0 0.0
      %1324 = vmatpush2.msra.mxu0 0.0
      %1325 = vmatprep.subr.mxu0 0.0
      %1326 = vmatpush2.msra.mxu0 0.0
      %1327 = vmatprep.subr.mxu0 0.0
      %1328 = vmatpush2.msra.mxu0 0.0
      %1329 = vmatprep.mubr.f32.mxu0 0.0
      %1330 = vmatmul.mubr.f32.gmra.mxu0 %v1261
      %v1331 = vpop.f32.mrf.mxu0
      %v1332 = vadd.f32 0.0, %v1331
      %v1333 = vpop.f32.mrf.mxu0
      %1334 = vdwg.mxu0
      %1335 = vrot.lane.b32.xlu0 %v149, 48
      %v1336 = vpop.permute.xlu0 %1335
      %v1338 = vsel %vm517, %v1179, 0
      %v1340 = vsel %vm521, %v1336, 0
      %1342 = vmatprep.subr.mxu0 0.0
      %1343 = vmatpush1.msra.mxu0 0.0
      %1344 = vmatprep.subr.mxu0 0.0
      %1345 = vmatpush1.msra.mxu0 0.0
      %1346 = vmatprep.subr.mxu0 0.0
      %1347 = vmatpush1.msra.mxu0 0.0
      %1348 = vmatprep.subr.mxu0 0.0
      %1349 = vmatpush1.msra.mxu0 0.0
      %1350 = vmatprep.subr.mxu0 0.0
      %1351 = vmatpush1.msra.mxu0 0.0
      %1352 = vmatprep.subr.mxu0 0.0
      %1353 = vmatpush1.msra.mxu0 0.0
      %1354 = vmatprep.subr.mxu0 0.0
      %1355 = vmatpush1.msra.mxu0 0.0
      %1356 = vmatprep.subr.mxu0 0.0
      %1357 = vmatpush1.msra.mxu0 0.0
      %1358 = vmatprep.subr.mxu0 0.0
      %1359 = vmatpush1.msra.mxu0 0.0
      %1360 = vmatprep.subr.mxu0 0.0
      %1361 = vmatpush1.msra.mxu0 0.0
      %1362 = vmatprep.subr.mxu0 0.0
      %1363 = vmatpush1.msra.mxu0 0.0
      %1364 = vmatprep.subr.mxu0 0.0
      %1365 = vmatpush1.msra.mxu0 0.0
      %1366 = vmatprep.subr.mxu0 0.0
      %1367 = vmatpush1.msra.mxu0 0.0
      %1368 = vmatprep.subr.mxu0 0.0
      %1369 = vmatpush1.msra.mxu0 0.0
      %1370 = vmatprep.subr.mxu0 0.0
      %1371 = vmatpush1.msra.mxu0 0.0
      %1372 = vmatprep.subr.mxu0 0.0
      %1373 = vmatpush1.msra.mxu0 %v1340
      %1374 = vmatprep.subr.mxu0 0.0
      %1375 = vmatpush2.msra.mxu0 0.0
      %1376 = vmatprep.subr.mxu0 0.0
      %1377 = vmatpush2.msra.mxu0 0.0
      %1378 = vmatprep.subr.mxu0 0.0
      %1379 = vmatpush2.msra.mxu0 0.0
      %1380 = vmatprep.subr.mxu0 0.0
      %1381 = vmatpush2.msra.mxu0 0.0
      %1382 = vmatprep.subr.mxu0 0.0
      %1383 = vmatpush2.msra.mxu0 0.0
      %1384 = vmatprep.subr.mxu0 0.0
      %1385 = vmatpush2.msra.mxu0 0.0
      %1386 = vmatprep.subr.mxu0 0.0
      %1387 = vmatpush2.msra.mxu0 0.0
      %1388 = vmatprep.subr.mxu0 0.0
      %1389 = vmatpush2.msra.mxu0 0.0
      %1390 = vmatprep.subr.mxu0 0.0
      %1391 = vmatpush2.msra.mxu0 0.0
      %1392 = vmatprep.subr.mxu0 0.0
      %1393 = vmatpush2.msra.mxu0 0.0
      %1394 = vmatprep.subr.mxu0 0.0
      %1395 = vmatpush2.msra.mxu0 0.0
      %1396 = vmatprep.subr.mxu0 0.0
      %1397 = vmatpush2.msra.mxu0 0.0
      %1398 = vmatprep.subr.mxu0 0.0
      %1399 = vmatpush2.msra.mxu0 0.0
      %1400 = vmatprep.subr.mxu0 0.0
      %1401 = vmatpush2.msra.mxu0 0.0
      %1402 = vmatprep.subr.mxu0 0.0
      %1403 = vmatpush2.msra.mxu0 0.0
      %1404 = vmatprep.subr.mxu0 0.0
      %1405 = vmatpush2.msra.mxu0 0.0
      %1406 = vmatprep.mubr.f32.mxu0 0.0
      %1407 = vmatmul.mubr.f32.gmra.mxu0 %v1338
      %v1408 = vpop.f32.mrf.mxu0
      %v1409 = vadd.f32 0.0, %v1408
      %v1410 = vpop.f32.mrf.mxu0
      %1411 = vdwg.mxu0
      %1412 = vrot.lane.b32.xlu0 %v150, 48
      %v1413 = vpop.permute.xlu0 %1412
      %v1415 = vsel %vm517, %v1180, 0
      %v1417 = vsel %vm521, %v1413, 0
      %1419 = vmatprep.subr.mxu0 0.0
      %1420 = vmatpush1.msra.mxu0 0.0
      %1421 = vmatprep.subr.mxu0 0.0
      %1422 = vmatpush1.msra.mxu0 0.0
      %1423 = vmatprep.subr.mxu0 0.0
      %1424 = vmatpush1.msra.mxu0 0.0
      %1425 = vmatprep.subr.mxu0 0.0
      %1426 = vmatpush1.msra.mxu0 0.0
      %1427 = vmatprep.subr.mxu0 0.0
      %1428 = vmatpush1.msra.mxu0 0.0
      %1429 = vmatprep.subr.mxu0 0.0
      %1430 = vmatpush1.msra.mxu0 0.0
      %1431 = vmatprep.subr.mxu0 0.0
      %1432 = vmatpush1.msra.mxu0 0.0
      %1433 = vmatprep.subr.mxu0 0.0
      %1434 = vmatpush1.msra.mxu0 0.0
      %1435 = vmatprep.subr.mxu0 0.0
      %1436 = vmatpush1.msra.mxu0 0.0
      %1437 = vmatprep.subr.mxu0 0.0
      %1438 = vmatpush1.msra.mxu0 0.0
      %1439 = vmatprep.subr.mxu0 0.0
      %1440 = vmatpush1.msra.mxu0 0.0
      %1441 = vmatprep.subr.mxu0 0.0
      %1442 = vmatpush1.msra.mxu0 0.0
      %1443 = vmatprep.subr.mxu0 0.0
      %1444 = vmatpush1.msra.mxu0 0.0
      %1445 = vmatprep.subr.mxu0 0.0
      %1446 = vmatpush1.msra.mxu0 0.0
      %1447 = vmatprep.subr.mxu0 0.0
      %1448 = vmatpush1.msra.mxu0 0.0
      %1449 = vmatprep.subr.mxu0 0.0
      %1450 = vmatpush1.msra.mxu0 %v1417
      %1451 = vmatprep.subr.mxu0 0.0
      %1452 = vmatpush2.msra.mxu0 0.0
      %1453 = vmatprep.subr.mxu0 0.0
      %1454 = vmatpush2.msra.mxu0 0.0
      %1455 = vmatprep.subr.mxu0 0.0
      %1456 = vmatpush2.msra.mxu0 0.0
      %1457 = vmatprep.subr.mxu0 0.0
      %1458 = vmatpush2.msra.mxu0 0.0
      %1459 = vmatprep.subr.mxu0 0.0
      %1460 = vmatpush2.msra.mxu0 0.0
      %1461 = vmatprep.subr.mxu0 0.0
      %1462 = vmatpush2.msra.mxu0 0.0
      %1463 = vmatprep.subr.mxu0 0.0
      %1464 = vmatpush2.msra.mxu0 0.0
      %1465 = vmatprep.subr.mxu0 0.0
      %1466 = vmatpush2.msra.mxu0 0.0
      %1467 = vmatprep.subr.mxu0 0.0
      %1468 = vmatpush2.msra.mxu0 0.0
      %1469 = vmatprep.subr.mxu0 0.0
      %1470 = vmatpush2.msra.mxu0 0.0
      %1471 = vmatprep.subr.mxu0 0.0
      %1472 = vmatpush2.msra.mxu0 0.0
      %1473 = vmatprep.subr.mxu0 0.0
      %1474 = vmatpush2.msra.mxu0 0.0
      %1475 = vmatprep.subr.mxu0 0.0
      %1476 = vmatpush2.msra.mxu0 0.0
      %1477 = vmatprep.subr.mxu0 0.0
      %1478 = vmatpush2.msra.mxu0 0.0
      %1479 = vmatprep.subr.mxu0 0.0
      %1480 = vmatpush2.msra.mxu0 0.0
      %1481 = vmatprep.subr.mxu0 0.0
      %1482 = vmatpush2.msra.mxu0 0.0
      %1483 = vmatprep.mubr.f32.mxu0 0.0
      %1484 = vmatmul.mubr.f32.gmra.mxu0 %v1415
      %v1485 = vpop.f32.mrf.mxu0
      %v1486 = vadd.f32 0.0, %v1485
      %v1487 = vpop.f32.mrf.mxu0
      %1488 = vdwg.mxu0
      %1493 = vrot.lane.b32.xlu0 %v1255, 16
      %v1494 = vpop.permute.xlu0 %1493
      %1495 = vrot.lane.b32.xlu0 %v1332, 16
      %v1496 = vpop.permute.xlu0 %1495
      %1497 = vrot.lane.b32.xlu0 %v1409, 16
      %v1498 = vpop.permute.xlu0 %1497
      %1499 = vrot.lane.b32.xlu0 %v1486, 16
      %v1500 = vpop.permute.xlu0 %1499
      %v1505 = vsel %vm160, %v591, %v1494
      %v1506 = vsel %vm160, %v668, %v1496
      %v1507 = vsel %vm160, %v745, %v1498
      %v1508 = vsel %vm160, %v822, %v1500
      %vm1509 = vcmask 257024
      %1510 = vst.msk [vmem:[%s145] sm:$0xf] %vm1509, %v1505
      %1511 = vst.msk [vmem:[%s145 + $0x4] sm:$0xf] %vm1509, %v1506
      %1512 = vst.msk [vmem:[%s145 + $0x8] sm:$0xf] %vm1509, %v1507
      %1513 = vst.msk [vmem:[%s145 + $0xc] sm:$0xf] %vm1509, %v1508
      %s1514 = smul.u32 4, %s13
      %p1515 = scmp.lt.s32.totalorder %s1514, 7
      %s1516 = scalar_select %p1515, %s1514, 7
      %s1517 = smul.addr %s1516, 4
      %s1518 = scalar_lea.vmem %s2, %s1517
      // Predicated region
      $region29: #{swin_forward.26} parent=27 // pred_check
        %p1519 = pneg %p78
      $region30: #{swin_forward.26} parent=27 // pred_check_branch
        %1521 = sbr.rel (%p1519) target = $region32
      $region31: #{swin_forward.26} parent=27 // pred_region
        %s1522 = smul.u32 4, %s13
      $region32: #{swin_forward.26} parent=27 // pred_fallthru
        _
    $region28: #{swin_forward.26} parent=5 // pred_fallthru
      _
    %p1523 = scmp.le.s32.totalorder 2, %s8
    // Predicated region
    $region33: #{swin_forward.26} parent=5 // pred_check
      %p1524 = pneg %p1523
    $region34: #{swin_forward.26} parent=5 // pred_check_branch
      %1526 = sbr.rel (%p1524) target = $region36
    $region35: #{swin_forward.26} parent=5 // pred_region
      %s1527 = ssub.s32 %s8, 2
      // Predicated region
      $region37: #{swin_forward.26} parent=35 // pred_check
        %p1528 = pneg %p84
      $region38: #{swin_forward.26} parent=35 // pred_check_branch
        %1530 = sbr.rel (%p1528) target = $region40
      $region39: #{swin_forward.26} parent=35 // pred_region
        %s1531 = smul.u32 4, %s14
        %p1532 = scmp.lt.s32.totalorder %s1531, 7
        %s1533 = scalar_select %p1532, %s1531, 7
        %s1534 = smul.addr %s1533, 4
        %s1535 = scalar_lea.vmem %s2, %s1534
      $region40: #{swin_forward.26} parent=35 // pred_fallthru
        _
    $region36: #{swin_forward.26} parent=5 // pred_fallthru
      _
  $region6: #{swin_forward.26} parent=0 // loop_footer
    %s12 = sadd.s32 1, %s8
  $region7: #{swin_forward.26} parent=0 // loop_footer_branch
    %7 = sbr.rel target = $region3
  $region8: #{swin_forward.26} parent=0 // loop_exit
    _

// kernel: swin_forward.29
$region0: #{swin_forward.29}
  #allocation0 [shape = 'u32[]', space=smem, size = 0x4, offset = 0x4, fixed_abs, tag = 'smem constant byte address 0x4 - core index']
  #allocation1 [shape = 'u32[144,128]{1,0:T(1,128)}', space=vmem, size = 0x12000, scoped, tag = 'internal scratch']
  %s0 = inlined_call_operand.vmem [shape: f32[32,128], index: 0, kind: input, shape index: {}]
  %s1 = inlined_call_operand.vmem [shape: f32[128,32], index: 1, kind: input, shape index: {}]
  %s2 = inlined_call_operand.vmem [shape: f32[1,32], index: 2, kind: input, shape index: {}]
  %s3 = inlined_call_operand.vmem [shape: f32[32,32], index: 3, kind: input, shape index: {}]
  %s4 = inlined_call_operand.vmem [shape: f32[32,32], index: 4, kind: output, shape index: {}]
  %s5 = sld [smem:[#allocation0]]
  $region26: #{swin_forward.29} parent=0
    _
  %s7 = ssub.s32 1, %s5
  %s8 = scalar_select 0, %s7, %s5
  // Predicated region
  $region2: #{swin_forward.29} parent=0 // pred_check
    _
  $region3: #{swin_forward.29} parent=0 // pred_check_branch
    %10 = sbr.rel (0) target = $region5
  $region4: #{swin_forward.29} parent=0 // pred_region
    _
  $region5: #{swin_forward.29} parent=0 // pred_fallthru
    _
  // Predicated region
  $region6: #{swin_forward.29} parent=0 // pred_check
    _
  $region7: #{swin_forward.29} parent=0 // pred_check_branch
    %12 = sbr.rel (0) target = $region9
  $region8: #{swin_forward.29} parent=0 // pred_region
    _
  $region9: #{swin_forward.29} parent=0 // pred_fallthru
    _
  // Predicated region
  $region10: #{swin_forward.29} parent=0 // pred_check
    _
  $region11: #{swin_forward.29} parent=0 // pred_check_branch
    %14 = sbr.rel (0) target = $region13
  $region12: #{swin_forward.29} parent=0 // pred_region
    _
  $region13: #{swin_forward.29} parent=0 // pred_fallthru
    _
  // Predicated region
  $region14: #{swin_forward.29} parent=0 // pred_check
    _
  $region15: #{swin_forward.29} parent=0 // pred_check_branch
    %16 = sbr.rel (0) target = $region17
  $region16: #{swin_forward.29} parent=0 // pred_region
    _
  $region17: #{swin_forward.29} parent=0 // pred_fallthru
    _
  %v17 = vld [vmem:[%s0] sm:$0xff]
  %v18 = vld [vmem:[%s0 + $0x8] sm:$0xff]
  %v19 = vld [vmem:[%s0 + $0x10] sm:$0xff]
  %v20 = vld [vmem:[%s0 + $0x18] sm:$0xff]
  %v21 = vld [vmem:[%s1] sm:$0xff]
  %v22 = vld [vmem:[%s1 + $0x8] sm:$0xff]
  %v23 = vld [vmem:[%s1 + $0x10] sm:$0xff]
  %v24 = vld [vmem:[%s1 + $0x18] sm:$0xff]
  %v25 = vld [vmem:[%s1 + $0x20] sm:$0xff]
  %v26 = vld [vmem:[%s1 + $0x28] sm:$0xff]
  %v27 = vld [vmem:[%s1 + $0x30] sm:$0xff]
  %v28 = vld [vmem:[%s1 + $0x38] sm:$0xff]
  %v29 = vld [vmem:[%s1 + $0x40] sm:$0xff]
  %v30 = vld [vmem:[%s1 + $0x48] sm:$0xff]
  %v31 = vld [vmem:[%s1 + $0x50] sm:$0xff]
  %v32 = vld [vmem:[%s1 + $0x58] sm:$0xff]
  %v33 = vld [vmem:[%s1 + $0x60] sm:$0xff]
  %v34 = vld [vmem:[%s1 + $0x68] sm:$0xff]
  %v35 = vld [vmem:[%s1 + $0x70] sm:$0xff]
  %v36 = vld [vmem:[%s1 + $0x78] sm:$0xff]
  %v37 = vld [vmem:[%s2] sm:$0x1]
  %v39 = vlaneseq
  %v40 = vshrl.u32 %v39, 7
  %v41 = vsub.s32 0, %v40
  %v42 = vrot.slane %v37, %v41
  %44 = vmatprep.subr.mxu0 0.0
  %45 = vmatpush1.msra.mxu0 %v36
  %46 = vmatprep.subr.mxu0 0.0
  %47 = vmatpush1.msra.mxu0 %v35
  %48 = vmatprep.subr.mxu0 0.0
  %49 = vmatpush1.msra.mxu0 %v34
  %50 = vmatprep.subr.mxu0 0.0
  %51 = vmatpush1.msra.mxu0 %v33
  %52 = vmatprep.subr.mxu0 0.0
  %53 = vmatpush1.msra.mxu0 %v32
  %54 = vmatprep.subr.mxu0 0.0
  %55 = vmatpush1.msra.mxu0 %v31
  %56 = vmatprep.subr.mxu0 0.0
  %57 = vmatpush1.msra.mxu0 %v30
  %58 = vmatprep.subr.mxu0 0.0
  %59 = vmatpush1.msra.mxu0 %v29
  %60 = vmatprep.subr.mxu0 0.0
  %61 = vmatpush1.msra.mxu0 %v28
  %62 = vmatprep.subr.mxu0 0.0
  %63 = vmatpush1.msra.mxu0 %v27
  %64 = vmatprep.subr.mxu0 0.0
  %65 = vmatpush1.msra.mxu0 %v26
  %66 = vmatprep.subr.mxu0 0.0
  %67 = vmatpush1.msra.mxu0 %v25
  %68 = vmatprep.subr.mxu0 0.0
  %69 = vmatpush1.msra.mxu0 %v24
  %70 = vmatprep.subr.mxu0 0.0
  %71 = vmatpush1.msra.mxu0 %v23
  %72 = vmatprep.subr.mxu0 0.0
  %73 = vmatpush1.msra.mxu0 %v22
  %74 = vmatprep.subr.mxu0 0.0
  %75 = vmatpush1.msra.mxu0 %v21
  %76 = vmatprep.subr.mxu0 0.0
  %77 = vmatpush2.msra.mxu0 0.0
  %78 = vmatprep.subr.mxu0 0.0
  %79 = vmatpush2.msra.mxu0 0.0
  %80 = vmatprep.subr.mxu0 0.0
  %81 = vmatpush2.msra.mxu0 0.0
  %82 = vmatprep.subr.mxu0 0.0
  %83 = vmatpush2.msra.mxu0 0.0
  %84 = vmatprep.subr.mxu0 0.0
  %85 = vmatpush2.msra.mxu0 0.0
  %86 = vmatprep.subr.mxu0 0.0
  %87 = vmatpush2.msra.mxu0 0.0
  %88 = vmatprep.subr.mxu0 0.0
  %89 = vmatpush2.msra.mxu0 0.0
  %90 = vmatprep.subr.mxu0 0.0
  %91 = vmatpush2.msra.mxu0 0.0
  %92 = vmatprep.subr.mxu0 0.0
  %93 = vmatpush2.msra.mxu0 0.0
  %94 = vmatprep.subr.mxu0 0.0
  %95 = vmatpush2.msra.mxu0 0.0
  %96 = vmatprep.subr.mxu0 0.0
  %97 = vmatpush2.msra.mxu0 0.0
  %98 = vmatprep.subr.mxu0 0.0
  %99 = vmatpush2.msra.mxu0 0.0
  %100 = vmatprep.subr.mxu0 0.0
  %101 = vmatpush2.msra.mxu0 0.0
  %102 = vmatprep.subr.mxu0 0.0
  %103 = vmatpush2.msra.mxu0 0.0
  %104 = vmatprep.subr.mxu0 0.0
  %105 = vmatpush2.msra.mxu0 0.0
  %106 = vmatprep.subr.mxu0 0.0
  %107 = vmatpush2.msra.mxu0 0.0
  %108 = vmatprep.mubr.f32.mxu0 0.0
  %109 = vmatmul.mubr.f32.gmra.mxu0 %v17
  %v110 = vpop.f32.mrf.mxu0
  %v111 = vadd.f32 %v42, %v110
  %v112 = vpop.f32.mrf.mxu0
  %113 = vmatprep.mubr.f32.mxu0 0.0
  %114 = vmatmul.mubr.f32.gmra.mxu0 %v18
  %v115 = vpop.f32.mrf.mxu0
  %v116 = vadd.f32 %v42, %v115
  %v117 = vpop.f32.mrf.mxu0
  %118 = vmatprep.mubr.f32.mxu0 0.0
  %119 = vmatmul.mubr.f32.gmra.mxu0 %v19
  %v120 = vpop.f32.mrf.mxu0
  %v121 = vadd.f32 %v42, %v120
  %v122 = vpop.f32.mrf.mxu0
  %123 = vmatprep.mubr.f32.mxu0 0.0
  %124 = vmatmul.mubr.f32.gmra.mxu0 %v20
  %v125 = vpop.f32.mrf.mxu0
  %v126 = vadd.f32 %v42, %v125
  %v127 = vpop.f32.mrf.mxu0
  %128 = vdwg.mxu0
  %v129 = vld [vmem:[%s3] sm:$0xff]
  %v130 = vld [vmem:[%s3 + $0x8] sm:$0xff]
  %v131 = vld [vmem:[%s3 + $0x10] sm:$0xff]
  %v132 = vld [vmem:[%s3 + $0x18] sm:$0xff]
  %v133 = vadd.f32 %v111, %v129
  %v134 = vadd.f32 %v116, %v130
  %v135 = vadd.f32 %v121, %v131
  %v136 = vadd.f32 %v126, %v132
  %vm137 = vcmask 261120
  %138 = vst.msk [vmem:[%s4] sm:$0xff] %vm137, %v133
  %139 = vst.msk [vmem:[%s4 + $0x8] sm:$0xff] %vm137, %v134
  %140 = vst.msk [vmem:[%s4 + $0x10] sm:$0xff] %vm137, %v135
  %141 = vst.msk [vmem:[%s4 + $0x18] sm:$0xff] %vm137, %v136
  // Predicated region
  $region18: #{swin_forward.29} parent=0 // pred_check
    _
  $region19: #{swin_forward.29} parent=0 // pred_check_branch
    %143 = sbr.rel (0) target = $region21
  $region20: #{swin_forward.29} parent=0 // pred_region
    _
  $region21: #{swin_forward.29} parent=0 // pred_fallthru
    _
  // Predicated region
  $region22: #{swin_forward.29} parent=0 // pred_check
    _
  $region23: #{swin_forward.29} parent=0 // pred_check_branch
    %145 = sbr.rel (0) target = $region25
  $region24: #{swin_forward.29} parent=0 // pred_region
    _
  $region25: #{swin_forward.29} parent=0 // pred_fallthru
    _

// kernel: swin_forward.28
$region0: #{swin_forward.28}
  #allocation0 [shape = 'u32[]', space=smem, size = 0x4, offset = 0x4, fixed_abs, tag = 'smem constant byte address 0x4 - core index']
  #allocation1 [shape = 'u32[144,128]{1,0:T(1,128)}', space=vmem, size = 0x12000, scoped, tag = 'internal scratch']
  %s0 = inlined_call_operand.vmem [shape: f32[32,32], index: 0, kind: input, shape index: {}]
  %s1 = inlined_call_operand.vmem [shape: f32[32,128], index: 1, kind: input, shape index: {}]
  %s2 = inlined_call_operand.vmem [shape: f32[1,128], index: 2, kind: input, shape index: {}]
  %s3 = inlined_call_operand.vmem [shape: f32[1,32], index: 3, kind: input, shape index: {}]
  %s4 = inlined_call_operand.vmem [shape: f32[1,32], index: 4, kind: input, shape index: {}]
  %s5 = inlined_call_operand.vmem [shape: f32[32,128], index: 5, kind: output, shape index: {}]
  %s6 = sld [smem:[#allocation0]]
  $region30: #{swin_forward.28} parent=0
    _
  %s8 = ssub.s32 1, %s6
  %s9 = scalar_select 0, %s8, %s6
  // Predicated region
  $region2: #{swin_forward.28} parent=0 // pred_check
    _
  $region3: #{swin_forward.28} parent=0 // pred_check_branch
    %11 = sbr.rel (0) target = $region5
  $region4: #{swin_forward.28} parent=0 // pred_region
    _
  $region5: #{swin_forward.28} parent=0 // pred_fallthru
    _
  // Predicated region
  $region6: #{swin_forward.28} parent=0 // pred_check
    _
  $region7: #{swin_forward.28} parent=0 // pred_check_branch
    %13 = sbr.rel (0) target = $region9
  $region8: #{swin_forward.28} parent=0 // pred_region
    _
  $region9: #{swin_forward.28} parent=0 // pred_fallthru
    _
  // Predicated region
  $region10: #{swin_forward.28} parent=0 // pred_check
    _
  $region11: #{swin_forward.28} parent=0 // pred_check_branch
    %15 = sbr.rel (0) target = $region13
  $region12: #{swin_forward.28} parent=0 // pred_region
    _
  $region13: #{swin_forward.28} parent=0 // pred_fallthru
    _
  // Predicated region
  $region14: #{swin_forward.28} parent=0 // pred_check
    _
  $region15: #{swin_forward.28} parent=0 // pred_check_branch
    %17 = sbr.rel (0) target = $region17
  $region16: #{swin_forward.28} parent=0 // pred_region
    _
  $region17: #{swin_forward.28} parent=0 // pred_fallthru
    _
  // Predicated region
  $region18: #{swin_forward.28} parent=0 // pred_check
    _
  $region19: #{swin_forward.28} parent=0 // pred_check_branch
    %19 = sbr.rel (0) target = $region21
  $region20: #{swin_forward.28} parent=0 // pred_region
    _
  $region21: #{swin_forward.28} parent=0 // pred_fallthru
    _
  %v20 = vld [vmem:[%s0] sm:$0xff]
  %v21 = vld [vmem:[%s0 + $0x8] sm:$0xff]
  %v22 = vld [vmem:[%s0 + $0x10] sm:$0xff]
  %v23 = vld [vmem:[%s0 + $0x18] sm:$0xff]
  %vm24 = vcmask 261120
  %v25 = vsel %vm24, %v20, 0.0
  %26 = vadd.xlane.f32.xlu0 %v25
  %v27 = vpop.xlane.xlu0 %26
  %v28 = vsel %vm24, %v21, 0.0
  %29 = vadd.xlane.f32.xlu0 %v28
  %v30 = vpop.xlane.xlu0 %29
  %v31 = vsel %vm24, %v22, 0.0
  %32 = vadd.xlane.f32.xlu0 %v31
  %v33 = vpop.xlane.xlu0 %32
  %v34 = vsel %vm24, %v23, 0.0
  %35 = vadd.xlane.f32.xlu0 %v34
  %v36 = vpop.xlane.xlu0 %35
  %v37 = vrcp.pop 32.0
  %v38 = vmul.f32 %v27, %v37
  %v39 = vmul.f32 %v30, %v37
  %v40 = vmul.f32 %v33, %v37
  %v41 = vmul.f32 %v36, %v37
  %v42 = vsub.f32 %v20, %v38
  %v43 = vsub.f32 %v21, %v39
  %v44 = vsub.f32 %v22, %v40
  %v45 = vsub.f32 %v23, %v41
  %v46 = vmul.f32 %v42, %v42
  %v47 = vmul.f32 %v43, %v43
  %v48 = vmul.f32 %v44, %v44
  %v49 = vmul.f32 %v45, %v45
  %v50 = vsel %vm24, %v46, 0.0
  %51 = vadd.xlane.f32.xlu0 %v50
  %v52 = vpop.xlane.xlu0 %51
  %v53 = vsel %vm24, %v47, 0.0
  %54 = vadd.xlane.f32.xlu0 %v53
  %v55 = vpop.xlane.xlu0 %54
  %v56 = vsel %vm24, %v48, 0.0
  %57 = vadd.xlane.f32.xlu0 %v56
  %v58 = vpop.xlane.xlu0 %57
  %v59 = vsel %vm24, %v49, 0.0
  %60 = vadd.xlane.f32.xlu0 %v59
  %v61 = vpop.xlane.xlu0 %60
  %v62 = vmul.f32 %v52, %v37
  %v63 = vmul.f32 %v55, %v37
  %v64 = vmul.f32 %v58, %v37
  %v65 = vmul.f32 %v61, %v37
  %v66 = vadd.f32 %v62, 1e-06
  %v67 = vadd.f32 %v63, 1e-06
  %v68 = vadd.f32 %v64, 1e-06
  %v69 = vadd.f32 %v65, 1e-06
  %v70 = vrsqrt.pop %v66
  %v71 = vrsqrt.pop %v67
  %v72 = vrsqrt.pop %v68
  %v73 = vrsqrt.pop %v69
  %v74 = vmul.f32 %v42, %v70
  %v75 = vmul.f32 %v43, %v71
  %v76 = vmul.f32 %v44, %v72
  %v77 = vmul.f32 %v45, %v73
  %v78 = vld [vmem:[%s3] sm:$0x1]
  %v80 = vlaneseq
  %v81 = vshrl.u32 %v80, 7
  %v82 = vsub.s32 0, %v81
  %v83 = vrot.slane %v78, %v82
  %v85 = vmul.f32 %v74, %v83
  %v86 = vmul.f32 %v75, %v83
  %v87 = vmul.f32 %v76, %v83
  %v88 = vmul.f32 %v77, %v83
  %v89 = vld [vmem:[%s4] sm:$0x1]
  %v91 = vlaneseq
  %v92 = vshrl.u32 %v91, 7
  %v93 = vsub.s32 0, %v92
  %v94 = vrot.slane %v89, %v93
  %v96 = vadd.f32 %v85, %v94
  %v97 = vadd.f32 %v86, %v94
  %v98 = vadd.f32 %v87, %v94
  %v99 = vadd.f32 %v88, %v94
  %v100 = vld [vmem:[%s1] sm:$0xff]
  %v101 = vld [vmem:[%s1 + $0x8] sm:$0xff]
  %v102 = vld [vmem:[%s1 + $0x10] sm:$0xff]
  %v103 = vld [vmem:[%s1 + $0x18] sm:$0xff]
  %v104 = vld [vmem:[%s2] sm:$0x1]
  %v106 = vlaneseq
  %v107 = vshrl.u32 %v106, 7
  %v108 = vsub.s32 0, %v107
  %v109 = vrot.slane %v104, %v108
  %v112 = vsel %vm24, %v96, 0
  %v115 = vsel %vm24, %v97, 0
  %v118 = vsel %vm24, %v98, 0
  %v121 = vsel %vm24, %v99, 0
  %123 = vmatprep.subr.mxu0 0.0
  %124 = vmatpush1.msra.mxu0 0.0
  %125 = vmatprep.subr.mxu0 0.0
  %126 = vmatpush1.msra.mxu0 0.0
  %127 = vmatprep.subr.mxu0 0.0
  %128 = vmatpush1.msra.mxu0 0.0
  %129 = vmatprep.subr.mxu0 0.0
  %130 = vmatpush1.msra.mxu0 0.0
  %131 = vmatprep.subr.mxu0 0.0
  %132 = vmatpush1.msra.mxu0 0.0
  %133 = vmatprep.subr.mxu0 0.0
  %134 = vmatpush1.msra.mxu0 0.0
  %135 = vmatprep.subr.mxu0 0.0
  %136 = vmatpush1.msra.mxu0 0.0
  %137 = vmatprep.subr.mxu0 0.0
  %138 = vmatpush1.msra.mxu0 0.0
  %139 = vmatprep.subr.mxu0 0.0
  %140 = vmatpush1.msra.mxu0 0.0
  %141 = vmatprep.subr.mxu0 0.0
  %142 = vmatpush1.msra.mxu0 0.0
  %143 = vmatprep.subr.mxu0 0.0
  %144 = vmatpush1.msra.mxu0 0.0
  %145 = vmatprep.subr.mxu0 0.0
  %146 = vmatpush1.msra.mxu0 0.0
  %147 = vmatprep.subr.mxu0 0.0
  %148 = vmatpush1.msra.mxu0 %v103
  %149 = vmatprep.subr.mxu0 0.0
  %150 = vmatpush1.msra.mxu0 %v102
  %151 = vmatprep.subr.mxu0 0.0
  %152 = vmatpush1.msra.mxu0 %v101
  %153 = vmatprep.subr.mxu0 0.0
  %154 = vmatpush1.msra.mxu0 %v100
  %155 = vmatprep.subr.mxu0 0.0
  %156 = vmatpush2.msra.mxu0 0.0
  %157 = vmatprep.subr.mxu0 0.0
  %158 = vmatpush2.msra.mxu0 0.0
  %159 = vmatprep.subr.mxu0 0.0
  %160 = vmatpush2.msra.mxu0 0.0
  %161 = vmatprep.subr.mxu0 0.0
  %162 = vmatpush2.msra.mxu0 0.0
  %163 = vmatprep.subr.mxu0 0.0
  %164 = vmatpush2.msra.mxu0 0.0
  %165 = vmatprep.subr.mxu0 0.0
  %166 = vmatpush2.msra.mxu0 0.0
  %167 = vmatprep.subr.mxu0 0.0
  %168 = vmatpush2.msra.mxu0 0.0
  %169 = vmatprep.subr.mxu0 0.0
  %170 = vmatpush2.msra.mxu0 0.0
  %171 = vmatprep.subr.mxu0 0.0
  %172 = vmatpush2.msra.mxu0 0.0
  %173 = vmatprep.subr.mxu0 0.0
  %174 = vmatpush2.msra.mxu0 0.0
  %175 = vmatprep.subr.mxu0 0.0
  %176 = vmatpush2.msra.mxu0 0.0
  %177 = vmatprep.subr.mxu0 0.0
  %178 = vmatpush2.msra.mxu0 0.0
  %179 = vmatprep.subr.mxu0 0.0
  %180 = vmatpush2.msra.mxu0 0.0
  %181 = vmatprep.subr.mxu0 0.0
  %182 = vmatpush2.msra.mxu0 0.0
  %183 = vmatprep.subr.mxu0 0.0
  %184 = vmatpush2.msra.mxu0 0.0
  %185 = vmatprep.subr.mxu0 0.0
  %186 = vmatpush2.msra.mxu0 0.0
  %187 = vmatprep.mubr.f32.mxu0 0.0
  %188 = vmatmul.mubr.f32.gmra.mxu0 %v112
  %v189 = vpop.f32.mrf.mxu0
  %v190 = vadd.f32 %v109, %v189
  %v191 = vpop.f32.mrf.mxu0
  %192 = vmatprep.mubr.f32.mxu0 0.0
  %193 = vmatmul.mubr.f32.gmra.mxu0 %v115
  %v194 = vpop.f32.mrf.mxu0
  %v195 = vadd.f32 %v109, %v194
  %v196 = vpop.f32.mrf.mxu0
  %197 = vmatprep.mubr.f32.mxu0 0.0
  %198 = vmatmul.mubr.f32.gmra.mxu0 %v118
  %v199 = vpop.f32.mrf.mxu0
  %v200 = vadd.f32 %v109, %v199
  %v201 = vpop.f32.mrf.mxu0
  %202 = vmatprep.mubr.f32.mxu0 0.0
  %203 = vmatmul.mubr.f32.gmra.mxu0 %v121
  %v204 = vpop.f32.mrf.mxu0
  %v205 = vadd.f32 %v109, %v204
  %v206 = vpop.f32.mrf.mxu0
  %207 = vdwg.mxu0
  %v208 = vmul.f32 %v190, 0.5
  %v209 = vmul.f32 %v195, 0.5
  %v210 = vmul.f32 %v200, 0.5
  %v211 = vmul.f32 %v205, 0.5
  %v212 = vmul.f32 %v190, 0.70710677
  %v213 = vmul.f32 %v195, 0.70710677
  %v214 = vmul.f32 %v200, 0.70710677
  %v215 = vmul.f32 %v205, 0.70710677
  %vm216 = vcmp.ge.f32.partialorder %v212, 0.0
  %vm217 = vcmp.ge.f32.partialorder %v213, 0.0
  %vm218 = vcmp.ge.f32.partialorder %v214, 0.0
  %vm219 = vcmp.ge.f32.partialorder %v215, 0.0
  %v220 = vsel %vm216, 1.0, -1.0
  %v221 = vsel %vm217, 1.0, -1.0
  %v222 = vsel %vm218, 1.0, -1.0
  %v223 = vsel %vm219, 1.0, -1.0
  %v224 = vand.u32 2147483647, %v212
  %v225 = vand.u32 2147483647, %v213
  %v226 = vand.u32 2147483647, %v214
  %v227 = vand.u32 2147483647, %v215
  %v228 = vmul.f32 %v224, 0.3275911
  %v229 = vmul.f32 %v225, 0.3275911
  %v230 = vmul.f32 %v226, 0.3275911
  %v231 = vmul.f32 %v227, 0.3275911
  %v232 = vadd.f32 %v228, 1.0
  %v233 = vadd.f32 %v229, 1.0
  %v234 = vadd.f32 %v230, 1.0
  %v235 = vadd.f32 %v231, 1.0
  %v236 = vrcp.pop %v232
  %v237 = vmul.f32 1.0, %v236
  %v238 = vrcp.pop %v233
  %v239 = vmul.f32 1.0, %v238
  %v240 = vrcp.pop %v234
  %v241 = vmul.f32 1.0, %v240
  %v242 = vrcp.pop %v235
  %v243 = vmul.f32 1.0, %v242
  %v244 = vmul.f32 %v237, 1.0614054
  %v245 = vmul.f32 %v239, 1.0614054
  %v246 = vmul.f32 %v241, 1.0614054
  %v247 = vmul.f32 %v243, 1.0614054
  %v248 = vadd.f32 %v244, -1.4531521
  %v249 = vadd.f32 %v245, -1.4531521
  %v250 = vadd.f32 %v246, -1.4531521
  %v251 = vadd.f32 %v247, -1.4531521
  %v252 = vmul.f32 %v248, %v237
  %v253 = vmul.f32 %v249, %v239
  %v254 = vmul.f32 %v250, %v241
  %v255 = vmul.f32 %v251, %v243
  %v256 = vadd.f32 %v252, 1.4214138
  %v257 = vadd.f32 %v253, 1.4214138
  %v258 = vadd.f32 %v254, 1.4214138
  %v259 = vadd.f32 %v255, 1.4214138
  %v260 = vmul.f32 %v256, %v237
  %v261 = vmul.f32 %v257, %v239
  %v262 = vmul.f32 %v258, %v241
  %v263 = vmul.f32 %v259, %v243
  %v264 = vadd.f32 %v260, -0.28449672
  %v265 = vadd.f32 %v261, -0.28449672
  %v266 = vadd.f32 %v262, -0.28449672
  %v267 = vadd.f32 %v263, -0.28449672
  %v268 = vmul.f32 %v264, %v237
  %v269 = vmul.f32 %v265, %v239
  %v270 = vmul.f32 %v266, %v241
  %v271 = vmul.f32 %v267, %v243
  %v272 = vadd.f32 %v268, 0.2548296
  %v273 = vadd.f32 %v269, 0.2548296
  %v274 = vadd.f32 %v270, 0.2548296
  %v275 = vadd.f32 %v271, 0.2548296
  %v276 = vmul.f32 %v272, %v237
  %v277 = vmul.f32 %v273, %v239
  %v278 = vmul.f32 %v274, %v241
  %v279 = vmul.f32 %v275, %v243
  %v280 = vsub.f32 0.0, %v224
  %v281 = vsub.f32 0.0, %v225
  %v282 = vsub.f32 0.0, %v226
  %v283 = vsub.f32 0.0, %v227
  %v284 = vmul.f32 %v280, %v224
  %v285 = vmul.f32 %v281, %v225
  %v286 = vmul.f32 %v282, %v226
  %v287 = vmul.f32 %v283, %v227
  %v288 = vmul.f32 %v284, 1.442695
  %v289 = vpow.pop %v288
  %v290 = vmul.f32 %v285, 1.442695
  %v291 = vpow.pop %v290
  %v292 = vmul.f32 %v286, 1.442695
  %v293 = vpow.pop %v292
  %v294 = vmul.f32 %v287, 1.442695
  %v295 = vpow.pop %v294
  %v296 = vmul.f32 %v276, %v289
  %v297 = vmul.f32 %v277, %v291
  %v298 = vmul.f32 %v278, %v293
  %v299 = vmul.f32 %v279, %v295
  %v300 = vsub.f32 1.0, %v296
  %v301 = vsub.f32 1.0, %v297
  %v302 = vsub.f32 1.0, %v298
  %v303 = vsub.f32 1.0, %v299
  %v304 = vmul.f32 %v220, %v300
  %v305 = vmul.f32 %v221, %v301
  %v306 = vmul.f32 %v222, %v302
  %v307 = vmul.f32 %v223, %v303
  %v308 = vadd.f32 %v304, 1.0
  %v309 = vadd.f32 %v305, 1.0
  %v310 = vadd.f32 %v306, 1.0
  %v311 = vadd.f32 %v307, 1.0
  %v312 = vmul.f32 %v208, %v308
  %v313 = vmul.f32 %v209, %v309
  %v314 = vmul.f32 %v210, %v310
  %v315 = vmul.f32 %v211, %v311
  %316 = vst [vmem:[%s5] sm:$0xff] %v312
  %317 = vst [vmem:[%s5 + $0x8] sm:$0xff] %v313
  %318 = vst [vmem:[%s5 + $0x10] sm:$0xff] %v314
  %319 = vst [vmem:[%s5 + $0x18] sm:$0xff] %v315
  // Predicated region
  $region22: #{swin_forward.28} parent=0 // pred_check
    _
  $region23: #{swin_forward.28} parent=0 // pred_check_branch
    %321 = sbr.rel (0) target = $region25
  $region24: #{swin_forward.28} parent=0 // pred_region
    _
  $region25: #{swin_forward.28} parent=0 // pred_fallthru
    _
  // Predicated region
  $region26: #{swin_forward.28} parent=0 // pred_check
    _
  $region27: #{swin_forward.28} parent=0 // pred_check_branch
    %323 = sbr.rel (0) target = $region29
  $region28: #{swin_forward.28} parent=0 // pred_region
    _
  $region29: #{swin_forward.28} parent=0 // pred_fallthru
    _

// kernel: swin_forward.31
$region0: #{swin_forward.31}
  #allocation0 [shape = 'u32[]', space=smem, size = 0x4, offset = 0x4, fixed_abs, tag = 'smem constant byte address 0x4 - core index']
  #allocation1 [shape = 'u32[144,128]{1,0:T(1,128)}', space=vmem, size = 0x12000, scoped, tag = 'internal scratch']
  %s0 = inlined_call_operand.vmem [shape: f32[8,4,96], index: 0, kind: input, shape index: {}]
  %s1 = inlined_call_operand.vmem [shape: f32[2,4,4], index: 1, kind: input, shape index: {}]
  %s2 = inlined_call_operand.vmem [shape: f32[4,4,4], index: 2, kind: input, shape index: {}]
  %s3 = inlined_call_operand.vmem [shape: f32[8,4,32], index: 3, kind: output, shape index: {}]
  %s4 = sld [smem:[#allocation0]]
  $region45: #{swin_forward.31} parent=0
    _
  %s6 = ssub.s32 1, %s4
  %s7 = scalar_select 0, %s6, %s4
  loop: start=0, step=1, limit=4
  $region2: #{swin_forward.31} parent=0 // loop_pre_header
    _
  $region3: #{swin_forward.31} parent=0 // loop_header
    %s9 = sphi 0, %s13
    %p10 = scmp.ge.s32.totalorder %s9, 4
    %s19 = sphi 0, %s21
    %s22 = sphi 0, %s19
    %s23 = sphi 0, %s22
    %s39 = sphi 0, %s23
    %s43 = sphi 0, %s43
    %s45 = sphi 0, %s43
    %s46 = sphi 0, %s45
    %s60 = sphi 0, %s46
    %s64 = sphi 0, %s64
    %s66 = sphi 0, %s64
    %s67 = sphi 0, %s66
    %s81 = sphi 0, %s67
    %s87 = sphi 0, %s89
    %s90 = sphi 0, %s87
    %s91 = sphi 0, %s90
    %s107 = sphi 0, %s91
  $region4: #{swin_forward.31} parent=0 // loop_header_branch
    %12 = sbr.rel (%p10) target = $region8
  $region5: #{swin_forward.31} parent=0 // loop_body
    %s14 = ssub.s32 %s9, 1
    %s15 = ssub.s32 %s9, 2
    %s16 = sadd.s32 %s9, 1
    %s17 = ssub.s32 %s9, %s16
    %p18 = scmp.eq.s32.totalorder %s17, 0
    %s20 = sadd.s32 %s19, 1
    %s21 = scalar_select %p18, %s19, %s20
    %p24 = pneg %p18
    %p25 = scmp.eq.s32.totalorder %s9, 1
    %p26 = por %p24, %p25
    %p27 = scmp.ne.s32.totalorder %s19, %s22
    %p28 = scmp.eq.s32.totalorder %s9, 0
    %p29 = por %p27, %p28
    %p30 = scmp.ne.s32.totalorder %s19, %s22
    %p31 = scmp.eq.s32.totalorder %s14, 1
    %p32 = por %p30, %p31
    %p33 = scmp.ne.s32.totalorder %s22, %s23
    %p34 = scmp.eq.s32.totalorder %s14, 0
    %p35 = por %p33, %p34
    %p36 = scmp.ne.s32.totalorder %s22, %s23
    %p37 = scmp.eq.s32.totalorder %s15, 1
    %p38 = por %p36, %p37
    %p40 = scmp.ne.s32.totalorder %s23, %s39
    %p41 = scmp.eq.s32.totalorder %s15, 0
    %p42 = por %p40, %p41
    %s44 = sadd.s32 %s43, 1
    %p47 = scmp.eq.s32.totalorder %s9, 1
    %p48 = scmp.ne.s32.totalorder %s43, %s45
    %p49 = scmp.eq.s32.totalorder %s9, 0
    %p50 = por %p48, %p49
    %p51 = scmp.ne.s32.totalorder %s43, %s45
    %p52 = scmp.eq.s32.totalorder %s14, 1
    %p53 = por %p51, %p52
    %p54 = scmp.ne.s32.totalorder %s45, %s46
    %p55 = scmp.eq.s32.totalorder %s14, 0
    %p56 = por %p54, %p55
    %p57 = scmp.ne.s32.totalorder %s45, %s46
    %p58 = scmp.eq.s32.totalorder %s15, 1
    %p59 = por %p57, %p58
    %p61 = scmp.ne.s32.totalorder %s46, %s60
    %p62 = scmp.eq.s32.totalorder %s15, 0
    %p63 = por %p61, %p62
    %s65 = sadd.s32 %s64, 1
    %p68 = scmp.eq.s32.totalorder %s9, 1
    %p69 = scmp.ne.s32.totalorder %s64, %s66
    %p70 = scmp.eq.s32.totalorder %s9, 0
    %p71 = por %p69, %p70
    %p72 = scmp.ne.s32.totalorder %s64, %s66
    %p73 = scmp.eq.s32.totalorder %s14, 1
    %p74 = por %p72, %p73
    %p75 = scmp.ne.s32.totalorder %s66, %s67
    %p76 = scmp.eq.s32.totalorder %s14, 0
    %p77 = por %p75, %p76
    %p78 = scmp.ne.s32.totalorder %s66, %s67
    %p79 = scmp.eq.s32.totalorder %s15, 1
    %p80 = por %p78, %p79
    %p82 = scmp.ne.s32.totalorder %s67, %s81
    %p83 = scmp.eq.s32.totalorder %s15, 0
    %p84 = por %p82, %p83
    %s85 = ssub.s32 %s9, %s16
    %p86 = scmp.eq.s32.totalorder %s85, 0
    %s88 = sadd.s32 %s87, 1
    %s89 = scalar_select %p86, %s87, %s88
    %p92 = pneg %p86
    %p93 = scmp.eq.s32.totalorder %s9, 1
    %p94 = por %p92, %p93
    %p95 = scmp.ne.s32.totalorder %s87, %s90
    %p96 = scmp.eq.s32.totalorder %s9, 0
    %p97 = por %p95, %p96
    %p98 = scmp.ne.s32.totalorder %s87, %s90
    %p99 = scmp.eq.s32.totalorder %s14, 1
    %p100 = por %p98, %p99
    %p101 = scmp.ne.s32.totalorder %s90, %s91
    %p102 = scmp.eq.s32.totalorder %s14, 0
    %p103 = por %p101, %p102
    %p104 = scmp.ne.s32.totalorder %s90, %s91
    %p105 = scmp.eq.s32.totalorder %s15, 1
    %p106 = por %p104, %p105
    %p108 = scmp.ne.s32.totalorder %s91, %s107
    %p109 = scmp.eq.s32.totalorder %s15, 0
    %p110 = por %p108, %p109
    %p111 = scmp.le.s32.totalorder 1, %s9
    %p112 = scmp.lt.s32.totalorder %s9, 3
    %p113 = pnand %p111, %p112
    %p114 = pneg %p113
    // Predicated region
    $region9: #{swin_forward.31} parent=5 // pred_check
      _
    $region10: #{swin_forward.31} parent=5 // pred_check_branch
      %116 = sbr.rel (%p113) target = $region12
    $region11: #{swin_forward.31} parent=5 // pred_region
      %s117 = ssub.s32 %s9, 1
      // Predicated region
      $region13: #{swin_forward.31} parent=11 // pred_check
        %p118 = pneg %p56
      $region14: #{swin_forward.31} parent=11 // pred_check_branch
        %120 = sbr.rel (%p118) target = $region16
      $region15: #{swin_forward.31} parent=11 // pred_region
        _
      $region16: #{swin_forward.31} parent=11 // pred_fallthru
        _
      // Predicated region
      $region17: #{swin_forward.31} parent=11 // pred_check
        %p121 = pneg %p77
      $region18: #{swin_forward.31} parent=11 // pred_check_branch
        %123 = sbr.rel (%p121) target = $region20
      $region19: #{swin_forward.31} parent=11 // pred_region
        _
      $region20: #{swin_forward.31} parent=11 // pred_fallthru
        _
    $region12: #{swin_forward.31} parent=5 // pred_fallthru
      _
    %p124 = scmp.lt.s32.totalorder %s9, 2
    // Predicated region
    $region21: #{swin_forward.31} parent=5 // pred_check
      %p125 = pneg %p124
    $region22: #{swin_forward.31} parent=5 // pred_check_branch
      %127 = sbr.rel (%p125) target = $region24
    $region23: #{swin_forward.31} parent=5 // pred_region
      // Predicated region
      $region25: #{swin_forward.31} parent=23 // pred_check
        %p128 = pneg %p29
      $region26: #{swin_forward.31} parent=23 // pred_check_branch
        %130 = sbr.rel (%p128) target = $region28
      $region27: #{swin_forward.31} parent=23 // pred_region
        %s131 = smul.u32 4, %s9
        %p132 = scmp.lt.s32.totalorder %s131, 7
        %s133 = scalar_select %p132, %s131, 7
        %s134 = smul.addr %s133, 4
        %s135 = scalar_lea.vmem %s0, %s134
        %s136 = smul.u32 4, %s9
      $region28: #{swin_forward.31} parent=23 // pred_fallthru
        _
    $region24: #{swin_forward.31} parent=5 // pred_fallthru
      _
    %p137 = scmp.le.s32.totalorder 1, %s9
    %p138 = scmp.lt.s32.totalorder %s9, 3
    %p139 = pnand %p137, %p138
    %p140 = pneg %p139
    // Predicated region
    $region29: #{swin_forward.31} parent=5 // pred_check
      _
    $region30: #{swin_forward.31} parent=5 // pred_check_branch
      %142 = sbr.rel (%p139) target = $region32
    $region31: #{swin_forward.31} parent=5 // pred_region
      %s143 = ssub.s32 %s9, 1
      %s144 = smul.u32 4, %s14
      %p145 = scmp.lt.s32.totalorder %s144, 7
      %s146 = scalar_select %p145, %s144, 7
      %s147 = smul.addr %s146, 4
      %s148 = scalar_lea.vmem %s0, %s147
      %p149 = pneg %p35
      %p150 = pneg %p32
      %p151 = pneg %p56
      %p152 = pneg %p53
      %p153 = pneg %p77
      %p154 = pneg %p74
      %p155 = pneg %p103
      %p156 = pneg %p100
      %s157 = smul.u32 4, %s14
      %p158 = scmp.lt.s32.totalorder %s157, 7
      %s159 = scalar_select %p158, %s157, 7
      %s160 = smul.addr %s159, 4
      %s161 = scalar_lea.vmem %s3, %s160
      %s162 = smul.u32 4, %s14
      %p163 = scmp.lt.s32.totalorder %s162, 7
      %s164 = scalar_select %p163, %s162, 7
      %s165 = smul.addr %s164, 4
      %s166 = scalar_lea.vmem %s0, %s165
      %s167 = smul.u32 4, %s14
      %s168 = smul.u32 4, %s14
      %p169 = scmp.lt.s32.totalorder %s168, 7
      %s170 = scalar_select %p169, %s168, 7
      %s171 = smul.addr %s170, 4
      %s172 = scalar_lea.vmem %s3, %s171
      %s173 = smul.u32 4, %s14
      %v174 = vld [vmem:[%s166] sm:$0xf]
      %v175 = vld [vmem:[%s166 + $0x4] sm:$0xf]
      %v176 = vld [vmem:[%s166 + $0x8] sm:$0xf]
      %v177 = vld [vmem:[%s166 + $0xc] sm:$0xf]
      %v178 = vld [vmem:[%s1] sm:$0xf]
      %v179 = vld [vmem:[%s1 + $0x4] sm:$0xf]
      %v180 = vld [vmem:[%s2] sm:$0xf]
      %v181 = vld [vmem:[%s2 + $0x4] sm:$0xf]
      %v182 = vld [vmem:[%s2 + $0x8] sm:$0xf]
      %v183 = vld [vmem:[%s2 + $0xc] sm:$0xf]
      %v184 = vmul.f32 %v174, 0.25
      %v185 = vmul.f32 %v175, 0.25
      %v186 = vmul.f32 %v176, 0.25
      %v187 = vmul.f32 %v177, 0.25
      %189 = vrot.lane.b32.xlu0 %v174, 96
      %v190 = vpop.permute.xlu0 %189
      %vm191 = vcmask 130048
      %v193 = vsel %vm191, %v184, 0
      %v195 = vsel %vm191, %v190, 0
      %197 = vmatprep.subr.mxu0 0.0
      %198 = vmatpush1.xpose.msra.mxu0 0.0
      %199 = vmatprep.subr.mxu0 0.0
      %200 = vmatpush1.xpose.msra.mxu0 0.0
      %201 = vmatprep.subr.mxu0 0.0
      %202 = vmatpush1.xpose.msra.mxu0 0.0
      %203 = vmatprep.subr.mxu0 0.0
      %204 = vmatpush1.xpose.msra.mxu0 0.0
      %205 = vmatprep.subr.mxu0 0.0
      %206 = vmatpush1.xpose.msra.mxu0 0.0
      %207 = vmatprep.subr.mxu0 0.0
      %208 = vmatpush1.xpose.msra.mxu0 0.0
      %209 = vmatprep.subr.mxu0 0.0
      %210 = vmatpush1.xpose.msra.mxu0 0.0
      %211 = vmatprep.subr.mxu0 0.0
      %212 = vmatpush1.xpose.msra.mxu0 0.0
      %213 = vmatprep.subr.mxu0 0.0
      %214 = vmatpush1.xpose.msra.mxu0 0.0
      %215 = vmatprep.subr.mxu0 0.0
      %216 = vmatpush1.xpose.msra.mxu0 0.0
      %217 = vmatprep.subr.mxu0 0.0
      %218 = vmatpush1.xpose.msra.mxu0 0.0
      %219 = vmatprep.subr.mxu0 0.0
      %220 = vmatpush1.xpose.msra.mxu0 0.0
      %221 = vmatprep.subr.mxu0 0.0
      %222 = vmatpush1.xpose.msra.mxu0 0.0
      %223 = vmatprep.subr.mxu0 0.0
      %224 = vmatpush1.xpose.msra.mxu0 0.0
      %225 = vmatprep.subr.mxu0 0.0
      %226 = vmatpush1.xpose.msra.mxu0 0.0
      %227 = vmatprep.subr.mxu0 0.0
      %228 = vmatpush1.xpose.msra.mxu0 %v195
      %229 = vmatprep.subr.mxu0 0.0
      %230 = vmatpush2.xpose.msra.mxu0 0.0
      %231 = vmatprep.subr.mxu0 0.0
      %232 = vmatpush2.xpose.msra.mxu0 0.0
      %233 = vmatprep.subr.mxu0 0.0
      %234 = vmatpush2.xpose.msra.mxu0 0.0
      %235 = vmatprep.subr.mxu0 0.0
      %236 = vmatpush2.xpose.msra.mxu0 0.0
      %237 = vmatprep.subr.mxu0 0.0
      %238 = vmatpush2.xpose.msra.mxu0 0.0
      %239 = vmatprep.subr.mxu0 0.0
      %240 = vmatpush2.xpose.msra.mxu0 0.0
      %241 = vmatprep.subr.mxu0 0.0
      %242 = vmatpush2.xpose.msra.mxu0 0.0
      %243 = vmatprep.subr.mxu0 0.0
      %244 = vmatpush2.xpose.msra.mxu0 0.0
      %245 = vmatprep.subr.mxu0 0.0
      %246 = vmatpush2.xpose.msra.mxu0 0.0
      %247 = vmatprep.subr.mxu0 0.0
      %248 = vmatpush2.xpose.msra.mxu0 0.0
      %249 = vmatprep.subr.mxu0 0.0
      %250 = vmatpush2.xpose.msra.mxu0 0.0
      %251 = vmatprep.subr.mxu0 0.0
      %252 = vmatpush2.xpose.msra.mxu0 0.0
      %253 = vmatprep.subr.mxu0 0.0
      %254 = vmatpush2.xpose.msra.mxu0 0.0
      %255 = vmatprep.subr.mxu0 0.0
      %256 = vmatpush2.xpose.msra.mxu0 0.0
      %257 = vmatprep.subr.mxu0 0.0
      %258 = vmatpush2.xpose.msra.mxu0 0.0
      %259 = vmatprep.subr.mxu0 0.0
      %260 = vmatpush2.xpose.msra.mxu0 0.0
      %261 = vmatprep.mubr.f32.mxu0 0.0
      %262 = vmatmul.mubr.f32.gmra.mxu0 %v193
      %v263 = vpop.f32.mrf.mxu0
      %v264 = vadd.f32 %v178, %v263
      %v265 = vpop.f32.mrf.mxu0
      %266 = vdwg.mxu0
      %268 = vrot.lane.b32.xlu0 %v175, 96
      %v269 = vpop.permute.xlu0 %268
      %v271 = vsel %vm191, %v185, 0
      %v273 = vsel %vm191, %v269, 0
      %275 = vmatprep.subr.mxu0 0.0
      %276 = vmatpush1.xpose.msra.mxu0 0.0
      %277 = vmatprep.subr.mxu0 0.0
      %278 = vmatpush1.xpose.msra.mxu0 0.0
      %279 = vmatprep.subr.mxu0 0.0
      %280 = vmatpush1.xpose.msra.mxu0 0.0
      %281 = vmatprep.subr.mxu0 0.0
      %282 = vmatpush1.xpose.msra.mxu0 0.0
      %283 = vmatprep.subr.mxu0 0.0
      %284 = vmatpush1.xpose.msra.mxu0 0.0
      %285 = vmatprep.subr.mxu0 0.0
      %286 = vmatpush1.xpose.msra.mxu0 0.0
      %287 = vmatprep.subr.mxu0 0.0
      %288 = vmatpush1.xpose.msra.mxu0 0.0
      %289 = vmatprep.subr.mxu0 0.0
      %290 = vmatpush1.xpose.msra.mxu0 0.0
      %291 = vmatprep.subr.mxu0 0.0
      %292 = vmatpush1.xpose.msra.mxu0 0.0
      %293 = vmatprep.subr.mxu0 0.0
      %294 = vmatpush1.xpose.msra.mxu0 0.0
      %295 = vmatprep.subr.mxu0 0.0
      %296 = vmatpush1.xpose.msra.mxu0 0.0
      %297 = vmatprep.subr.mxu0 0.0
      %298 = vmatpush1.xpose.msra.mxu0 0.0
      %299 = vmatprep.subr.mxu0 0.0
      %300 = vmatpush1.xpose.msra.mxu0 0.0
      %301 = vmatprep.subr.mxu0 0.0
      %302 = vmatpush1.xpose.msra.mxu0 0.0
      %303 = vmatprep.subr.mxu0 0.0
      %304 = vmatpush1.xpose.msra.mxu0 0.0
      %305 = vmatprep.subr.mxu0 0.0
      %306 = vmatpush1.xpose.msra.mxu0 %v273
      %307 = vmatprep.subr.mxu0 0.0
      %308 = vmatpush2.xpose.msra.mxu0 0.0
      %309 = vmatprep.subr.mxu0 0.0
      %310 = vmatpush2.xpose.msra.mxu0 0.0
      %311 = vmatprep.subr.mxu0 0.0
      %312 = vmatpush2.xpose.msra.mxu0 0.0
      %313 = vmatprep.subr.mxu0 0.0
      %314 = vmatpush2.xpose.msra.mxu0 0.0
      %315 = vmatprep.subr.mxu0 0.0
      %316 = vmatpush2.xpose.msra.mxu0 0.0
      %317 = vmatprep.subr.mxu0 0.0
      %318 = vmatpush2.xpose.msra.mxu0 0.0
      %319 = vmatprep.subr.mxu0 0.0
      %320 = vmatpush2.xpose.msra.mxu0 0.0
      %321 = vmatprep.subr.mxu0 0.0
      %322 = vmatpush2.xpose.msra.mxu0 0.0
      %323 = vmatprep.subr.mxu0 0.0
      %324 = vmatpush2.xpose.msra.mxu0 0.0
      %325 = vmatprep.subr.mxu0 0.0
      %326 = vmatpush2.xpose.msra.mxu0 0.0
      %327 = vmatprep.subr.mxu0 0.0
      %328 = vmatpush2.xpose.msra.mxu0 0.0
      %329 = vmatprep.subr.mxu0 0.0
      %330 = vmatpush2.xpose.msra.mxu0 0.0
      %331 = vmatprep.subr.mxu0 0.0
      %332 = vmatpush2.xpose.msra.mxu0 0.0
      %333 = vmatprep.subr.mxu0 0.0
      %334 = vmatpush2.xpose.msra.mxu0 0.0
      %335 = vmatprep.subr.mxu0 0.0
      %336 = vmatpush2.xpose.msra.mxu0 0.0
      %337 = vmatprep.subr.mxu0 0.0
      %338 = vmatpush2.xpose.msra.mxu0 0.0
      %339 = vmatprep.mubr.f32.mxu0 0.0
      %340 = vmatmul.mubr.f32.gmra.mxu0 %v271
      %v341 = vpop.f32.mrf.mxu0
      %v342 = vadd.f32 %v178, %v341
      %v343 = vpop.f32.mrf.mxu0
      %344 = vdwg.mxu0
      %346 = vrot.lane.b32.xlu0 %v176, 96
      %v347 = vpop.permute.xlu0 %346
      %v349 = vsel %vm191, %v186, 0
      %v351 = vsel %vm191, %v347, 0
      %353 = vmatprep.subr.mxu0 0.0
      %354 = vmatpush1.xpose.msra.mxu0 0.0
      %355 = vmatprep.subr.mxu0 0.0
      %356 = vmatpush1.xpose.msra.mxu0 0.0
      %357 = vmatprep.subr.mxu0 0.0
      %358 = vmatpush1.xpose.msra.mxu0 0.0
      %359 = vmatprep.subr.mxu0 0.0
      %360 = vmatpush1.xpose.msra.mxu0 0.0
      %361 = vmatprep.subr.mxu0 0.0
      %362 = vmatpush1.xpose.msra.mxu0 0.0
      %363 = vmatprep.subr.mxu0 0.0
      %364 = vmatpush1.xpose.msra.mxu0 0.0
      %365 = vmatprep.subr.mxu0 0.0
      %366 = vmatpush1.xpose.msra.mxu0 0.0
      %367 = vmatprep.subr.mxu0 0.0
      %368 = vmatpush1.xpose.msra.mxu0 0.0
      %369 = vmatprep.subr.mxu0 0.0
      %370 = vmatpush1.xpose.msra.mxu0 0.0
      %371 = vmatprep.subr.mxu0 0.0
      %372 = vmatpush1.xpose.msra.mxu0 0.0
      %373 = vmatprep.subr.mxu0 0.0
      %374 = vmatpush1.xpose.msra.mxu0 0.0
      %375 = vmatprep.subr.mxu0 0.0
      %376 = vmatpush1.xpose.msra.mxu0 0.0
      %377 = vmatprep.subr.mxu0 0.0
      %378 = vmatpush1.xpose.msra.mxu0 0.0
      %379 = vmatprep.subr.mxu0 0.0
      %380 = vmatpush1.xpose.msra.mxu0 0.0
      %381 = vmatprep.subr.mxu0 0.0
      %382 = vmatpush1.xpose.msra.mxu0 0.0
      %383 = vmatprep.subr.mxu0 0.0
      %384 = vmatpush1.xpose.msra.mxu0 %v351
      %385 = vmatprep.subr.mxu0 0.0
      %386 = vmatpush2.xpose.msra.mxu0 0.0
      %387 = vmatprep.subr.mxu0 0.0
      %388 = vmatpush2.xpose.msra.mxu0 0.0
      %389 = vmatprep.subr.mxu0 0.0
      %390 = vmatpush2.xpose.msra.mxu0 0.0
      %391 = vmatprep.subr.mxu0 0.0
      %392 = vmatpush2.xpose.msra.mxu0 0.0
      %393 = vmatprep.subr.mxu0 0.0
      %394 = vmatpush2.xpose.msra.mxu0 0.0
      %395 = vmatprep.subr.mxu0 0.0
      %396 = vmatpush2.xpose.msra.mxu0 0.0
      %397 = vmatprep.subr.mxu0 0.0
      %398 = vmatpush2.xpose.msra.mxu0 0.0
      %399 = vmatprep.subr.mxu0 0.0
      %400 = vmatpush2.xpose.msra.mxu0 0.0
      %401 = vmatprep.subr.mxu0 0.0
      %402 = vmatpush2.xpose.msra.mxu0 0.0
      %403 = vmatprep.subr.mxu0 0.0
      %404 = vmatpush2.xpose.msra.mxu0 0.0
      %405 = vmatprep.subr.mxu0 0.0
      %406 = vmatpush2.xpose.msra.mxu0 0.0
      %407 = vmatprep.subr.mxu0 0.0
      %408 = vmatpush2.xpose.msra.mxu0 0.0
      %409 = vmatprep.subr.mxu0 0.0
      %410 = vmatpush2.xpose.msra.mxu0 0.0
      %411 = vmatprep.subr.mxu0 0.0
      %412 = vmatpush2.xpose.msra.mxu0 0.0
      %413 = vmatprep.subr.mxu0 0.0
      %414 = vmatpush2.xpose.msra.mxu0 0.0
      %415 = vmatprep.subr.mxu0 0.0
      %416 = vmatpush2.xpose.msra.mxu0 0.0
      %417 = vmatprep.mubr.f32.mxu0 0.0
      %418 = vmatmul.mubr.f32.gmra.mxu0 %v349
      %v419 = vpop.f32.mrf.mxu0
      %v420 = vadd.f32 %v178, %v419
      %v421 = vpop.f32.mrf.mxu0
      %422 = vdwg.mxu0
      %424 = vrot.lane.b32.xlu0 %v177, 96
      %v425 = vpop.permute.xlu0 %424
      %v427 = vsel %vm191, %v187, 0
      %v429 = vsel %vm191, %v425, 0
      %431 = vmatprep.subr.mxu0 0.0
      %432 = vmatpush1.xpose.msra.mxu0 0.0
      %433 = vmatprep.subr.mxu0 0.0
      %434 = vmatpush1.xpose.msra.mxu0 0.0
      %435 = vmatprep.subr.mxu0 0.0
      %436 = vmatpush1.xpose.msra.mxu0 0.0
      %437 = vmatprep.subr.mxu0 0.0
      %438 = vmatpush1.xpose.msra.mxu0 0.0
      %439 = vmatprep.subr.mxu0 0.0
      %440 = vmatpush1.xpose.msra.mxu0 0.0
      %441 = vmatprep.subr.mxu0 0.0
      %442 = vmatpush1.xpose.msra.mxu0 0.0
      %443 = vmatprep.subr.mxu0 0.0
      %444 = vmatpush1.xpose.msra.mxu0 0.0
      %445 = vmatprep.subr.mxu0 0.0
      %446 = vmatpush1.xpose.msra.mxu0 0.0
      %447 = vmatprep.subr.mxu0 0.0
      %448 = vmatpush1.xpose.msra.mxu0 0.0
      %449 = vmatprep.subr.mxu0 0.0
      %450 = vmatpush1.xpose.msra.mxu0 0.0
      %451 = vmatprep.subr.mxu0 0.0
      %452 = vmatpush1.xpose.msra.mxu0 0.0
      %453 = vmatprep.subr.mxu0 0.0
      %454 = vmatpush1.xpose.msra.mxu0 0.0
      %455 = vmatprep.subr.mxu0 0.0
      %456 = vmatpush1.xpose.msra.mxu0 0.0
      %457 = vmatprep.subr.mxu0 0.0
      %458 = vmatpush1.xpose.msra.mxu0 0.0
      %459 = vmatprep.subr.mxu0 0.0
      %460 = vmatpush1.xpose.msra.mxu0 0.0
      %461 = vmatprep.subr.mxu0 0.0
      %462 = vmatpush1.xpose.msra.mxu0 %v429
      %463 = vmatprep.subr.mxu0 0.0
      %464 = vmatpush2.xpose.msra.mxu0 0.0
      %465 = vmatprep.subr.mxu0 0.0
      %466 = vmatpush2.xpose.msra.mxu0 0.0
      %467 = vmatprep.subr.mxu0 0.0
      %468 = vmatpush2.xpose.msra.mxu0 0.0
      %469 = vmatprep.subr.mxu0 0.0
      %470 = vmatpush2.xpose.msra.mxu0 0.0
      %471 = vmatprep.subr.mxu0 0.0
      %472 = vmatpush2.xpose.msra.mxu0 0.0
      %473 = vmatprep.subr.mxu0 0.0
      %474 = vmatpush2.xpose.msra.mxu0 0.0
      %475 = vmatprep.subr.mxu0 0.0
      %476 = vmatpush2.xpose.msra.mxu0 0.0
      %477 = vmatprep.subr.mxu0 0.0
      %478 = vmatpush2.xpose.msra.mxu0 0.0
      %479 = vmatprep.subr.mxu0 0.0
      %480 = vmatpush2.xpose.msra.mxu0 0.0
      %481 = vmatprep.subr.mxu0 0.0
      %482 = vmatpush2.xpose.msra.mxu0 0.0
      %483 = vmatprep.subr.mxu0 0.0
      %484 = vmatpush2.xpose.msra.mxu0 0.0
      %485 = vmatprep.subr.mxu0 0.0
      %486 = vmatpush2.xpose.msra.mxu0 0.0
      %487 = vmatprep.subr.mxu0 0.0
      %488 = vmatpush2.xpose.msra.mxu0 0.0
      %489 = vmatprep.subr.mxu0 0.0
      %490 = vmatpush2.xpose.msra.mxu0 0.0
      %491 = vmatprep.subr.mxu0 0.0
      %492 = vmatpush2.xpose.msra.mxu0 0.0
      %493 = vmatprep.subr.mxu0 0.0
      %494 = vmatpush2.xpose.msra.mxu0 0.0
      %495 = vmatprep.mubr.f32.mxu0 0.0
      %496 = vmatmul.mubr.f32.gmra.mxu0 %v427
      %v497 = vpop.f32.mrf.mxu0
      %v498 = vadd.f32 %v178, %v497
      %v499 = vpop.f32.mrf.mxu0
      %500 = vdwg.mxu0
      %v501 = vadd.f32 %v264, %v180
      %v502 = vadd.f32 %v342, %v181
      %v503 = vadd.f32 %v420, %v182
      %v504 = vadd.f32 %v498, %v183
      %vm505 = vcmask 27648
      %v506 = vsel %vm505, %v501, -inf
      %507 = vmax.xlane.f32.xlu0 %v506
      %v508 = vpop.xlane.xlu0 %507
      %v509 = vsel %vm505, %v502, -inf
      %510 = vmax.xlane.f32.xlu0 %v509
      %v511 = vpop.xlane.xlu0 %510
      %v512 = vsel %vm505, %v503, -inf
      %513 = vmax.xlane.f32.xlu0 %v512
      %v514 = vpop.xlane.xlu0 %513
      %v515 = vsel %vm505, %v504, -inf
      %516 = vmax.xlane.f32.xlu0 %v515
      %v517 = vpop.xlane.xlu0 %516
      %v518 = vsub.f32 %v501, %v508
      %v519 = vsub.f32 %v502, %v511
      %v520 = vsub.f32 %v503, %v514
      %v521 = vsub.f32 %v504, %v517
      %v522 = vmul.f32 %v518, 1.442695
      %v523 = vpow.pop %v522
      %v524 = vmul.f32 %v519, 1.442695
      %v525 = vpow.pop %v524
      %v526 = vmul.f32 %v520, 1.442695
      %v527 = vpow.pop %v526
      %v528 = vmul.f32 %v521, 1.442695
      %v529 = vpow.pop %v528
      %v530 = vsel %vm505, %v523, 0.0
      %531 = vadd.xlane.f32.xlu0 %v530
      %v532 = vpop.xlane.xlu0 %531
      %v533 = vsel %vm505, %v525, 0.0
      %534 = vadd.xlane.f32.xlu0 %v533
      %v535 = vpop.xlane.xlu0 %534
      %v536 = vsel %vm505, %v527, 0.0
      %537 = vadd.xlane.f32.xlu0 %v536
      %v538 = vpop.xlane.xlu0 %537
      %v539 = vsel %vm505, %v529, 0.0
      %540 = vadd.xlane.f32.xlu0 %v539
      %v541 = vpop.xlane.xlu0 %540
      %v542 = vrcp.pop %v532
      %v543 = vrcp.pop %v535
      %v544 = vrcp.pop %v538
      %v545 = vrcp.pop %v541
      %v546 = vmul.f32 %v523, %v542
      %v547 = vmul.f32 %v525, %v543
      %v548 = vmul.f32 %v527, %v544
      %v549 = vmul.f32 %v529, %v545
      %550 = vrot.lane.b32.xlu0 %v174, 64
      %v551 = vpop.permute.xlu0 %550
      %vm552 = vcmask 31744
      %v554 = vsel %vm552, %v546, 0
      %vm556 = vcmask 1043456
      %v557 = vsel %vm556, %v551, 0
      %559 = vmatprep.subr.mxu0 0.0
      %560 = vmatpush1.msra.mxu0 0.0
      %561 = vmatprep.subr.mxu0 0.0
      %562 = vmatpush1.msra.mxu0 0.0
      %563 = vmatprep.subr.mxu0 0.0
      %564 = vmatpush1.msra.mxu0 0.0
      %565 = vmatprep.subr.mxu0 0.0
      %566 = vmatpush1.msra.mxu0 0.0
      %567 = vmatprep.subr.mxu0 0.0
      %568 = vmatpush1.msra.mxu0 0.0
      %569 = vmatprep.subr.mxu0 0.0
      %570 = vmatpush1.msra.mxu0 0.0
      %571 = vmatprep.subr.mxu0 0.0
      %572 = vmatpush1.msra.mxu0 0.0
      %573 = vmatprep.subr.mxu0 0.0
      %574 = vmatpush1.msra.mxu0 0.0
      %575 = vmatprep.subr.mxu0 0.0
      %576 = vmatpush1.msra.mxu0 0.0
      %577 = vmatprep.subr.mxu0 0.0
      %578 = vmatpush1.msra.mxu0 0.0
      %579 = vmatprep.subr.mxu0 0.0
      %580 = vmatpush1.msra.mxu0 0.0
      %581 = vmatprep.subr.mxu0 0.0
      %582 = vmatpush1.msra.mxu0 0.0
      %583 = vmatprep.subr.mxu0 0.0
      %584 = vmatpush1.msra.mxu0 0.0
      %585 = vmatprep.subr.mxu0 0.0
      %586 = vmatpush1.msra.mxu0 0.0
      %587 = vmatprep.subr.mxu0 0.0
      %588 = vmatpush1.msra.mxu0 0.0
      %589 = vmatprep.subr.mxu0 0.0
      %590 = vmatpush1.msra.mxu0 %v557
      %591 = vmatprep.subr.mxu0 0.0
      %592 = vmatpush2.msra.mxu0 0.0
      %593 = vmatprep.subr.mxu0 0.0
      %594 = vmatpush2.msra.mxu0 0.0
      %595 = vmatprep.subr.mxu0 0.0
      %596 = vmatpush2.msra.mxu0 0.0
      %597 = vmatprep.subr.mxu0 0.0
      %598 = vmatpush2.msra.mxu0 0.0
      %599 = vmatprep.subr.mxu0 0.0
      %600 = vmatpush2.msra.mxu0 0.0
      %601 = vmatprep.subr.mxu0 0.0
      %602 = vmatpush2.msra.mxu0 0.0
      %603 = vmatprep.subr.mxu0 0.0
      %604 = vmatpush2.msra.mxu0 0.0
      %605 = vmatprep.subr.mxu0 0.0
      %606 = vmatpush2.msra.mxu0 0.0
      %607 = vmatprep.subr.mxu0 0.0
      %608 = vmatpush2.msra.mxu0 0.0
      %609 = vmatprep.subr.mxu0 0.0
      %610 = vmatpush2.msra.mxu0 0.0
      %611 = vmatprep.subr.mxu0 0.0
      %612 = vmatpush2.msra.mxu0 0.0
      %613 = vmatprep.subr.mxu0 0.0
      %614 = vmatpush2.msra.mxu0 0.0
      %615 = vmatprep.subr.mxu0 0.0
      %616 = vmatpush2.msra.mxu0 0.0
      %617 = vmatprep.subr.mxu0 0.0
      %618 = vmatpush2.msra.mxu0 0.0
      %619 = vmatprep.subr.mxu0 0.0
      %620 = vmatpush2.msra.mxu0 0.0
      %621 = vmatprep.subr.mxu0 0.0
      %622 = vmatpush2.msra.mxu0 0.0
      %623 = vmatprep.mubr.f32.mxu0 0.0
      %624 = vmatmul.mubr.f32.gmra.mxu0 %v554
      %v625 = vpop.f32.mrf.mxu0
      %v626 = vadd.f32 0.0, %v625
      %v627 = vpop.f32.mrf.mxu0
      %628 = vdwg.mxu0
      %629 = vrot.lane.b32.xlu0 %v175, 64
      %v630 = vpop.permute.xlu0 %629
      %v632 = vsel %vm552, %v547, 0
      %v634 = vsel %vm556, %v630, 0
      %636 = vmatprep.subr.mxu0 0.0
      %637 = vmatpush1.msra.mxu0 0.0
      %638 = vmatprep.subr.mxu0 0.0
      %639 = vmatpush1.msra.mxu0 0.0
      %640 = vmatprep.subr.mxu0 0.0
      %641 = vmatpush1.msra.mxu0 0.0
      %642 = vmatprep.subr.mxu0 0.0
      %643 = vmatpush1.msra.mxu0 0.0
      %644 = vmatprep.subr.mxu0 0.0
      %645 = vmatpush1.msra.mxu0 0.0
      %646 = vmatprep.subr.mxu0 0.0
      %647 = vmatpush1.msra.mxu0 0.0
      %648 = vmatprep.subr.mxu0 0.0
      %649 = vmatpush1.msra.mxu0 0.0
      %650 = vmatprep.subr.mxu0 0.0
      %651 = vmatpush1.msra.mxu0 0.0
      %652 = vmatprep.subr.mxu0 0.0
      %653 = vmatpush1.msra.mxu0 0.0
      %654 = vmatprep.subr.mxu0 0.0
      %655 = vmatpush1.msra.mxu0 0.0
      %656 = vmatprep.subr.mxu0 0.0
      %657 = vmatpush1.msra.mxu0 0.0
      %658 = vmatprep.subr.mxu0 0.0
      %659 = vmatpush1.msra.mxu0 0.0
      %660 = vmatprep.subr.mxu0 0.0
      %661 = vmatpush1.msra.mxu0 0.0
      %662 = vmatprep.subr.mxu0 0.0
      %663 = vmatpush1.msra.mxu0 0.0
      %664 = vmatprep.subr.mxu0 0.0
      %665 = vmatpush1.msra.mxu0 0.0
      %666 = vmatprep.subr.mxu0 0.0
      %667 = vmatpush1.msra.mxu0 %v634
      %668 = vmatprep.subr.mxu0 0.0
      %669 = vmatpush2.msra.mxu0 0.0
      %670 = vmatprep.subr.mxu0 0.0
      %671 = vmatpush2.msra.mxu0 0.0
      %672 = vmatprep.subr.mxu0 0.0
      %673 = vmatpush2.msra.mxu0 0.0
      %674 = vmatprep.subr.mxu0 0.0
      %675 = vmatpush2.msra.mxu0 0.0
      %676 = vmatprep.subr.mxu0 0.0
      %677 = vmatpush2.msra.mxu0 0.0
      %678 = vmatprep.subr.mxu0 0.0
      %679 = vmatpush2.msra.mxu0 0.0
      %680 = vmatprep.subr.mxu0 0.0
      %681 = vmatpush2.msra.mxu0 0.0
      %682 = vmatprep.subr.mxu0 0.0
      %683 = vmatpush2.msra.mxu0 0.0
      %684 = vmatprep.subr.mxu0 0.0
      %685 = vmatpush2.msra.mxu0 0.0
      %686 = vmatprep.subr.mxu0 0.0
      %687 = vmatpush2.msra.mxu0 0.0
      %688 = vmatprep.subr.mxu0 0.0
      %689 = vmatpush2.msra.mxu0 0.0
      %690 = vmatprep.subr.mxu0 0.0
      %691 = vmatpush2.msra.mxu0 0.0
      %692 = vmatprep.subr.mxu0 0.0
      %693 = vmatpush2.msra.mxu0 0.0
      %694 = vmatprep.subr.mxu0 0.0
      %695 = vmatpush2.msra.mxu0 0.0
      %696 = vmatprep.subr.mxu0 0.0
      %697 = vmatpush2.msra.mxu0 0.0
      %698 = vmatprep.subr.mxu0 0.0
      %699 = vmatpush2.msra.mxu0 0.0
      %700 = vmatprep.mubr.f32.mxu0 0.0
      %701 = vmatmul.mubr.f32.gmra.mxu0 %v632
      %v702 = vpop.f32.mrf.mxu0
      %v703 = vadd.f32 0.0, %v702
      %v704 = vpop.f32.mrf.mxu0
      %705 = vdwg.mxu0
      %706 = vrot.lane.b32.xlu0 %v176, 64
      %v707 = vpop.permute.xlu0 %706
      %v709 = vsel %vm552, %v548, 0
      %v711 = vsel %vm556, %v707, 0
      %713 = vmatprep.subr.mxu0 0.0
      %714 = vmatpush1.msra.mxu0 0.0
      %715 = vmatprep.subr.mxu0 0.0
      %716 = vmatpush1.msra.mxu0 0.0
      %717 = vmatprep.subr.mxu0 0.0
      %718 = vmatpush1.msra.mxu0 0.0
      %719 = vmatprep.subr.mxu0 0.0
      %720 = vmatpush1.msra.mxu0 0.0
      %721 = vmatprep.subr.mxu0 0.0
      %722 = vmatpush1.msra.mxu0 0.0
      %723 = vmatprep.subr.mxu0 0.0
      %724 = vmatpush1.msra.mxu0 0.0
      %725 = vmatprep.subr.mxu0 0.0
      %726 = vmatpush1.msra.mxu0 0.0
      %727 = vmatprep.subr.mxu0 0.0
      %728 = vmatpush1.msra.mxu0 0.0
      %729 = vmatprep.subr.mxu0 0.0
      %730 = vmatpush1.msra.mxu0 0.0
      %731 = vmatprep.subr.mxu0 0.0
      %732 = vmatpush1.msra.mxu0 0.0
      %733 = vmatprep.subr.mxu0 0.0
      %734 = vmatpush1.msra.mxu0 0.0
      %735 = vmatprep.subr.mxu0 0.0
      %736 = vmatpush1.msra.mxu0 0.0
      %737 = vmatprep.subr.mxu0 0.0
      %738 = vmatpush1.msra.mxu0 0.0
      %739 = vmatprep.subr.mxu0 0.0
      %740 = vmatpush1.msra.mxu0 0.0
      %741 = vmatprep.subr.mxu0 0.0
      %742 = vmatpush1.msra.mxu0 0.0
      %743 = vmatprep.subr.mxu0 0.0
      %744 = vmatpush1.msra.mxu0 %v711
      %745 = vmatprep.subr.mxu0 0.0
      %746 = vmatpush2.msra.mxu0 0.0
      %747 = vmatprep.subr.mxu0 0.0
      %748 = vmatpush2.msra.mxu0 0.0
      %749 = vmatprep.subr.mxu0 0.0
      %750 = vmatpush2.msra.mxu0 0.0
      %751 = vmatprep.subr.mxu0 0.0
      %752 = vmatpush2.msra.mxu0 0.0
      %753 = vmatprep.subr.mxu0 0.0
      %754 = vmatpush2.msra.mxu0 0.0
      %755 = vmatprep.subr.mxu0 0.0
      %756 = vmatpush2.msra.mxu0 0.0
      %757 = vmatprep.subr.mxu0 0.0
      %758 = vmatpush2.msra.mxu0 0.0
      %759 = vmatprep.subr.mxu0 0.0
      %760 = vmatpush2.msra.mxu0 0.0
      %761 = vmatprep.subr.mxu0 0.0
      %762 = vmatpush2.msra.mxu0 0.0
      %763 = vmatprep.subr.mxu0 0.0
      %764 = vmatpush2.msra.mxu0 0.0
      %765 = vmatprep.subr.mxu0 0.0
      %766 = vmatpush2.msra.mxu0 0.0
      %767 = vmatprep.subr.mxu0 0.0
      %768 = vmatpush2.msra.mxu0 0.0
      %769 = vmatprep.subr.mxu0 0.0
      %770 = vmatpush2.msra.mxu0 0.0
      %771 = vmatprep.subr.mxu0 0.0
      %772 = vmatpush2.msra.mxu0 0.0
      %773 = vmatprep.subr.mxu0 0.0
      %774 = vmatpush2.msra.mxu0 0.0
      %775 = vmatprep.subr.mxu0 0.0
      %776 = vmatpush2.msra.mxu0 0.0
      %777 = vmatprep.mubr.f32.mxu0 0.0
      %778 = vmatmul.mubr.f32.gmra.mxu0 %v709
      %v779 = vpop.f32.mrf.mxu0
      %v780 = vadd.f32 0.0, %v779
      %v781 = vpop.f32.mrf.mxu0
      %782 = vdwg.mxu0
      %783 = vrot.lane.b32.xlu0 %v177, 64
      %v784 = vpop.permute.xlu0 %783
      %v786 = vsel %vm552, %v549, 0
      %v788 = vsel %vm556, %v784, 0
      %790 = vmatprep.subr.mxu0 0.0
      %791 = vmatpush1.msra.mxu0 0.0
      %792 = vmatprep.subr.mxu0 0.0
      %793 = vmatpush1.msra.mxu0 0.0
      %794 = vmatprep.subr.mxu0 0.0
      %795 = vmatpush1.msra.mxu0 0.0
      %796 = vmatprep.subr.mxu0 0.0
      %797 = vmatpush1.msra.mxu0 0.0
      %798 = vmatprep.subr.mxu0 0.0
      %799 = vmatpush1.msra.mxu0 0.0
      %800 = vmatprep.subr.mxu0 0.0
      %801 = vmatpush1.msra.mxu0 0.0
      %802 = vmatprep.subr.mxu0 0.0
      %803 = vmatpush1.msra.mxu0 0.0
      %804 = vmatprep.subr.mxu0 0.0
      %805 = vmatpush1.msra.mxu0 0.0
      %806 = vmatprep.subr.mxu0 0.0
      %807 = vmatpush1.msra.mxu0 0.0
      %808 = vmatprep.subr.mxu0 0.0
      %809 = vmatpush1.msra.mxu0 0.0
      %810 = vmatprep.subr.mxu0 0.0
      %811 = vmatpush1.msra.mxu0 0.0
      %812 = vmatprep.subr.mxu0 0.0
      %813 = vmatpush1.msra.mxu0 0.0
      %814 = vmatprep.subr.mxu0 0.0
      %815 = vmatpush1.msra.mxu0 0.0
      %816 = vmatprep.subr.mxu0 0.0
      %817 = vmatpush1.msra.mxu0 0.0
      %818 = vmatprep.subr.mxu0 0.0
      %819 = vmatpush1.msra.mxu0 0.0
      %820 = vmatprep.subr.mxu0 0.0
      %821 = vmatpush1.msra.mxu0 %v788
      %822 = vmatprep.subr.mxu0 0.0
      %823 = vmatpush2.msra.mxu0 0.0
      %824 = vmatprep.subr.mxu0 0.0
      %825 = vmatpush2.msra.mxu0 0.0
      %826 = vmatprep.subr.mxu0 0.0
      %827 = vmatpush2.msra.mxu0 0.0
      %828 = vmatprep.subr.mxu0 0.0
      %829 = vmatpush2.msra.mxu0 0.0
      %830 = vmatprep.subr.mxu0 0.0
      %831 = vmatpush2.msra.mxu0 0.0
      %832 = vmatprep.subr.mxu0 0.0
      %833 = vmatpush2.msra.mxu0 0.0
      %834 = vmatprep.subr.mxu0 0.0
      %835 = vmatpush2.msra.mxu0 0.0
      %836 = vmatprep.subr.mxu0 0.0
      %837 = vmatpush2.msra.mxu0 0.0
      %838 = vmatprep.subr.mxu0 0.0
      %839 = vmatpush2.msra.mxu0 0.0
      %840 = vmatprep.subr.mxu0 0.0
      %841 = vmatpush2.msra.mxu0 0.0
      %842 = vmatprep.subr.mxu0 0.0
      %843 = vmatpush2.msra.mxu0 0.0
      %844 = vmatprep.subr.mxu0 0.0
      %845 = vmatpush2.msra.mxu0 0.0
      %846 = vmatprep.subr.mxu0 0.0
      %847 = vmatpush2.msra.mxu0 0.0
      %848 = vmatprep.subr.mxu0 0.0
      %849 = vmatpush2.msra.mxu0 0.0
      %850 = vmatprep.subr.mxu0 0.0
      %851 = vmatpush2.msra.mxu0 0.0
      %852 = vmatprep.subr.mxu0 0.0
      %853 = vmatpush2.msra.mxu0 0.0
      %854 = vmatprep.mubr.f32.mxu0 0.0
      %855 = vmatmul.mubr.f32.gmra.mxu0 %v786
      %v856 = vpop.f32.mrf.mxu0
      %v857 = vadd.f32 0.0, %v856
      %v858 = vpop.f32.mrf.mxu0
      %859 = vdwg.mxu0
      %860 = vrot.lane.b32.xlu0 %v184, 112
      %v861 = vpop.permute.xlu0 %860
      %862 = vrot.lane.b32.xlu0 %v174, 80
      %v863 = vpop.permute.xlu0 %862
      %v864 = vsel %vm191, %v861, 0
      %v866 = vsel %vm191, %v863, 0
      %868 = vmatprep.subr.mxu0 0.0
      %869 = vmatpush1.xpose.msra.mxu0 0.0
      %870 = vmatprep.subr.mxu0 0.0
      %871 = vmatpush1.xpose.msra.mxu0 0.0
      %872 = vmatprep.subr.mxu0 0.0
      %873 = vmatpush1.xpose.msra.mxu0 0.0
      %874 = vmatprep.subr.mxu0 0.0
      %875 = vmatpush1.xpose.msra.mxu0 0.0
      %876 = vmatprep.subr.mxu0 0.0
      %877 = vmatpush1.xpose.msra.mxu0 0.0
      %878 = vmatprep.subr.mxu0 0.0
      %879 = vmatpush1.xpose.msra.mxu0 0.0
      %880 = vmatprep.subr.mxu0 0.0
      %881 = vmatpush1.xpose.msra.mxu0 0.0
      %882 = vmatprep.subr.mxu0 0.0
      %883 = vmatpush1.xpose.msra.mxu0 0.0
      %884 = vmatprep.subr.mxu0 0.0
      %885 = vmatpush1.xpose.msra.mxu0 0.0
      %886 = vmatprep.subr.mxu0 0.0
      %887 = vmatpush1.xpose.msra.mxu0 0.0
      %888 = vmatprep.subr.mxu0 0.0
      %889 = vmatpush1.xpose.msra.mxu0 0.0
      %890 = vmatprep.subr.mxu0 0.0
      %891 = vmatpush1.xpose.msra.mxu0 0.0
      %892 = vmatprep.subr.mxu0 0.0
      %893 = vmatpush1.xpose.msra.mxu0 0.0
      %894 = vmatprep.subr.mxu0 0.0
      %895 = vmatpush1.xpose.msra.mxu0 0.0
      %896 = vmatprep.subr.mxu0 0.0
      %897 = vmatpush1.xpose.msra.mxu0 0.0
      %898 = vmatprep.subr.mxu0 0.0
      %899 = vmatpush1.xpose.msra.mxu0 %v866
      %900 = vmatprep.subr.mxu0 0.0
      %901 = vmatpush2.xpose.msra.mxu0 0.0
      %902 = vmatprep.subr.mxu0 0.0
      %903 = vmatpush2.xpose.msra.mxu0 0.0
      %904 = vmatprep.subr.mxu0 0.0
      %905 = vmatpush2.xpose.msra.mxu0 0.0
      %906 = vmatprep.subr.mxu0 0.0
      %907 = vmatpush2.xpose.msra.mxu0 0.0
      %908 = vmatprep.subr.mxu0 0.0
      %909 = vmatpush2.xpose.msra.mxu0 0.0
      %910 = vmatprep.subr.mxu0 0.0
      %911 = vmatpush2.xpose.msra.mxu0 0.0
      %912 = vmatprep.subr.mxu0 0.0
      %913 = vmatpush2.xpose.msra.mxu0 0.0
      %914 = vmatprep.subr.mxu0 0.0
      %915 = vmatpush2.xpose.msra.mxu0 0.0
      %916 = vmatprep.subr.mxu0 0.0
      %917 = vmatpush2.xpose.msra.mxu0 0.0
      %918 = vmatprep.subr.mxu0 0.0
      %919 = vmatpush2.xpose.msra.mxu0 0.0
      %920 = vmatprep.subr.mxu0 0.0
      %921 = vmatpush2.xpose.msra.mxu0 0.0
      %922 = vmatprep.subr.mxu0 0.0
      %923 = vmatpush2.xpose.msra.mxu0 0.0
      %924 = vmatprep.subr.mxu0 0.0
      %925 = vmatpush2.xpose.msra.mxu0 0.0
      %926 = vmatprep.subr.mxu0 0.0
      %927 = vmatpush2.xpose.msra.mxu0 0.0
      %928 = vmatprep.subr.mxu0 0.0
      %929 = vmatpush2.xpose.msra.mxu0 0.0
      %930 = vmatprep.subr.mxu0 0.0
      %931 = vmatpush2.xpose.msra.mxu0 0.0
      %932 = vmatprep.mubr.f32.mxu0 0.0
      %933 = vmatmul.mubr.f32.gmra.mxu0 %v864
      %v934 = vpop.f32.mrf.mxu0
      %v935 = vadd.f32 %v179, %v934
      %v936 = vpop.f32.mrf.mxu0
      %937 = vdwg.mxu0
      %938 = vrot.lane.b32.xlu0 %v185, 112
      %v939 = vpop.permute.xlu0 %938
      %940 = vrot.lane.b32.xlu0 %v175, 80
      %v941 = vpop.permute.xlu0 %940
      %v942 = vsel %vm191, %v939, 0
      %v944 = vsel %vm191, %v941, 0
      %946 = vmatprep.subr.mxu0 0.0
      %947 = vmatpush1.xpose.msra.mxu0 0.0
      %948 = vmatprep.subr.mxu0 0.0
      %949 = vmatpush1.xpose.msra.mxu0 0.0
      %950 = vmatprep.subr.mxu0 0.0
      %951 = vmatpush1.xpose.msra.mxu0 0.0
      %952 = vmatprep.subr.mxu0 0.0
      %953 = vmatpush1.xpose.msra.mxu0 0.0
      %954 = vmatprep.subr.mxu0 0.0
      %955 = vmatpush1.xpose.msra.mxu0 0.0
      %956 = vmatprep.subr.mxu0 0.0
      %957 = vmatpush1.xpose.msra.mxu0 0.0
      %958 = vmatprep.subr.mxu0 0.0
      %959 = vmatpush1.xpose.msra.mxu0 0.0
      %960 = vmatprep.subr.mxu0 0.0
      %961 = vmatpush1.xpose.msra.mxu0 0.0
      %962 = vmatprep.subr.mxu0 0.0
      %963 = vmatpush1.xpose.msra.mxu0 0.0
      %964 = vmatprep.subr.mxu0 0.0
      %965 = vmatpush1.xpose.msra.mxu0 0.0
      %966 = vmatprep.subr.mxu0 0.0
      %967 = vmatpush1.xpose.msra.mxu0 0.0
      %968 = vmatprep.subr.mxu0 0.0
      %969 = vmatpush1.xpose.msra.mxu0 0.0
      %970 = vmatprep.subr.mxu0 0.0
      %971 = vmatpush1.xpose.msra.mxu0 0.0
      %972 = vmatprep.subr.mxu0 0.0
      %973 = vmatpush1.xpose.msra.mxu0 0.0
      %974 = vmatprep.subr.mxu0 0.0
      %975 = vmatpush1.xpose.msra.mxu0 0.0
      %976 = vmatprep.subr.mxu0 0.0
      %977 = vmatpush1.xpose.msra.mxu0 %v944
      %978 = vmatprep.subr.mxu0 0.0
      %979 = vmatpush2.xpose.msra.mxu0 0.0
      %980 = vmatprep.subr.mxu0 0.0
      %981 = vmatpush2.xpose.msra.mxu0 0.0
      %982 = vmatprep.subr.mxu0 0.0
      %983 = vmatpush2.xpose.msra.mxu0 0.0
      %984 = vmatprep.subr.mxu0 0.0
      %985 = vmatpush2.xpose.msra.mxu0 0.0
      %986 = vmatprep.subr.mxu0 0.0
      %987 = vmatpush2.xpose.msra.mxu0 0.0
      %988 = vmatprep.subr.mxu0 0.0
      %989 = vmatpush2.xpose.msra.mxu0 0.0
      %990 = vmatprep.subr.mxu0 0.0
      %991 = vmatpush2.xpose.msra.mxu0 0.0
      %992 = vmatprep.subr.mxu0 0.0
      %993 = vmatpush2.xpose.msra.mxu0 0.0
      %994 = vmatprep.subr.mxu0 0.0
      %995 = vmatpush2.xpose.msra.mxu0 0.0
      %996 = vmatprep.subr.mxu0 0.0
      %997 = vmatpush2.xpose.msra.mxu0 0.0
      %998 = vmatprep.subr.mxu0 0.0
      %999 = vmatpush2.xpose.msra.mxu0 0.0
      %1000 = vmatprep.subr.mxu0 0.0
      %1001 = vmatpush2.xpose.msra.mxu0 0.0
      %1002 = vmatprep.subr.mxu0 0.0
      %1003 = vmatpush2.xpose.msra.mxu0 0.0
      %1004 = vmatprep.subr.mxu0 0.0
      %1005 = vmatpush2.xpose.msra.mxu0 0.0
      %1006 = vmatprep.subr.mxu0 0.0
      %1007 = vmatpush2.xpose.msra.mxu0 0.0
      %1008 = vmatprep.subr.mxu0 0.0
      %1009 = vmatpush2.xpose.msra.mxu0 0.0
      %1010 = vmatprep.mubr.f32.mxu0 0.0
      %1011 = vmatmul.mubr.f32.gmra.mxu0 %v942
      %v1012 = vpop.f32.mrf.mxu0
      %v1013 = vadd.f32 %v179, %v1012
      %v1014 = vpop.f32.mrf.mxu0
      %1015 = vdwg.mxu0
      %1016 = vrot.lane.b32.xlu0 %v186, 112
      %v1017 = vpop.permute.xlu0 %1016
      %1018 = vrot.lane.b32.xlu0 %v176, 80
      %v1019 = vpop.permute.xlu0 %1018
      %v1020 = vsel %vm191, %v1017, 0
      %v1022 = vsel %vm191, %v1019, 0
      %1024 = vmatprep.subr.mxu0 0.0
      %1025 = vmatpush1.xpose.msra.mxu0 0.0
      %1026 = vmatprep.subr.mxu0 0.0
      %1027 = vmatpush1.xpose.msra.mxu0 0.0
      %1028 = vmatprep.subr.mxu0 0.0
      %1029 = vmatpush1.xpose.msra.mxu0 0.0
      %1030 = vmatprep.subr.mxu0 0.0
      %1031 = vmatpush1.xpose.msra.mxu0 0.0
      %1032 = vmatprep.subr.mxu0 0.0
      %1033 = vmatpush1.xpose.msra.mxu0 0.0
      %1034 = vmatprep.subr.mxu0 0.0
      %1035 = vmatpush1.xpose.msra.mxu0 0.0
      %1036 = vmatprep.subr.mxu0 0.0
      %1037 = vmatpush1.xpose.msra.mxu0 0.0
      %1038 = vmatprep.subr.mxu0 0.0
      %1039 = vmatpush1.xpose.msra.mxu0 0.0
      %1040 = vmatprep.subr.mxu0 0.0
      %1041 = vmatpush1.xpose.msra.mxu0 0.0
      %1042 = vmatprep.subr.mxu0 0.0
      %1043 = vmatpush1.xpose.msra.mxu0 0.0
      %1044 = vmatprep.subr.mxu0 0.0
      %1045 = vmatpush1.xpose.msra.mxu0 0.0
      %1046 = vmatprep.subr.mxu0 0.0
      %1047 = vmatpush1.xpose.msra.mxu0 0.0
      %1048 = vmatprep.subr.mxu0 0.0
      %1049 = vmatpush1.xpose.msra.mxu0 0.0
      %1050 = vmatprep.subr.mxu0 0.0
      %1051 = vmatpush1.xpose.msra.mxu0 0.0
      %1052 = vmatprep.subr.mxu0 0.0
      %1053 = vmatpush1.xpose.msra.mxu0 0.0
      %1054 = vmatprep.subr.mxu0 0.0
      %1055 = vmatpush1.xpose.msra.mxu0 %v1022
      %1056 = vmatprep.subr.mxu0 0.0
      %1057 = vmatpush2.xpose.msra.mxu0 0.0
      %1058 = vmatprep.subr.mxu0 0.0
      %1059 = vmatpush2.xpose.msra.mxu0 0.0
      %1060 = vmatprep.subr.mxu0 0.0
      %1061 = vmatpush2.xpose.msra.mxu0 0.0
      %1062 = vmatprep.subr.mxu0 0.0
      %1063 = vmatpush2.xpose.msra.mxu0 0.0
      %1064 = vmatprep.subr.mxu0 0.0
      %1065 = vmatpush2.xpose.msra.mxu0 0.0
      %1066 = vmatprep.subr.mxu0 0.0
      %1067 = vmatpush2.xpose.msra.mxu0 0.0
      %1068 = vmatprep.subr.mxu0 0.0
      %1069 = vmatpush2.xpose.msra.mxu0 0.0
      %1070 = vmatprep.subr.mxu0 0.0
      %1071 = vmatpush2.xpose.msra.mxu0 0.0
      %1072 = vmatprep.subr.mxu0 0.0
      %1073 = vmatpush2.xpose.msra.mxu0 0.0
      %1074 = vmatprep.subr.mxu0 0.0
      %1075 = vmatpush2.xpose.msra.mxu0 0.0
      %1076 = vmatprep.subr.mxu0 0.0
      %1077 = vmatpush2.xpose.msra.mxu0 0.0
      %1078 = vmatprep.subr.mxu0 0.0
      %1079 = vmatpush2.xpose.msra.mxu0 0.0
      %1080 = vmatprep.subr.mxu0 0.0
      %1081 = vmatpush2.xpose.msra.mxu0 0.0
      %1082 = vmatprep.subr.mxu0 0.0
      %1083 = vmatpush2.xpose.msra.mxu0 0.0
      %1084 = vmatprep.subr.mxu0 0.0
      %1085 = vmatpush2.xpose.msra.mxu0 0.0
      %1086 = vmatprep.subr.mxu0 0.0
      %1087 = vmatpush2.xpose.msra.mxu0 0.0
      %1088 = vmatprep.mubr.f32.mxu0 0.0
      %1089 = vmatmul.mubr.f32.gmra.mxu0 %v1020
      %v1090 = vpop.f32.mrf.mxu0
      %v1091 = vadd.f32 %v179, %v1090
      %v1092 = vpop.f32.mrf.mxu0
      %1093 = vdwg.mxu0
      %1094 = vrot.lane.b32.xlu0 %v187, 112
      %v1095 = vpop.permute.xlu0 %1094
      %1096 = vrot.lane.b32.xlu0 %v177, 80
      %v1097 = vpop.permute.xlu0 %1096
      %v1098 = vsel %vm191, %v1095, 0
      %v1100 = vsel %vm191, %v1097, 0
      %1102 = vmatprep.subr.mxu0 0.0
      %1103 = vmatpush1.xpose.msra.mxu0 0.0
      %1104 = vmatprep.subr.mxu0 0.0
      %1105 = vmatpush1.xpose.msra.mxu0 0.0
      %1106 = vmatprep.subr.mxu0 0.0
      %1107 = vmatpush1.xpose.msra.mxu0 0.0
      %1108 = vmatprep.subr.mxu0 0.0
      %1109 = vmatpush1.xpose.msra.mxu0 0.0
      %1110 = vmatprep.subr.mxu0 0.0
      %1111 = vmatpush1.xpose.msra.mxu0 0.0
      %1112 = vmatprep.subr.mxu0 0.0
      %1113 = vmatpush1.xpose.msra.mxu0 0.0
      %1114 = vmatprep.subr.mxu0 0.0
      %1115 = vmatpush1.xpose.msra.mxu0 0.0
      %1116 = vmatprep.subr.mxu0 0.0
      %1117 = vmatpush1.xpose.msra.mxu0 0.0
      %1118 = vmatprep.subr.mxu0 0.0
      %1119 = vmatpush1.xpose.msra.mxu0 0.0
      %1120 = vmatprep.subr.mxu0 0.0
      %1121 = vmatpush1.xpose.msra.mxu0 0.0
      %1122 = vmatprep.subr.mxu0 0.0
      %1123 = vmatpush1.xpose.msra.mxu0 0.0
      %1124 = vmatprep.subr.mxu0 0.0
      %1125 = vmatpush1.xpose.msra.mxu0 0.0
      %1126 = vmatprep.subr.mxu0 0.0
      %1127 = vmatpush1.xpose.msra.mxu0 0.0
      %1128 = vmatprep.subr.mxu0 0.0
      %1129 = vmatpush1.xpose.msra.mxu0 0.0
      %1130 = vmatprep.subr.mxu0 0.0
      %1131 = vmatpush1.xpose.msra.mxu0 0.0
      %1132 = vmatprep.subr.mxu0 0.0
      %1133 = vmatpush1.xpose.msra.mxu0 %v1100
      %1134 = vmatprep.subr.mxu0 0.0
      %1135 = vmatpush2.xpose.msra.mxu0 0.0
      %1136 = vmatprep.subr.mxu0 0.0
      %1137 = vmatpush2.xpose.msra.mxu0 0.0
      %1138 = vmatprep.subr.mxu0 0.0
      %1139 = vmatpush2.xpose.msra.mxu0 0.0
      %1140 = vmatprep.subr.mxu0 0.0
      %1141 = vmatpush2.xpose.msra.mxu0 0.0
      %1142 = vmatprep.subr.mxu0 0.0
      %1143 = vmatpush2.xpose.msra.mxu0 0.0
      %1144 = vmatprep.subr.mxu0 0.0
      %1145 = vmatpush2.xpose.msra.mxu0 0.0
      %1146 = vmatprep.subr.mxu0 0.0
      %1147 = vmatpush2.xpose.msra.mxu0 0.0
      %1148 = vmatprep.subr.mxu0 0.0
      %1149 = vmatpush2.xpose.msra.mxu0 0.0
      %1150 = vmatprep.subr.mxu0 0.0
      %1151 = vmatpush2.xpose.msra.mxu0 0.0
      %1152 = vmatprep.subr.mxu0 0.0
      %1153 = vmatpush2.xpose.msra.mxu0 0.0
      %1154 = vmatprep.subr.mxu0 0.0
      %1155 = vmatpush2.xpose.msra.mxu0 0.0
      %1156 = vmatprep.subr.mxu0 0.0
      %1157 = vmatpush2.xpose.msra.mxu0 0.0
      %1158 = vmatprep.subr.mxu0 0.0
      %1159 = vmatpush2.xpose.msra.mxu0 0.0
      %1160 = vmatprep.subr.mxu0 0.0
      %1161 = vmatpush2.xpose.msra.mxu0 0.0
      %1162 = vmatprep.subr.mxu0 0.0
      %1163 = vmatpush2.xpose.msra.mxu0 0.0
      %1164 = vmatprep.subr.mxu0 0.0
      %1165 = vmatpush2.xpose.msra.mxu0 0.0
      %1166 = vmatprep.mubr.f32.mxu0 0.0
      %1167 = vmatmul.mubr.f32.gmra.mxu0 %v1098
      %v1168 = vpop.f32.mrf.mxu0
      %v1169 = vadd.f32 %v179, %v1168
      %v1170 = vpop.f32.mrf.mxu0
      %1171 = vdwg.mxu0
      %v1172 = vadd.f32 %v935, %v180
      %v1173 = vadd.f32 %v1013, %v181
      %v1174 = vadd.f32 %v1091, %v182
      %v1175 = vadd.f32 %v1169, %v183
      %v1176 = vsel %vm505, %v1172, -inf
      %1177 = vmax.xlane.f32.xlu0 %v1176
      %v1178 = vpop.xlane.xlu0 %1177
      %v1179 = vsel %vm505, %v1173, -inf
      %1180 = vmax.xlane.f32.xlu0 %v1179
      %v1181 = vpop.xlane.xlu0 %1180
      %v1182 = vsel %vm505, %v1174, -inf
      %1183 = vmax.xlane.f32.xlu0 %v1182
      %v1184 = vpop.xlane.xlu0 %1183
      %v1185 = vsel %vm505, %v1175, -inf
      %1186 = vmax.xlane.f32.xlu0 %v1185
      %v1187 = vpop.xlane.xlu0 %1186
      %v1188 = vsub.f32 %v1172, %v1178
      %v1189 = vsub.f32 %v1173, %v1181
      %v1190 = vsub.f32 %v1174, %v1184
      %v1191 = vsub.f32 %v1175, %v1187
      %v1192 = vmul.f32 %v1188, 1.442695
      %v1193 = vpow.pop %v1192
      %v1194 = vmul.f32 %v1189, 1.442695
      %v1195 = vpow.pop %v1194
      %v1196 = vmul.f32 %v1190, 1.442695
      %v1197 = vpow.pop %v1196
      %v1198 = vmul.f32 %v1191, 1.442695
      %v1199 = vpow.pop %v1198
      %v1200 = vsel %vm505, %v1193, 0.0
      %1201 = vadd.xlane.f32.xlu0 %v1200
      %v1202 = vpop.xlane.xlu0 %1201
      %v1203 = vsel %vm505, %v1195, 0.0
      %1204 = vadd.xlane.f32.xlu0 %v1203
      %v1205 = vpop.xlane.xlu0 %1204
      %v1206 = vsel %vm505, %v1197, 0.0
      %1207 = vadd.xlane.f32.xlu0 %v1206
      %v1208 = vpop.xlane.xlu0 %1207
      %v1209 = vsel %vm505, %v1199, 0.0
      %1210 = vadd.xlane.f32.xlu0 %v1209
      %v1211 = vpop.xlane.xlu0 %1210
      %v1212 = vrcp.pop %v1202
      %v1213 = vrcp.pop %v1205
      %v1214 = vrcp.pop %v1208
      %v1215 = vrcp.pop %v1211
      %v1216 = vmul.f32 %v1193, %v1212
      %v1217 = vmul.f32 %v1195, %v1213
      %v1218 = vmul.f32 %v1197, %v1214
      %v1219 = vmul.f32 %v1199, %v1215
      %1220 = vrot.lane.b32.xlu0 %v174, 48
      %v1221 = vpop.permute.xlu0 %1220
      %v1223 = vsel %vm552, %v1216, 0
      %v1225 = vsel %vm556, %v1221, 0
      %1227 = vmatprep.subr.mxu0 0.0
      %1228 = vmatpush1.msra.mxu0 0.0
      %1229 = vmatprep.subr.mxu0 0.0
      %1230 = vmatpush1.msra.mxu0 0.0
      %1231 = vmatprep.subr.mxu0 0.0
      %1232 = vmatpush1.msra.mxu0 0.0
      %1233 = vmatprep.subr.mxu0 0.0
      %1234 = vmatpush1.msra.mxu0 0.0
      %1235 = vmatprep.subr.mxu0 0.0
      %1236 = vmatpush1.msra.mxu0 0.0
      %1237 = vmatprep.subr.mxu0 0.0
      %1238 = vmatpush1.msra.mxu0 0.0
      %1239 = vmatprep.subr.mxu0 0.0
      %1240 = vmatpush1.msra.mxu0 0.0
      %1241 = vmatprep.subr.mxu0 0.0
      %1242 = vmatpush1.msra.mxu0 0.0
      %1243 = vmatprep.subr.mxu0 0.0
      %1244 = vmatpush1.msra.mxu0 0.0
      %1245 = vmatprep.subr.mxu0 0.0
      %1246 = vmatpush1.msra.mxu0 0.0
      %1247 = vmatprep.subr.mxu0 0.0
      %1248 = vmatpush1.msra.mxu0 0.0
      %1249 = vmatprep.subr.mxu0 0.0
      %1250 = vmatpush1.msra.mxu0 0.0
      %1251 = vmatprep.subr.mxu0 0.0
      %1252 = vmatpush1.msra.mxu0 0.0
      %1253 = vmatprep.subr.mxu0 0.0
      %1254 = vmatpush1.msra.mxu0 0.0
      %1255 = vmatprep.subr.mxu0 0.0
      %1256 = vmatpush1.msra.mxu0 0.0
      %1257 = vmatprep.subr.mxu0 0.0
      %1258 = vmatpush1.msra.mxu0 %v1225
      %1259 = vmatprep.subr.mxu0 0.0
      %1260 = vmatpush2.msra.mxu0 0.0
      %1261 = vmatprep.subr.mxu0 0.0
      %1262 = vmatpush2.msra.mxu0 0.0
      %1263 = vmatprep.subr.mxu0 0.0
      %1264 = vmatpush2.msra.mxu0 0.0
      %1265 = vmatprep.subr.mxu0 0.0
      %1266 = vmatpush2.msra.mxu0 0.0
      %1267 = vmatprep.subr.mxu0 0.0
      %1268 = vmatpush2.msra.mxu0 0.0
      %1269 = vmatprep.subr.mxu0 0.0
      %1270 = vmatpush2.msra.mxu0 0.0
      %1271 = vmatprep.subr.mxu0 0.0
      %1272 = vmatpush2.msra.mxu0 0.0
      %1273 = vmatprep.subr.mxu0 0.0
      %1274 = vmatpush2.msra.mxu0 0.0
      %1275 = vmatprep.subr.mxu0 0.0
      %1276 = vmatpush2.msra.mxu0 0.0
      %1277 = vmatprep.subr.mxu0 0.0
      %1278 = vmatpush2.msra.mxu0 0.0
      %1279 = vmatprep.subr.mxu0 0.0
      %1280 = vmatpush2.msra.mxu0 0.0
      %1281 = vmatprep.subr.mxu0 0.0
      %1282 = vmatpush2.msra.mxu0 0.0
      %1283 = vmatprep.subr.mxu0 0.0
      %1284 = vmatpush2.msra.mxu0 0.0
      %1285 = vmatprep.subr.mxu0 0.0
      %1286 = vmatpush2.msra.mxu0 0.0
      %1287 = vmatprep.subr.mxu0 0.0
      %1288 = vmatpush2.msra.mxu0 0.0
      %1289 = vmatprep.subr.mxu0 0.0
      %1290 = vmatpush2.msra.mxu0 0.0
      %1291 = vmatprep.mubr.f32.mxu0 0.0
      %1292 = vmatmul.mubr.f32.gmra.mxu0 %v1223
      %v1293 = vpop.f32.mrf.mxu0
      %v1294 = vadd.f32 0.0, %v1293
      %v1295 = vpop.f32.mrf.mxu0
      %1296 = vdwg.mxu0
      %1297 = vrot.lane.b32.xlu0 %v175, 48
      %v1298 = vpop.permute.xlu0 %1297
      %v1300 = vsel %vm552, %v1217, 0
      %v1302 = vsel %vm556, %v1298, 0
      %1304 = vmatprep.subr.mxu0 0.0
      %1305 = vmatpush1.msra.mxu0 0.0
      %1306 = vmatprep.subr.mxu0 0.0
      %1307 = vmatpush1.msra.mxu0 0.0
      %1308 = vmatprep.subr.mxu0 0.0
      %1309 = vmatpush1.msra.mxu0 0.0
      %1310 = vmatprep.subr.mxu0 0.0
      %1311 = vmatpush1.msra.mxu0 0.0
      %1312 = vmatprep.subr.mxu0 0.0
      %1313 = vmatpush1.msra.mxu0 0.0
      %1314 = vmatprep.subr.mxu0 0.0
      %1315 = vmatpush1.msra.mxu0 0.0
      %1316 = vmatprep.subr.mxu0 0.0
      %1317 = vmatpush1.msra.mxu0 0.0
      %1318 = vmatprep.subr.mxu0 0.0
      %1319 = vmatpush1.msra.mxu0 0.0
      %1320 = vmatprep.subr.mxu0 0.0
      %1321 = vmatpush1.msra.mxu0 0.0
      %1322 = vmatprep.subr.mxu0 0.0
      %1323 = vmatpush1.msra.mxu0 0.0
      %1324 = vmatprep.subr.mxu0 0.0
      %1325 = vmatpush1.msra.mxu0 0.0
      %1326 = vmatprep.subr.mxu0 0.0
      %1327 = vmatpush1.msra.mxu0 0.0
      %1328 = vmatprep.subr.mxu0 0.0
      %1329 = vmatpush1.msra.mxu0 0.0
      %1330 = vmatprep.subr.mxu0 0.0
      %1331 = vmatpush1.msra.mxu0 0.0
      %1332 = vmatprep.subr.mxu0 0.0
      %1333 = vmatpush1.msra.mxu0 0.0
      %1334 = vmatprep.subr.mxu0 0.0
      %1335 = vmatpush1.msra.mxu0 %v1302
      %1336 = vmatprep.subr.mxu0 0.0
      %1337 = vmatpush2.msra.mxu0 0.0
      %1338 = vmatprep.subr.mxu0 0.0
      %1339 = vmatpush2.msra.mxu0 0.0
      %1340 = vmatprep.subr.mxu0 0.0
      %1341 = vmatpush2.msra.mxu0 0.0
      %1342 = vmatprep.subr.mxu0 0.0
      %1343 = vmatpush2.msra.mxu0 0.0
      %1344 = vmatprep.subr.mxu0 0.0
      %1345 = vmatpush2.msra.mxu0 0.0
      %1346 = vmatprep.subr.mxu0 0.0
      %1347 = vmatpush2.msra.mxu0 0.0
      %1348 = vmatprep.subr.mxu0 0.0
      %1349 = vmatpush2.msra.mxu0 0.0
      %1350 = vmatprep.subr.mxu0 0.0
      %1351 = vmatpush2.msra.mxu0 0.0
      %1352 = vmatprep.subr.mxu0 0.0
      %1353 = vmatpush2.msra.mxu0 0.0
      %1354 = vmatprep.subr.mxu0 0.0
      %1355 = vmatpush2.msra.mxu0 0.0
      %1356 = vmatprep.subr.mxu0 0.0
      %1357 = vmatpush2.msra.mxu0 0.0
      %1358 = vmatprep.subr.mxu0 0.0
      %1359 = vmatpush2.msra.mxu0 0.0
      %1360 = vmatprep.subr.mxu0 0.0
      %1361 = vmatpush2.msra.mxu0 0.0
      %1362 = vmatprep.subr.mxu0 0.0
      %1363 = vmatpush2.msra.mxu0 0.0
      %1364 = vmatprep.subr.mxu0 0.0
      %1365 = vmatpush2.msra.mxu0 0.0
      %1366 = vmatprep.subr.mxu0 0.0
      %1367 = vmatpush2.msra.mxu0 0.0
      %1368 = vmatprep.mubr.f32.mxu0 0.0
      %1369 = vmatmul.mubr.f32.gmra.mxu0 %v1300
      %v1370 = vpop.f32.mrf.mxu0
      %v1371 = vadd.f32 0.0, %v1370
      %v1372 = vpop.f32.mrf.mxu0
      %1373 = vdwg.mxu0
      %1374 = vrot.lane.b32.xlu0 %v176, 48
      %v1375 = vpop.permute.xlu0 %1374
      %v1377 = vsel %vm552, %v1218, 0
      %v1379 = vsel %vm556, %v1375, 0
      %1381 = vmatprep.subr.mxu0 0.0
      %1382 = vmatpush1.msra.mxu0 0.0
      %1383 = vmatprep.subr.mxu0 0.0
      %1384 = vmatpush1.msra.mxu0 0.0
      %1385 = vmatprep.subr.mxu0 0.0
      %1386 = vmatpush1.msra.mxu0 0.0
      %1387 = vmatprep.subr.mxu0 0.0
      %1388 = vmatpush1.msra.mxu0 0.0
      %1389 = vmatprep.subr.mxu0 0.0
      %1390 = vmatpush1.msra.mxu0 0.0
      %1391 = vmatprep.subr.mxu0 0.0
      %1392 = vmatpush1.msra.mxu0 0.0
      %1393 = vmatprep.subr.mxu0 0.0
      %1394 = vmatpush1.msra.mxu0 0.0
      %1395 = vmatprep.subr.mxu0 0.0
      %1396 = vmatpush1.msra.mxu0 0.0
      %1397 = vmatprep.subr.mxu0 0.0
      %1398 = vmatpush1.msra.mxu0 0.0
      %1399 = vmatprep.subr.mxu0 0.0
      %1400 = vmatpush1.msra.mxu0 0.0
      %1401 = vmatprep.subr.mxu0 0.0
      %1402 = vmatpush1.msra.mxu0 0.0
      %1403 = vmatprep.subr.mxu0 0.0
      %1404 = vmatpush1.msra.mxu0 0.0
      %1405 = vmatprep.subr.mxu0 0.0
      %1406 = vmatpush1.msra.mxu0 0.0
      %1407 = vmatprep.subr.mxu0 0.0
      %1408 = vmatpush1.msra.mxu0 0.0
      %1409 = vmatprep.subr.mxu0 0.0
      %1410 = vmatpush1.msra.mxu0 0.0
      %1411 = vmatprep.subr.mxu0 0.0
      %1412 = vmatpush1.msra.mxu0 %v1379
      %1413 = vmatprep.subr.mxu0 0.0
      %1414 = vmatpush2.msra.mxu0 0.0
      %1415 = vmatprep.subr.mxu0 0.0
      %1416 = vmatpush2.msra.mxu0 0.0
      %1417 = vmatprep.subr.mxu0 0.0
      %1418 = vmatpush2.msra.mxu0 0.0
      %1419 = vmatprep.subr.mxu0 0.0
      %1420 = vmatpush2.msra.mxu0 0.0
      %1421 = vmatprep.subr.mxu0 0.0
      %1422 = vmatpush2.msra.mxu0 0.0
      %1423 = vmatprep.subr.mxu0 0.0
      %1424 = vmatpush2.msra.mxu0 0.0
      %1425 = vmatprep.subr.mxu0 0.0
      %1426 = vmatpush2.msra.mxu0 0.0
      %1427 = vmatprep.subr.mxu0 0.0
      %1428 = vmatpush2.msra.mxu0 0.0
      %1429 = vmatprep.subr.mxu0 0.0
      %1430 = vmatpush2.msra.mxu0 0.0
      %1431 = vmatprep.subr.mxu0 0.0
      %1432 = vmatpush2.msra.mxu0 0.0
      %1433 = vmatprep.subr.mxu0 0.0
      %1434 = vmatpush2.msra.mxu0 0.0
      %1435 = vmatprep.subr.mxu0 0.0
      %1436 = vmatpush2.msra.mxu0 0.0
      %1437 = vmatprep.subr.mxu0 0.0
      %1438 = vmatpush2.msra.mxu0 0.0
      %1439 = vmatprep.subr.mxu0 0.0
      %1440 = vmatpush2.msra.mxu0 0.0
      %1441 = vmatprep.subr.mxu0 0.0
      %1442 = vmatpush2.msra.mxu0 0.0
      %1443 = vmatprep.subr.mxu0 0.0
      %1444 = vmatpush2.msra.mxu0 0.0
      %1445 = vmatprep.mubr.f32.mxu0 0.0
      %1446 = vmatmul.mubr.f32.gmra.mxu0 %v1377
      %v1447 = vpop.f32.mrf.mxu0
      %v1448 = vadd.f32 0.0, %v1447
      %v1449 = vpop.f32.mrf.mxu0
      %1450 = vdwg.mxu0
      %1451 = vrot.lane.b32.xlu0 %v177, 48
      %v1452 = vpop.permute.xlu0 %1451
      %v1454 = vsel %vm552, %v1219, 0
      %v1456 = vsel %vm556, %v1452, 0
      %1458 = vmatprep.subr.mxu0 0.0
      %1459 = vmatpush1.msra.mxu0 0.0
      %1460 = vmatprep.subr.mxu0 0.0
      %1461 = vmatpush1.msra.mxu0 0.0
      %1462 = vmatprep.subr.mxu0 0.0
      %1463 = vmatpush1.msra.mxu0 0.0
      %1464 = vmatprep.subr.mxu0 0.0
      %1465 = vmatpush1.msra.mxu0 0.0
      %1466 = vmatprep.subr.mxu0 0.0
      %1467 = vmatpush1.msra.mxu0 0.0
      %1468 = vmatprep.subr.mxu0 0.0
      %1469 = vmatpush1.msra.mxu0 0.0
      %1470 = vmatprep.subr.mxu0 0.0
      %1471 = vmatpush1.msra.mxu0 0.0
      %1472 = vmatprep.subr.mxu0 0.0
      %1473 = vmatpush1.msra.mxu0 0.0
      %1474 = vmatprep.subr.mxu0 0.0
      %1475 = vmatpush1.msra.mxu0 0.0
      %1476 = vmatprep.subr.mxu0 0.0
      %1477 = vmatpush1.msra.mxu0 0.0
      %1478 = vmatprep.subr.mxu0 0.0
      %1479 = vmatpush1.msra.mxu0 0.0
      %1480 = vmatprep.subr.mxu0 0.0
      %1481 = vmatpush1.msra.mxu0 0.0
      %1482 = vmatprep.subr.mxu0 0.0
      %1483 = vmatpush1.msra.mxu0 0.0
      %1484 = vmatprep.subr.mxu0 0.0
      %1485 = vmatpush1.msra.mxu0 0.0
      %1486 = vmatprep.subr.mxu0 0.0
      %1487 = vmatpush1.msra.mxu0 0.0
      %1488 = vmatprep.subr.mxu0 0.0
      %1489 = vmatpush1.msra.mxu0 %v1456
      %1490 = vmatprep.subr.mxu0 0.0
      %1491 = vmatpush2.msra.mxu0 0.0
      %1492 = vmatprep.subr.mxu0 0.0
      %1493 = vmatpush2.msra.mxu0 0.0
      %1494 = vmatprep.subr.mxu0 0.0
      %1495 = vmatpush2.msra.mxu0 0.0
      %1496 = vmatprep.subr.mxu0 0.0
      %1497 = vmatpush2.msra.mxu0 0.0
      %1498 = vmatprep.subr.mxu0 0.0
      %1499 = vmatpush2.msra.mxu0 0.0
      %1500 = vmatprep.subr.mxu0 0.0
      %1501 = vmatpush2.msra.mxu0 0.0
      %1502 = vmatprep.subr.mxu0 0.0
      %1503 = vmatpush2.msra.mxu0 0.0
      %1504 = vmatprep.subr.mxu0 0.0
      %1505 = vmatpush2.msra.mxu0 0.0
      %1506 = vmatprep.subr.mxu0 0.0
      %1507 = vmatpush2.msra.mxu0 0.0
      %1508 = vmatprep.subr.mxu0 0.0
      %1509 = vmatpush2.msra.mxu0 0.0
      %1510 = vmatprep.subr.mxu0 0.0
      %1511 = vmatpush2.msra.mxu0 0.0
      %1512 = vmatprep.subr.mxu0 0.0
      %1513 = vmatpush2.msra.mxu0 0.0
      %1514 = vmatprep.subr.mxu0 0.0
      %1515 = vmatpush2.msra.mxu0 0.0
      %1516 = vmatprep.subr.mxu0 0.0
      %1517 = vmatpush2.msra.mxu0 0.0
      %1518 = vmatprep.subr.mxu0 0.0
      %1519 = vmatpush2.msra.mxu0 0.0
      %1520 = vmatprep.subr.mxu0 0.0
      %1521 = vmatpush2.msra.mxu0 0.0
      %1522 = vmatprep.mubr.f32.mxu0 0.0
      %1523 = vmatmul.mubr.f32.gmra.mxu0 %v1454
      %v1524 = vpop.f32.mrf.mxu0
      %v1525 = vadd.f32 0.0, %v1524
      %v1526 = vpop.f32.mrf.mxu0
      %1527 = vdwg.mxu0
      %1532 = vrot.lane.b32.xlu0 %v1294, 16
      %v1533 = vpop.permute.xlu0 %1532
      %1534 = vrot.lane.b32.xlu0 %v1371, 16
      %v1535 = vpop.permute.xlu0 %1534
      %1536 = vrot.lane.b32.xlu0 %v1448, 16
      %v1537 = vpop.permute.xlu0 %1536
      %1538 = vrot.lane.b32.xlu0 %v1525, 16
      %v1539 = vpop.permute.xlu0 %1538
      %v1544 = vsel %vm191, %v626, %v1533
      %v1545 = vsel %vm191, %v703, %v1535
      %v1546 = vsel %vm191, %v780, %v1537
      %v1547 = vsel %vm191, %v857, %v1539
      %vm1548 = vcmask 257024
      %1549 = vst.msk [vmem:[%s172] sm:$0xf] %vm1548, %v1544
      %1550 = vst.msk [vmem:[%s172 + $0x4] sm:$0xf] %vm1548, %v1545
      %1551 = vst.msk [vmem:[%s172 + $0x8] sm:$0xf] %vm1548, %v1546
      %1552 = vst.msk [vmem:[%s172 + $0xc] sm:$0xf] %vm1548, %v1547
      %s1553 = smul.u32 4, %s14
      %p1554 = scmp.lt.s32.totalorder %s1553, 7
      %s1555 = scalar_select %p1554, %s1553, 7
      %s1556 = smul.addr %s1555, 4
      %s1557 = scalar_lea.vmem %s3, %s1556
      // Predicated region
      $region33: #{swin_forward.31} parent=31 // pred_check
        %p1558 = pneg %p100
      $region34: #{swin_forward.31} parent=31 // pred_check_branch
        %1560 = sbr.rel (%p1558) target = $region36
      $region35: #{swin_forward.31} parent=31 // pred_region
        %s1561 = smul.u32 4, %s14
      $region36: #{swin_forward.31} parent=31 // pred_fallthru
        _
    $region32: #{swin_forward.31} parent=5 // pred_fallthru
      _
    %p1562 = scmp.le.s32.totalorder 2, %s9
    // Predicated region
    $region37: #{swin_forward.31} parent=5 // pred_check
      %p1563 = pneg %p1562
    $region38: #{swin_forward.31} parent=5 // pred_check_branch
      %1565 = sbr.rel (%p1563) target = $region40
    $region39: #{swin_forward.31} parent=5 // pred_region
      %s1566 = ssub.s32 %s9, 2
      // Predicated region
      $region41: #{swin_forward.31} parent=39 // pred_check
        %p1567 = pneg %p106
      $region42: #{swin_forward.31} parent=39 // pred_check_branch
        %1569 = sbr.rel (%p1567) target = $region44
      $region43: #{swin_forward.31} parent=39 // pred_region
        %s1570 = smul.u32 4, %s15
        %p1571 = scmp.lt.s32.totalorder %s1570, 7
        %s1572 = scalar_select %p1571, %s1570, 7
        %s1573 = smul.addr %s1572, 4
        %s1574 = scalar_lea.vmem %s3, %s1573
      $region44: #{swin_forward.31} parent=39 // pred_fallthru
        _
    $region40: #{swin_forward.31} parent=5 // pred_fallthru
      _
  $region6: #{swin_forward.31} parent=0 // loop_footer
    %s13 = sadd.s32 1, %s9
  $region7: #{swin_forward.31} parent=0 // loop_footer_branch
    %8 = sbr.rel target = $region3
  $region8: #{swin_forward.31} parent=0 // loop_exit
    _

// kernel: swin_forward.35
$region0: #{swin_forward.35}
  #allocation0 [shape = 'u32[]', space=smem, size = 0x4, offset = 0x4, fixed_abs, tag = 'smem constant byte address 0x4 - core index']
  #allocation1 [shape = 'u32[144,128]{1,0:T(1,128)}', space=vmem, size = 0x12000, scoped, tag = 'internal scratch']
  %s0 = inlined_call_operand.vmem [shape: f32[8,128], index: 0, kind: input, shape index: {}]
  %s1 = inlined_call_operand.vmem [shape: f32[128,64], index: 1, kind: input, shape index: {}]
  %s2 = inlined_call_operand.vmem [shape: f32[1,128], index: 2, kind: input, shape index: {}]
  %s3 = inlined_call_operand.vmem [shape: f32[1,128], index: 3, kind: input, shape index: {}]
  %s4 = inlined_call_operand.vmem [shape: f32[8,64], index: 4, kind: output, shape index: {}]
  %s5 = sld [smem:[#allocation0]]
  $region26: #{swin_forward.35} parent=0
    _
  %s7 = ssub.s32 1, %s5
  %s8 = scalar_select 0, %s7, %s5
  // Predicated region
  $region2: #{swin_forward.35} parent=0 // pred_check
    _
  $region3: #{swin_forward.35} parent=0 // pred_check_branch
    %10 = sbr.rel (0) target = $region5
  $region4: #{swin_forward.35} parent=0 // pred_region
    _
  $region5: #{swin_forward.35} parent=0 // pred_fallthru
    _
  // Predicated region
  $region6: #{swin_forward.35} parent=0 // pred_check
    _
  $region7: #{swin_forward.35} parent=0 // pred_check_branch
    %12 = sbr.rel (0) target = $region9
  $region8: #{swin_forward.35} parent=0 // pred_region
    _
  $region9: #{swin_forward.35} parent=0 // pred_fallthru
    _
  // Predicated region
  $region10: #{swin_forward.35} parent=0 // pred_check
    _
  $region11: #{swin_forward.35} parent=0 // pred_check_branch
    %14 = sbr.rel (0) target = $region13
  $region12: #{swin_forward.35} parent=0 // pred_region
    _
  $region13: #{swin_forward.35} parent=0 // pred_fallthru
    _
  // Predicated region
  $region14: #{swin_forward.35} parent=0 // pred_check
    _
  $region15: #{swin_forward.35} parent=0 // pred_check_branch
    %16 = sbr.rel (0) target = $region17
  $region16: #{swin_forward.35} parent=0 // pred_region
    _
  $region17: #{swin_forward.35} parent=0 // pred_fallthru
    _
  %v17 = vld [vmem:[%s0] sm:$0xff]
  %18 = vadd.xlane.f32.xlu0 %v17
  %v19 = vpop.xlane.xlu0 %18
  %v20 = vrcp.pop 128.0
  %v21 = vmul.f32 %v19, %v20
  %v22 = vsub.f32 %v17, %v21
  %v23 = vmul.f32 %v22, %v22
  %24 = vadd.xlane.f32.xlu0 %v23
  %v25 = vpop.xlane.xlu0 %24
  %v26 = vmul.f32 %v25, %v20
  %v27 = vadd.f32 %v26, 1e-06
  %v28 = vrsqrt.pop %v27
  %v29 = vmul.f32 %v22, %v28
  %v30 = vld [vmem:[%s2] sm:$0x1]
  %v32 = vlaneseq
  %v33 = vshrl.u32 %v32, 7
  %v34 = vsub.s32 0, %v33
  %v35 = vrot.slane %v30, %v34
  %v37 = vmul.f32 %v29, %v35
  %v38 = vld [vmem:[%s3] sm:$0x1]
  %v40 = vlaneseq
  %v41 = vshrl.u32 %v40, 7
  %v42 = vsub.s32 0, %v41
  %v43 = vrot.slane %v38, %v42
  %v45 = vadd.f32 %v37, %v43
  %v46 = vld [vmem:[%s1] sm:$0xff]
  %v47 = vld [vmem:[%s1 + $0x8] sm:$0xff]
  %v48 = vld [vmem:[%s1 + $0x10] sm:$0xff]
  %v49 = vld [vmem:[%s1 + $0x18] sm:$0xff]
  %v50 = vld [vmem:[%s1 + $0x20] sm:$0xff]
  %v51 = vld [vmem:[%s1 + $0x28] sm:$0xff]
  %v52 = vld [vmem:[%s1 + $0x30] sm:$0xff]
  %v53 = vld [vmem:[%s1 + $0x38] sm:$0xff]
  %v54 = vld [vmem:[%s1 + $0x40] sm:$0xff]
  %v55 = vld [vmem:[%s1 + $0x48] sm:$0xff]
  %v56 = vld [vmem:[%s1 + $0x50] sm:$0xff]
  %v57 = vld [vmem:[%s1 + $0x58] sm:$0xff]
  %v58 = vld [vmem:[%s1 + $0x60] sm:$0xff]
  %v59 = vld [vmem:[%s1 + $0x68] sm:$0xff]
  %v60 = vld [vmem:[%s1 + $0x70] sm:$0xff]
  %v61 = vld [vmem:[%s1 + $0x78] sm:$0xff]
  %62 = vmatprep.subr.mxu0 0.0
  %63 = vmatpush1.msra.mxu0 %v61
  %64 = vmatprep.subr.mxu0 0.0
  %65 = vmatpush1.msra.mxu0 %v60
  %66 = vmatprep.subr.mxu0 0.0
  %67 = vmatpush1.msra.mxu0 %v59
  %68 = vmatprep.subr.mxu0 0.0
  %69 = vmatpush1.msra.mxu0 %v58
  %70 = vmatprep.subr.mxu0 0.0
  %71 = vmatpush1.msra.mxu0 %v57
  %72 = vmatprep.subr.mxu0 0.0
  %73 = vmatpush1.msra.mxu0 %v56
  %74 = vmatprep.subr.mxu0 0.0
  %75 = vmatpush1.msra.mxu0 %v55
  %76 = vmatprep.subr.mxu0 0.0
  %77 = vmatpush1.msra.mxu0 %v54
  %78 = vmatprep.subr.mxu0 0.0
  %79 = vmatpush1.msra.mxu0 %v53
  %80 = vmatprep.subr.mxu0 0.0
  %81 = vmatpush1.msra.mxu0 %v52
  %82 = vmatprep.subr.mxu0 0.0
  %83 = vmatpush1.msra.mxu0 %v51
  %84 = vmatprep.subr.mxu0 0.0
  %85 = vmatpush1.msra.mxu0 %v50
  %86 = vmatprep.subr.mxu0 0.0
  %87 = vmatpush1.msra.mxu0 %v49
  %88 = vmatprep.subr.mxu0 0.0
  %89 = vmatpush1.msra.mxu0 %v48
  %90 = vmatprep.subr.mxu0 0.0
  %91 = vmatpush1.msra.mxu0 %v47
  %92 = vmatprep.subr.mxu0 0.0
  %93 = vmatpush1.msra.mxu0 %v46
  %94 = vmatprep.subr.mxu0 0.0
  %95 = vmatpush2.msra.mxu0 0.0
  %96 = vmatprep.subr.mxu0 0.0
  %97 = vmatpush2.msra.mxu0 0.0
  %98 = vmatprep.subr.mxu0 0.0
  %99 = vmatpush2.msra.mxu0 0.0
  %100 = vmatprep.subr.mxu0 0.0
  %101 = vmatpush2.msra.mxu0 0.0
  %102 = vmatprep.subr.mxu0 0.0
  %103 = vmatpush2.msra.mxu0 0.0
  %104 = vmatprep.subr.mxu0 0.0
  %105 = vmatpush2.msra.mxu0 0.0
  %106 = vmatprep.subr.mxu0 0.0
  %107 = vmatpush2.msra.mxu0 0.0
  %108 = vmatprep.subr.mxu0 0.0
  %109 = vmatpush2.msra.mxu0 0.0
  %110 = vmatprep.subr.mxu0 0.0
  %111 = vmatpush2.msra.mxu0 0.0
  %112 = vmatprep.subr.mxu0 0.0
  %113 = vmatpush2.msra.mxu0 0.0
  %114 = vmatprep.subr.mxu0 0.0
  %115 = vmatpush2.msra.mxu0 0.0
  %116 = vmatprep.subr.mxu0 0.0
  %117 = vmatpush2.msra.mxu0 0.0
  %118 = vmatprep.subr.mxu0 0.0
  %119 = vmatpush2.msra.mxu0 0.0
  %120 = vmatprep.subr.mxu0 0.0
  %121 = vmatpush2.msra.mxu0 0.0
  %122 = vmatprep.subr.mxu0 0.0
  %123 = vmatpush2.msra.mxu0 0.0
  %124 = vmatprep.subr.mxu0 0.0
  %125 = vmatpush2.msra.mxu0 0.0
  %126 = vmatprep.mubr.f32.mxu0 0.0
  %127 = vmatmul.mubr.f32.gmra.mxu0 %v45
  %v128 = vpop.f32.mrf.mxu0
  %v129 = vadd.f32 0.0, %v128
  %v130 = vpop.f32.mrf.mxu0
  %131 = vdwg.mxu0
  %vm132 = vcmask 523264
  %133 = vst.msk [vmem:[%s4] sm:$0xff] %vm132, %v129
  // Predicated region
  $region18: #{swin_forward.35} parent=0 // pred_check
    _
  $region19: #{swin_forward.35} parent=0 // pred_check_branch
    %135 = sbr.rel (0) target = $region21
  $region20: #{swin_forward.35} parent=0 // pred_region
    _
  $region21: #{swin_forward.35} parent=0 // pred_fallthru
    _
  // Predicated region
  $region22: #{swin_forward.35} parent=0 // pred_check
    _
  $region23: #{swin_forward.35} parent=0 // pred_check_branch
    %137 = sbr.rel (0) target = $region25
  $region24: #{swin_forward.35} parent=0 // pred_region
    _
  $region25: #{swin_forward.35} parent=0 // pred_fallthru
    _

// kernel: swin_forward.37
$region0: #{swin_forward.37}
  #allocation0 [shape = 'u32[]', space=smem, size = 0x4, offset = 0x4, fixed_abs, tag = 'smem constant byte address 0x4 - core index']
  #allocation1 [shape = 'u32[144,128]{1,0:T(1,128)}', space=vmem, size = 0x12000, scoped, tag = 'internal scratch']
  %s0 = inlined_call_operand.vmem [shape: f32[8,64], index: 0, kind: input, shape index: {}]
  %s1 = inlined_call_operand.vmem [shape: f32[64,192], index: 1, kind: input, shape index: {}]
  %s2 = inlined_call_operand.vmem [shape: f32[1,192], index: 2, kind: input, shape index: {}]
  %s3 = inlined_call_operand.vmem [shape: f32[1,64], index: 3, kind: input, shape index: {}]
  %s4 = inlined_call_operand.vmem [shape: f32[1,64], index: 4, kind: input, shape index: {}]
  %s5 = inlined_call_operand.vmem [shape: f32[8,192], index: 5, kind: output, shape index: {}]
  %s6 = sld [smem:[#allocation0]]
  $region30: #{swin_forward.37} parent=0
    _
  %s8 = ssub.s32 1, %s6
  %s9 = scalar_select 0, %s8, %s6
  // Predicated region
  $region2: #{swin_forward.37} parent=0 // pred_check
    _
  $region3: #{swin_forward.37} parent=0 // pred_check_branch
    %11 = sbr.rel (0) target = $region5
  $region4: #{swin_forward.37} parent=0 // pred_region
    _
  $region5: #{swin_forward.37} parent=0 // pred_fallthru
    _
  // Predicated region
  $region6: #{swin_forward.37} parent=0 // pred_check
    _
  $region7: #{swin_forward.37} parent=0 // pred_check_branch
    %13 = sbr.rel (0) target = $region9
  $region8: #{swin_forward.37} parent=0 // pred_region
    _
  $region9: #{swin_forward.37} parent=0 // pred_fallthru
    _
  // Predicated region
  $region10: #{swin_forward.37} parent=0 // pred_check
    _
  $region11: #{swin_forward.37} parent=0 // pred_check_branch
    %15 = sbr.rel (0) target = $region13
  $region12: #{swin_forward.37} parent=0 // pred_region
    _
  $region13: #{swin_forward.37} parent=0 // pred_fallthru
    _
  // Predicated region
  $region14: #{swin_forward.37} parent=0 // pred_check
    _
  $region15: #{swin_forward.37} parent=0 // pred_check_branch
    %17 = sbr.rel (0) target = $region17
  $region16: #{swin_forward.37} parent=0 // pred_region
    _
  $region17: #{swin_forward.37} parent=0 // pred_fallthru
    _
  // Predicated region
  $region18: #{swin_forward.37} parent=0 // pred_check
    _
  $region19: #{swin_forward.37} parent=0 // pred_check_branch
    %19 = sbr.rel (0) target = $region21
  $region20: #{swin_forward.37} parent=0 // pred_region
    _
  $region21: #{swin_forward.37} parent=0 // pred_fallthru
    _
  %v20 = vld [vmem:[%s0] sm:$0xff]
  %vm21 = vcmask 523264
  %v22 = vsel %vm21, %v20, 0.0
  %23 = vadd.xlane.f32.xlu0 %v22
  %v24 = vpop.xlane.xlu0 %23
  %v25 = vrcp.pop 64.0
  %v26 = vmul.f32 %v24, %v25
  %v27 = vsub.f32 %v20, %v26
  %v28 = vmul.f32 %v27, %v27
  %v29 = vsel %vm21, %v28, 0.0
  %30 = vadd.xlane.f32.xlu0 %v29
  %v31 = vpop.xlane.xlu0 %30
  %v32 = vmul.f32 %v31, %v25
  %v33 = vadd.f32 %v32, 1e-06
  %v34 = vrsqrt.pop %v33
  %v35 = vmul.f32 %v27, %v34
  %v36 = vld [vmem:[%s3] sm:$0x1]
  %v38 = vlaneseq
  %v39 = vshrl.u32 %v38, 7
  %v40 = vsub.s32 0, %v39
  %v41 = vrot.slane %v36, %v40
  %v43 = vmul.f32 %v35, %v41
  %v44 = vld [vmem:[%s4] sm:$0x1]
  %v46 = vlaneseq
  %v47 = vshrl.u32 %v46, 7
  %v48 = vsub.s32 0, %v47
  %v49 = vrot.slane %v44, %v48
  %v51 = vadd.f32 %v43, %v49
  %v52 = vld [vmem:[%s1] sm:$0xff]
  %v53 = vld [vmem:[%s1 + $0x8] sm:$0xff]
  %v54 = vld [vmem:[%s1 + $0x10] sm:$0xff]
  %v55 = vld [vmem:[%s1 + $0x18] sm:$0xff]
  %v56 = vld [vmem:[%s1 + $0x20] sm:$0xff]
  %v57 = vld [vmem:[%s1 + $0x28] sm:$0xff]
  %v58 = vld [vmem:[%s1 + $0x30] sm:$0xff]
  %v59 = vld [vmem:[%s1 + $0x38] sm:$0xff]
  %v60 = vld [vmem:[%s1 + $0x40] sm:$0xff]
  %v61 = vld [vmem:[%s1 + $0x48] sm:$0xff]
  %v62 = vld [vmem:[%s1 + $0x50] sm:$0xff]
  %v63 = vld [vmem:[%s1 + $0x58] sm:$0xff]
  %v64 = vld [vmem:[%s1 + $0x60] sm:$0xff]
  %v65 = vld [vmem:[%s1 + $0x68] sm:$0xff]
  %v66 = vld [vmem:[%s1 + $0x70] sm:$0xff]
  %v67 = vld [vmem:[%s1 + $0x78] sm:$0xff]
  %v68 = vld [vmem:[%s2] sm:$0x3]
  %v70 = vlaneseq
  %v71 = vshrl.u32 %v70, 7
  %v72 = vsub.s32 0, %v71
  %v73 = vrot.slane %v68, %v72
  %v74 = vlaneseq
  %v75 = vshrl.u32 %v74, 7
  %v76 = vsub.s32 1, %v75
  %v77 = vrot.slane %v68, %v76
  %v81 = vsel %vm21, %v51, 0
  %83 = vmatprep.subr.mxu0 0.0
  %84 = vmatpush1.msra.mxu0 0.0
  %85 = vmatprep.subr.mxu0 0.0
  %86 = vmatpush1.msra.mxu0 0.0
  %87 = vmatprep.subr.mxu0 0.0
  %88 = vmatpush1.msra.mxu0 0.0
  %89 = vmatprep.subr.mxu0 0.0
  %90 = vmatpush1.msra.mxu0 0.0
  %91 = vmatprep.subr.mxu0 0.0
  %92 = vmatpush1.msra.mxu0 0.0
  %93 = vmatprep.subr.mxu0 0.0
  %94 = vmatpush1.msra.mxu0 0.0
  %95 = vmatprep.subr.mxu0 0.0
  %96 = vmatpush1.msra.mxu0 0.0
  %97 = vmatprep.subr.mxu0 0.0
  %98 = vmatpush1.msra.mxu0 0.0
  %99 = vmatprep.subr.mxu0 %v67
  %100 = vmatpush1.msra.mxu0 %v66
  %101 = vmatprep.subr.mxu0 %v65
  %102 = vmatpush1.msra.mxu0 %v64
  %103 = vmatprep.subr.mxu0 %v63
  %104 = vmatpush1.msra.mxu0 %v62
  %105 = vmatprep.subr.mxu0 %v61
  %106 = vmatpush1.msra.mxu0 %v60
  %107 = vmatprep.subr.mxu0 %v59
  %108 = vmatpush1.msra.mxu0 %v58
  %109 = vmatprep.subr.mxu0 %v57
  %110 = vmatpush1.msra.mxu0 %v56
  %111 = vmatprep.subr.mxu0 %v55
  %112 = vmatpush1.msra.mxu0 %v54
  %113 = vmatprep.subr.mxu0 %v53
  %114 = vmatpush1.msra.mxu0 %v52
  %115 = vmatprep.subr.mxu0 0.0
  %116 = vmatpush2.msra.mxu0 0.0
  %117 = vmatprep.subr.mxu0 0.0
  %118 = vmatpush2.msra.mxu0 0.0
  %119 = vmatprep.subr.mxu0 0.0
  %120 = vmatpush2.msra.mxu0 0.0
  %121 = vmatprep.subr.mxu0 0.0
  %122 = vmatpush2.msra.mxu0 0.0
  %123 = vmatprep.subr.mxu0 0.0
  %124 = vmatpush2.msra.mxu0 0.0
  %125 = vmatprep.subr.mxu0 0.0
  %126 = vmatpush2.msra.mxu0 0.0
  %127 = vmatprep.subr.mxu0 0.0
  %128 = vmatpush2.msra.mxu0 0.0
  %129 = vmatprep.subr.mxu0 0.0
  %130 = vmatpush2.msra.mxu0 0.0
  %131 = vmatprep.subr.mxu0 0.0
  %132 = vmatpush2.msra.mxu0 0.0
  %133 = vmatprep.subr.mxu0 0.0
  %134 = vmatpush2.msra.mxu0 0.0
  %135 = vmatprep.subr.mxu0 0.0
  %136 = vmatpush2.msra.mxu0 0.0
  %137 = vmatprep.subr.mxu0 0.0
  %138 = vmatpush2.msra.mxu0 0.0
  %139 = vmatprep.subr.mxu0 0.0
  %140 = vmatpush2.msra.mxu0 0.0
  %141 = vmatprep.subr.mxu0 0.0
  %142 = vmatpush2.msra.mxu0 0.0
  %143 = vmatprep.subr.mxu0 0.0
  %144 = vmatpush2.msra.mxu0 0.0
  %145 = vmatprep.subr.mxu0 0.0
  %146 = vmatpush2.msra.mxu0 0.0
  %147 = vmatprep.mubr.f32.mxu0 0.0
  %148 = vmatmul.mubr.f32.gmra.mxu0 %v81
  %v149 = vpop.f32.mrf.mxu0
  %v150 = vadd.f32 %v73, %v149
  %v151 = vpop.f32.mrf.mxu0
  %v152 = vadd.f32 %v77, %v151
  %153 = vdwg.mxu0
  %154 = vst [vmem:[%s5] sm:$0xff] %v150
  %155 = vst.msk [vmem:[%s5 + $0x8] sm:$0xff] %vm21, %v152
  // Predicated region
  $region22: #{swin_forward.37} parent=0 // pred_check
    _
  $region23: #{swin_forward.37} parent=0 // pred_check_branch
    %157 = sbr.rel (0) target = $region25
  $region24: #{swin_forward.37} parent=0 // pred_region
    _
  $region25: #{swin_forward.37} parent=0 // pred_fallthru
    _
  // Predicated region
  $region26: #{swin_forward.37} parent=0 // pred_check
    _
  $region27: #{swin_forward.37} parent=0 // pred_check_branch
    %159 = sbr.rel (0) target = $region29
  $region28: #{swin_forward.37} parent=0 // pred_region
    _
  $region29: #{swin_forward.37} parent=0 // pred_fallthru
    _

// kernel: swin_forward.38
$region0: #{swin_forward.38}
  #allocation0 [shape = 'u32[]', space=smem, size = 0x4, offset = 0x4, fixed_abs, tag = 'smem constant byte address 0x4 - core index']
  #allocation1 [shape = 'u32[144,128]{1,0:T(1,128)}', space=vmem, size = 0x12000, scoped, tag = 'internal scratch']
  %s0 = inlined_call_operand.vmem [shape: f32[2,4,192], index: 0, kind: input, shape index: {}]
  %s1 = inlined_call_operand.vmem [shape: f32[4,4,4], index: 1, kind: input, shape index: {}]
  %s2 = inlined_call_operand.vmem [shape: f32[2,4,64], index: 2, kind: output, shape index: {}]
  %s3 = sld [smem:[#allocation0]]
  $region41: #{swin_forward.38} parent=0
    _
  %s5 = ssub.s32 1, %s3
  %s6 = scalar_select 0, %s5, %s3
  loop: start=0, step=1, limit=4
  $region2: #{swin_forward.38} parent=0 // loop_pre_header
    _
  $region3: #{swin_forward.38} parent=0 // loop_header
    %s8 = sphi 0, %s12
    %p9 = scmp.ge.s32.totalorder %s8, 4
    %s18 = sphi 0, %s20
    %s21 = sphi 0, %s18
    %s22 = sphi 0, %s21
    %s38 = sphi 0, %s22
    %s42 = sphi 0, %s42
    %s44 = sphi 0, %s42
    %s45 = sphi 0, %s44
    %s59 = sphi 0, %s45
    %s65 = sphi 0, %s67
    %s68 = sphi 0, %s65
    %s69 = sphi 0, %s68
    %s85 = sphi 0, %s69
  $region4: #{swin_forward.38} parent=0 // loop_header_branch
    %11 = sbr.rel (%p9) target = $region8
  $region5: #{swin_forward.38} parent=0 // loop_body
    %s13 = ssub.s32 %s8, 1
    %s14 = ssub.s32 %s8, 2
    %s15 = sadd.s32 %s8, 1
    %s16 = ssub.s32 %s8, %s15
    %p17 = scmp.eq.s32.totalorder %s16, 0
    %s19 = sadd.s32 %s18, 1
    %s20 = scalar_select %p17, %s18, %s19
    %p23 = pneg %p17
    %p24 = scmp.eq.s32.totalorder %s8, 1
    %p25 = por %p23, %p24
    %p26 = scmp.ne.s32.totalorder %s18, %s21
    %p27 = scmp.eq.s32.totalorder %s8, 0
    %p28 = por %p26, %p27
    %p29 = scmp.ne.s32.totalorder %s18, %s21
    %p30 = scmp.eq.s32.totalorder %s13, 1
    %p31 = por %p29, %p30
    %p32 = scmp.ne.s32.totalorder %s21, %s22
    %p33 = scmp.eq.s32.totalorder %s13, 0
    %p34 = por %p32, %p33
    %p35 = scmp.ne.s32.totalorder %s21, %s22
    %p36 = scmp.eq.s32.totalorder %s14, 1
    %p37 = por %p35, %p36
    %p39 = scmp.ne.s32.totalorder %s22, %s38
    %p40 = scmp.eq.s32.totalorder %s14, 0
    %p41 = por %p39, %p40
    %s43 = sadd.s32 %s42, 1
    %p46 = scmp.eq.s32.totalorder %s8, 1
    %p47 = scmp.ne.s32.totalorder %s42, %s44
    %p48 = scmp.eq.s32.totalorder %s8, 0
    %p49 = por %p47, %p48
    %p50 = scmp.ne.s32.totalorder %s42, %s44
    %p51 = scmp.eq.s32.totalorder %s13, 1
    %p52 = por %p50, %p51
    %p53 = scmp.ne.s32.totalorder %s44, %s45
    %p54 = scmp.eq.s32.totalorder %s13, 0
    %p55 = por %p53, %p54
    %p56 = scmp.ne.s32.totalorder %s44, %s45
    %p57 = scmp.eq.s32.totalorder %s14, 1
    %p58 = por %p56, %p57
    %p60 = scmp.ne.s32.totalorder %s45, %s59
    %p61 = scmp.eq.s32.totalorder %s14, 0
    %p62 = por %p60, %p61
    %s63 = ssub.s32 %s8, %s15
    %p64 = scmp.eq.s32.totalorder %s63, 0
    %s66 = sadd.s32 %s65, 1
    %s67 = scalar_select %p64, %s65, %s66
    %p70 = pneg %p64
    %p71 = scmp.eq.s32.totalorder %s8, 1
    %p72 = por %p70, %p71
    %p73 = scmp.ne.s32.totalorder %s65, %s68
    %p74 = scmp.eq.s32.totalorder %s8, 0
    %p75 = por %p73, %p74
    %p76 = scmp.ne.s32.totalorder %s65, %s68
    %p77 = scmp.eq.s32.totalorder %s13, 1
    %p78 = por %p76, %p77
    %p79 = scmp.ne.s32.totalorder %s68, %s69
    %p80 = scmp.eq.s32.totalorder %s13, 0
    %p81 = por %p79, %p80
    %p82 = scmp.ne.s32.totalorder %s68, %s69
    %p83 = scmp.eq.s32.totalorder %s14, 1
    %p84 = por %p82, %p83
    %p86 = scmp.ne.s32.totalorder %s69, %s85
    %p87 = scmp.eq.s32.totalorder %s14, 0
    %p88 = por %p86, %p87
    %p89 = scmp.le.s32.totalorder 1, %s8
    %p90 = scmp.lt.s32.totalorder %s8, 3
    %p91 = pnand %p89, %p90
    %p92 = pneg %p91
    // Predicated region
    $region9: #{swin_forward.38} parent=5 // pred_check
      _
    $region10: #{swin_forward.38} parent=5 // pred_check_branch
      %94 = sbr.rel (%p91) target = $region12
    $region11: #{swin_forward.38} parent=5 // pred_region
      %s95 = ssub.s32 %s8, 1
      // Predicated region
      $region13: #{swin_forward.38} parent=11 // pred_check
        %p96 = pneg %p55
      $region14: #{swin_forward.38} parent=11 // pred_check_branch
        %98 = sbr.rel (%p96) target = $region16
      $region15: #{swin_forward.38} parent=11 // pred_region
        _
      $region16: #{swin_forward.38} parent=11 // pred_fallthru
        _
    $region12: #{swin_forward.38} parent=5 // pred_fallthru
      _
    %p99 = scmp.lt.s32.totalorder %s8, 2
    // Predicated region
    $region17: #{swin_forward.38} parent=5 // pred_check
      %p100 = pneg %p99
    $region18: #{swin_forward.38} parent=5 // pred_check_branch
      %102 = sbr.rel (%p100) target = $region20
    $region19: #{swin_forward.38} parent=5 // pred_region
      // Predicated region
      $region21: #{swin_forward.38} parent=19 // pred_check
        %p103 = pneg %p28
      $region22: #{swin_forward.38} parent=19 // pred_check_branch
        %105 = sbr.rel (%p103) target = $region24
      $region23: #{swin_forward.38} parent=19 // pred_region
        %p106 = scmp.lt.s32.totalorder %s8, 1
        %s107 = scalar_select %p106, %s8, 1
        %s108 = smul.addr %s107, 2
        %s109 = smul.addr %s108, 4
        %s110 = scalar_lea.vmem %s0, %s109
      $region24: #{swin_forward.38} parent=19 // pred_fallthru
        _
    $region20: #{swin_forward.38} parent=5 // pred_fallthru
      _
    %p111 = scmp.le.s32.totalorder 1, %s8
    %p112 = scmp.lt.s32.totalorder %s8, 3
    %p113 = pnand %p111, %p112
    %p114 = pneg %p113
    // Predicated region
    $region25: #{swin_forward.38} parent=5 // pred_check
      _
    $region26: #{swin_forward.38} parent=5 // pred_check_branch
      %116 = sbr.rel (%p113) target = $region28
    $region27: #{swin_forward.38} parent=5 // pred_region
      %s117 = ssub.s32 %s8, 1
      %p118 = scmp.lt.s32.totalorder %s13, 1
      %s119 = scalar_select %p118, %s13, 1
      %s120 = smul.addr %s119, 2
      %s121 = smul.addr %s120, 4
      %s122 = scalar_lea.vmem %s0, %s121
      %p123 = pneg %p34
      %p124 = pneg %p31
      %p125 = pneg %p55
      %p126 = pneg %p52
      %p127 = pneg %p81
      %p128 = pneg %p78
      %p129 = scmp.lt.s32.totalorder %s13, 1
      %s130 = scalar_select %p129, %s13, 1
      %s131 = smul.addr %s130, 4
      %s132 = scalar_lea.vmem %s2, %s131
      %p133 = scmp.lt.s32.totalorder %s13, 1
      %s134 = scalar_select %p133, %s13, 1
      %s135 = smul.addr %s134, 2
      %s136 = smul.addr %s135, 4
      %s137 = scalar_lea.vmem %s0, %s136
      %p138 = scmp.lt.s32.totalorder %s13, 1
      %s139 = scalar_select %p138, %s13, 1
      %s140 = smul.addr %s139, 4
      %s141 = scalar_lea.vmem %s2, %s140
      %v142 = vld [vmem:[%s137] sm:$0xff]
      %v143 = vld [vmem:[%s1] sm:$0xf]
      %v144 = vld [vmem:[%s1 + $0x4] sm:$0xf]
      %v145 = vld [vmem:[%s1 + $0x8] sm:$0xf]
      %v146 = vld [vmem:[%s1 + $0xc] sm:$0xf]
      %v147 = vmul.f32 %v142, 0.25
      %149 = vrot.lane.b32.xlu0 %v142, 64
      %v150 = vpop.permute.xlu0 %149
      %vm151 = vcmask 130048
      %v153 = vsel %vm151, %v147, 0
      %v155 = vsel %vm151, %v150, 0
      %157 = vmatprep.subr.mxu0 0.0
      %158 = vmatpush1.xpose.msra.mxu0 0.0
      %159 = vmatprep.subr.mxu0 0.0
      %160 = vmatpush1.xpose.msra.mxu0 0.0
      %161 = vmatprep.subr.mxu0 0.0
      %162 = vmatpush1.xpose.msra.mxu0 0.0
      %163 = vmatprep.subr.mxu0 0.0
      %164 = vmatpush1.xpose.msra.mxu0 0.0
      %165 = vmatprep.subr.mxu0 0.0
      %166 = vmatpush1.xpose.msra.mxu0 0.0
      %167 = vmatprep.subr.mxu0 0.0
      %168 = vmatpush1.xpose.msra.mxu0 0.0
      %169 = vmatprep.subr.mxu0 0.0
      %170 = vmatpush1.xpose.msra.mxu0 0.0
      %171 = vmatprep.subr.mxu0 0.0
      %172 = vmatpush1.xpose.msra.mxu0 0.0
      %173 = vmatprep.subr.mxu0 0.0
      %174 = vmatpush1.xpose.msra.mxu0 0.0
      %175 = vmatprep.subr.mxu0 0.0
      %176 = vmatpush1.xpose.msra.mxu0 0.0
      %177 = vmatprep.subr.mxu0 0.0
      %178 = vmatpush1.xpose.msra.mxu0 0.0
      %179 = vmatprep.subr.mxu0 0.0
      %180 = vmatpush1.xpose.msra.mxu0 0.0
      %181 = vmatprep.subr.mxu0 0.0
      %182 = vmatpush1.xpose.msra.mxu0 0.0
      %183 = vmatprep.subr.mxu0 0.0
      %184 = vmatpush1.xpose.msra.mxu0 0.0
      %185 = vmatprep.subr.mxu0 0.0
      %186 = vmatpush1.xpose.msra.mxu0 0.0
      %187 = vmatprep.subr.mxu0 0.0
      %188 = vmatpush1.xpose.msra.mxu0 %v155
      %189 = vmatprep.subr.mxu0 0.0
      %190 = vmatpush2.xpose.msra.mxu0 0.0
      %191 = vmatprep.subr.mxu0 0.0
      %192 = vmatpush2.xpose.msra.mxu0 0.0
      %193 = vmatprep.subr.mxu0 0.0
      %194 = vmatpush2.xpose.msra.mxu0 0.0
      %195 = vmatprep.subr.mxu0 0.0
      %196 = vmatpush2.xpose.msra.mxu0 0.0
      %197 = vmatprep.subr.mxu0 0.0
      %198 = vmatpush2.xpose.msra.mxu0 0.0
      %199 = vmatprep.subr.mxu0 0.0
      %200 = vmatpush2.xpose.msra.mxu0 0.0
      %201 = vmatprep.subr.mxu0 0.0
      %202 = vmatpush2.xpose.msra.mxu0 0.0
      %203 = vmatprep.subr.mxu0 0.0
      %204 = vmatpush2.xpose.msra.mxu0 0.0
      %205 = vmatprep.subr.mxu0 0.0
      %206 = vmatpush2.xpose.msra.mxu0 0.0
      %207 = vmatprep.subr.mxu0 0.0
      %208 = vmatpush2.xpose.msra.mxu0 0.0
      %209 = vmatprep.subr.mxu0 0.0
      %210 = vmatpush2.xpose.msra.mxu0 0.0
      %211 = vmatprep.subr.mxu0 0.0
      %212 = vmatpush2.xpose.msra.mxu0 0.0
      %213 = vmatprep.subr.mxu0 0.0
      %214 = vmatpush2.xpose.msra.mxu0 0.0
      %215 = vmatprep.subr.mxu0 0.0
      %216 = vmatpush2.xpose.msra.mxu0 0.0
      %217 = vmatprep.subr.mxu0 0.0
      %218 = vmatpush2.xpose.msra.mxu0 0.0
      %219 = vmatprep.subr.mxu0 0.0
      %220 = vmatpush2.xpose.msra.mxu0 0.0
      %221 = vmatprep.mubr.f32.mxu0 0.0
      %222 = vmatmul.mubr.f32.gmra.mxu0 %v153
      %v223 = vpop.f32.mrf.mxu0
      %v224 = vadd.f32 %v143, %v223
      %v225 = vpop.f32.mrf.mxu0
      %226 = vdwg.mxu0
      %vm227 = vcmask 27648
      %v228 = vsel %vm227, %v224, -inf
      %229 = vmax.xlane.f32.xlu0 %v228
      %v230 = vpop.xlane.xlu0 %229
      %v231 = vsub.f32 %v224, %v230
      %v232 = vmul.f32 %v231, 1.442695
      %v233 = vpow.pop %v232
      %v234 = vsel %vm227, %v233, 0.0
      %235 = vadd.xlane.f32.xlu0 %v234
      %v236 = vpop.xlane.xlu0 %235
      %v237 = vrcp.pop %v236
      %v238 = vmul.f32 %v233, %v237
      %v239 = vrot.slane %v142, 4
      %vm240 = vcmask 31744
      %v242 = vsel %vm240, %v238, 0
      %vm244 = vcmask 1043456
      %v245 = vsel %vm244, %v239, 0
      %247 = vmatprep.subr.mxu0 0.0
      %248 = vmatpush1.msra.mxu0 0.0
      %249 = vmatprep.subr.mxu0 0.0
      %250 = vmatpush1.msra.mxu0 0.0
      %251 = vmatprep.subr.mxu0 0.0
      %252 = vmatpush1.msra.mxu0 0.0
      %253 = vmatprep.subr.mxu0 0.0
      %254 = vmatpush1.msra.mxu0 0.0
      %255 = vmatprep.subr.mxu0 0.0
      %256 = vmatpush1.msra.mxu0 0.0
      %257 = vmatprep.subr.mxu0 0.0
      %258 = vmatpush1.msra.mxu0 0.0
      %259 = vmatprep.subr.mxu0 0.0
      %260 = vmatpush1.msra.mxu0 0.0
      %261 = vmatprep.subr.mxu0 0.0
      %262 = vmatpush1.msra.mxu0 0.0
      %263 = vmatprep.subr.mxu0 0.0
      %264 = vmatpush1.msra.mxu0 0.0
      %265 = vmatprep.subr.mxu0 0.0
      %266 = vmatpush1.msra.mxu0 0.0
      %267 = vmatprep.subr.mxu0 0.0
      %268 = vmatpush1.msra.mxu0 0.0
      %269 = vmatprep.subr.mxu0 0.0
      %270 = vmatpush1.msra.mxu0 0.0
      %271 = vmatprep.subr.mxu0 0.0
      %272 = vmatpush1.msra.mxu0 0.0
      %273 = vmatprep.subr.mxu0 0.0
      %274 = vmatpush1.msra.mxu0 0.0
      %275 = vmatprep.subr.mxu0 0.0
      %276 = vmatpush1.msra.mxu0 0.0
      %277 = vmatprep.subr.mxu0 0.0
      %278 = vmatpush1.msra.mxu0 %v245
      %279 = vmatprep.subr.mxu0 0.0
      %280 = vmatpush2.msra.mxu0 0.0
      %281 = vmatprep.subr.mxu0 0.0
      %282 = vmatpush2.msra.mxu0 0.0
      %283 = vmatprep.subr.mxu0 0.0
      %284 = vmatpush2.msra.mxu0 0.0
      %285 = vmatprep.subr.mxu0 0.0
      %286 = vmatpush2.msra.mxu0 0.0
      %287 = vmatprep.subr.mxu0 0.0
      %288 = vmatpush2.msra.mxu0 0.0
      %289 = vmatprep.subr.mxu0 0.0
      %290 = vmatpush2.msra.mxu0 0.0
      %291 = vmatprep.subr.mxu0 0.0
      %292 = vmatpush2.msra.mxu0 0.0
      %293 = vmatprep.subr.mxu0 0.0
      %294 = vmatpush2.msra.mxu0 0.0
      %295 = vmatprep.subr.mxu0 0.0
      %296 = vmatpush2.msra.mxu0 0.0
      %297 = vmatprep.subr.mxu0 0.0
      %298 = vmatpush2.msra.mxu0 0.0
      %299 = vmatprep.subr.mxu0 0.0
      %300 = vmatpush2.msra.mxu0 0.0
      %301 = vmatprep.subr.mxu0 0.0
      %302 = vmatpush2.msra.mxu0 0.0
      %303 = vmatprep.subr.mxu0 0.0
      %304 = vmatpush2.msra.mxu0 0.0
      %305 = vmatprep.subr.mxu0 0.0
      %306 = vmatpush2.msra.mxu0 0.0
      %307 = vmatprep.subr.mxu0 0.0
      %308 = vmatpush2.msra.mxu0 0.0
      %309 = vmatprep.subr.mxu0 0.0
      %310 = vmatpush2.msra.mxu0 0.0
      %311 = vmatprep.mubr.f32.mxu0 0.0
      %312 = vmatmul.mubr.f32.gmra.mxu0 %v242
      %v313 = vpop.f32.mrf.mxu0
      %v314 = vadd.f32 0.0, %v313
      %v315 = vpop.f32.mrf.mxu0
      %316 = vdwg.mxu0
      %317 = vrot.lane.b32.xlu0 %v147, 112
      %v318 = vpop.permute.xlu0 %317
      %319 = vrot.lane.b32.xlu0 %v142, 48
      %v320 = vpop.permute.xlu0 %319
      %v321 = vsel %vm151, %v318, 0
      %v323 = vsel %vm151, %v320, 0
      %325 = vmatprep.subr.mxu0 0.0
      %326 = vmatpush1.xpose.msra.mxu0 0.0
      %327 = vmatprep.subr.mxu0 0.0
      %328 = vmatpush1.xpose.msra.mxu0 0.0
      %329 = vmatprep.subr.mxu0 0.0
      %330 = vmatpush1.xpose.msra.mxu0 0.0
      %331 = vmatprep.subr.mxu0 0.0
      %332 = vmatpush1.xpose.msra.mxu0 0.0
      %333 = vmatprep.subr.mxu0 0.0
      %334 = vmatpush1.xpose.msra.mxu0 0.0
      %335 = vmatprep.subr.mxu0 0.0
      %336 = vmatpush1.xpose.msra.mxu0 0.0
      %337 = vmatprep.subr.mxu0 0.0
      %338 = vmatpush1.xpose.msra.mxu0 0.0
      %339 = vmatprep.subr.mxu0 0.0
      %340 = vmatpush1.xpose.msra.mxu0 0.0
      %341 = vmatprep.subr.mxu0 0.0
      %342 = vmatpush1.xpose.msra.mxu0 0.0
      %343 = vmatprep.subr.mxu0 0.0
      %344 = vmatpush1.xpose.msra.mxu0 0.0
      %345 = vmatprep.subr.mxu0 0.0
      %346 = vmatpush1.xpose.msra.mxu0 0.0
      %347 = vmatprep.subr.mxu0 0.0
      %348 = vmatpush1.xpose.msra.mxu0 0.0
      %349 = vmatprep.subr.mxu0 0.0
      %350 = vmatpush1.xpose.msra.mxu0 0.0
      %351 = vmatprep.subr.mxu0 0.0
      %352 = vmatpush1.xpose.msra.mxu0 0.0
      %353 = vmatprep.subr.mxu0 0.0
      %354 = vmatpush1.xpose.msra.mxu0 0.0
      %355 = vmatprep.subr.mxu0 0.0
      %356 = vmatpush1.xpose.msra.mxu0 %v323
      %357 = vmatprep.subr.mxu0 0.0
      %358 = vmatpush2.xpose.msra.mxu0 0.0
      %359 = vmatprep.subr.mxu0 0.0
      %360 = vmatpush2.xpose.msra.mxu0 0.0
      %361 = vmatprep.subr.mxu0 0.0
      %362 = vmatpush2.xpose.msra.mxu0 0.0
      %363 = vmatprep.subr.mxu0 0.0
      %364 = vmatpush2.xpose.msra.mxu0 0.0
      %365 = vmatprep.subr.mxu0 0.0
      %366 = vmatpush2.xpose.msra.mxu0 0.0
      %367 = vmatprep.subr.mxu0 0.0
      %368 = vmatpush2.xpose.msra.mxu0 0.0
      %369 = vmatprep.subr.mxu0 0.0
      %370 = vmatpush2.xpose.msra.mxu0 0.0
      %371 = vmatprep.subr.mxu0 0.0
      %372 = vmatpush2.xpose.msra.mxu0 0.0
      %373 = vmatprep.subr.mxu0 0.0
      %374 = vmatpush2.xpose.msra.mxu0 0.0
      %375 = vmatprep.subr.mxu0 0.0
      %376 = vmatpush2.xpose.msra.mxu0 0.0
      %377 = vmatprep.subr.mxu0 0.0
      %378 = vmatpush2.xpose.msra.mxu0 0.0
      %379 = vmatprep.subr.mxu0 0.0
      %380 = vmatpush2.xpose.msra.mxu0 0.0
      %381 = vmatprep.subr.mxu0 0.0
      %382 = vmatpush2.xpose.msra.mxu0 0.0
      %383 = vmatprep.subr.mxu0 0.0
      %384 = vmatpush2.xpose.msra.mxu0 0.0
      %385 = vmatprep.subr.mxu0 0.0
      %386 = vmatpush2.xpose.msra.mxu0 0.0
      %387 = vmatprep.subr.mxu0 0.0
      %388 = vmatpush2.xpose.msra.mxu0 0.0
      %389 = vmatprep.mubr.f32.mxu0 0.0
      %390 = vmatmul.mubr.f32.gmra.mxu0 %v321
      %v391 = vpop.f32.mrf.mxu0
      %v392 = vadd.f32 %v144, %v391
      %v393 = vpop.f32.mrf.mxu0
      %394 = vdwg.mxu0
      %v395 = vsel %vm227, %v392, -inf
      %396 = vmax.xlane.f32.xlu0 %v395
      %v397 = vpop.xlane.xlu0 %396
      %v398 = vsub.f32 %v392, %v397
      %v399 = vmul.f32 %v398, 1.442695
      %v400 = vpow.pop %v399
      %v401 = vsel %vm227, %v400, 0.0
      %402 = vadd.xlane.f32.xlu0 %v401
      %v403 = vpop.xlane.xlu0 %402
      %v404 = vrcp.pop %v403
      %v405 = vmul.f32 %v400, %v404
      %406 = vrot.lane.b32.xlu0 %v142, 112
      %v407 = vpop.permute.xlu0 %406
      %v408 = vrot.slane %v407, 4
      %v410 = vsel %vm240, %v405, 0
      %v412 = vsel %vm244, %v408, 0
      %414 = vmatprep.subr.mxu0 0.0
      %415 = vmatpush1.msra.mxu0 0.0
      %416 = vmatprep.subr.mxu0 0.0
      %417 = vmatpush1.msra.mxu0 0.0
      %418 = vmatprep.subr.mxu0 0.0
      %419 = vmatpush1.msra.mxu0 0.0
      %420 = vmatprep.subr.mxu0 0.0
      %421 = vmatpush1.msra.mxu0 0.0
      %422 = vmatprep.subr.mxu0 0.0
      %423 = vmatpush1.msra.mxu0 0.0
      %424 = vmatprep.subr.mxu0 0.0
      %425 = vmatpush1.msra.mxu0 0.0
      %426 = vmatprep.subr.mxu0 0.0
      %427 = vmatpush1.msra.mxu0 0.0
      %428 = vmatprep.subr.mxu0 0.0
      %429 = vmatpush1.msra.mxu0 0.0
      %430 = vmatprep.subr.mxu0 0.0
      %431 = vmatpush1.msra.mxu0 0.0
      %432 = vmatprep.subr.mxu0 0.0
      %433 = vmatpush1.msra.mxu0 0.0
      %434 = vmatprep.subr.mxu0 0.0
      %435 = vmatpush1.msra.mxu0 0.0
      %436 = vmatprep.subr.mxu0 0.0
      %437 = vmatpush1.msra.mxu0 0.0
      %438 = vmatprep.subr.mxu0 0.0
      %439 = vmatpush1.msra.mxu0 0.0
      %440 = vmatprep.subr.mxu0 0.0
      %441 = vmatpush1.msra.mxu0 0.0
      %442 = vmatprep.subr.mxu0 0.0
      %443 = vmatpush1.msra.mxu0 0.0
      %444 = vmatprep.subr.mxu0 0.0
      %445 = vmatpush1.msra.mxu0 %v412
      %446 = vmatprep.subr.mxu0 0.0
      %447 = vmatpush2.msra.mxu0 0.0
      %448 = vmatprep.subr.mxu0 0.0
      %449 = vmatpush2.msra.mxu0 0.0
      %450 = vmatprep.subr.mxu0 0.0
      %451 = vmatpush2.msra.mxu0 0.0
      %452 = vmatprep.subr.mxu0 0.0
      %453 = vmatpush2.msra.mxu0 0.0
      %454 = vmatprep.subr.mxu0 0.0
      %455 = vmatpush2.msra.mxu0 0.0
      %456 = vmatprep.subr.mxu0 0.0
      %457 = vmatpush2.msra.mxu0 0.0
      %458 = vmatprep.subr.mxu0 0.0
      %459 = vmatpush2.msra.mxu0 0.0
      %460 = vmatprep.subr.mxu0 0.0
      %461 = vmatpush2.msra.mxu0 0.0
      %462 = vmatprep.subr.mxu0 0.0
      %463 = vmatpush2.msra.mxu0 0.0
      %464 = vmatprep.subr.mxu0 0.0
      %465 = vmatpush2.msra.mxu0 0.0
      %466 = vmatprep.subr.mxu0 0.0
      %467 = vmatpush2.msra.mxu0 0.0
      %468 = vmatprep.subr.mxu0 0.0
      %469 = vmatpush2.msra.mxu0 0.0
      %470 = vmatprep.subr.mxu0 0.0
      %471 = vmatpush2.msra.mxu0 0.0
      %472 = vmatprep.subr.mxu0 0.0
      %473 = vmatpush2.msra.mxu0 0.0
      %474 = vmatprep.subr.mxu0 0.0
      %475 = vmatpush2.msra.mxu0 0.0
      %476 = vmatprep.subr.mxu0 0.0
      %477 = vmatpush2.msra.mxu0 0.0
      %478 = vmatprep.mubr.f32.mxu0 0.0
      %479 = vmatmul.mubr.f32.gmra.mxu0 %v410
      %v480 = vpop.f32.mrf.mxu0
      %v481 = vadd.f32 0.0, %v480
      %v482 = vpop.f32.mrf.mxu0
      %483 = vdwg.mxu0
      %484 = vrot.lane.b32.xlu0 %v147, 96
      %v485 = vpop.permute.xlu0 %484
      %486 = vrot.lane.b32.xlu0 %v142, 32
      %v487 = vpop.permute.xlu0 %486
      %v488 = vsel %vm151, %v485, 0
      %v490 = vsel %vm151, %v487, 0
      %492 = vmatprep.subr.mxu0 0.0
      %493 = vmatpush1.xpose.msra.mxu0 0.0
      %494 = vmatprep.subr.mxu0 0.0
      %495 = vmatpush1.xpose.msra.mxu0 0.0
      %496 = vmatprep.subr.mxu0 0.0
      %497 = vmatpush1.xpose.msra.mxu0 0.0
      %498 = vmatprep.subr.mxu0 0.0
      %499 = vmatpush1.xpose.msra.mxu0 0.0
      %500 = vmatprep.subr.mxu0 0.0
      %501 = vmatpush1.xpose.msra.mxu0 0.0
      %502 = vmatprep.subr.mxu0 0.0
      %503 = vmatpush1.xpose.msra.mxu0 0.0
      %504 = vmatprep.subr.mxu0 0.0
      %505 = vmatpush1.xpose.msra.mxu0 0.0
      %506 = vmatprep.subr.mxu0 0.0
      %507 = vmatpush1.xpose.msra.mxu0 0.0
      %508 = vmatprep.subr.mxu0 0.0
      %509 = vmatpush1.xpose.msra.mxu0 0.0
      %510 = vmatprep.subr.mxu0 0.0
      %511 = vmatpush1.xpose.msra.mxu0 0.0
      %512 = vmatprep.subr.mxu0 0.0
      %513 = vmatpush1.xpose.msra.mxu0 0.0
      %514 = vmatprep.subr.mxu0 0.0
      %515 = vmatpush1.xpose.msra.mxu0 0.0
      %516 = vmatprep.subr.mxu0 0.0
      %517 = vmatpush1.xpose.msra.mxu0 0.0
      %518 = vmatprep.subr.mxu0 0.0
      %519 = vmatpush1.xpose.msra.mxu0 0.0
      %520 = vmatprep.subr.mxu0 0.0
      %521 = vmatpush1.xpose.msra.mxu0 0.0
      %522 = vmatprep.subr.mxu0 0.0
      %523 = vmatpush1.xpose.msra.mxu0 %v490
      %524 = vmatprep.subr.mxu0 0.0
      %525 = vmatpush2.xpose.msra.mxu0 0.0
      %526 = vmatprep.subr.mxu0 0.0
      %527 = vmatpush2.xpose.msra.mxu0 0.0
      %528 = vmatprep.subr.mxu0 0.0
      %529 = vmatpush2.xpose.msra.mxu0 0.0
      %530 = vmatprep.subr.mxu0 0.0
      %531 = vmatpush2.xpose.msra.mxu0 0.0
      %532 = vmatprep.subr.mxu0 0.0
      %533 = vmatpush2.xpose.msra.mxu0 0.0
      %534 = vmatprep.subr.mxu0 0.0
      %535 = vmatpush2.xpose.msra.mxu0 0.0
      %536 = vmatprep.subr.mxu0 0.0
      %537 = vmatpush2.xpose.msra.mxu0 0.0
      %538 = vmatprep.subr.mxu0 0.0
      %539 = vmatpush2.xpose.msra.mxu0 0.0
      %540 = vmatprep.subr.mxu0 0.0
      %541 = vmatpush2.xpose.msra.mxu0 0.0
      %542 = vmatprep.subr.mxu0 0.0
      %543 = vmatpush2.xpose.msra.mxu0 0.0
      %544 = vmatprep.subr.mxu0 0.0
      %545 = vmatpush2.xpose.msra.mxu0 0.0
      %546 = vmatprep.subr.mxu0 0.0
      %547 = vmatpush2.xpose.msra.mxu0 0.0
      %548 = vmatprep.subr.mxu0 0.0
      %549 = vmatpush2.xpose.msra.mxu0 0.0
      %550 = vmatprep.subr.mxu0 0.0
      %551 = vmatpush2.xpose.msra.mxu0 0.0
      %552 = vmatprep.subr.mxu0 0.0
      %553 = vmatpush2.xpose.msra.mxu0 0.0
      %554 = vmatprep.subr.mxu0 0.0
      %555 = vmatpush2.xpose.msra.mxu0 0.0
      %556 = vmatprep.mubr.f32.mxu0 0.0
      %557 = vmatmul.mubr.f32.gmra.mxu0 %v488
      %v558 = vpop.f32.mrf.mxu0
      %v559 = vadd.f32 %v145, %v558
      %v560 = vpop.f32.mrf.mxu0
      %561 = vdwg.mxu0
      %v562 = vsel %vm227, %v559, -inf
      %563 = vmax.xlane.f32.xlu0 %v562
      %v564 = vpop.xlane.xlu0 %563
      %v565 = vsub.f32 %v559, %v564
      %v566 = vmul.f32 %v565, 1.442695
      %v567 = vpow.pop %v566
      %v568 = vsel %vm227, %v567, 0.0
      %569 = vadd.xlane.f32.xlu0 %v568
      %v570 = vpop.xlane.xlu0 %569
      %v571 = vrcp.pop %v570
      %v572 = vmul.f32 %v567, %v571
      %573 = vrot.lane.b32.xlu0 %v142, 96
      %v574 = vpop.permute.xlu0 %573
      %v575 = vrot.slane %v574, 4
      %v577 = vsel %vm240, %v572, 0
      %v579 = vsel %vm244, %v575, 0
      %581 = vmatprep.subr.mxu0 0.0
      %582 = vmatpush1.msra.mxu0 0.0
      %583 = vmatprep.subr.mxu0 0.0
      %584 = vmatpush1.msra.mxu0 0.0
      %585 = vmatprep.subr.mxu0 0.0
      %586 = vmatpush1.msra.mxu0 0.0
      %587 = vmatprep.subr.mxu0 0.0
      %588 = vmatpush1.msra.mxu0 0.0
      %589 = vmatprep.subr.mxu0 0.0
      %590 = vmatpush1.msra.mxu0 0.0
      %591 = vmatprep.subr.mxu0 0.0
      %592 = vmatpush1.msra.mxu0 0.0
      %593 = vmatprep.subr.mxu0 0.0
      %594 = vmatpush1.msra.mxu0 0.0
      %595 = vmatprep.subr.mxu0 0.0
      %596 = vmatpush1.msra.mxu0 0.0
      %597 = vmatprep.subr.mxu0 0.0
      %598 = vmatpush1.msra.mxu0 0.0
      %599 = vmatprep.subr.mxu0 0.0
      %600 = vmatpush1.msra.mxu0 0.0
      %601 = vmatprep.subr.mxu0 0.0
      %602 = vmatpush1.msra.mxu0 0.0
      %603 = vmatprep.subr.mxu0 0.0
      %604 = vmatpush1.msra.mxu0 0.0
      %605 = vmatprep.subr.mxu0 0.0
      %606 = vmatpush1.msra.mxu0 0.0
      %607 = vmatprep.subr.mxu0 0.0
      %608 = vmatpush1.msra.mxu0 0.0
      %609 = vmatprep.subr.mxu0 0.0
      %610 = vmatpush1.msra.mxu0 0.0
      %611 = vmatprep.subr.mxu0 0.0
      %612 = vmatpush1.msra.mxu0 %v579
      %613 = vmatprep.subr.mxu0 0.0
      %614 = vmatpush2.msra.mxu0 0.0
      %615 = vmatprep.subr.mxu0 0.0
      %616 = vmatpush2.msra.mxu0 0.0
      %617 = vmatprep.subr.mxu0 0.0
      %618 = vmatpush2.msra.mxu0 0.0
      %619 = vmatprep.subr.mxu0 0.0
      %620 = vmatpush2.msra.mxu0 0.0
      %621 = vmatprep.subr.mxu0 0.0
      %622 = vmatpush2.msra.mxu0 0.0
      %623 = vmatprep.subr.mxu0 0.0
      %624 = vmatpush2.msra.mxu0 0.0
      %625 = vmatprep.subr.mxu0 0.0
      %626 = vmatpush2.msra.mxu0 0.0
      %627 = vmatprep.subr.mxu0 0.0
      %628 = vmatpush2.msra.mxu0 0.0
      %629 = vmatprep.subr.mxu0 0.0
      %630 = vmatpush2.msra.mxu0 0.0
      %631 = vmatprep.subr.mxu0 0.0
      %632 = vmatpush2.msra.mxu0 0.0
      %633 = vmatprep.subr.mxu0 0.0
      %634 = vmatpush2.msra.mxu0 0.0
      %635 = vmatprep.subr.mxu0 0.0
      %636 = vmatpush2.msra.mxu0 0.0
      %637 = vmatprep.subr.mxu0 0.0
      %638 = vmatpush2.msra.mxu0 0.0
      %639 = vmatprep.subr.mxu0 0.0
      %640 = vmatpush2.msra.mxu0 0.0
      %641 = vmatprep.subr.mxu0 0.0
      %642 = vmatpush2.msra.mxu0 0.0
      %643 = vmatprep.subr.mxu0 0.0
      %644 = vmatpush2.msra.mxu0 0.0
      %645 = vmatprep.mubr.f32.mxu0 0.0
      %646 = vmatmul.mubr.f32.gmra.mxu0 %v577
      %v647 = vpop.f32.mrf.mxu0
      %v648 = vadd.f32 0.0, %v647
      %v649 = vpop.f32.mrf.mxu0
      %650 = vdwg.mxu0
      %651 = vrot.lane.b32.xlu0 %v147, 80
      %v652 = vpop.permute.xlu0 %651
      %653 = vrot.lane.b32.xlu0 %v142, 16
      %v654 = vpop.permute.xlu0 %653
      %v655 = vsel %vm151, %v652, 0
      %v657 = vsel %vm151, %v654, 0
      %659 = vmatprep.subr.mxu0 0.0
      %660 = vmatpush1.xpose.msra.mxu0 0.0
      %661 = vmatprep.subr.mxu0 0.0
      %662 = vmatpush1.xpose.msra.mxu0 0.0
      %663 = vmatprep.subr.mxu0 0.0
      %664 = vmatpush1.xpose.msra.mxu0 0.0
      %665 = vmatprep.subr.mxu0 0.0
      %666 = vmatpush1.xpose.msra.mxu0 0.0
      %667 = vmatprep.subr.mxu0 0.0
      %668 = vmatpush1.xpose.msra.mxu0 0.0
      %669 = vmatprep.subr.mxu0 0.0
      %670 = vmatpush1.xpose.msra.mxu0 0.0
      %671 = vmatprep.subr.mxu0 0.0
      %672 = vmatpush1.xpose.msra.mxu0 0.0
      %673 = vmatprep.subr.mxu0 0.0
      %674 = vmatpush1.xpose.msra.mxu0 0.0
      %675 = vmatprep.subr.mxu0 0.0
      %676 = vmatpush1.xpose.msra.mxu0 0.0
      %677 = vmatprep.subr.mxu0 0.0
      %678 = vmatpush1.xpose.msra.mxu0 0.0
      %679 = vmatprep.subr.mxu0 0.0
      %680 = vmatpush1.xpose.msra.mxu0 0.0
      %681 = vmatprep.subr.mxu0 0.0
      %682 = vmatpush1.xpose.msra.mxu0 0.0
      %683 = vmatprep.subr.mxu0 0.0
      %684 = vmatpush1.xpose.msra.mxu0 0.0
      %685 = vmatprep.subr.mxu0 0.0
      %686 = vmatpush1.xpose.msra.mxu0 0.0
      %687 = vmatprep.subr.mxu0 0.0
      %688 = vmatpush1.xpose.msra.mxu0 0.0
      %689 = vmatprep.subr.mxu0 0.0
      %690 = vmatpush1.xpose.msra.mxu0 %v657
      %691 = vmatprep.subr.mxu0 0.0
      %692 = vmatpush2.xpose.msra.mxu0 0.0
      %693 = vmatprep.subr.mxu0 0.0
      %694 = vmatpush2.xpose.msra.mxu0 0.0
      %695 = vmatprep.subr.mxu0 0.0
      %696 = vmatpush2.xpose.msra.mxu0 0.0
      %697 = vmatprep.subr.mxu0 0.0
      %698 = vmatpush2.xpose.msra.mxu0 0.0
      %699 = vmatprep.subr.mxu0 0.0
      %700 = vmatpush2.xpose.msra.mxu0 0.0
      %701 = vmatprep.subr.mxu0 0.0
      %702 = vmatpush2.xpose.msra.mxu0 0.0
      %703 = vmatprep.subr.mxu0 0.0
      %704 = vmatpush2.xpose.msra.mxu0 0.0
      %705 = vmatprep.subr.mxu0 0.0
      %706 = vmatpush2.xpose.msra.mxu0 0.0
      %707 = vmatprep.subr.mxu0 0.0
      %708 = vmatpush2.xpose.msra.mxu0 0.0
      %709 = vmatprep.subr.mxu0 0.0
      %710 = vmatpush2.xpose.msra.mxu0 0.0
      %711 = vmatprep.subr.mxu0 0.0
      %712 = vmatpush2.xpose.msra.mxu0 0.0
      %713 = vmatprep.subr.mxu0 0.0
      %714 = vmatpush2.xpose.msra.mxu0 0.0
      %715 = vmatprep.subr.mxu0 0.0
      %716 = vmatpush2.xpose.msra.mxu0 0.0
      %717 = vmatprep.subr.mxu0 0.0
      %718 = vmatpush2.xpose.msra.mxu0 0.0
      %719 = vmatprep.subr.mxu0 0.0
      %720 = vmatpush2.xpose.msra.mxu0 0.0
      %721 = vmatprep.subr.mxu0 0.0
      %722 = vmatpush2.xpose.msra.mxu0 0.0
      %723 = vmatprep.mubr.f32.mxu0 0.0
      %724 = vmatmul.mubr.f32.gmra.mxu0 %v655
      %v725 = vpop.f32.mrf.mxu0
      %v726 = vadd.f32 %v146, %v725
      %v727 = vpop.f32.mrf.mxu0
      %728 = vdwg.mxu0
      %v729 = vsel %vm227, %v726, -inf
      %730 = vmax.xlane.f32.xlu0 %v729
      %v731 = vpop.xlane.xlu0 %730
      %v732 = vsub.f32 %v726, %v731
      %v733 = vmul.f32 %v732, 1.442695
      %v734 = vpow.pop %v733
      %v735 = vsel %vm227, %v734, 0.0
      %736 = vadd.xlane.f32.xlu0 %v735
      %v737 = vpop.xlane.xlu0 %736
      %v738 = vrcp.pop %v737
      %v739 = vmul.f32 %v734, %v738
      %740 = vrot.lane.b32.xlu0 %v142, 80
      %v741 = vpop.permute.xlu0 %740
      %v742 = vrot.slane %v741, 4
      %v744 = vsel %vm240, %v739, 0
      %v746 = vsel %vm244, %v742, 0
      %748 = vmatprep.subr.mxu0 0.0
      %749 = vmatpush1.msra.mxu0 0.0
      %750 = vmatprep.subr.mxu0 0.0
      %751 = vmatpush1.msra.mxu0 0.0
      %752 = vmatprep.subr.mxu0 0.0
      %753 = vmatpush1.msra.mxu0 0.0
      %754 = vmatprep.subr.mxu0 0.0
      %755 = vmatpush1.msra.mxu0 0.0
      %756 = vmatprep.subr.mxu0 0.0
      %757 = vmatpush1.msra.mxu0 0.0
      %758 = vmatprep.subr.mxu0 0.0
      %759 = vmatpush1.msra.mxu0 0.0
      %760 = vmatprep.subr.mxu0 0.0
      %761 = vmatpush1.msra.mxu0 0.0
      %762 = vmatprep.subr.mxu0 0.0
      %763 = vmatpush1.msra.mxu0 0.0
      %764 = vmatprep.subr.mxu0 0.0
      %765 = vmatpush1.msra.mxu0 0.0
      %766 = vmatprep.subr.mxu0 0.0
      %767 = vmatpush1.msra.mxu0 0.0
      %768 = vmatprep.subr.mxu0 0.0
      %769 = vmatpush1.msra.mxu0 0.0
      %770 = vmatprep.subr.mxu0 0.0
      %771 = vmatpush1.msra.mxu0 0.0
      %772 = vmatprep.subr.mxu0 0.0
      %773 = vmatpush1.msra.mxu0 0.0
      %774 = vmatprep.subr.mxu0 0.0
      %775 = vmatpush1.msra.mxu0 0.0
      %776 = vmatprep.subr.mxu0 0.0
      %777 = vmatpush1.msra.mxu0 0.0
      %778 = vmatprep.subr.mxu0 0.0
      %779 = vmatpush1.msra.mxu0 %v746
      %780 = vmatprep.subr.mxu0 0.0
      %781 = vmatpush2.msra.mxu0 0.0
      %782 = vmatprep.subr.mxu0 0.0
      %783 = vmatpush2.msra.mxu0 0.0
      %784 = vmatprep.subr.mxu0 0.0
      %785 = vmatpush2.msra.mxu0 0.0
      %786 = vmatprep.subr.mxu0 0.0
      %787 = vmatpush2.msra.mxu0 0.0
      %788 = vmatprep.subr.mxu0 0.0
      %789 = vmatpush2.msra.mxu0 0.0
      %790 = vmatprep.subr.mxu0 0.0
      %791 = vmatpush2.msra.mxu0 0.0
      %792 = vmatprep.subr.mxu0 0.0
      %793 = vmatpush2.msra.mxu0 0.0
      %794 = vmatprep.subr.mxu0 0.0
      %795 = vmatpush2.msra.mxu0 0.0
      %796 = vmatprep.subr.mxu0 0.0
      %797 = vmatpush2.msra.mxu0 0.0
      %798 = vmatprep.subr.mxu0 0.0
      %799 = vmatpush2.msra.mxu0 0.0
      %800 = vmatprep.subr.mxu0 0.0
      %801 = vmatpush2.msra.mxu0 0.0
      %802 = vmatprep.subr.mxu0 0.0
      %803 = vmatpush2.msra.mxu0 0.0
      %804 = vmatprep.subr.mxu0 0.0
      %805 = vmatpush2.msra.mxu0 0.0
      %806 = vmatprep.subr.mxu0 0.0
      %807 = vmatpush2.msra.mxu0 0.0
      %808 = vmatprep.subr.mxu0 0.0
      %809 = vmatpush2.msra.mxu0 0.0
      %810 = vmatprep.subr.mxu0 0.0
      %811 = vmatpush2.msra.mxu0 0.0
      %812 = vmatprep.mubr.f32.mxu0 0.0
      %813 = vmatmul.mubr.f32.gmra.mxu0 %v744
      %v814 = vpop.f32.mrf.mxu0
      %v815 = vadd.f32 0.0, %v814
      %v816 = vpop.f32.mrf.mxu0
      %817 = vdwg.mxu0
      %819 = vrot.lane.b32.xlu0 %v481, 16
      %v820 = vpop.permute.xlu0 %819
      %823 = vrot.lane.b32.xlu0 %v648, 32
      %v824 = vpop.permute.xlu0 %823
      %827 = vrot.lane.b32.xlu0 %v815, 48
      %v828 = vpop.permute.xlu0 %827
      %v830 = vsel %vm151, %v314, %v820
      %vm831 = vcmask 261120
      %v832 = vsel %vm831, %v830, %v824
      %vm833 = vcmask 392192
      %v834 = vsel %vm833, %v832, %v828
      %vm835 = vcmask 519168
      %836 = vst.msk [vmem:[%s141] sm:$0xf] %vm835, %v834
      %p837 = scmp.lt.s32.totalorder %s13, 1
      %s838 = scalar_select %p837, %s13, 1
      %s839 = smul.addr %s838, 4
      %s840 = scalar_lea.vmem %s2, %s839
      // Predicated region
      $region29: #{swin_forward.38} parent=27 // pred_check
        %p841 = pneg %p78
      $region30: #{swin_forward.38} parent=27 // pred_check_branch
        %843 = sbr.rel (%p841) target = $region32
      $region31: #{swin_forward.38} parent=27 // pred_region
        _
      $region32: #{swin_forward.38} parent=27 // pred_fallthru
        _
    $region28: #{swin_forward.38} parent=5 // pred_fallthru
      _
    %p844 = scmp.le.s32.totalorder 2, %s8
    // Predicated region
    $region33: #{swin_forward.38} parent=5 // pred_check
      %p845 = pneg %p844
    $region34: #{swin_forward.38} parent=5 // pred_check_branch
      %847 = sbr.rel (%p845) target = $region36
    $region35: #{swin_forward.38} parent=5 // pred_region
      %s848 = ssub.s32 %s8, 2
      // Predicated region
      $region37: #{swin_forward.38} parent=35 // pred_check
        %p849 = pneg %p84
      $region38: #{swin_forward.38} parent=35 // pred_check_branch
        %851 = sbr.rel (%p849) target = $region40
      $region39: #{swin_forward.38} parent=35 // pred_region
        %p852 = scmp.lt.s32.totalorder %s14, 1
        %s853 = scalar_select %p852, %s14, 1
        %s854 = smul.addr %s853, 4
        %s855 = scalar_lea.vmem %s2, %s854
      $region40: #{swin_forward.38} parent=35 // pred_fallthru
        _
    $region36: #{swin_forward.38} parent=5 // pred_fallthru
      _
  $region6: #{swin_forward.38} parent=0 // loop_footer
    %s12 = sadd.s32 1, %s8
  $region7: #{swin_forward.38} parent=0 // loop_footer_branch
    %7 = sbr.rel target = $region3
  $region8: #{swin_forward.38} parent=0 // loop_exit
    _

// kernel: swin_forward.39
$region0: #{swin_forward.39}
  #allocation0 [shape = 'u32[]', space=smem, size = 0x4, offset = 0x4, fixed_abs, tag = 'smem constant byte address 0x4 - core index']
  #allocation1 [shape = 'u32[144,128]{1,0:T(1,128)}', space=vmem, size = 0x12000, scoped, tag = 'internal scratch']
  %s0 = inlined_call_operand.vmem [shape: f32[8,64], index: 0, kind: input, shape index: {}]
  %s1 = inlined_call_operand.vmem [shape: f32[64,64], index: 1, kind: input, shape index: {}]
  %s2 = inlined_call_operand.vmem [shape: f32[1,64], index: 2, kind: input, shape index: {}]
  %s3 = inlined_call_operand.vmem [shape: f32[8,64], index: 3, kind: input, shape index: {}]
  %s4 = inlined_call_operand.vmem [shape: f32[8,64], index: 4, kind: output, shape index: {}]
  %s5 = sld [smem:[#allocation0]]
  $region26: #{swin_forward.39} parent=0
    _
  %s7 = ssub.s32 1, %s5
  %s8 = scalar_select 0, %s7, %s5
  // Predicated region
  $region2: #{swin_forward.39} parent=0 // pred_check
    _
  $region3: #{swin_forward.39} parent=0 // pred_check_branch
    %10 = sbr.rel (0) target = $region5
  $region4: #{swin_forward.39} parent=0 // pred_region
    _
  $region5: #{swin_forward.39} parent=0 // pred_fallthru
    _
  // Predicated region
  $region6: #{swin_forward.39} parent=0 // pred_check
    _
  $region7: #{swin_forward.39} parent=0 // pred_check_branch
    %12 = sbr.rel (0) target = $region9
  $region8: #{swin_forward.39} parent=0 // pred_region
    _
  $region9: #{swin_forward.39} parent=0 // pred_fallthru
    _
  // Predicated region
  $region10: #{swin_forward.39} parent=0 // pred_check
    _
  $region11: #{swin_forward.39} parent=0 // pred_check_branch
    %14 = sbr.rel (0) target = $region13
  $region12: #{swin_forward.39} parent=0 // pred_region
    _
  $region13: #{swin_forward.39} parent=0 // pred_fallthru
    _
  // Predicated region
  $region14: #{swin_forward.39} parent=0 // pred_check
    _
  $region15: #{swin_forward.39} parent=0 // pred_check_branch
    %16 = sbr.rel (0) target = $region17
  $region16: #{swin_forward.39} parent=0 // pred_region
    _
  $region17: #{swin_forward.39} parent=0 // pred_fallthru
    _
  %v17 = vld [vmem:[%s0] sm:$0xff]
  %v18 = vld [vmem:[%s1] sm:$0xff]
  %v19 = vld [vmem:[%s1 + $0x8] sm:$0xff]
  %v20 = vld [vmem:[%s1 + $0x10] sm:$0xff]
  %v21 = vld [vmem:[%s1 + $0x18] sm:$0xff]
  %v22 = vld [vmem:[%s1 + $0x20] sm:$0xff]
  %v23 = vld [vmem:[%s1 + $0x28] sm:$0xff]
  %v24 = vld [vmem:[%s1 + $0x30] sm:$0xff]
  %v25 = vld [vmem:[%s1 + $0x38] sm:$0xff]
  %v26 = vld [vmem:[%s2] sm:$0x1]
  %v28 = vlaneseq
  %v29 = vshrl.u32 %v28, 7
  %v30 = vsub.s32 0, %v29
  %v31 = vrot.slane %v26, %v30
  %vm33 = vcmask 523264
  %v35 = vsel %vm33, %v17, 0
  %37 = vmatprep.subr.mxu0 0.0
  %38 = vmatpush1.msra.mxu0 0.0
  %39 = vmatprep.subr.mxu0 0.0
  %40 = vmatpush1.msra.mxu0 0.0
  %41 = vmatprep.subr.mxu0 0.0
  %42 = vmatpush1.msra.mxu0 0.0
  %43 = vmatprep.subr.mxu0 0.0
  %44 = vmatpush1.msra.mxu0 0.0
  %45 = vmatprep.subr.mxu0 0.0
  %46 = vmatpush1.msra.mxu0 0.0
  %47 = vmatprep.subr.mxu0 0.0
  %48 = vmatpush1.msra.mxu0 0.0
  %49 = vmatprep.subr.mxu0 0.0
  %50 = vmatpush1.msra.mxu0 0.0
  %51 = vmatprep.subr.mxu0 0.0
  %52 = vmatpush1.msra.mxu0 0.0
  %53 = vmatprep.subr.mxu0 0.0
  %54 = vmatpush1.msra.mxu0 %v25
  %55 = vmatprep.subr.mxu0 0.0
  %56 = vmatpush1.msra.mxu0 %v24
  %57 = vmatprep.subr.mxu0 0.0
  %58 = vmatpush1.msra.mxu0 %v23
  %59 = vmatprep.subr.mxu0 0.0
  %60 = vmatpush1.msra.mxu0 %v22
  %61 = vmatprep.subr.mxu0 0.0
  %62 = vmatpush1.msra.mxu0 %v21
  %63 = vmatprep.subr.mxu0 0.0
  %64 = vmatpush1.msra.mxu0 %v20
  %65 = vmatprep.subr.mxu0 0.0
  %66 = vmatpush1.msra.mxu0 %v19
  %67 = vmatprep.subr.mxu0 0.0
  %68 = vmatpush1.msra.mxu0 %v18
  %69 = vmatprep.subr.mxu0 0.0
  %70 = vmatpush2.msra.mxu0 0.0
  %71 = vmatprep.subr.mxu0 0.0
  %72 = vmatpush2.msra.mxu0 0.0
  %73 = vmatprep.subr.mxu0 0.0
  %74 = vmatpush2.msra.mxu0 0.0
  %75 = vmatprep.subr.mxu0 0.0
  %76 = vmatpush2.msra.mxu0 0.0
  %77 = vmatprep.subr.mxu0 0.0
  %78 = vmatpush2.msra.mxu0 0.0
  %79 = vmatprep.subr.mxu0 0.0
  %80 = vmatpush2.msra.mxu0 0.0
  %81 = vmatprep.subr.mxu0 0.0
  %82 = vmatpush2.msra.mxu0 0.0
  %83 = vmatprep.subr.mxu0 0.0
  %84 = vmatpush2.msra.mxu0 0.0
  %85 = vmatprep.subr.mxu0 0.0
  %86 = vmatpush2.msra.mxu0 0.0
  %87 = vmatprep.subr.mxu0 0.0
  %88 = vmatpush2.msra.mxu0 0.0
  %89 = vmatprep.subr.mxu0 0.0
  %90 = vmatpush2.msra.mxu0 0.0
  %91 = vmatprep.subr.mxu0 0.0
  %92 = vmatpush2.msra.mxu0 0.0
  %93 = vmatprep.subr.mxu0 0.0
  %94 = vmatpush2.msra.mxu0 0.0
  %95 = vmatprep.subr.mxu0 0.0
  %96 = vmatpush2.msra.mxu0 0.0
  %97 = vmatprep.subr.mxu0 0.0
  %98 = vmatpush2.msra.mxu0 0.0
  %99 = vmatprep.subr.mxu0 0.0
  %100 = vmatpush2.msra.mxu0 0.0
  %101 = vmatprep.mubr.f32.mxu0 0.0
  %102 = vmatmul.mubr.f32.gmra.mxu0 %v35
  %v103 = vpop.f32.mrf.mxu0
  %v104 = vadd.f32 %v31, %v103
  %v105 = vpop.f32.mrf.mxu0
  %106 = vdwg.mxu0
  %v107 = vld [vmem:[%s3] sm:$0xff]
  %v108 = vadd.f32 %v104, %v107
  %109 = vst.msk [vmem:[%s4] sm:$0xff] %vm33, %v108
  // Predicated region
  $region18: #{swin_forward.39} parent=0 // pred_check
    _
  $region19: #{swin_forward.39} parent=0 // pred_check_branch
    %111 = sbr.rel (0) target = $region21
  $region20: #{swin_forward.39} parent=0 // pred_region
    _
  $region21: #{swin_forward.39} parent=0 // pred_fallthru
    _
  // Predicated region
  $region22: #{swin_forward.39} parent=0 // pred_check
    _
  $region23: #{swin_forward.39} parent=0 // pred_check_branch
    %113 = sbr.rel (0) target = $region25
  $region24: #{swin_forward.39} parent=0 // pred_region
    _
  $region25: #{swin_forward.39} parent=0 // pred_fallthru
    _

// kernel: swin_forward.41
$region0: #{swin_forward.41}
  #allocation0 [shape = 'u32[]', space=smem, size = 0x4, offset = 0x4, fixed_abs, tag = 'smem constant byte address 0x4 - core index']
  #allocation1 [shape = 'u32[144,128]{1,0:T(1,128)}', space=vmem, size = 0x12000, scoped, tag = 'internal scratch']
  %s0 = inlined_call_operand.vmem [shape: f32[8,256], index: 0, kind: input, shape index: {}]
  %s1 = inlined_call_operand.vmem [shape: f32[256,64], index: 1, kind: input, shape index: {}]
  %s2 = inlined_call_operand.vmem [shape: f32[1,64], index: 2, kind: input, shape index: {}]
  %s3 = inlined_call_operand.vmem [shape: f32[8,64], index: 3, kind: input, shape index: {}]
  %s4 = inlined_call_operand.vmem [shape: f32[8,64], index: 4, kind: output, shape index: {}]
  %s5 = sld [smem:[#allocation0]]
  $region26: #{swin_forward.41} parent=0
    _
  %s7 = ssub.s32 1, %s5
  %s8 = scalar_select 0, %s7, %s5
  // Predicated region
  $region2: #{swin_forward.41} parent=0 // pred_check
    _
  $region3: #{swin_forward.41} parent=0 // pred_check_branch
    %10 = sbr.rel (0) target = $region5
  $region4: #{swin_forward.41} parent=0 // pred_region
    _
  $region5: #{swin_forward.41} parent=0 // pred_fallthru
    _
  // Predicated region
  $region6: #{swin_forward.41} parent=0 // pred_check
    _
  $region7: #{swin_forward.41} parent=0 // pred_check_branch
    %12 = sbr.rel (0) target = $region9
  $region8: #{swin_forward.41} parent=0 // pred_region
    _
  $region9: #{swin_forward.41} parent=0 // pred_fallthru
    _
  // Predicated region
  $region10: #{swin_forward.41} parent=0 // pred_check
    _
  $region11: #{swin_forward.41} parent=0 // pred_check_branch
    %14 = sbr.rel (0) target = $region13
  $region12: #{swin_forward.41} parent=0 // pred_region
    _
  $region13: #{swin_forward.41} parent=0 // pred_fallthru
    _
  // Predicated region
  $region14: #{swin_forward.41} parent=0 // pred_check
    _
  $region15: #{swin_forward.41} parent=0 // pred_check_branch
    %16 = sbr.rel (0) target = $region17
  $region16: #{swin_forward.41} parent=0 // pred_region
    _
  $region17: #{swin_forward.41} parent=0 // pred_fallthru
    _
  %v17 = vld [vmem:[%s0] sm:$0xff]
  %v18 = vld [vmem:[%s0 + $0x8] sm:$0xff]
  %v19 = vld [vmem:[%s1] sm:$0xff]
  %v20 = vld [vmem:[%s1 + $0x8] sm:$0xff]
  %v21 = vld [vmem:[%s1 + $0x10] sm:$0xff]
  %v22 = vld [vmem:[%s1 + $0x18] sm:$0xff]
  %v23 = vld [vmem:[%s1 + $0x20] sm:$0xff]
  %v24 = vld [vmem:[%s1 + $0x28] sm:$0xff]
  %v25 = vld [vmem:[%s1 + $0x30] sm:$0xff]
  %v26 = vld [vmem:[%s1 + $0x38] sm:$0xff]
  %v27 = vld [vmem:[%s1 + $0x40] sm:$0xff]
  %v28 = vld [vmem:[%s1 + $0x48] sm:$0xff]
  %v29 = vld [vmem:[%s1 + $0x50] sm:$0xff]
  %v30 = vld [vmem:[%s1 + $0x58] sm:$0xff]
  %v31 = vld [vmem:[%s1 + $0x60] sm:$0xff]
  %v32 = vld [vmem:[%s1 + $0x68] sm:$0xff]
  %v33 = vld [vmem:[%s1 + $0x70] sm:$0xff]
  %v34 = vld [vmem:[%s1 + $0x78] sm:$0xff]
  %v35 = vld [vmem:[%s1 + $0x80] sm:$0xff]
  %v36 = vld [vmem:[%s1 + $0x88] sm:$0xff]
  %v37 = vld [vmem:[%s1 + $0x90] sm:$0xff]
  %v38 = vld [vmem:[%s1 + $0x98] sm:$0xff]
  %v39 = vld [vmem:[%s1 + $0xa0] sm:$0xff]
  %v40 = vld [vmem:[%s1 + $0xa8] sm:$0xff]
  %v41 = vld [vmem:[%s1 + $0xb0] sm:$0xff]
  %v42 = vld [vmem:[%s1 + $0xb8] sm:$0xff]
  %v43 = vld [vmem:[%s1 + $0xc0] sm:$0xff]
  %v44 = vld [vmem:[%s1 + $0xc8] sm:$0xff]
  %v45 = vld [vmem:[%s1 + $0xd0] sm:$0xff]
  %v46 = vld [vmem:[%s1 + $0xd8] sm:$0xff]
  %v47 = vld [vmem:[%s1 + $0xe0] sm:$0xff]
  %v48 = vld [vmem:[%s1 + $0xe8] sm:$0xff]
  %v49 = vld [vmem:[%s1 + $0xf0] sm:$0xff]
  %v50 = vld [vmem:[%s1 + $0xf8] sm:$0xff]
  %v51 = vld [vmem:[%s2] sm:$0x1]
  %v53 = vlaneseq
  %v54 = vshrl.u32 %v53, 7
  %v55 = vsub.s32 0, %v54
  %v56 = vrot.slane %v51, %v55
  %58 = vmatprep.subr.mxu0 0.0
  %59 = vmatpush1.msra.mxu0 %v34
  %60 = vmatprep.subr.mxu0 0.0
  %61 = vmatpush1.msra.mxu0 %v33
  %62 = vmatprep.subr.mxu0 0.0
  %63 = vmatpush1.msra.mxu0 %v32
  %64 = vmatprep.subr.mxu0 0.0
  %65 = vmatpush1.msra.mxu0 %v31
  %66 = vmatprep.subr.mxu0 0.0
  %67 = vmatpush1.msra.mxu0 %v30
  %68 = vmatprep.subr.mxu0 0.0
  %69 = vmatpush1.msra.mxu0 %v29
  %70 = vmatprep.subr.mxu0 0.0
  %71 = vmatpush1.msra.mxu0 %v28
  %72 = vmatprep.subr.mxu0 0.0
  %73 = vmatpush1.msra.mxu0 %v27
  %74 = vmatprep.subr.mxu0 0.0
  %75 = vmatpush1.msra.mxu0 %v26
  %76 = vmatprep.subr.mxu0 0.0
  %77 = vmatpush1.msra.mxu0 %v25
  %78 = vmatprep.subr.mxu0 0.0
  %79 = vmatpush1.msra.mxu0 %v24
  %80 = vmatprep.subr.mxu0 0.0
  %81 = vmatpush1.msra.mxu0 %v23
  %82 = vmatprep.subr.mxu0 0.0
  %83 = vmatpush1.msra.mxu0 %v22
  %84 = vmatprep.subr.mxu0 0.0
  %85 = vmatpush1.msra.mxu0 %v21
  %86 = vmatprep.subr.mxu0 0.0
  %87 = vmatpush1.msra.mxu0 %v20
  %88 = vmatprep.subr.mxu0 0.0
  %89 = vmatpush1.msra.mxu0 %v19
  %90 = vmatprep.subr.mxu0 0.0
  %91 = vmatpush2.msra.mxu0 %v50
  %92 = vmatprep.subr.mxu0 0.0
  %93 = vmatpush2.msra.mxu0 %v49
  %94 = vmatprep.subr.mxu0 0.0
  %95 = vmatpush2.msra.mxu0 %v48
  %96 = vmatprep.subr.mxu0 0.0
  %97 = vmatpush2.msra.mxu0 %v47
  %98 = vmatprep.subr.mxu0 0.0
  %99 = vmatpush2.msra.mxu0 %v46
  %100 = vmatprep.subr.mxu0 0.0
  %101 = vmatpush2.msra.mxu0 %v45
  %102 = vmatprep.subr.mxu0 0.0
  %103 = vmatpush2.msra.mxu0 %v44
  %104 = vmatprep.subr.mxu0 0.0
  %105 = vmatpush2.msra.mxu0 %v43
  %106 = vmatprep.subr.mxu0 0.0
  %107 = vmatpush2.msra.mxu0 %v42
  %108 = vmatprep.subr.mxu0 0.0
  %109 = vmatpush2.msra.mxu0 %v41
  %110 = vmatprep.subr.mxu0 0.0
  %111 = vmatpush2.msra.mxu0 %v40
  %112 = vmatprep.subr.mxu0 0.0
  %113 = vmatpush2.msra.mxu0 %v39
  %114 = vmatprep.subr.mxu0 0.0
  %115 = vmatpush2.msra.mxu0 %v38
  %116 = vmatprep.subr.mxu0 0.0
  %117 = vmatpush2.msra.mxu0 %v37
  %118 = vmatprep.subr.mxu0 0.0
  %119 = vmatpush2.msra.mxu0 %v36
  %120 = vmatprep.subr.mxu0 0.0
  %121 = vmatpush2.msra.mxu0 %v35
  %122 = vmatprep.mubr.f32.mxu0 %v18
  %123 = vmatmul.mubr.f32.gmra.mxu0 %v17
  %v124 = vpop.f32.mrf.mxu0
  %v125 = vadd.f32 %v56, %v124
  %v126 = vpop.f32.mrf.mxu0
  %127 = vdwg.mxu0
  %v128 = vld [vmem:[%s3] sm:$0xff]
  %v129 = vadd.f32 %v125, %v128
  %vm130 = vcmask 523264
  %131 = vst.msk [vmem:[%s4] sm:$0xff] %vm130, %v129
  // Predicated region
  $region18: #{swin_forward.41} parent=0 // pred_check
    _
  $region19: #{swin_forward.41} parent=0 // pred_check_branch
    %133 = sbr.rel (0) target = $region21
  $region20: #{swin_forward.41} parent=0 // pred_region
    _
  $region21: #{swin_forward.41} parent=0 // pred_fallthru
    _
  // Predicated region
  $region22: #{swin_forward.41} parent=0 // pred_check
    _
  $region23: #{swin_forward.41} parent=0 // pred_check_branch
    %135 = sbr.rel (0) target = $region25
  $region24: #{swin_forward.41} parent=0 // pred_region
    _
  $region25: #{swin_forward.41} parent=0 // pred_fallthru
    _

// kernel: swin_forward.40
$region0: #{swin_forward.40}
  #allocation0 [shape = 'u32[]', space=smem, size = 0x4, offset = 0x4, fixed_abs, tag = 'smem constant byte address 0x4 - core index']
  #allocation1 [shape = 'u32[144,128]{1,0:T(1,128)}', space=vmem, size = 0x12000, scoped, tag = 'internal scratch']
  %s0 = inlined_call_operand.vmem [shape: f32[8,64], index: 0, kind: input, shape index: {}]
  %s1 = inlined_call_operand.vmem [shape: f32[64,256], index: 1, kind: input, shape index: {}]
  %s2 = inlined_call_operand.vmem [shape: f32[1,256], index: 2, kind: input, shape index: {}]
  %s3 = inlined_call_operand.vmem [shape: f32[1,64], index: 3, kind: input, shape index: {}]
  %s4 = inlined_call_operand.vmem [shape: f32[1,64], index: 4, kind: input, shape index: {}]
  %s5 = inlined_call_operand.vmem [shape: f32[8,256], index: 5, kind: output, shape index: {}]
  %s6 = sld [smem:[#allocation0]]
  $region30: #{swin_forward.40} parent=0
    _
  %s8 = ssub.s32 1, %s6
  %s9 = scalar_select 0, %s8, %s6
  // Predicated region
  $region2: #{swin_forward.40} parent=0 // pred_check
    _
  $region3: #{swin_forward.40} parent=0 // pred_check_branch
    %11 = sbr.rel (0) target = $region5
  $region4: #{swin_forward.40} parent=0 // pred_region
    _
  $region5: #{swin_forward.40} parent=0 // pred_fallthru
    _
  // Predicated region
  $region6: #{swin_forward.40} parent=0 // pred_check
    _
  $region7: #{swin_forward.40} parent=0 // pred_check_branch
    %13 = sbr.rel (0) target = $region9
  $region8: #{swin_forward.40} parent=0 // pred_region
    _
  $region9: #{swin_forward.40} parent=0 // pred_fallthru
    _
  // Predicated region
  $region10: #{swin_forward.40} parent=0 // pred_check
    _
  $region11: #{swin_forward.40} parent=0 // pred_check_branch
    %15 = sbr.rel (0) target = $region13
  $region12: #{swin_forward.40} parent=0 // pred_region
    _
  $region13: #{swin_forward.40} parent=0 // pred_fallthru
    _
  // Predicated region
  $region14: #{swin_forward.40} parent=0 // pred_check
    _
  $region15: #{swin_forward.40} parent=0 // pred_check_branch
    %17 = sbr.rel (0) target = $region17
  $region16: #{swin_forward.40} parent=0 // pred_region
    _
  $region17: #{swin_forward.40} parent=0 // pred_fallthru
    _
  // Predicated region
  $region18: #{swin_forward.40} parent=0 // pred_check
    _
  $region19: #{swin_forward.40} parent=0 // pred_check_branch
    %19 = sbr.rel (0) target = $region21
  $region20: #{swin_forward.40} parent=0 // pred_region
    _
  $region21: #{swin_forward.40} parent=0 // pred_fallthru
    _
  %v20 = vld [vmem:[%s0] sm:$0xff]
  %vm21 = vcmask 523264
  %v22 = vsel %vm21, %v20, 0.0
  %23 = vadd.xlane.f32.xlu0 %v22
  %v24 = vpop.xlane.xlu0 %23
  %v25 = vrcp.pop 64.0
  %v26 = vmul.f32 %v24, %v25
  %v27 = vsub.f32 %v20, %v26
  %v28 = vmul.f32 %v27, %v27
  %v29 = vsel %vm21, %v28, 0.0
  %30 = vadd.xlane.f32.xlu0 %v29
  %v31 = vpop.xlane.xlu0 %30
  %v32 = vmul.f32 %v31, %v25
  %v33 = vadd.f32 %v32, 1e-06
  %v34 = vrsqrt.pop %v33
  %v35 = vmul.f32 %v27, %v34
  %v36 = vld [vmem:[%s3] sm:$0x1]
  %v38 = vlaneseq
  %v39 = vshrl.u32 %v38, 7
  %v40 = vsub.s32 0, %v39
  %v41 = vrot.slane %v36, %v40
  %v43 = vmul.f32 %v35, %v41
  %v44 = vld [vmem:[%s4] sm:$0x1]
  %v46 = vlaneseq
  %v47 = vshrl.u32 %v46, 7
  %v48 = vsub.s32 0, %v47
  %v49 = vrot.slane %v44, %v48
  %v51 = vadd.f32 %v43, %v49
  %v52 = vld [vmem:[%s1] sm:$0xff]
  %v53 = vld [vmem:[%s1 + $0x8] sm:$0xff]
  %v54 = vld [vmem:[%s1 + $0x10] sm:$0xff]
  %v55 = vld [vmem:[%s1 + $0x18] sm:$0xff]
  %v56 = vld [vmem:[%s1 + $0x20] sm:$0xff]
  %v57 = vld [vmem:[%s1 + $0x28] sm:$0xff]
  %v58 = vld [vmem:[%s1 + $0x30] sm:$0xff]
  %v59 = vld [vmem:[%s1 + $0x38] sm:$0xff]
  %v60 = vld [vmem:[%s1 + $0x40] sm:$0xff]
  %v61 = vld [vmem:[%s1 + $0x48] sm:$0xff]
  %v62 = vld [vmem:[%s1 + $0x50] sm:$0xff]
  %v63 = vld [vmem:[%s1 + $0x58] sm:$0xff]
  %v64 = vld [vmem:[%s1 + $0x60] sm:$0xff]
  %v65 = vld [vmem:[%s1 + $0x68] sm:$0xff]
  %v66 = vld [vmem:[%s1 + $0x70] sm:$0xff]
  %v67 = vld [vmem:[%s1 + $0x78] sm:$0xff]
  %v68 = vld [vmem:[%s2] sm:$0x3]
  %v70 = vlaneseq
  %v71 = vshrl.u32 %v70, 7
  %v72 = vsub.s32 0, %v71
  %v73 = vrot.slane %v68, %v72
  %v74 = vlaneseq
  %v75 = vshrl.u32 %v74, 7
  %v76 = vsub.s32 1, %v75
  %v77 = vrot.slane %v68, %v76
  %v81 = vsel %vm21, %v51, 0
  %83 = vmatprep.subr.mxu0 0.0
  %84 = vmatpush1.msra.mxu0 0.0
  %85 = vmatprep.subr.mxu0 0.0
  %86 = vmatpush1.msra.mxu0 0.0
  %87 = vmatprep.subr.mxu0 0.0
  %88 = vmatpush1.msra.mxu0 0.0
  %89 = vmatprep.subr.mxu0 0.0
  %90 = vmatpush1.msra.mxu0 0.0
  %91 = vmatprep.subr.mxu0 0.0
  %92 = vmatpush1.msra.mxu0 0.0
  %93 = vmatprep.subr.mxu0 0.0
  %94 = vmatpush1.msra.mxu0 0.0
  %95 = vmatprep.subr.mxu0 0.0
  %96 = vmatpush1.msra.mxu0 0.0
  %97 = vmatprep.subr.mxu0 0.0
  %98 = vmatpush1.msra.mxu0 0.0
  %99 = vmatprep.subr.mxu0 %v67
  %100 = vmatpush1.msra.mxu0 %v66
  %101 = vmatprep.subr.mxu0 %v65
  %102 = vmatpush1.msra.mxu0 %v64
  %103 = vmatprep.subr.mxu0 %v63
  %104 = vmatpush1.msra.mxu0 %v62
  %105 = vmatprep.subr.mxu0 %v61
  %106 = vmatpush1.msra.mxu0 %v60
  %107 = vmatprep.subr.mxu0 %v59
  %108 = vmatpush1.msra.mxu0 %v58
  %109 = vmatprep.subr.mxu0 %v57
  %110 = vmatpush1.msra.mxu0 %v56
  %111 = vmatprep.subr.mxu0 %v55
  %112 = vmatpush1.msra.mxu0 %v54
  %113 = vmatprep.subr.mxu0 %v53
  %114 = vmatpush1.msra.mxu0 %v52
  %115 = vmatprep.subr.mxu0 0.0
  %116 = vmatpush2.msra.mxu0 0.0
  %117 = vmatprep.subr.mxu0 0.0
  %118 = vmatpush2.msra.mxu0 0.0
  %119 = vmatprep.subr.mxu0 0.0
  %120 = vmatpush2.msra.mxu0 0.0
  %121 = vmatprep.subr.mxu0 0.0
  %122 = vmatpush2.msra.mxu0 0.0
  %123 = vmatprep.subr.mxu0 0.0
  %124 = vmatpush2.msra.mxu0 0.0
  %125 = vmatprep.subr.mxu0 0.0
  %126 = vmatpush2.msra.mxu0 0.0
  %127 = vmatprep.subr.mxu0 0.0
  %128 = vmatpush2.msra.mxu0 0.0
  %129 = vmatprep.subr.mxu0 0.0
  %130 = vmatpush2.msra.mxu0 0.0
  %131 = vmatprep.subr.mxu0 0.0
  %132 = vmatpush2.msra.mxu0 0.0
  %133 = vmatprep.subr.mxu0 0.0
  %134 = vmatpush2.msra.mxu0 0.0
  %135 = vmatprep.subr.mxu0 0.0
  %136 = vmatpush2.msra.mxu0 0.0
  %137 = vmatprep.subr.mxu0 0.0
  %138 = vmatpush2.msra.mxu0 0.0
  %139 = vmatprep.subr.mxu0 0.0
  %140 = vmatpush2.msra.mxu0 0.0
  %141 = vmatprep.subr.mxu0 0.0
  %142 = vmatpush2.msra.mxu0 0.0
  %143 = vmatprep.subr.mxu0 0.0
  %144 = vmatpush2.msra.mxu0 0.0
  %145 = vmatprep.subr.mxu0 0.0
  %146 = vmatpush2.msra.mxu0 0.0
  %147 = vmatprep.mubr.f32.mxu0 0.0
  %148 = vmatmul.mubr.f32.gmra.mxu0 %v81
  %v149 = vpop.f32.mrf.mxu0
  %v150 = vadd.f32 %v73, %v149
  %v151 = vpop.f32.mrf.mxu0
  %v152 = vadd.f32 %v77, %v151
  %153 = vdwg.mxu0
  %v154 = vmul.f32 %v150, 0.5
  %v155 = vmul.f32 %v152, 0.5
  %v156 = vmul.f32 %v150, 0.70710677
  %v157 = vmul.f32 %v152, 0.70710677
  %vm158 = vcmp.ge.f32.partialorder %v156, 0.0
  %vm159 = vcmp.ge.f32.partialorder %v157, 0.0
  %v160 = vsel %vm158, 1.0, -1.0
  %v161 = vsel %vm159, 1.0, -1.0
  %v162 = vand.u32 2147483647, %v156
  %v163 = vand.u32 2147483647, %v157
  %v164 = vmul.f32 %v162, 0.3275911
  %v165 = vmul.f32 %v163, 0.3275911
  %v166 = vadd.f32 %v164, 1.0
  %v167 = vadd.f32 %v165, 1.0
  %v168 = vrcp.pop %v166
  %v169 = vmul.f32 1.0, %v168
  %v170 = vrcp.pop %v167
  %v171 = vmul.f32 1.0, %v170
  %v172 = vmul.f32 %v169, 1.0614054
  %v173 = vmul.f32 %v171, 1.0614054
  %v174 = vadd.f32 %v172, -1.4531521
  %v175 = vadd.f32 %v173, -1.4531521
  %v176 = vmul.f32 %v174, %v169
  %v177 = vmul.f32 %v175, %v171
  %v178 = vadd.f32 %v176, 1.4214138
  %v179 = vadd.f32 %v177, 1.4214138
  %v180 = vmul.f32 %v178, %v169
  %v181 = vmul.f32 %v179, %v171
  %v182 = vadd.f32 %v180, -0.28449672
  %v183 = vadd.f32 %v181, -0.28449672
  %v184 = vmul.f32 %v182, %v169
  %v185 = vmul.f32 %v183, %v171
  %v186 = vadd.f32 %v184, 0.2548296
  %v187 = vadd.f32 %v185, 0.2548296
  %v188 = vmul.f32 %v186, %v169
  %v189 = vmul.f32 %v187, %v171
  %v190 = vsub.f32 0.0, %v162
  %v191 = vsub.f32 0.0, %v163
  %v192 = vmul.f32 %v190, %v162
  %v193 = vmul.f32 %v191, %v163
  %v194 = vmul.f32 %v192, 1.442695
  %v195 = vpow.pop %v194
  %v196 = vmul.f32 %v193, 1.442695
  %v197 = vpow.pop %v196
  %v198 = vmul.f32 %v188, %v195
  %v199 = vmul.f32 %v189, %v197
  %v200 = vsub.f32 1.0, %v198
  %v201 = vsub.f32 1.0, %v199
  %v202 = vmul.f32 %v160, %v200
  %v203 = vmul.f32 %v161, %v201
  %v204 = vadd.f32 %v202, 1.0
  %v205 = vadd.f32 %v203, 1.0
  %v206 = vmul.f32 %v154, %v204
  %v207 = vmul.f32 %v155, %v205
  %208 = vst [vmem:[%s5] sm:$0xff] %v206
  %209 = vst [vmem:[%s5 + $0x8] sm:$0xff] %v207
  // Predicated region
  $region22: #{swin_forward.40} parent=0 // pred_check
    _
  $region23: #{swin_forward.40} parent=0 // pred_check_branch
    %211 = sbr.rel (0) target = $region25
  $region24: #{swin_forward.40} parent=0 // pred_region
    _
  $region25: #{swin_forward.40} parent=0 // pred_fallthru
    _
  // Predicated region
  $region26: #{swin_forward.40} parent=0 // pred_check
    _
  $region27: #{swin_forward.40} parent=0 // pred_check_branch
    %213 = sbr.rel (0) target = $region29
  $region28: #{swin_forward.40} parent=0 // pred_region
    _
  $region29: #{swin_forward.40} parent=0 // pred_fallthru
    _

// kernel: swin_forward.47
$region0: #{swin_forward.47}
  #allocation0 [shape = 'u32[]', space=smem, size = 0x4, offset = 0x4, fixed_abs, tag = 'smem constant byte address 0x4 - core index']
  #allocation1 [shape = 'u32[144,128]{1,0:T(1,128)}', space=vmem, size = 0x12000, scoped, tag = 'internal scratch']
  %s0 = inlined_call_operand.vmem [shape: f32[8,64], index: 0, kind: input, shape index: {}]
  %s1 = inlined_call_operand.vmem [shape: f32[1,64], index: 1, kind: input, shape index: {}]
  %s2 = inlined_call_operand.vmem [shape: f32[1,64], index: 2, kind: input, shape index: {}]
  %s3 = inlined_call_operand.hbm [shape: f32[8,64], index: 3, kind: output, shape index: {}]
  %s4 = sld [smem:[#allocation0]]
  $region22: #{swin_forward.47} parent=0
    _
  %s6 = ssub.s32 1, %s4
  %s7 = scalar_select 0, %s6, %s4
  $region1: #{swin_forward.47} parent=0
    #allocation2 [shape = 'u8[4096]{0}', space=vmem, size = 0x1000, scoped, tag = 'output window, operand 0, single buffered']
    #allocation3 [shape = 's32[1]{0}', space=sflag, size = 0x4, scoped, tag = 'scoped memory for swin_forward.47']
    %8 = vsyncpa [#allocation3], 0
    // Predicated region
    $region2: #{swin_forward.47} parent=1 // pred_check
      _
    $region3: #{swin_forward.47} parent=1 // pred_check_branch
      %10 = sbr.rel (0) target = $region5
    $region4: #{swin_forward.47} parent=1 // pred_region
      _
    $region5: #{swin_forward.47} parent=1 // pred_fallthru
      _
    // Predicated region
    $region6: #{swin_forward.47} parent=1 // pred_check
      _
    $region7: #{swin_forward.47} parent=1 // pred_check_branch
      %12 = sbr.rel (0) target = $region9
    $region8: #{swin_forward.47} parent=1 // pred_region
      _
    $region9: #{swin_forward.47} parent=1 // pred_fallthru
      _
    // Predicated region
    $region10: #{swin_forward.47} parent=1 // pred_check
      _
    $region11: #{swin_forward.47} parent=1 // pred_check_branch
      %14 = sbr.rel (0) target = $region13
    $region12: #{swin_forward.47} parent=1 // pred_region
      _
    $region13: #{swin_forward.47} parent=1 // pred_fallthru
      _
    %v15 = vld [vmem:[%s0] sm:$0xff]
    %vm16 = vcmask 523264
    %v17 = vsel %vm16, %v15, 0.0
    %18 = vadd.xlane.f32.xlu0 %v17
    %v19 = vpop.xlane.xlu0 %18
    %v20 = vrcp.pop 64.0
    %v21 = vmul.f32 %v19, %v20
    %v22 = vsub.f32 %v15, %v21
    %v23 = vmul.f32 %v22, %v22
    %v24 = vsel %vm16, %v23, 0.0
    %25 = vadd.xlane.f32.xlu0 %v24
    %v26 = vpop.xlane.xlu0 %25
    %v27 = vmul.f32 %v26, %v20
    %v28 = vadd.f32 %v27, 1e-06
    %v29 = vrsqrt.pop %v28
    %v30 = vmul.f32 %v22, %v29
    %v31 = vld [vmem:[%s1] sm:$0x1]
    %v33 = vlaneseq
    %v34 = vshrl.u32 %v33, 7
    %v35 = vsub.s32 0, %v34
    %v36 = vrot.slane %v31, %v35
    %v38 = vmul.f32 %v30, %v36
    %v39 = vld [vmem:[%s2] sm:$0x1]
    %v41 = vlaneseq
    %v42 = vshrl.u32 %v41, 7
    %v43 = vsub.s32 0, %v42
    %v44 = vrot.slane %v39, %v43
    %v46 = vadd.f32 %v38, %v44
    %47 = vst.msk [vmem:[#allocation2] sm:$0xff] %vm16, %v46
    // Predicated region
    $region14: #{swin_forward.47} parent=1 // pred_check
      _
    $region15: #{swin_forward.47} parent=1 // pred_check_branch
      %49 = sbr.rel (0) target = $region17
    $region16: #{swin_forward.47} parent=1 // pred_region
      %s51 = ssub.s32 128, 128
      %52 = vsyncadd [#allocation3], %s51
      %s54 = sshll.u32 [#allocation2], 4
      %s55 = int_to_ptr.vmem [resolvable:$true] %s54
      %57 = dma.vmem_to_hbm [thread:$0]  %s55, 128, %s3, [#allocation3]
    $region17: #{swin_forward.47} parent=1 // pred_fallthru
      _
    // Predicated region
    $region18: #{swin_forward.47} parent=1 // pred_check
      _
    $region19: #{swin_forward.47} parent=1 // pred_check_branch
      %59 = sbr.rel (0) target = $region21
    $region20: #{swin_forward.47} parent=1 // pred_region
      %60 = dma.done [#allocation3], 128
    $region21: #{swin_forward.47} parent=1 // pred_fallthru
      _
    %61 = vsyncpa [#allocation3], 1

// kernel: swin_forward.36
$region0: #{swin_forward.36}
  #allocation0 [shape = 'u32[]', space=smem, size = 0x4, offset = 0x4, fixed_abs, tag = 'smem constant byte address 0x4 - core index']
  #allocation1 [shape = 'u32[144,128]{1,0:T(1,128)}', space=vmem, size = 0x12000, scoped, tag = 'internal scratch']
  %s0 = inlined_call_operand.vmem [shape: f32[32,32], index: 0, kind: input, shape index: {}]
  %s1 = inlined_call_operand.vmem [shape: f32[1,32], index: 1, kind: input, shape index: {}]
  %s2 = inlined_call_operand.vmem [shape: f32[1,32], index: 2, kind: input, shape index: {}]
  %s3 = inlined_call_operand.hbm [shape: f32[32,32], index: 3, kind: output, shape index: {}]
  %s4 = sld [smem:[#allocation0]]
  $region22: #{swin_forward.36} parent=0
    _
  %s6 = ssub.s32 1, %s4
  %s7 = scalar_select 0, %s6, %s4
  $region1: #{swin_forward.36} parent=0
    #allocation2 [shape = 'u8[16384]{0}', space=vmem, size = 0x4000, scoped, tag = 'output window, operand 0, single buffered']
    #allocation3 [shape = 's32[1]{0}', space=sflag, size = 0x4, scoped, tag = 'scoped memory for swin_forward.36']
    %8 = vsyncpa [#allocation3], 0
    // Predicated region
    $region2: #{swin_forward.36} parent=1 // pred_check
      _
    $region3: #{swin_forward.36} parent=1 // pred_check_branch
      %10 = sbr.rel (0) target = $region5
    $region4: #{swin_forward.36} parent=1 // pred_region
      _
    $region5: #{swin_forward.36} parent=1 // pred_fallthru
      _
    // Predicated region
    $region6: #{swin_forward.36} parent=1 // pred_check
      _
    $region7: #{swin_forward.36} parent=1 // pred_check_branch
      %12 = sbr.rel (0) target = $region9
    $region8: #{swin_forward.36} parent=1 // pred_region
      _
    $region9: #{swin_forward.36} parent=1 // pred_fallthru
      _
    // Predicated region
    $region10: #{swin_forward.36} parent=1 // pred_check
      _
    $region11: #{swin_forward.36} parent=1 // pred_check_branch
      %14 = sbr.rel (0) target = $region13
    $region12: #{swin_forward.36} parent=1 // pred_region
      _
    $region13: #{swin_forward.36} parent=1 // pred_fallthru
      _
    %v15 = vld [vmem:[%s0] sm:$0xff]
    %v16 = vld [vmem:[%s0 + $0x8] sm:$0xff]
    %v17 = vld [vmem:[%s0 + $0x10] sm:$0xff]
    %v18 = vld [vmem:[%s0 + $0x18] sm:$0xff]
    %vm19 = vcmask 261120
    %v20 = vsel %vm19, %v15, 0.0
    %21 = vadd.xlane.f32.xlu0 %v20
    %v22 = vpop.xlane.xlu0 %21
    %v23 = vsel %vm19, %v16, 0.0
    %24 = vadd.xlane.f32.xlu0 %v23
    %v25 = vpop.xlane.xlu0 %24
    %v26 = vsel %vm19, %v17, 0.0
    %27 = vadd.xlane.f32.xlu0 %v26
    %v28 = vpop.xlane.xlu0 %27
    %v29 = vsel %vm19, %v18, 0.0
    %30 = vadd.xlane.f32.xlu0 %v29
    %v31 = vpop.xlane.xlu0 %30
    %v32 = vrcp.pop 32.0
    %v33 = vmul.f32 %v22, %v32
    %v34 = vmul.f32 %v25, %v32
    %v35 = vmul.f32 %v28, %v32
    %v36 = vmul.f32 %v31, %v32
    %v37 = vsub.f32 %v15, %v33
    %v38 = vsub.f32 %v16, %v34
    %v39 = vsub.f32 %v17, %v35
    %v40 = vsub.f32 %v18, %v36
    %v41 = vmul.f32 %v37, %v37
    %v42 = vmul.f32 %v38, %v38
    %v43 = vmul.f32 %v39, %v39
    %v44 = vmul.f32 %v40, %v40
    %v45 = vsel %vm19, %v41, 0.0
    %46 = vadd.xlane.f32.xlu0 %v45
    %v47 = vpop.xlane.xlu0 %46
    %v48 = vsel %vm19, %v42, 0.0
    %49 = vadd.xlane.f32.xlu0 %v48
    %v50 = vpop.xlane.xlu0 %49
    %v51 = vsel %vm19, %v43, 0.0
    %52 = vadd.xlane.f32.xlu0 %v51
    %v53 = vpop.xlane.xlu0 %52
    %v54 = vsel %vm19, %v44, 0.0
    %55 = vadd.xlane.f32.xlu0 %v54
    %v56 = vpop.xlane.xlu0 %55
    %v57 = vmul.f32 %v47, %v32
    %v58 = vmul.f32 %v50, %v32
    %v59 = vmul.f32 %v53, %v32
    %v60 = vmul.f32 %v56, %v32
    %v61 = vadd.f32 %v57, 1e-06
    %v62 = vadd.f32 %v58, 1e-06
    %v63 = vadd.f32 %v59, 1e-06
    %v64 = vadd.f32 %v60, 1e-06
    %v65 = vrsqrt.pop %v61
    %v66 = vrsqrt.pop %v62
    %v67 = vrsqrt.pop %v63
    %v68 = vrsqrt.pop %v64
    %v69 = vmul.f32 %v37, %v65
    %v70 = vmul.f32 %v38, %v66
    %v71 = vmul.f32 %v39, %v67
    %v72 = vmul.f32 %v40, %v68
    %v73 = vld [vmem:[%s1] sm:$0x1]
    %v75 = vlaneseq
    %v76 = vshrl.u32 %v75, 7
    %v77 = vsub.s32 0, %v76
    %v78 = vrot.slane %v73, %v77
    %v80 = vmul.f32 %v69, %v78
    %v81 = vmul.f32 %v70, %v78
    %v82 = vmul.f32 %v71, %v78
    %v83 = vmul.f32 %v72, %v78
    %v84 = vld [vmem:[%s2] sm:$0x1]
    %v86 = vlaneseq
    %v87 = vshrl.u32 %v86, 7
    %v88 = vsub.s32 0, %v87
    %v89 = vrot.slane %v84, %v88
    %v91 = vadd.f32 %v80, %v89
    %v92 = vadd.f32 %v81, %v89
    %v93 = vadd.f32 %v82, %v89
    %v94 = vadd.f32 %v83, %v89
    %95 = vst.msk [vmem:[#allocation2] sm:$0xff] %vm19, %v91
    %96 = vst.msk [vmem:[#allocation2 + $0x8] sm:$0xff] %vm19, %v92
    %97 = vst.msk [vmem:[#allocation2 + $0x10] sm:$0xff] %vm19, %v93
    %98 = vst.msk [vmem:[#allocation2 + $0x18] sm:$0xff] %vm19, %v94
    // Predicated region
    $region14: #{swin_forward.36} parent=1 // pred_check
      _
    $region15: #{swin_forward.36} parent=1 // pred_check_branch
      %100 = sbr.rel (0) target = $region17
    $region16: #{swin_forward.36} parent=1 // pred_region
      %s102 = ssub.s32 512, 512
      %103 = vsyncadd [#allocation3], %s102
      %s104 = sshll.u32 [#allocation2], 4
      %s105 = int_to_ptr.vmem [resolvable:$true] %s104
      %110 = dma.vmem_to_hbm [thread:$0]  %s105, 512, %s3, [#allocation3], 128, 128, 8
    $region17: #{swin_forward.36} parent=1 // pred_fallthru
      _
    // Predicated region
    $region18: #{swin_forward.36} parent=1 // pred_check
      _
    $region19: #{swin_forward.36} parent=1 // pred_check_branch
      %112 = sbr.rel (0) target = $region21
    $region20: #{swin_forward.36} parent=1 // pred_region
      %113 = dma.done [#allocation3], 512
    $region21: #{swin_forward.36} parent=1 // pred_fallthru
      _
    %114 = vsyncpa [#allocation3], 1

// kernel: swin_forward.43
$region0: #{swin_forward.43}
  #allocation0 [shape = 'u32[]', space=smem, size = 0x4, offset = 0x4, fixed_abs, tag = 'smem constant byte address 0x4 - core index']
  #allocation1 [shape = 'u32[144,128]{1,0:T(1,128)}', space=vmem, size = 0x12000, scoped, tag = 'internal scratch']
  %s0 = inlined_call_operand.vmem [shape: f32[2,4,192], index: 0, kind: input, shape index: {}]
  %s1 = inlined_call_operand.vmem [shape: f32[4,4,4], index: 1, kind: input, shape index: {}]
  %s2 = inlined_call_operand.vmem [shape: f32[1,4,4], index: 2, kind: input, shape index: {}]
  %s3 = inlined_call_operand.vmem [shape: f32[2,4,64], index: 3, kind: output, shape index: {}]
  %s4 = sld [smem:[#allocation0]]
  $region45: #{swin_forward.43} parent=0
    _
  %s6 = ssub.s32 1, %s4
  %s7 = scalar_select 0, %s6, %s4
  loop: start=0, step=1, limit=4
  $region2: #{swin_forward.43} parent=0 // loop_pre_header
    _
  $region3: #{swin_forward.43} parent=0 // loop_header
    %s9 = sphi 0, %s13
    %p10 = scmp.ge.s32.totalorder %s9, 4
    %s19 = sphi 0, %s21
    %s22 = sphi 0, %s19
    %s23 = sphi 0, %s22
    %s39 = sphi 0, %s23
    %s43 = sphi 0, %s43
    %s45 = sphi 0, %s43
    %s46 = sphi 0, %s45
    %s60 = sphi 0, %s46
    %s64 = sphi 0, %s64
    %s66 = sphi 0, %s64
    %s67 = sphi 0, %s66
    %s81 = sphi 0, %s67
    %s87 = sphi 0, %s89
    %s90 = sphi 0, %s87
    %s91 = sphi 0, %s90
    %s107 = sphi 0, %s91
  $region4: #{swin_forward.43} parent=0 // loop_header_branch
    %12 = sbr.rel (%p10) target = $region8
  $region5: #{swin_forward.43} parent=0 // loop_body
    %s14 = ssub.s32 %s9, 1
    %s15 = ssub.s32 %s9, 2
    %s16 = sadd.s32 %s9, 1
    %s17 = ssub.s32 %s9, %s16
    %p18 = scmp.eq.s32.totalorder %s17, 0
    %s20 = sadd.s32 %s19, 1
    %s21 = scalar_select %p18, %s19, %s20
    %p24 = pneg %p18
    %p25 = scmp.eq.s32.totalorder %s9, 1
    %p26 = por %p24, %p25
    %p27 = scmp.ne.s32.totalorder %s19, %s22
    %p28 = scmp.eq.s32.totalorder %s9, 0
    %p29 = por %p27, %p28
    %p30 = scmp.ne.s32.totalorder %s19, %s22
    %p31 = scmp.eq.s32.totalorder %s14, 1
    %p32 = por %p30, %p31
    %p33 = scmp.ne.s32.totalorder %s22, %s23
    %p34 = scmp.eq.s32.totalorder %s14, 0
    %p35 = por %p33, %p34
    %p36 = scmp.ne.s32.totalorder %s22, %s23
    %p37 = scmp.eq.s32.totalorder %s15, 1
    %p38 = por %p36, %p37
    %p40 = scmp.ne.s32.totalorder %s23, %s39
    %p41 = scmp.eq.s32.totalorder %s15, 0
    %p42 = por %p40, %p41
    %s44 = sadd.s32 %s43, 1
    %p47 = scmp.eq.s32.totalorder %s9, 1
    %p48 = scmp.ne.s32.totalorder %s43, %s45
    %p49 = scmp.eq.s32.totalorder %s9, 0
    %p50 = por %p48, %p49
    %p51 = scmp.ne.s32.totalorder %s43, %s45
    %p52 = scmp.eq.s32.totalorder %s14, 1
    %p53 = por %p51, %p52
    %p54 = scmp.ne.s32.totalorder %s45, %s46
    %p55 = scmp.eq.s32.totalorder %s14, 0
    %p56 = por %p54, %p55
    %p57 = scmp.ne.s32.totalorder %s45, %s46
    %p58 = scmp.eq.s32.totalorder %s15, 1
    %p59 = por %p57, %p58
    %p61 = scmp.ne.s32.totalorder %s46, %s60
    %p62 = scmp.eq.s32.totalorder %s15, 0
    %p63 = por %p61, %p62
    %s65 = sadd.s32 %s64, 1
    %p68 = scmp.eq.s32.totalorder %s9, 1
    %p69 = scmp.ne.s32.totalorder %s64, %s66
    %p70 = scmp.eq.s32.totalorder %s9, 0
    %p71 = por %p69, %p70
    %p72 = scmp.ne.s32.totalorder %s64, %s66
    %p73 = scmp.eq.s32.totalorder %s14, 1
    %p74 = por %p72, %p73
    %p75 = scmp.ne.s32.totalorder %s66, %s67
    %p76 = scmp.eq.s32.totalorder %s14, 0
    %p77 = por %p75, %p76
    %p78 = scmp.ne.s32.totalorder %s66, %s67
    %p79 = scmp.eq.s32.totalorder %s15, 1
    %p80 = por %p78, %p79
    %p82 = scmp.ne.s32.totalorder %s67, %s81
    %p83 = scmp.eq.s32.totalorder %s15, 0
    %p84 = por %p82, %p83
    %s85 = ssub.s32 %s9, %s16
    %p86 = scmp.eq.s32.totalorder %s85, 0
    %s88 = sadd.s32 %s87, 1
    %s89 = scalar_select %p86, %s87, %s88
    %p92 = pneg %p86
    %p93 = scmp.eq.s32.totalorder %s9, 1
    %p94 = por %p92, %p93
    %p95 = scmp.ne.s32.totalorder %s87, %s90
    %p96 = scmp.eq.s32.totalorder %s9, 0
    %p97 = por %p95, %p96
    %p98 = scmp.ne.s32.totalorder %s87, %s90
    %p99 = scmp.eq.s32.totalorder %s14, 1
    %p100 = por %p98, %p99
    %p101 = scmp.ne.s32.totalorder %s90, %s91
    %p102 = scmp.eq.s32.totalorder %s14, 0
    %p103 = por %p101, %p102
    %p104 = scmp.ne.s32.totalorder %s90, %s91
    %p105 = scmp.eq.s32.totalorder %s15, 1
    %p106 = por %p104, %p105
    %p108 = scmp.ne.s32.totalorder %s91, %s107
    %p109 = scmp.eq.s32.totalorder %s15, 0
    %p110 = por %p108, %p109
    %p111 = scmp.le.s32.totalorder 1, %s9
    %p112 = scmp.lt.s32.totalorder %s9, 3
    %p113 = pnand %p111, %p112
    %p114 = pneg %p113
    // Predicated region
    $region9: #{swin_forward.43} parent=5 // pred_check
      _
    $region10: #{swin_forward.43} parent=5 // pred_check_branch
      %116 = sbr.rel (%p113) target = $region12
    $region11: #{swin_forward.43} parent=5 // pred_region
      %s117 = ssub.s32 %s9, 1
      // Predicated region
      $region13: #{swin_forward.43} parent=11 // pred_check
        %p118 = pneg %p56
      $region14: #{swin_forward.43} parent=11 // pred_check_branch
        %120 = sbr.rel (%p118) target = $region16
      $region15: #{swin_forward.43} parent=11 // pred_region
        _
      $region16: #{swin_forward.43} parent=11 // pred_fallthru
        _
      // Predicated region
      $region17: #{swin_forward.43} parent=11 // pred_check
        %p121 = pneg %p77
      $region18: #{swin_forward.43} parent=11 // pred_check_branch
        %123 = sbr.rel (%p121) target = $region20
      $region19: #{swin_forward.43} parent=11 // pred_region
        _
      $region20: #{swin_forward.43} parent=11 // pred_fallthru
        _
    $region12: #{swin_forward.43} parent=5 // pred_fallthru
      _
    %p124 = scmp.lt.s32.totalorder %s9, 2
    // Predicated region
    $region21: #{swin_forward.43} parent=5 // pred_check
      %p125 = pneg %p124
    $region22: #{swin_forward.43} parent=5 // pred_check_branch
      %127 = sbr.rel (%p125) target = $region24
    $region23: #{swin_forward.43} parent=5 // pred_region
      // Predicated region
      $region25: #{swin_forward.43} parent=23 // pred_check
        %p128 = pneg %p29
      $region26: #{swin_forward.43} parent=23 // pred_check_branch
        %130 = sbr.rel (%p128) target = $region28
      $region27: #{swin_forward.43} parent=23 // pred_region
        %p131 = scmp.lt.s32.totalorder %s9, 1
        %s132 = scalar_select %p131, %s9, 1
        %s133 = smul.addr %s132, 2
        %s134 = smul.addr %s133, 4
        %s135 = scalar_lea.vmem %s0, %s134
      $region28: #{swin_forward.43} parent=23 // pred_fallthru
        _
    $region24: #{swin_forward.43} parent=5 // pred_fallthru
      _
    %p136 = scmp.le.s32.totalorder 1, %s9
    %p137 = scmp.lt.s32.totalorder %s9, 3
    %p138 = pnand %p136, %p137
    %p139 = pneg %p138
    // Predicated region
    $region29: #{swin_forward.43} parent=5 // pred_check
      _
    $region30: #{swin_forward.43} parent=5 // pred_check_branch
      %141 = sbr.rel (%p138) target = $region32
    $region31: #{swin_forward.43} parent=5 // pred_region
      %s142 = ssub.s32 %s9, 1
      %p143 = scmp.lt.s32.totalorder %s14, 1
      %s144 = scalar_select %p143, %s14, 1
      %s145 = smul.addr %s144, 2
      %s146 = smul.addr %s145, 4
      %s147 = scalar_lea.vmem %s0, %s146
      %p148 = pneg %p35
      %p149 = pneg %p32
      %p150 = pneg %p56
      %p151 = pneg %p53
      %p152 = pneg %p77
      %p153 = pneg %p74
      %p154 = pneg %p103
      %p155 = pneg %p100
      %p156 = scmp.lt.s32.totalorder %s14, 1
      %s157 = scalar_select %p156, %s14, 1
      %s158 = smul.addr %s157, 4
      %s159 = scalar_lea.vmem %s3, %s158
      %p160 = scmp.lt.s32.totalorder %s14, 1
      %s161 = scalar_select %p160, %s14, 1
      %s162 = smul.addr %s161, 2
      %s163 = smul.addr %s162, 4
      %s164 = scalar_lea.vmem %s0, %s163
      %p165 = scmp.lt.s32.totalorder %s14, 1
      %s166 = scalar_select %p165, %s14, 1
      %s167 = smul.addr %s166, 4
      %s168 = scalar_lea.vmem %s3, %s167
      %v169 = vld [vmem:[%s164] sm:$0xff]
      %v170 = vld [vmem:[%s1] sm:$0xf]
      %v171 = vld [vmem:[%s1 + $0x4] sm:$0xf]
      %v172 = vld [vmem:[%s1 + $0x8] sm:$0xf]
      %v173 = vld [vmem:[%s1 + $0xc] sm:$0xf]
      %v174 = vld [vmem:[%s2] sm:$0xf]
      %v175 = vmul.f32 %v169, 0.25
      %177 = vrot.lane.b32.xlu0 %v169, 64
      %v178 = vpop.permute.xlu0 %177
      %vm179 = vcmask 130048
      %v181 = vsel %vm179, %v175, 0
      %v183 = vsel %vm179, %v178, 0
      %185 = vmatprep.subr.mxu0 0.0
      %186 = vmatpush1.xpose.msra.mxu0 0.0
      %187 = vmatprep.subr.mxu0 0.0
      %188 = vmatpush1.xpose.msra.mxu0 0.0
      %189 = vmatprep.subr.mxu0 0.0
      %190 = vmatpush1.xpose.msra.mxu0 0.0
      %191 = vmatprep.subr.mxu0 0.0
      %192 = vmatpush1.xpose.msra.mxu0 0.0
      %193 = vmatprep.subr.mxu0 0.0
      %194 = vmatpush1.xpose.msra.mxu0 0.0
      %195 = vmatprep.subr.mxu0 0.0
      %196 = vmatpush1.xpose.msra.mxu0 0.0
      %197 = vmatprep.subr.mxu0 0.0
      %198 = vmatpush1.xpose.msra.mxu0 0.0
      %199 = vmatprep.subr.mxu0 0.0
      %200 = vmatpush1.xpose.msra.mxu0 0.0
      %201 = vmatprep.subr.mxu0 0.0
      %202 = vmatpush1.xpose.msra.mxu0 0.0
      %203 = vmatprep.subr.mxu0 0.0
      %204 = vmatpush1.xpose.msra.mxu0 0.0
      %205 = vmatprep.subr.mxu0 0.0
      %206 = vmatpush1.xpose.msra.mxu0 0.0
      %207 = vmatprep.subr.mxu0 0.0
      %208 = vmatpush1.xpose.msra.mxu0 0.0
      %209 = vmatprep.subr.mxu0 0.0
      %210 = vmatpush1.xpose.msra.mxu0 0.0
      %211 = vmatprep.subr.mxu0 0.0
      %212 = vmatpush1.xpose.msra.mxu0 0.0
      %213 = vmatprep.subr.mxu0 0.0
      %214 = vmatpush1.xpose.msra.mxu0 0.0
      %215 = vmatprep.subr.mxu0 0.0
      %216 = vmatpush1.xpose.msra.mxu0 %v183
      %217 = vmatprep.subr.mxu0 0.0
      %218 = vmatpush2.xpose.msra.mxu0 0.0
      %219 = vmatprep.subr.mxu0 0.0
      %220 = vmatpush2.xpose.msra.mxu0 0.0
      %221 = vmatprep.subr.mxu0 0.0
      %222 = vmatpush2.xpose.msra.mxu0 0.0
      %223 = vmatprep.subr.mxu0 0.0
      %224 = vmatpush2.xpose.msra.mxu0 0.0
      %225 = vmatprep.subr.mxu0 0.0
      %226 = vmatpush2.xpose.msra.mxu0 0.0
      %227 = vmatprep.subr.mxu0 0.0
      %228 = vmatpush2.xpose.msra.mxu0 0.0
      %229 = vmatprep.subr.mxu0 0.0
      %230 = vmatpush2.xpose.msra.mxu0 0.0
      %231 = vmatprep.subr.mxu0 0.0
      %232 = vmatpush2.xpose.msra.mxu0 0.0
      %233 = vmatprep.subr.mxu0 0.0
      %234 = vmatpush2.xpose.msra.mxu0 0.0
      %235 = vmatprep.subr.mxu0 0.0
      %236 = vmatpush2.xpose.msra.mxu0 0.0
      %237 = vmatprep.subr.mxu0 0.0
      %238 = vmatpush2.xpose.msra.mxu0 0.0
      %239 = vmatprep.subr.mxu0 0.0
      %240 = vmatpush2.xpose.msra.mxu0 0.0
      %241 = vmatprep.subr.mxu0 0.0
      %242 = vmatpush2.xpose.msra.mxu0 0.0
      %243 = vmatprep.subr.mxu0 0.0
      %244 = vmatpush2.xpose.msra.mxu0 0.0
      %245 = vmatprep.subr.mxu0 0.0
      %246 = vmatpush2.xpose.msra.mxu0 0.0
      %247 = vmatprep.subr.mxu0 0.0
      %248 = vmatpush2.xpose.msra.mxu0 0.0
      %249 = vmatprep.mubr.f32.mxu0 0.0
      %250 = vmatmul.mubr.f32.gmra.mxu0 %v181
      %v251 = vpop.f32.mrf.mxu0
      %v252 = vadd.f32 %v170, %v251
      %v253 = vpop.f32.mrf.mxu0
      %254 = vdwg.mxu0
      %v255 = vadd.f32 %v252, %v174
      %vm256 = vcmask 27648
      %v257 = vsel %vm256, %v255, -inf
      %258 = vmax.xlane.f32.xlu0 %v257
      %v259 = vpop.xlane.xlu0 %258
      %v260 = vsub.f32 %v255, %v259
      %v261 = vmul.f32 %v260, 1.442695
      %v262 = vpow.pop %v261
      %v263 = vsel %vm256, %v262, 0.0
      %264 = vadd.xlane.f32.xlu0 %v263
      %v265 = vpop.xlane.xlu0 %264
      %v266 = vrcp.pop %v265
      %v267 = vmul.f32 %v262, %v266
      %v268 = vrot.slane %v169, 4
      %vm269 = vcmask 31744
      %v271 = vsel %vm269, %v267, 0
      %vm273 = vcmask 1043456
      %v274 = vsel %vm273, %v268, 0
      %276 = vmatprep.subr.mxu0 0.0
      %277 = vmatpush1.msra.mxu0 0.0
      %278 = vmatprep.subr.mxu0 0.0
      %279 = vmatpush1.msra.mxu0 0.0
      %280 = vmatprep.subr.mxu0 0.0
      %281 = vmatpush1.msra.mxu0 0.0
      %282 = vmatprep.subr.mxu0 0.0
      %283 = vmatpush1.msra.mxu0 0.0
      %284 = vmatprep.subr.mxu0 0.0
      %285 = vmatpush1.msra.mxu0 0.0
      %286 = vmatprep.subr.mxu0 0.0
      %287 = vmatpush1.msra.mxu0 0.0
      %288 = vmatprep.subr.mxu0 0.0
      %289 = vmatpush1.msra.mxu0 0.0
      %290 = vmatprep.subr.mxu0 0.0
      %291 = vmatpush1.msra.mxu0 0.0
      %292 = vmatprep.subr.mxu0 0.0
      %293 = vmatpush1.msra.mxu0 0.0
      %294 = vmatprep.subr.mxu0 0.0
      %295 = vmatpush1.msra.mxu0 0.0
      %296 = vmatprep.subr.mxu0 0.0
      %297 = vmatpush1.msra.mxu0 0.0
      %298 = vmatprep.subr.mxu0 0.0
      %299 = vmatpush1.msra.mxu0 0.0
      %300 = vmatprep.subr.mxu0 0.0
      %301 = vmatpush1.msra.mxu0 0.0
      %302 = vmatprep.subr.mxu0 0.0
      %303 = vmatpush1.msra.mxu0 0.0
      %304 = vmatprep.subr.mxu0 0.0
      %305 = vmatpush1.msra.mxu0 0.0
      %306 = vmatprep.subr.mxu0 0.0
      %307 = vmatpush1.msra.mxu0 %v274
      %308 = vmatprep.subr.mxu0 0.0
      %309 = vmatpush2.msra.mxu0 0.0
      %310 = vmatprep.subr.mxu0 0.0
      %311 = vmatpush2.msra.mxu0 0.0
      %312 = vmatprep.subr.mxu0 0.0
      %313 = vmatpush2.msra.mxu0 0.0
      %314 = vmatprep.subr.mxu0 0.0
      %315 = vmatpush2.msra.mxu0 0.0
      %316 = vmatprep.subr.mxu0 0.0
      %317 = vmatpush2.msra.mxu0 0.0
      %318 = vmatprep.subr.mxu0 0.0
      %319 = vmatpush2.msra.mxu0 0.0
      %320 = vmatprep.subr.mxu0 0.0
      %321 = vmatpush2.msra.mxu0 0.0
      %322 = vmatprep.subr.mxu0 0.0
      %323 = vmatpush2.msra.mxu0 0.0
      %324 = vmatprep.subr.mxu0 0.0
      %325 = vmatpush2.msra.mxu0 0.0
      %326 = vmatprep.subr.mxu0 0.0
      %327 = vmatpush2.msra.mxu0 0.0
      %328 = vmatprep.subr.mxu0 0.0
      %329 = vmatpush2.msra.mxu0 0.0
      %330 = vmatprep.subr.mxu0 0.0
      %331 = vmatpush2.msra.mxu0 0.0
      %332 = vmatprep.subr.mxu0 0.0
      %333 = vmatpush2.msra.mxu0 0.0
      %334 = vmatprep.subr.mxu0 0.0
      %335 = vmatpush2.msra.mxu0 0.0
      %336 = vmatprep.subr.mxu0 0.0
      %337 = vmatpush2.msra.mxu0 0.0
      %338 = vmatprep.subr.mxu0 0.0
      %339 = vmatpush2.msra.mxu0 0.0
      %340 = vmatprep.mubr.f32.mxu0 0.0
      %341 = vmatmul.mubr.f32.gmra.mxu0 %v271
      %v342 = vpop.f32.mrf.mxu0
      %v343 = vadd.f32 0.0, %v342
      %v344 = vpop.f32.mrf.mxu0
      %345 = vdwg.mxu0
      %346 = vrot.lane.b32.xlu0 %v175, 112
      %v347 = vpop.permute.xlu0 %346
      %348 = vrot.lane.b32.xlu0 %v169, 48
      %v349 = vpop.permute.xlu0 %348
      %v350 = vsel %vm179, %v347, 0
      %v352 = vsel %vm179, %v349, 0
      %354 = vmatprep.subr.mxu0 0.0
      %355 = vmatpush1.xpose.msra.mxu0 0.0
      %356 = vmatprep.subr.mxu0 0.0
      %357 = vmatpush1.xpose.msra.mxu0 0.0
      %358 = vmatprep.subr.mxu0 0.0
      %359 = vmatpush1.xpose.msra.mxu0 0.0
      %360 = vmatprep.subr.mxu0 0.0
      %361 = vmatpush1.xpose.msra.mxu0 0.0
      %362 = vmatprep.subr.mxu0 0.0
      %363 = vmatpush1.xpose.msra.mxu0 0.0
      %364 = vmatprep.subr.mxu0 0.0
      %365 = vmatpush1.xpose.msra.mxu0 0.0
      %366 = vmatprep.subr.mxu0 0.0
      %367 = vmatpush1.xpose.msra.mxu0 0.0
      %368 = vmatprep.subr.mxu0 0.0
      %369 = vmatpush1.xpose.msra.mxu0 0.0
      %370 = vmatprep.subr.mxu0 0.0
      %371 = vmatpush1.xpose.msra.mxu0 0.0
      %372 = vmatprep.subr.mxu0 0.0
      %373 = vmatpush1.xpose.msra.mxu0 0.0
      %374 = vmatprep.subr.mxu0 0.0
      %375 = vmatpush1.xpose.msra.mxu0 0.0
      %376 = vmatprep.subr.mxu0 0.0
      %377 = vmatpush1.xpose.msra.mxu0 0.0
      %378 = vmatprep.subr.mxu0 0.0
      %379 = vmatpush1.xpose.msra.mxu0 0.0
      %380 = vmatprep.subr.mxu0 0.0
      %381 = vmatpush1.xpose.msra.mxu0 0.0
      %382 = vmatprep.subr.mxu0 0.0
      %383 = vmatpush1.xpose.msra.mxu0 0.0
      %384 = vmatprep.subr.mxu0 0.0
      %385 = vmatpush1.xpose.msra.mxu0 %v352
      %386 = vmatprep.subr.mxu0 0.0
      %387 = vmatpush2.xpose.msra.mxu0 0.0
      %388 = vmatprep.subr.mxu0 0.0
      %389 = vmatpush2.xpose.msra.mxu0 0.0
      %390 = vmatprep.subr.mxu0 0.0
      %391 = vmatpush2.xpose.msra.mxu0 0.0
      %392 = vmatprep.subr.mxu0 0.0
      %393 = vmatpush2.xpose.msra.mxu0 0.0
      %394 = vmatprep.subr.mxu0 0.0
      %395 = vmatpush2.xpose.msra.mxu0 0.0
      %396 = vmatprep.subr.mxu0 0.0
      %397 = vmatpush2.xpose.msra.mxu0 0.0
      %398 = vmatprep.subr.mxu0 0.0
      %399 = vmatpush2.xpose.msra.mxu0 0.0
      %400 = vmatprep.subr.mxu0 0.0
      %401 = vmatpush2.xpose.msra.mxu0 0.0
      %402 = vmatprep.subr.mxu0 0.0
      %403 = vmatpush2.xpose.msra.mxu0 0.0
      %404 = vmatprep.subr.mxu0 0.0
      %405 = vmatpush2.xpose.msra.mxu0 0.0
      %406 = vmatprep.subr.mxu0 0.0
      %407 = vmatpush2.xpose.msra.mxu0 0.0
      %408 = vmatprep.subr.mxu0 0.0
      %409 = vmatpush2.xpose.msra.mxu0 0.0
      %410 = vmatprep.subr.mxu0 0.0
      %411 = vmatpush2.xpose.msra.mxu0 0.0
      %412 = vmatprep.subr.mxu0 0.0
      %413 = vmatpush2.xpose.msra.mxu0 0.0
      %414 = vmatprep.subr.mxu0 0.0
      %415 = vmatpush2.xpose.msra.mxu0 0.0
      %416 = vmatprep.subr.mxu0 0.0
      %417 = vmatpush2.xpose.msra.mxu0 0.0
      %418 = vmatprep.mubr.f32.mxu0 0.0
      %419 = vmatmul.mubr.f32.gmra.mxu0 %v350
      %v420 = vpop.f32.mrf.mxu0
      %v421 = vadd.f32 %v171, %v420
      %v422 = vpop.f32.mrf.mxu0
      %423 = vdwg.mxu0
      %v424 = vadd.f32 %v421, %v174
      %v425 = vsel %vm256, %v424, -inf
      %426 = vmax.xlane.f32.xlu0 %v425
      %v427 = vpop.xlane.xlu0 %426
      %v428 = vsub.f32 %v424, %v427
      %v429 = vmul.f32 %v428, 1.442695
      %v430 = vpow.pop %v429
      %v431 = vsel %vm256, %v430, 0.0
      %432 = vadd.xlane.f32.xlu0 %v431
      %v433 = vpop.xlane.xlu0 %432
      %v434 = vrcp.pop %v433
      %v435 = vmul.f32 %v430, %v434
      %436 = vrot.lane.b32.xlu0 %v169, 112
      %v437 = vpop.permute.xlu0 %436
      %v438 = vrot.slane %v437, 4
      %v440 = vsel %vm269, %v435, 0
      %v442 = vsel %vm273, %v438, 0
      %444 = vmatprep.subr.mxu0 0.0
      %445 = vmatpush1.msra.mxu0 0.0
      %446 = vmatprep.subr.mxu0 0.0
      %447 = vmatpush1.msra.mxu0 0.0
      %448 = vmatprep.subr.mxu0 0.0
      %449 = vmatpush1.msra.mxu0 0.0
      %450 = vmatprep.subr.mxu0 0.0
      %451 = vmatpush1.msra.mxu0 0.0
      %452 = vmatprep.subr.mxu0 0.0
      %453 = vmatpush1.msra.mxu0 0.0
      %454 = vmatprep.subr.mxu0 0.0
      %455 = vmatpush1.msra.mxu0 0.0
      %456 = vmatprep.subr.mxu0 0.0
      %457 = vmatpush1.msra.mxu0 0.0
      %458 = vmatprep.subr.mxu0 0.0
      %459 = vmatpush1.msra.mxu0 0.0
      %460 = vmatprep.subr.mxu0 0.0
      %461 = vmatpush1.msra.mxu0 0.0
      %462 = vmatprep.subr.mxu0 0.0
      %463 = vmatpush1.msra.mxu0 0.0
      %464 = vmatprep.subr.mxu0 0.0
      %465 = vmatpush1.msra.mxu0 0.0
      %466 = vmatprep.subr.mxu0 0.0
      %467 = vmatpush1.msra.mxu0 0.0
      %468 = vmatprep.subr.mxu0 0.0
      %469 = vmatpush1.msra.mxu0 0.0
      %470 = vmatprep.subr.mxu0 0.0
      %471 = vmatpush1.msra.mxu0 0.0
      %472 = vmatprep.subr.mxu0 0.0
      %473 = vmatpush1.msra.mxu0 0.0
      %474 = vmatprep.subr.mxu0 0.0
      %475 = vmatpush1.msra.mxu0 %v442
      %476 = vmatprep.subr.mxu0 0.0
      %477 = vmatpush2.msra.mxu0 0.0
      %478 = vmatprep.subr.mxu0 0.0
      %479 = vmatpush2.msra.mxu0 0.0
      %480 = vmatprep.subr.mxu0 0.0
      %481 = vmatpush2.msra.mxu0 0.0
      %482 = vmatprep.subr.mxu0 0.0
      %483 = vmatpush2.msra.mxu0 0.0
      %484 = vmatprep.subr.mxu0 0.0
      %485 = vmatpush2.msra.mxu0 0.0
      %486 = vmatprep.subr.mxu0 0.0
      %487 = vmatpush2.msra.mxu0 0.0
      %488 = vmatprep.subr.mxu0 0.0
      %489 = vmatpush2.msra.mxu0 0.0
      %490 = vmatprep.subr.mxu0 0.0
      %491 = vmatpush2.msra.mxu0 0.0
      %492 = vmatprep.subr.mxu0 0.0
      %493 = vmatpush2.msra.mxu0 0.0
      %494 = vmatprep.subr.mxu0 0.0
      %495 = vmatpush2.msra.mxu0 0.0
      %496 = vmatprep.subr.mxu0 0.0
      %497 = vmatpush2.msra.mxu0 0.0
      %498 = vmatprep.subr.mxu0 0.0
      %499 = vmatpush2.msra.mxu0 0.0
      %500 = vmatprep.subr.mxu0 0.0
      %501 = vmatpush2.msra.mxu0 0.0
      %502 = vmatprep.subr.mxu0 0.0
      %503 = vmatpush2.msra.mxu0 0.0
      %504 = vmatprep.subr.mxu0 0.0
      %505 = vmatpush2.msra.mxu0 0.0
      %506 = vmatprep.subr.mxu0 0.0
      %507 = vmatpush2.msra.mxu0 0.0
      %508 = vmatprep.mubr.f32.mxu0 0.0
      %509 = vmatmul.mubr.f32.gmra.mxu0 %v440
      %v510 = vpop.f32.mrf.mxu0
      %v511 = vadd.f32 0.0, %v510
      %v512 = vpop.f32.mrf.mxu0
      %513 = vdwg.mxu0
      %514 = vrot.lane.b32.xlu0 %v175, 96
      %v515 = vpop.permute.xlu0 %514
      %516 = vrot.lane.b32.xlu0 %v169, 32
      %v517 = vpop.permute.xlu0 %516
      %v518 = vsel %vm179, %v515, 0
      %v520 = vsel %vm179, %v517, 0
      %522 = vmatprep.subr.mxu0 0.0
      %523 = vmatpush1.xpose.msra.mxu0 0.0
      %524 = vmatprep.subr.mxu0 0.0
      %525 = vmatpush1.xpose.msra.mxu0 0.0
      %526 = vmatprep.subr.mxu0 0.0
      %527 = vmatpush1.xpose.msra.mxu0 0.0
      %528 = vmatprep.subr.mxu0 0.0
      %529 = vmatpush1.xpose.msra.mxu0 0.0
      %530 = vmatprep.subr.mxu0 0.0
      %531 = vmatpush1.xpose.msra.mxu0 0.0
      %532 = vmatprep.subr.mxu0 0.0
      %533 = vmatpush1.xpose.msra.mxu0 0.0
      %534 = vmatprep.subr.mxu0 0.0
      %535 = vmatpush1.xpose.msra.mxu0 0.0
      %536 = vmatprep.subr.mxu0 0.0
      %537 = vmatpush1.xpose.msra.mxu0 0.0
      %538 = vmatprep.subr.mxu0 0.0
      %539 = vmatpush1.xpose.msra.mxu0 0.0
      %540 = vmatprep.subr.mxu0 0.0
      %541 = vmatpush1.xpose.msra.mxu0 0.0
      %542 = vmatprep.subr.mxu0 0.0
      %543 = vmatpush1.xpose.msra.mxu0 0.0
      %544 = vmatprep.subr.mxu0 0.0
      %545 = vmatpush1.xpose.msra.mxu0 0.0
      %546 = vmatprep.subr.mxu0 0.0
      %547 = vmatpush1.xpose.msra.mxu0 0.0
      %548 = vmatprep.subr.mxu0 0.0
      %549 = vmatpush1.xpose.msra.mxu0 0.0
      %550 = vmatprep.subr.mxu0 0.0
      %551 = vmatpush1.xpose.msra.mxu0 0.0
      %552 = vmatprep.subr.mxu0 0.0
      %553 = vmatpush1.xpose.msra.mxu0 %v520
      %554 = vmatprep.subr.mxu0 0.0
      %555 = vmatpush2.xpose.msra.mxu0 0.0
      %556 = vmatprep.subr.mxu0 0.0
      %557 = vmatpush2.xpose.msra.mxu0 0.0
      %558 = vmatprep.subr.mxu0 0.0
      %559 = vmatpush2.xpose.msra.mxu0 0.0
      %560 = vmatprep.subr.mxu0 0.0
      %561 = vmatpush2.xpose.msra.mxu0 0.0
      %562 = vmatprep.subr.mxu0 0.0
      %563 = vmatpush2.xpose.msra.mxu0 0.0
      %564 = vmatprep.subr.mxu0 0.0
      %565 = vmatpush2.xpose.msra.mxu0 0.0
      %566 = vmatprep.subr.mxu0 0.0
      %567 = vmatpush2.xpose.msra.mxu0 0.0
      %568 = vmatprep.subr.mxu0 0.0
      %569 = vmatpush2.xpose.msra.mxu0 0.0
      %570 = vmatprep.subr.mxu0 0.0
      %571 = vmatpush2.xpose.msra.mxu0 0.0
      %572 = vmatprep.subr.mxu0 0.0
      %573 = vmatpush2.xpose.msra.mxu0 0.0
      %574 = vmatprep.subr.mxu0 0.0
      %575 = vmatpush2.xpose.msra.mxu0 0.0
      %576 = vmatprep.subr.mxu0 0.0
      %577 = vmatpush2.xpose.msra.mxu0 0.0
      %578 = vmatprep.subr.mxu0 0.0
      %579 = vmatpush2.xpose.msra.mxu0 0.0
      %580 = vmatprep.subr.mxu0 0.0
      %581 = vmatpush2.xpose.msra.mxu0 0.0
      %582 = vmatprep.subr.mxu0 0.0
      %583 = vmatpush2.xpose.msra.mxu0 0.0
      %584 = vmatprep.subr.mxu0 0.0
      %585 = vmatpush2.xpose.msra.mxu0 0.0
      %586 = vmatprep.mubr.f32.mxu0 0.0
      %587 = vmatmul.mubr.f32.gmra.mxu0 %v518
      %v588 = vpop.f32.mrf.mxu0
      %v589 = vadd.f32 %v172, %v588
      %v590 = vpop.f32.mrf.mxu0
      %591 = vdwg.mxu0
      %v592 = vadd.f32 %v589, %v174
      %v593 = vsel %vm256, %v592, -inf
      %594 = vmax.xlane.f32.xlu0 %v593
      %v595 = vpop.xlane.xlu0 %594
      %v596 = vsub.f32 %v592, %v595
      %v597 = vmul.f32 %v596, 1.442695
      %v598 = vpow.pop %v597
      %v599 = vsel %vm256, %v598, 0.0
      %600 = vadd.xlane.f32.xlu0 %v599
      %v601 = vpop.xlane.xlu0 %600
      %v602 = vrcp.pop %v601
      %v603 = vmul.f32 %v598, %v602
      %604 = vrot.lane.b32.xlu0 %v169, 96
      %v605 = vpop.permute.xlu0 %604
      %v606 = vrot.slane %v605, 4
      %v608 = vsel %vm269, %v603, 0
      %v610 = vsel %vm273, %v606, 0
      %612 = vmatprep.subr.mxu0 0.0
      %613 = vmatpush1.msra.mxu0 0.0
      %614 = vmatprep.subr.mxu0 0.0
      %615 = vmatpush1.msra.mxu0 0.0
      %616 = vmatprep.subr.mxu0 0.0
      %617 = vmatpush1.msra.mxu0 0.0
      %618 = vmatprep.subr.mxu0 0.0
      %619 = vmatpush1.msra.mxu0 0.0
      %620 = vmatprep.subr.mxu0 0.0
      %621 = vmatpush1.msra.mxu0 0.0
      %622 = vmatprep.subr.mxu0 0.0
      %623 = vmatpush1.msra.mxu0 0.0
      %624 = vmatprep.subr.mxu0 0.0
      %625 = vmatpush1.msra.mxu0 0.0
      %626 = vmatprep.subr.mxu0 0.0
      %627 = vmatpush1.msra.mxu0 0.0
      %628 = vmatprep.subr.mxu0 0.0
      %629 = vmatpush1.msra.mxu0 0.0
      %630 = vmatprep.subr.mxu0 0.0
      %631 = vmatpush1.msra.mxu0 0.0
      %632 = vmatprep.subr.mxu0 0.0
      %633 = vmatpush1.msra.mxu0 0.0
      %634 = vmatprep.subr.mxu0 0.0
      %635 = vmatpush1.msra.mxu0 0.0
      %636 = vmatprep.subr.mxu0 0.0
      %637 = vmatpush1.msra.mxu0 0.0
      %638 = vmatprep.subr.mxu0 0.0
      %639 = vmatpush1.msra.mxu0 0.0
      %640 = vmatprep.subr.mxu0 0.0
      %641 = vmatpush1.msra.mxu0 0.0
      %642 = vmatprep.subr.mxu0 0.0
      %643 = vmatpush1.msra.mxu0 %v610
      %644 = vmatprep.subr.mxu0 0.0
      %645 = vmatpush2.msra.mxu0 0.0
      %646 = vmatprep.subr.mxu0 0.0
      %647 = vmatpush2.msra.mxu0 0.0
      %648 = vmatprep.subr.mxu0 0.0
      %649 = vmatpush2.msra.mxu0 0.0
      %650 = vmatprep.subr.mxu0 0.0
      %651 = vmatpush2.msra.mxu0 0.0
      %652 = vmatprep.subr.mxu0 0.0
      %653 = vmatpush2.msra.mxu0 0.0
      %654 = vmatprep.subr.mxu0 0.0
      %655 = vmatpush2.msra.mxu0 0.0
      %656 = vmatprep.subr.mxu0 0.0
      %657 = vmatpush2.msra.mxu0 0.0
      %658 = vmatprep.subr.mxu0 0.0
      %659 = vmatpush2.msra.mxu0 0.0
      %660 = vmatprep.subr.mxu0 0.0
      %661 = vmatpush2.msra.mxu0 0.0
      %662 = vmatprep.subr.mxu0 0.0
      %663 = vmatpush2.msra.mxu0 0.0
      %664 = vmatprep.subr.mxu0 0.0
      %665 = vmatpush2.msra.mxu0 0.0
      %666 = vmatprep.subr.mxu0 0.0
      %667 = vmatpush2.msra.mxu0 0.0
      %668 = vmatprep.subr.mxu0 0.0
      %669 = vmatpush2.msra.mxu0 0.0
      %670 = vmatprep.subr.mxu0 0.0
      %671 = vmatpush2.msra.mxu0 0.0
      %672 = vmatprep.subr.mxu0 0.0
      %673 = vmatpush2.msra.mxu0 0.0
      %674 = vmatprep.subr.mxu0 0.0
      %675 = vmatpush2.msra.mxu0 0.0
      %676 = vmatprep.mubr.f32.mxu0 0.0
      %677 = vmatmul.mubr.f32.gmra.mxu0 %v608
      %v678 = vpop.f32.mrf.mxu0
      %v679 = vadd.f32 0.0, %v678
      %v680 = vpop.f32.mrf.mxu0
      %681 = vdwg.mxu0
      %682 = vrot.lane.b32.xlu0 %v175, 80
      %v683 = vpop.permute.xlu0 %682
      %684 = vrot.lane.b32.xlu0 %v169, 16
      %v685 = vpop.permute.xlu0 %684
      %v686 = vsel %vm179, %v683, 0
      %v688 = vsel %vm179, %v685, 0
      %690 = vmatprep.subr.mxu0 0.0
      %691 = vmatpush1.xpose.msra.mxu0 0.0
      %692 = vmatprep.subr.mxu0 0.0
      %693 = vmatpush1.xpose.msra.mxu0 0.0
      %694 = vmatprep.subr.mxu0 0.0
      %695 = vmatpush1.xpose.msra.mxu0 0.0
      %696 = vmatprep.subr.mxu0 0.0
      %697 = vmatpush1.xpose.msra.mxu0 0.0
      %698 = vmatprep.subr.mxu0 0.0
      %699 = vmatpush1.xpose.msra.mxu0 0.0
      %700 = vmatprep.subr.mxu0 0.0
      %701 = vmatpush1.xpose.msra.mxu0 0.0
      %702 = vmatprep.subr.mxu0 0.0
      %703 = vmatpush1.xpose.msra.mxu0 0.0
      %704 = vmatprep.subr.mxu0 0.0
      %705 = vmatpush1.xpose.msra.mxu0 0.0
      %706 = vmatprep.subr.mxu0 0.0
      %707 = vmatpush1.xpose.msra.mxu0 0.0
      %708 = vmatprep.subr.mxu0 0.0
      %709 = vmatpush1.xpose.msra.mxu0 0.0
      %710 = vmatprep.subr.mxu0 0.0
      %711 = vmatpush1.xpose.msra.mxu0 0.0
      %712 = vmatprep.subr.mxu0 0.0
      %713 = vmatpush1.xpose.msra.mxu0 0.0
      %714 = vmatprep.subr.mxu0 0.0
      %715 = vmatpush1.xpose.msra.mxu0 0.0
      %716 = vmatprep.subr.mxu0 0.0
      %717 = vmatpush1.xpose.msra.mxu0 0.0
      %718 = vmatprep.subr.mxu0 0.0
      %719 = vmatpush1.xpose.msra.mxu0 0.0
      %720 = vmatprep.subr.mxu0 0.0
      %721 = vmatpush1.xpose.msra.mxu0 %v688
      %722 = vmatprep.subr.mxu0 0.0
      %723 = vmatpush2.xpose.msra.mxu0 0.0
      %724 = vmatprep.subr.mxu0 0.0
      %725 = vmatpush2.xpose.msra.mxu0 0.0
      %726 = vmatprep.subr.mxu0 0.0
      %727 = vmatpush2.xpose.msra.mxu0 0.0
      %728 = vmatprep.subr.mxu0 0.0
      %729 = vmatpush2.xpose.msra.mxu0 0.0
      %730 = vmatprep.subr.mxu0 0.0
      %731 = vmatpush2.xpose.msra.mxu0 0.0
      %732 = vmatprep.subr.mxu0 0.0
      %733 = vmatpush2.xpose.msra.mxu0 0.0
      %734 = vmatprep.subr.mxu0 0.0
      %735 = vmatpush2.xpose.msra.mxu0 0.0
      %736 = vmatprep.subr.mxu0 0.0
      %737 = vmatpush2.xpose.msra.mxu0 0.0
      %738 = vmatprep.subr.mxu0 0.0
      %739 = vmatpush2.xpose.msra.mxu0 0.0
      %740 = vmatprep.subr.mxu0 0.0
      %741 = vmatpush2.xpose.msra.mxu0 0.0
      %742 = vmatprep.subr.mxu0 0.0
      %743 = vmatpush2.xpose.msra.mxu0 0.0
      %744 = vmatprep.subr.mxu0 0.0
      %745 = vmatpush2.xpose.msra.mxu0 0.0
      %746 = vmatprep.subr.mxu0 0.0
      %747 = vmatpush2.xpose.msra.mxu0 0.0
      %748 = vmatprep.subr.mxu0 0.0
      %749 = vmatpush2.xpose.msra.mxu0 0.0
      %750 = vmatprep.subr.mxu0 0.0
      %751 = vmatpush2.xpose.msra.mxu0 0.0
      %752 = vmatprep.subr.mxu0 0.0
      %753 = vmatpush2.xpose.msra.mxu0 0.0
      %754 = vmatprep.mubr.f32.mxu0 0.0
      %755 = vmatmul.mubr.f32.gmra.mxu0 %v686
      %v756 = vpop.f32.mrf.mxu0
      %v757 = vadd.f32 %v173, %v756
      %v758 = vpop.f32.mrf.mxu0
      %759 = vdwg.mxu0
      %v760 = vadd.f32 %v757, %v174
      %v761 = vsel %vm256, %v760, -inf
      %762 = vmax.xlane.f32.xlu0 %v761
      %v763 = vpop.xlane.xlu0 %762
      %v764 = vsub.f32 %v760, %v763
      %v765 = vmul.f32 %v764, 1.442695
      %v766 = vpow.pop %v765
      %v767 = vsel %vm256, %v766, 0.0
      %768 = vadd.xlane.f32.xlu0 %v767
      %v769 = vpop.xlane.xlu0 %768
      %v770 = vrcp.pop %v769
      %v771 = vmul.f32 %v766, %v770
      %772 = vrot.lane.b32.xlu0 %v169, 80
      %v773 = vpop.permute.xlu0 %772
      %v774 = vrot.slane %v773, 4
      %v776 = vsel %vm269, %v771, 0
      %v778 = vsel %vm273, %v774, 0
      %780 = vmatprep.subr.mxu0 0.0
      %781 = vmatpush1.msra.mxu0 0.0
      %782 = vmatprep.subr.mxu0 0.0
      %783 = vmatpush1.msra.mxu0 0.0
      %784 = vmatprep.subr.mxu0 0.0
      %785 = vmatpush1.msra.mxu0 0.0
      %786 = vmatprep.subr.mxu0 0.0
      %787 = vmatpush1.msra.mxu0 0.0
      %788 = vmatprep.subr.mxu0 0.0
      %789 = vmatpush1.msra.mxu0 0.0
      %790 = vmatprep.subr.mxu0 0.0
      %791 = vmatpush1.msra.mxu0 0.0
      %792 = vmatprep.subr.mxu0 0.0
      %793 = vmatpush1.msra.mxu0 0.0
      %794 = vmatprep.subr.mxu0 0.0
      %795 = vmatpush1.msra.mxu0 0.0
      %796 = vmatprep.subr.mxu0 0.0
      %797 = vmatpush1.msra.mxu0 0.0
      %798 = vmatprep.subr.mxu0 0.0
      %799 = vmatpush1.msra.mxu0 0.0
      %800 = vmatprep.subr.mxu0 0.0
      %801 = vmatpush1.msra.mxu0 0.0
      %802 = vmatprep.subr.mxu0 0.0
      %803 = vmatpush1.msra.mxu0 0.0
      %804 = vmatprep.subr.mxu0 0.0
      %805 = vmatpush1.msra.mxu0 0.0
      %806 = vmatprep.subr.mxu0 0.0
      %807 = vmatpush1.msra.mxu0 0.0
      %808 = vmatprep.subr.mxu0 0.0
      %809 = vmatpush1.msra.mxu0 0.0
      %810 = vmatprep.subr.mxu0 0.0
      %811 = vmatpush1.msra.mxu0 %v778
      %812 = vmatprep.subr.mxu0 0.0
      %813 = vmatpush2.msra.mxu0 0.0
      %814 = vmatprep.subr.mxu0 0.0
      %815 = vmatpush2.msra.mxu0 0.0
      %816 = vmatprep.subr.mxu0 0.0
      %817 = vmatpush2.msra.mxu0 0.0
      %818 = vmatprep.subr.mxu0 0.0
      %819 = vmatpush2.msra.mxu0 0.0
      %820 = vmatprep.subr.mxu0 0.0
      %821 = vmatpush2.msra.mxu0 0.0
      %822 = vmatprep.subr.mxu0 0.0
      %823 = vmatpush2.msra.mxu0 0.0
      %824 = vmatprep.subr.mxu0 0.0
      %825 = vmatpush2.msra.mxu0 0.0
      %826 = vmatprep.subr.mxu0 0.0
      %827 = vmatpush2.msra.mxu0 0.0
      %828 = vmatprep.subr.mxu0 0.0
      %829 = vmatpush2.msra.mxu0 0.0
      %830 = vmatprep.subr.mxu0 0.0
      %831 = vmatpush2.msra.mxu0 0.0
      %832 = vmatprep.subr.mxu0 0.0
      %833 = vmatpush2.msra.mxu0 0.0
      %834 = vmatprep.subr.mxu0 0.0
      %835 = vmatpush2.msra.mxu0 0.0
      %836 = vmatprep.subr.mxu0 0.0
      %837 = vmatpush2.msra.mxu0 0.0
      %838 = vmatprep.subr.mxu0 0.0
      %839 = vmatpush2.msra.mxu0 0.0
      %840 = vmatprep.subr.mxu0 0.0
      %841 = vmatpush2.msra.mxu0 0.0
      %842 = vmatprep.subr.mxu0 0.0
      %843 = vmatpush2.msra.mxu0 0.0
      %844 = vmatprep.mubr.f32.mxu0 0.0
      %845 = vmatmul.mubr.f32.gmra.mxu0 %v776
      %v846 = vpop.f32.mrf.mxu0
      %v847 = vadd.f32 0.0, %v846
      %v848 = vpop.f32.mrf.mxu0
      %849 = vdwg.mxu0
      %851 = vrot.lane.b32.xlu0 %v511, 16
      %v852 = vpop.permute.xlu0 %851
      %855 = vrot.lane.b32.xlu0 %v679, 32
      %v856 = vpop.permute.xlu0 %855
      %859 = vrot.lane.b32.xlu0 %v847, 48
      %v860 = vpop.permute.xlu0 %859
      %v862 = vsel %vm179, %v343, %v852
      %vm863 = vcmask 261120
      %v864 = vsel %vm863, %v862, %v856
      %vm865 = vcmask 392192
      %v866 = vsel %vm865, %v864, %v860
      %vm867 = vcmask 519168
      %868 = vst.msk [vmem:[%s168] sm:$0xf] %vm867, %v866
      %p869 = scmp.lt.s32.totalorder %s14, 1
      %s870 = scalar_select %p869, %s14, 1
      %s871 = smul.addr %s870, 4
      %s872 = scalar_lea.vmem %s3, %s871
      // Predicated region
      $region33: #{swin_forward.43} parent=31 // pred_check
        %p873 = pneg %p100
      $region34: #{swin_forward.43} parent=31 // pred_check_branch
        %875 = sbr.rel (%p873) target = $region36
      $region35: #{swin_forward.43} parent=31 // pred_region
        _
      $region36: #{swin_forward.43} parent=31 // pred_fallthru
        _
    $region32: #{swin_forward.43} parent=5 // pred_fallthru
      _
    %p876 = scmp.le.s32.totalorder 2, %s9
    // Predicated region
    $region37: #{swin_forward.43} parent=5 // pred_check
      %p877 = pneg %p876
    $region38: #{swin_forward.43} parent=5 // pred_check_branch
      %879 = sbr.rel (%p877) target = $region40
    $region39: #{swin_forward.43} parent=5 // pred_region
      %s880 = ssub.s32 %s9, 2
      // Predicated region
      $region41: #{swin_forward.43} parent=39 // pred_check
        %p881 = pneg %p106
      $region42: #{swin_forward.43} parent=39 // pred_check_branch
        %883 = sbr.rel (%p881) target = $region44
      $region43: #{swin_forward.43} parent=39 // pred_region
        %p884 = scmp.lt.s32.totalorder %s15, 1
        %s885 = scalar_select %p884, %s15, 1
        %s886 = smul.addr %s885, 4
        %s887 = scalar_lea.vmem %s3, %s886
      $region44: #{swin_forward.43} parent=39 // pred_fallthru
        _
    $region40: #{swin_forward.43} parent=5 // pred_fallthru
      _
  $region6: #{swin_forward.43} parent=0 // loop_footer
    %s13 = sadd.s32 1, %s9
  $region7: #{swin_forward.43} parent=0 // loop_footer_branch
    %8 = sbr.rel target = $region3
  $region8: #{swin_forward.43} parent=0 // loop_exit
    _

</llo_original>
